<compile_context>
chip_gen: v5e
topology: v5e:2x2
jax: 0.10.0
libtpu: 0.0.40
codegen_flags: <defaults>
</compile_context>

<pallas_src>
import jax
import jax.numpy as jnp
from jax import lax
from jax.experimental import pallas as pl
from jax.experimental.pallas import tpu as pltpu

EPS = 1e-5
MXU_DTYPE = jnp.bfloat16   # MXU feed dtype; set to jnp.float32 for full-f32 numerics.


# ---------------------------------------------------------------------------
# In-kernel helpers (traced inside the Pallas kernel body)
# ---------------------------------------------------------------------------
def _fill_im2col(pad_ref, patch_ref, H, W):
    """Pack the 9 shifted 3x3 windows of a zero-padded image into `patch_ref`.

    pad_ref  : VMEM ref (1, H+2, W+2, Cp), f32, border already zeroed.
    patch_ref: VMEM ref (H, W, 9*Cp), MXU dtype; lane layout is tap*Cp + c, matching
               the (9*Cp, Cout) weight reshape done by the wrapper.
    """
    Cp = pad_ref.shape[3]
    for kh in range(3):
        for kw in range(3):
            t = kh * 3 + kw
            patch_ref[:, :, t * Cp:(t + 1) * Cp] = (
                pad_ref[0, kh:kh + H, kw:kw + W, :].astype(patch_ref.dtype))


def _bn_scale_shift(y, gamma, beta):
    """Training-mode BatchNorm2d (batch stats over N,H,W, biased var) as scale/shift."""
    C = y.shape[-1]
    mean = jnp.mean(y, axis=(0, 1, 2), keepdims=True)
    var = jnp.mean(jnp.square(y - mean), axis=(0, 1, 2), keepdims=True)
    scale = gamma.reshape(1, 1, 1, C) * lax.rsqrt(var + EPS)   # rsqrt -> EUP slot
    shift = beta.reshape(1, 1, 1, C) - mean * scale
    return scale, shift


# ---------------------------------------------------------------------------
# Fused Pallas kernel
# ---------------------------------------------------------------------------
def _baseblock_kernel(x_ref, w1_ref, g1_ref, be1_ref, w2_ref, g2_ref, be2_ref,
                      o_ref,
                      xpad_s, p1_s, y_s, res_s, y1pad_s, p2_s):
    n = pl.program_id(0)
    N, H, W, C = y_s.shape

    @pl.when(n == 0)
    def _init():
        # Zero the padded scratches once; only their interiors are ever rewritten,
        # so the 1-pixel zero border (conv padding=1) persists across grid steps.
        xpad_s[...] = jnp.zeros_like(xpad_s)
        y1pad_s[...] = jnp.zeros_like(y1pad_s)

    # ---- per grid step (one batch sample): conv1 as a single im2col matmul --------
    x = x_ref[0]                                   # (H, W, Cin) f32
    res_s[n] = x                                   # stash residual (dim_change=None)
    xpad_s[0, 1:H + 1, 1:W + 1, :] = x             # in-kernel zero padding
    _fill_im2col(xpad_s, p1_s, H, W)
    # Conv bias omitted: training-mode BN subtracts the batch mean, which cancels a
    # per-channel bias exactly.
    y_s[n] = lax.dot_general(                      # (H, W, C), f32 accumulation
        p1_s[...], w1_ref[...],
        dimension_numbers=(((2,), (0,)), ((), ())),
        preferred_element_type=jnp.float32)

    # ---- last grid step: BN1 stats are global over (N,H,W); rest of block fused ---
    @pl.when(n == pl.num_programs(0) - 1)
    def _finalize():
        y1 = y_s[...]                              # conv1 pre-BN, all samples (f32)
        scale1, shift1 = _bn_scale_shift(y1, g1_ref[...], be1_ref[...])
        a1 = jnp.maximum(y1 * scale1 + shift1, 0.0)    # relu(bn1(conv1(x)))

        for i in range(N):                         # conv2: one im2col matmul / sample
            y1pad_s[0, 1:H + 1, 1:W + 1, :] = a1[i]
            _fill_im2col(y1pad_s, p2_s, H, W)
            y_s[i] = lax.dot_general(              # reuse y_s for conv2 pre-BN
                p2_s[...], w2_ref[...],
                dimension_numbers=(((2,), (0,)), ((), ())),
                preferred_element_type=jnp.float32)

        y2 = y_s[...]
        scale2, shift2 = _bn_scale_shift(y2, g2_ref[...], be2_ref[...])
        out = jnp.maximum(y2 * scale2 + shift2 + res_s[...], 0.0)
        o_ref[...] = out.astype(o_ref.dtype)


# ---------------------------------------------------------------------------
# Wrapper
# ---------------------------------------------------------------------------
def baseblock_forward(x_nchw, params):
    """x_nchw: (N, Cin, H, W) -> (N, planes, H, W). stride=1, dim_change=None."""
    x = jnp.transpose(x_nchw, (0, 2, 3, 1)).astype(jnp.float32)   # NHWC
    N, H, W, Cin = x.shape
    C = params["w1"].shape[-1]
    assert Cin == C, "dim_change=None requires input_planes == planes"

    # Weights reshaped to (9*Cin, Cout) with K ordered tap*Cin + cin, cast to bf16.
    w1 = params["w1"].reshape(9 * Cin, C).astype(MXU_DTYPE)
    w2 = params["w2"].reshape(9 * C, C).astype(MXU_DTYPE)

    out = pl.pallas_call(
        _baseblock_kernel,
        out_shape=jax.ShapeDtypeStruct((N, H, W, C), jnp.float32),
        grid_spec=pltpu.PrefetchScalarGridSpec(
            num_scalar_prefetch=0,
            grid=(N,),
            in_specs=[
                pl.BlockSpec((1, H, W, Cin), lambda n: (n, 0, 0, 0)),   # x: per sample
                pl.BlockSpec((9 * Cin, C), lambda n: (0, 0)),           # w1 (resident)
                pl.BlockSpec((1, C), lambda n: (0, 0)),                 # gamma1
                pl.BlockSpec((1, C), lambda n: (0, 0)),                 # beta1
                pl.BlockSpec((9 * C, C), lambda n: (0, 0)),             # w2 (resident)
                pl.BlockSpec((1, C), lambda n: (0, 0)),                 # gamma2
                pl.BlockSpec((1, C), lambda n: (0, 0)),                 # beta2
            ],
            # Output block is resident across the (arbitrary) grid axis and written
            # once on the last step (accumulator pattern).
            out_specs=pl.BlockSpec((N, H, W, C), lambda n: (0, 0, 0, 0)),
            scratch_shapes=[
                pltpu.VMEM((1, H + 2, W + 2, Cin), jnp.float32),   # xpad_s
                pltpu.VMEM((H, W, 9 * Cin), MXU_DTYPE),            # p1_s (im2col)
                pltpu.VMEM((N, H, W, C), jnp.float32),             # y_s (conv pre-BN)
                pltpu.VMEM((N, H, W, Cin), jnp.float32),           # res_s (residual)
                pltpu.VMEM((1, H + 2, W + 2, C), jnp.float32),     # y1pad_s
                pltpu.VMEM((H, W, 9 * C), MXU_DTYPE),              # p2_s (im2col)
            ],
        ),
        compiler_params=pltpu.CompilerParams(
            # BN training stats force a global reduction -> carried scratch/output,
            # so the batch grid axis must be "arbitrary" (sequential).
            dimension_semantics=("arbitrary",),
            # ~60 KiB scratch + double-buffered 4 KiB x blocks at these shapes;
            # 32 MiB fits the scoped-VMEM budget on v5e/v6e/v7x (64 MiB physical v7x).
            vmem_limit_bytes=32 * 1024 * 1024,
        ),
    )(x, w1, params["g1"], params["be1"], w2, params["g2"], params["be2"])

    return jnp.transpose(out, (0, 3, 1, 2))   # NHWC -> NCHW


# ---------------------------------------------------------------------------
# Pure-JAX reference (PyTorch training-mode semantics; conv operands rounded to
# MXU_DTYPE to mirror the kernel's bf16 MXU feed — set MXU_DTYPE=jnp.float32 for
# full-f32 comparison).  Bias is kept here: BN's mean subtraction cancels it.
# ---------------------------------------------------------------------------
def _ref_conv3x3(x_nhwc, w_taps, b):
    w_hwio = w_taps.reshape(3, 3, w_taps.shape[1], w_taps.shape[2])
    y = lax.conv_general_dilated(
        x_nhwc.astype(MXU_DTYPE), w_hwio.astype(MXU_DTYPE),
        window_strides=(1, 1), padding=((1, 1), (1, 1)),
        dimension_numbers=("NHWC", "HWIO", "NHWC"),
        preferred_element_type=jnp.float32)
    return y + b.reshape(1, 1, 1, -1)


def _ref_batchnorm_train(y, gamma, beta):
    mean = jnp.mean(y, axis=(0, 1, 2), keepdims=True)
    var = jnp.mean(jnp.square(y - mean), axis=(0, 1, 2), keepdims=True)
    scale = gamma.reshape(1, 1, 1, -1) / jnp.sqrt(var + EPS)
    shift = beta.reshape(1, 1, 1, -1) - mean * scale
    return y * scale + shift


def baseblock_reference(x_nchw, params):
    x = jnp.transpose(x_nchw, (0, 2, 3, 1)).astype(jnp.float32)
    y = _ref_conv3x3(x, params["w1"], params["b1"])
    y = _ref_batchnorm_train(y, params["g1"], params["be1"])
    y = jnp.maximum(y, 0.0)
    y = _ref_conv3x3(y, params["w2"], params["b2"])
    y = _ref_batchnorm_train(y, params["g2"], params["be2"])
    y = jnp.maximum(y + x, 0.0)
    return jnp.transpose(y, (0, 3, 1, 2))


# ---------------------------------------------------------------------------
# Deterministic parameter construction (synthetic weights, not a checkpoint)
# ---------------------------------------------------------------------------
def make_params(input_planes, planes, key):
    k = jax.random.split(key, 6)

    def conv_w(kk, cin, cout):
        # PyTorch layout (Cout, Cin, 3, 3) -> taps (9, Cin, Cout), tap = kh*3 + kw.
        w = 0.1 * jax.random.normal(kk, (cout, cin, 3, 3), jnp.float32)
        return jnp.transpose(w, (2, 3, 1, 0)).reshape(9, cin, cout)

    return {
        "w1": conv_w(k[0], input_planes, planes),
        "b1": 0.05 * jax.random.normal(k[1], (1, planes), jnp.float32),
        "g1": 1.0 + 0.1 * jax.random.normal(k[2], (1, planes), jnp.float32),
        "be1": 0.05 * jax.random.normal(k[3], (1, planes), jnp.float32),
        "w2": conv_w(k[4], planes, planes),
        "b2": 0.05 * jax.random.normal(k[5], (1, planes), jnp.float32),
        "g2": 1.0 + 0.01 * jnp.arange(planes, dtype=jnp.float32).reshape(1, planes),
        "be2": 0.01 * jnp.arange(planes, dtype=jnp.float32).reshape(1, planes),
    }


if __name__ == "__main__":
    key = jax.random.PRNGKey(0)
    k_x, k_p = jax.random.split(key)

    N, C, H, W = 2, 4, 16, 16          # input_planes = planes = 4, stride = 1
    x = jax.random.normal(k_x, (N, C, H, W), jnp.float32)
    params = make_params(C, C, k_p)

    out = jax.jit(baseblock_forward)(x, params)
    out = jax.block_until_ready(out)

    ref = baseblock_reference(x, params)
    assert out.shape == (N, C, H, W)
    assert bool(jnp.allclose(out, ref, atol=2e-3, rtol=2e-3)), "mismatch vs JAX reference"

    print("KERNEL_OK")
</pallas_src>

<mosaic_0001>
module attributes {stable_mosaic.version = 11 : i64} {
  func.func @_baseblock_kernel(%arg0: i32, %arg1: memref<1x16x16x4xf32, #tpu.memory_space<vmem>>, %arg2: memref<36x4xbf16, #tpu.memory_space<vmem>>, %arg3: memref<1x4xf32, #tpu.memory_space<vmem>>, %arg4: memref<1x4xf32, #tpu.memory_space<vmem>>, %arg5: memref<36x4xbf16, #tpu.memory_space<vmem>>, %arg6: memref<1x4xf32, #tpu.memory_space<vmem>>, %arg7: memref<1x4xf32, #tpu.memory_space<vmem>>, %arg8: memref<2x16x16x4xf32, #tpu.memory_space<vmem>>, %arg9: memref<1x18x18x4xf32, #tpu.memory_space<vmem>>, %arg10: memref<16x16x36xbf16, #tpu.memory_space<vmem>>, %arg11: memref<2x16x16x4xf32, #tpu.memory_space<vmem>>, %arg12: memref<2x16x16x4xf32, #tpu.memory_space<vmem>>, %arg13: memref<1x18x18x4xf32, #tpu.memory_space<vmem>>, %arg14: memref<16x16x36xbf16, #tpu.memory_space<vmem>>) attributes {dimension_semantics = [#tpu.dimension_semantics<arbitrary>], iteration_bounds = array<i64: 2>, scalar_prefetch = 0 : i64, scratch_operands = 6 : i64, tpu.core_type = #tpu.core_type<tc>, window_params = [{transform_indices = @transform_0, window_bounds = array<i64: 1, 16, 16, 4>}, {pipeline_mode = #tpu.pipeline_mode<synchronous>, transform_indices = @transform_1, window_bounds = array<i64: 36, 4>}, {pipeline_mode = #tpu.pipeline_mode<synchronous>, transform_indices = @transform_2, window_bounds = array<i64: 1, 4>}, {pipeline_mode = #tpu.pipeline_mode<synchronous>, transform_indices = @transform_3, window_bounds = array<i64: 1, 4>}, {pipeline_mode = #tpu.pipeline_mode<synchronous>, transform_indices = @transform_4, window_bounds = array<i64: 36, 4>}, {pipeline_mode = #tpu.pipeline_mode<synchronous>, transform_indices = @transform_5, window_bounds = array<i64: 1, 4>}, {pipeline_mode = #tpu.pipeline_mode<synchronous>, transform_indices = @transform_6, window_bounds = array<i64: 1, 4>}, {pipeline_mode = #tpu.pipeline_mode<synchronous>, transform_indices = @transform_7, window_bounds = array<i64: 2, 16, 16, 4>}]} {
    %c0_i32 = arith.constant 0 : i32
    %0 = arith.cmpi eq, %arg0, %c0_i32 : i32
    %1 = arith.extui %0 : i1 to i32
    %c0_i32_0 = arith.constant 0 : i32
    %2 = arith.cmpi ne, %1, %c0_i32_0 : i32
    scf.if %2 {
      %cst_73 = arith.constant 0.000000e+00 : f32
      %58 = vector.broadcast %cst_73 : f32 to vector<1x18x18x4xf32>
      %c0_74 = arith.constant 0 : index
      %c0_75 = arith.constant 0 : index
      %c0_76 = arith.constant 0 : index
      %c0_77 = arith.constant 0 : index
      %59 = vector.load %arg9[%c0_74, %c0_75, %c0_76, %c0_77] : memref<1x18x18x4xf32, #tpu.memory_space<vmem>>, vector<1x18x18x4xf32>
      tpu.vector_store %arg9[%c0_74, %c0_75, %c0_76, %c0_77], %58 {strides = array<i32>} : memref<1x18x18x4xf32, #tpu.memory_space<vmem>>, vector<1x18x18x4xf32>,
      %cst_78 = arith.constant 0.000000e+00 : f32
      %60 = vector.broadcast %cst_78 : f32 to vector<1x18x18x4xf32>
      %c0_79 = arith.constant 0 : index
      %c0_80 = arith.constant 0 : index
      %c0_81 = arith.constant 0 : index
      %c0_82 = arith.constant 0 : index
      %61 = vector.load %arg13[%c0_79, %c0_80, %c0_81, %c0_82] : memref<1x18x18x4xf32, #tpu.memory_space<vmem>>, vector<1x18x18x4xf32>
      tpu.vector_store %arg13[%c0_79, %c0_80, %c0_81, %c0_82], %60 {strides = array<i32>} : memref<1x18x18x4xf32, #tpu.memory_space<vmem>>, vector<1x18x18x4xf32>,
    } else {
    }
    %c0 = arith.constant 0 : index
    %c0_1 = arith.constant 0 : index
    %c0_2 = arith.constant 0 : index
    %c0_3 = arith.constant 0 : index
    %3 = vector.load %arg1[%c0, %c0_1, %c0_2, %c0_3] : memref<1x16x16x4xf32, #tpu.memory_space<vmem>>, vector<1x16x16x4xf32>
    %4 = vector.shape_cast %3 : vector<1x16x16x4xf32> to vector<16x16x4xf32>
    %5 = arith.index_cast %arg0 : i32 to index
    %c0_4 = arith.constant 0 : index
    %c0_5 = arith.constant 0 : index
    %c0_6 = arith.constant 0 : index
    %6 = vector.load %arg12[%5, %c0_4, %c0_5, %c0_6] : memref<2x16x16x4xf32, #tpu.memory_space<vmem>>, vector<1x16x16x4xf32>
    %7 = vector.shape_cast %6 : vector<1x16x16x4xf32> to vector<16x16x4xf32>
    %8 = vector.shape_cast %4 : vector<16x16x4xf32> to vector<1x16x16x4xf32>
    tpu.vector_store %arg12[%5, %c0_4, %c0_5, %c0_6], %8 {strides = array<i32>} : memref<2x16x16x4xf32, #tpu.memory_space<vmem>>, vector<1x16x16x4xf32>,
    %c0_7 = arith.constant 0 : index
    %c1 = arith.constant 1 : index
    %c1_8 = arith.constant 1 : index
    %c0_9 = arith.constant 0 : index
    %9 = vector.load %arg9[%c0_7, %c1, %c1_8, %c0_9] : memref<1x18x18x4xf32, #tpu.memory_space<vmem>>, vector<1x16x16x4xf32>
    %10 = vector.shape_cast %9 : vector<1x16x16x4xf32> to vector<16x16x4xf32>
    %11 = vector.shape_cast %4 : vector<16x16x4xf32> to vector<1x16x16x4xf32>
    tpu.vector_store %arg9[%c0_7, %c1, %c1_8, %c0_9], %11 {strides = array<i32>} : memref<1x18x18x4xf32, #tpu.memory_space<vmem>>, vector<1x16x16x4xf32>,
    %c0_10 = arith.constant 0 : index
    %c0_11 = arith.constant 0 : index
    %c0_12 = arith.constant 0 : index
    %c0_13 = arith.constant 0 : index
    %12 = vector.load %arg9[%c0_10, %c0_11, %c0_12, %c0_13] : memref<1x18x18x4xf32, #tpu.memory_space<vmem>>, vector<1x16x16x4xf32>
    %13 = vector.shape_cast %12 : vector<1x16x16x4xf32> to vector<16x16x4xf32>
    %14 = arith.truncf %13 : vector<16x16x4xf32> to vector<16x16x4xbf16>
    %c0_14 = arith.constant 0 : index
    %c0_15 = arith.constant 0 : index
    %c0_16 = arith.constant 0 : index
    %15 = vector.load %arg10[%c0_14, %c0_15, %c0_16] : memref<16x16x36xbf16, #tpu.memory_space<vmem>>, vector<16x16x4xbf16>
    tpu.vector_store %arg10[%c0_14, %c0_15, %c0_16], %14 {strides = array<i32>} : memref<16x16x36xbf16, #tpu.memory_space<vmem>>, vector<16x16x4xbf16>,
    %c0_17 = arith.constant 0 : index
    %c0_18 = arith.constant 0 : index
    %c1_19 = arith.constant 1 : index
    %c0_20 = arith.constant 0 : index
    %16 = vector.load %arg9[%c0_17, %c0_18, %c1_19, %c0_20] : memref<1x18x18x4xf32, #tpu.memory_space<vmem>>, vector<1x16x16x4xf32>
    %17 = vector.shape_cast %16 : vector<1x16x16x4xf32> to vector<16x16x4xf32>
    %18 = arith.truncf %17 : vector<16x16x4xf32> to vector<16x16x4xbf16>
    %c0_21 = arith.constant 0 : index
    %c0_22 = arith.constant 0 : index
    %c4 = arith.constant 4 : index
    %19 = vector.load %arg10[%c0_21, %c0_22, %c4] : memref<16x16x36xbf16, #tpu.memory_space<vmem>>, vector<16x16x4xbf16>
    tpu.vector_store %arg10[%c0_21, %c0_22, %c4], %18 {strides = array<i32>} : memref<16x16x36xbf16, #tpu.memory_space<vmem>>, vector<16x16x4xbf16>,
    %c0_23 = arith.constant 0 : index
    %c0_24 = arith.constant 0 : index
    %c2 = arith.constant 2 : index
    %c0_25 = arith.constant 0 : index
    %20 = vector.load %arg9[%c0_23, %c0_24, %c2, %c0_25] : memref<1x18x18x4xf32, #tpu.memory_space<vmem>>, vector<1x16x16x4xf32>
    %21 = vector.shape_cast %20 : vector<1x16x16x4xf32> to vector<16x16x4xf32>
    %22 = arith.truncf %21 : vector<16x16x4xf32> to vector<16x16x4xbf16>
    %c0_26 = arith.constant 0 : index
    %c0_27 = arith.constant 0 : index
    %c8 = arith.constant 8 : index
    %23 = vector.load %arg10[%c0_26, %c0_27, %c8] : memref<16x16x36xbf16, #tpu.memory_space<vmem>>, vector<16x16x4xbf16>
    tpu.vector_store %arg10[%c0_26, %c0_27, %c8], %22 {strides = array<i32>} : memref<16x16x36xbf16, #tpu.memory_space<vmem>>, vector<16x16x4xbf16>,
    %c0_28 = arith.constant 0 : index
    %c1_29 = arith.constant 1 : index
    %c0_30 = arith.constant 0 : index
    %c0_31 = arith.constant 0 : index
    %24 = vector.load %arg9[%c0_28, %c1_29, %c0_30, %c0_31] : memref<1x18x18x4xf32, #tpu.memory_space<vmem>>, vector<1x16x16x4xf32>
    %25 = vector.shape_cast %24 : vector<1x16x16x4xf32> to vector<16x16x4xf32>
    %26 = arith.truncf %25 : vector<16x16x4xf32> to vector<16x16x4xbf16>
    %c0_32 = arith.constant 0 : index
    %c0_33 = arith.constant 0 : index
    %c12 = arith.constant 12 : index
    %27 = vector.load %arg10[%c0_32, %c0_33, %c12] : memref<16x16x36xbf16, #tpu.memory_space<vmem>>, vector<16x16x4xbf16>
    tpu.vector_store %arg10[%c0_32, %c0_33, %c12], %26 {strides = array<i32>} : memref<16x16x36xbf16, #tpu.memory_space<vmem>>, vector<16x16x4xbf16>,
    %c0_34 = arith.constant 0 : index
    %c1_35 = arith.constant 1 : index
    %c1_36 = arith.constant 1 : index
    %c0_37 = arith.constant 0 : index
    %28 = vector.load %arg9[%c0_34, %c1_35, %c1_36, %c0_37] : memref<1x18x18x4xf32, #tpu.memory_space<vmem>>, vector<1x16x16x4xf32>
    %29 = vector.shape_cast %28 : vector<1x16x16x4xf32> to vector<16x16x4xf32>
    %30 = arith.truncf %29 : vector<16x16x4xf32> to vector<16x16x4xbf16>
    %c0_38 = arith.constant 0 : index
    %c0_39 = arith.constant 0 : index
    %c16 = arith.constant 16 : index
    %31 = vector.load %arg10[%c0_38, %c0_39, %c16] : memref<16x16x36xbf16, #tpu.memory_space<vmem>>, vector<16x16x4xbf16>
    tpu.vector_store %arg10[%c0_38, %c0_39, %c16], %30 {strides = array<i32>} : memref<16x16x36xbf16, #tpu.memory_space<vmem>>, vector<16x16x4xbf16>,
    %c0_40 = arith.constant 0 : index
    %c1_41 = arith.constant 1 : index
    %c2_42 = arith.constant 2 : index
    %c0_43 = arith.constant 0 : index
    %32 = vector.load %arg9[%c0_40, %c1_41, %c2_42, %c0_43] : memref<1x18x18x4xf32, #tpu.memory_space<vmem>>, vector<1x16x16x4xf32>
    %33 = vector.shape_cast %32 : vector<1x16x16x4xf32> to vector<16x16x4xf32>
    %34 = arith.truncf %33 : vector<16x16x4xf32> to vector<16x16x4xbf16>
    %c0_44 = arith.constant 0 : index
    %c0_45 = arith.constant 0 : index
    %c20 = arith.constant 20 : index
    %35 = vector.load %arg10[%c0_44, %c0_45, %c20] : memref<16x16x36xbf16, #tpu.memory_space<vmem>>, vector<16x16x4xbf16>
    tpu.vector_store %arg10[%c0_44, %c0_45, %c20], %34 {strides = array<i32>} : memref<16x16x36xbf16, #tpu.memory_space<vmem>>, vector<16x16x4xbf16>,
    %c0_46 = arith.constant 0 : index
    %c2_47 = arith.constant 2 : index
    %c0_48 = arith.constant 0 : index
    %c0_49 = arith.constant 0 : index
    %36 = vector.load %arg9[%c0_46, %c2_47, %c0_48, %c0_49] : memref<1x18x18x4xf32, #tpu.memory_space<vmem>>, vector<1x16x16x4xf32>
    %37 = vector.shape_cast %36 : vector<1x16x16x4xf32> to vector<16x16x4xf32>
    %38 = arith.truncf %37 : vector<16x16x4xf32> to vector<16x16x4xbf16>
    %c0_50 = arith.constant 0 : index
    %c0_51 = arith.constant 0 : index
    %c24 = arith.constant 24 : index
    %39 = vector.load %arg10[%c0_50, %c0_51, %c24] : memref<16x16x36xbf16, #tpu.memory_space<vmem>>, vector<16x16x4xbf16>
    tpu.vector_store %arg10[%c0_50, %c0_51, %c24], %38 {strides = array<i32>} : memref<16x16x36xbf16, #tpu.memory_space<vmem>>, vector<16x16x4xbf16>,
    %c0_52 = arith.constant 0 : index
    %c2_53 = arith.constant 2 : index
    %c1_54 = arith.constant 1 : index
    %c0_55 = arith.constant 0 : index
    %40 = vector.load %arg9[%c0_52, %c2_53, %c1_54, %c0_55] : memref<1x18x18x4xf32, #tpu.memory_space<vmem>>, vector<1x16x16x4xf32>
    %41 = vector.shape_cast %40 : vector<1x16x16x4xf32> to vector<16x16x4xf32>
    %42 = arith.truncf %41 : vector<16x16x4xf32> to vector<16x16x4xbf16>
    %c0_56 = arith.constant 0 : index
    %c0_57 = arith.constant 0 : index
    %c28 = arith.constant 28 : index
    %43 = vector.load %arg10[%c0_56, %c0_57, %c28] : memref<16x16x36xbf16, #tpu.memory_space<vmem>>, vector<16x16x4xbf16>
    tpu.vector_store %arg10[%c0_56, %c0_57, %c28], %42 {strides = array<i32>} : memref<16x16x36xbf16, #tpu.memory_space<vmem>>, vector<16x16x4xbf16>,
    %c0_58 = arith.constant 0 : index
    %c2_59 = arith.constant 2 : index
    %c2_60 = arith.constant 2 : index
    %c0_61 = arith.constant 0 : index
    %44 = vector.load %arg9[%c0_58, %c2_59, %c2_60, %c0_61] : memref<1x18x18x4xf32, #tpu.memory_space<vmem>>, vector<1x16x16x4xf32>
    %45 = vector.shape_cast %44 : vector<1x16x16x4xf32> to vector<16x16x4xf32>
    %46 = arith.truncf %45 : vector<16x16x4xf32> to vector<16x16x4xbf16>
    %c0_62 = arith.constant 0 : index
    %c0_63 = arith.constant 0 : index
    %c32 = arith.constant 32 : index
    %47 = vector.load %arg10[%c0_62, %c0_63, %c32] : memref<16x16x36xbf16, #tpu.memory_space<vmem>>, vector<16x16x4xbf16>
    tpu.vector_store %arg10[%c0_62, %c0_63, %c32], %46 {strides = array<i32>} : memref<16x16x36xbf16, #tpu.memory_space<vmem>>, vector<16x16x4xbf16>,
    %c0_64 = arith.constant 0 : index
    %c0_65 = arith.constant 0 : index
    %c0_66 = arith.constant 0 : index
    %48 = vector.load %arg10[%c0_64, %c0_65, %c0_66] : memref<16x16x36xbf16, #tpu.memory_space<vmem>>, vector<16x16x36xbf16>
    %c0_67 = arith.constant 0 : index
    %c0_68 = arith.constant 0 : index
    %49 = vector.load %arg2[%c0_67, %c0_68] : memref<36x4xbf16, #tpu.memory_space<vmem>>, vector<36x4xbf16>
    %cst = arith.constant dense<0.000000e+00> : vector<16x16x4xf32>
    %50 = tpu.matmul %48, %49, %cst {dimension_numbers = #tpu.dot_dimension_numbers<[2], [0], [0, 1], [1], [0, 0, 0, 1, 1, 1], [], []>} : vector<16x16x36xbf16>, vector<36x4xbf16>, vector<16x16x4xf32> -> vector<16x16x4xf32>
    %51 = arith.index_cast %arg0 : i32 to index
    %c0_69 = arith.constant 0 : index
    %c0_70 = arith.constant 0 : index
    %c0_71 = arith.constant 0 : index
    %52 = vector.load %arg11[%51, %c0_69, %c0_70, %c0_71] : memref<2x16x16x4xf32, #tpu.memory_space<vmem>>, vector<1x16x16x4xf32>
    %53 = vector.shape_cast %52 : vector<1x16x16x4xf32> to vector<16x16x4xf32>
    %54 = vector.shape_cast %50 : vector<16x16x4xf32> to vector<1x16x16x4xf32>
    tpu.vector_store %arg11[%51, %c0_69, %c0_70, %c0_71], %54 {strides = array<i32>} : memref<2x16x16x4xf32, #tpu.memory_space<vmem>>, vector<1x16x16x4xf32>,
    %c1_i32 = arith.constant 1 : i32
    %55 = arith.cmpi eq, %arg0, %c1_i32 : i32
    %56 = arith.extui %55 : i1 to i32
    %c0_i32_72 = arith.constant 0 : i32
    %57 = arith.cmpi ne, %56, %c0_i32_72 : i32
    scf.if %57 {
      %c0_73 = arith.constant 0 : index
      %c0_74 = arith.constant 0 : index
      %c0_75 = arith.constant 0 : index
      %c0_76 = arith.constant 0 : index
      %58 = vector.load %arg11[%c0_73, %c0_74, %c0_75, %c0_76] : memref<2x16x16x4xf32, #tpu.memory_space<vmem>>, vector<2x16x16x4xf32>
      %c0_77 = arith.constant 0 : index
      %c0_78 = arith.constant 0 : index
      %59 = vector.load %arg3[%c0_77, %c0_78] : memref<1x4xf32, #tpu.memory_space<vmem>>, vector<1x4xf32>
      %c0_79 = arith.constant 0 : index
      %c0_80 = arith.constant 0 : index
      %60 = vector.load %arg4[%c0_79, %c0_80] : memref<1x4xf32, #tpu.memory_space<vmem>>, vector<1x4xf32>
      %cst_81 = arith.constant dense<0.000000e+00> : vector<4xf32>
      %61 = vector.multi_reduction <add>, %58, %cst_81 [0, 1, 2] : vector<2x16x16x4xf32> to vector<4xf32>
      %62 = vector.shape_cast %61 : vector<4xf32> to vector<1x1x1x4xf32>
      %cst_82 = arith.constant 5.120000e+02 : f32
      %63 = vector.broadcast %cst_82 : f32 to vector<1x1x1x4xf32>
      %64 = arith.divf %62, %63 : vector<1x1x1x4xf32>
      %65 = vector.broadcast %64 : vector<1x1x1x4xf32> to vector<2x16x16x4xf32>
      %66 = arith.subf %58, %65 : vector<2x16x16x4xf32>
      %67 = arith.mulf %66, %66 : vector<2x16x16x4xf32>
      %cst_83 = arith.constant dense<0.000000e+00> : vector<4xf32>
      %68 = vector.multi_reduction <add>, %67, %cst_83 [0, 1, 2] : vector<2x16x16x4xf32> to vector<4xf32>
      %69 = vector.shape_cast %68 : vector<4xf32> to vector<1x1x1x4xf32>
      %cst_84 = arith.constant 5.120000e+02 : f32
      %70 = vector.broadcast %cst_84 : f32 to vector<1x1x1x4xf32>
      %71 = arith.divf %69, %70 : vector<1x1x1x4xf32>
      %72 = vector.shape_cast %59 : vector<1x4xf32> to vector<1x1x1x4xf32>
      %cst_85 = arith.constant 9.99999974E-6 : f32
      %73 = vector.broadcast %cst_85 : f32 to vector<1x1x1x4xf32>
      %74 = arith.addf %71, %73 : vector<1x1x1x4xf32>
      %75 = math.rsqrt %74 : vector<1x1x1x4xf32>
      %76 = arith.mulf %72, %75 : vector<1x1x1x4xf32>
      %77 = vector.shape_cast %60 : vector<1x4xf32> to vector<1x1x1x4xf32>
      %78 = arith.mulf %64, %76 : vector<1x1x1x4xf32>
      %79 = arith.subf %77, %78 : vector<1x1x1x4xf32>
      %80 = vector.broadcast %76 : vector<1x1x1x4xf32> to vector<2x16x16x4xf32>
      %81 = arith.mulf %58, %80 : vector<2x16x16x4xf32>
      %82 = vector.broadcast %79 : vector<1x1x1x4xf32> to vector<2x16x16x4xf32>
      %83 = arith.addf %81, %82 : vector<2x16x16x4xf32>
      %cst_86 = arith.constant 0.000000e+00 : f32
      %84 = vector.broadcast %cst_86 : f32 to vector<2x16x16x4xf32>
      %85 = arith.maximumf %83, %84 : vector<2x16x16x4xf32>
      %86 = vector.extract_strided_slice %85 {offsets = [0, 0, 0, 0], sizes = [1, 16, 16, 4], strides = [1, 1, 1, 1]} : vector<2x16x16x4xf32> to vector<1x16x16x4xf32>
      %87 = vector.shape_cast %86 : vector<1x16x16x4xf32> to vector<16x16x4xf32>
      %c0_87 = arith.constant 0 : index
      %c1_88 = arith.constant 1 : index
      %c1_89 = arith.constant 1 : index
      %c0_90 = arith.constant 0 : index
      %88 = vector.load %arg13[%c0_87, %c1_88, %c1_89, %c0_90] : memref<1x18x18x4xf32, #tpu.memory_space<vmem>>, vector<1x16x16x4xf32>
      %89 = vector.shape_cast %88 : vector<1x16x16x4xf32> to vector<16x16x4xf32>
      %90 = vector.shape_cast %87 : vector<16x16x4xf32> to vector<1x16x16x4xf32>
      tpu.vector_store %arg13[%c0_87, %c1_88, %c1_89, %c0_90], %90 {strides = array<i32>} : memref<1x18x18x4xf32, #tpu.memory_space<vmem>>, vector<1x16x16x4xf32>,
      %c0_91 = arith.constant 0 : index
      %c0_92 = arith.constant 0 : index
      %c0_93 = arith.constant 0 : index
      %c0_94 = arith.constant 0 : index
      %91 = vector.load %arg13[%c0_91, %c0_92, %c0_93, %c0_94] : memref<1x18x18x4xf32, #tpu.memory_space<vmem>>, vector<1x16x16x4xf32>
      %92 = vector.shape_cast %91 : vector<1x16x16x4xf32> to vector<16x16x4xf32>
      %93 = arith.truncf %92 : vector<16x16x4xf32> to vector<16x16x4xbf16>
      %c0_95 = arith.constant 0 : index
      %c0_96 = arith.constant 0 : index
      %c0_97 = arith.constant 0 : index
      %94 = vector.load %arg14[%c0_95, %c0_96, %c0_97] : memref<16x16x36xbf16, #tpu.memory_space<vmem>>, vector<16x16x4xbf16>
      tpu.vector_store %arg14[%c0_95, %c0_96, %c0_97], %93 {strides = array<i32>} : memref<16x16x36xbf16, #tpu.memory_space<vmem>>, vector<16x16x4xbf16>,
      %c0_98 = arith.constant 0 : index
      %c0_99 = arith.constant 0 : index
      %c1_100 = arith.constant 1 : index
      %c0_101 = arith.constant 0 : index
      %95 = vector.load %arg13[%c0_98, %c0_99, %c1_100, %c0_101] : memref<1x18x18x4xf32, #tpu.memory_space<vmem>>, vector<1x16x16x4xf32>
      %96 = vector.shape_cast %95 : vector<1x16x16x4xf32> to vector<16x16x4xf32>
      %97 = arith.truncf %96 : vector<16x16x4xf32> to vector<16x16x4xbf16>
      %c0_102 = arith.constant 0 : index
      %c0_103 = arith.constant 0 : index
      %c4_104 = arith.constant 4 : index
      %98 = vector.load %arg14[%c0_102, %c0_103, %c4_104] : memref<16x16x36xbf16, #tpu.memory_space<vmem>>, vector<16x16x4xbf16>
      tpu.vector_store %arg14[%c0_102, %c0_103, %c4_104], %97 {strides = array<i32>} : memref<16x16x36xbf16, #tpu.memory_space<vmem>>, vector<16x16x4xbf16>,
      %c0_105 = arith.constant 0 : index
      %c0_106 = arith.constant 0 : index
      %c2_107 = arith.constant 2 : index
      %c0_108 = arith.constant 0 : index
      %99 = vector.load %arg13[%c0_105, %c0_106, %c2_107, %c0_108] : memref<1x18x18x4xf32, #tpu.memory_space<vmem>>, vector<1x16x16x4xf32>
      %100 = vector.shape_cast %99 : vector<1x16x16x4xf32> to vector<16x16x4xf32>
      %101 = arith.truncf %100 : vector<16x16x4xf32> to vector<16x16x4xbf16>
      %c0_109 = arith.constant 0 : index
      %c0_110 = arith.constant 0 : index
      %c8_111 = arith.constant 8 : index
      %102 = vector.load %arg14[%c0_109, %c0_110, %c8_111] : memref<16x16x36xbf16, #tpu.memory_space<vmem>>, vector<16x16x4xbf16>
      tpu.vector_store %arg14[%c0_109, %c0_110, %c8_111], %101 {strides = array<i32>} : memref<16x16x36xbf16, #tpu.memory_space<vmem>>, vector<16x16x4xbf16>,
      %c0_112 = arith.constant 0 : index
      %c1_113 = arith.constant 1 : index
      %c0_114 = arith.constant 0 : index
      %c0_115 = arith.constant 0 : index
      %103 = vector.load %arg13[%c0_112, %c1_113, %c0_114, %c0_115] : memref<1x18x18x4xf32, #tpu.memory_space<vmem>>, vector<1x16x16x4xf32>
      %104 = vector.shape_cast %103 : vector<1x16x16x4xf32> to vector<16x16x4xf32>
      %105 = arith.truncf %104 : vector<16x16x4xf32> to vector<16x16x4xbf16>
      %c0_116 = arith.constant 0 : index
      %c0_117 = arith.constant 0 : index
      %c12_118 = arith.constant 12 : index
      %106 = vector.load %arg14[%c0_116, %c0_117, %c12_118] : memref<16x16x36xbf16, #tpu.memory_space<vmem>>, vector<16x16x4xbf16>
      tpu.vector_store %arg14[%c0_116, %c0_117, %c12_118], %105 {strides = array<i32>} : memref<16x16x36xbf16, #tpu.memory_space<vmem>>, vector<16x16x4xbf16>,
      %c0_119 = arith.constant 0 : index
      %c1_120 = arith.constant 1 : index
      %c1_121 = arith.constant 1 : index
      %c0_122 = arith.constant 0 : index
      %107 = vector.load %arg13[%c0_119, %c1_120, %c1_121, %c0_122] : memref<1x18x18x4xf32, #tpu.memory_space<vmem>>, vector<1x16x16x4xf32>
      %108 = vector.shape_cast %107 : vector<1x16x16x4xf32> to vector<16x16x4xf32>
      %109 = arith.truncf %108 : vector<16x16x4xf32> to vector<16x16x4xbf16>
      %c0_123 = arith.constant 0 : index
      %c0_124 = arith.constant 0 : index
      %c16_125 = arith.constant 16 : index
      %110 = vector.load %arg14[%c0_123, %c0_124, %c16_125] : memref<16x16x36xbf16, #tpu.memory_space<vmem>>, vector<16x16x4xbf16>
      tpu.vector_store %arg14[%c0_123, %c0_124, %c16_125], %109 {strides = array<i32>} : memref<16x16x36xbf16, #tpu.memory_space<vmem>>, vector<16x16x4xbf16>,
      %c0_126 = arith.constant 0 : index
      %c1_127 = arith.constant 1 : index
      %c2_128 = arith.constant 2 : index
      %c0_129 = arith.constant 0 : index
      %111 = vector.load %arg13[%c0_126, %c1_127, %c2_128, %c0_129] : memref<1x18x18x4xf32, #tpu.memory_space<vmem>>, vector<1x16x16x4xf32>
      %112 = vector.shape_cast %111 : vector<1x16x16x4xf32> to vector<16x16x4xf32>
      %113 = arith.truncf %112 : vector<16x16x4xf32> to vector<16x16x4xbf16>
      %c0_130 = arith.constant 0 : index
      %c0_131 = arith.constant 0 : index
      %c20_132 = arith.constant 20 : index
      %114 = vector.load %arg14[%c0_130, %c0_131, %c20_132] : memref<16x16x36xbf16, #tpu.memory_space<vmem>>, vector<16x16x4xbf16>
      tpu.vector_store %arg14[%c0_130, %c0_131, %c20_132], %113 {strides = array<i32>} : memref<16x16x36xbf16, #tpu.memory_space<vmem>>, vector<16x16x4xbf16>,
      %c0_133 = arith.constant 0 : index
      %c2_134 = arith.constant 2 : index
      %c0_135 = arith.constant 0 : index
      %c0_136 = arith.constant 0 : index
      %115 = vector.load %arg13[%c0_133, %c2_134, %c0_135, %c0_136] : memref<1x18x18x4xf32, #tpu.memory_space<vmem>>, vector<1x16x16x4xf32>
      %116 = vector.shape_cast %115 : vector<1x16x16x4xf32> to vector<16x16x4xf32>
      %117 = arith.truncf %116 : vector<16x16x4xf32> to vector<16x16x4xbf16>
      %c0_137 = arith.constant 0 : index
      %c0_138 = arith.constant 0 : index
      %c24_139 = arith.constant 24 : index
      %118 = vector.load %arg14[%c0_137, %c0_138, %c24_139] : memref<16x16x36xbf16, #tpu.memory_space<vmem>>, vector<16x16x4xbf16>
      tpu.vector_store %arg14[%c0_137, %c0_138, %c24_139], %117 {strides = array<i32>} : memref<16x16x36xbf16, #tpu.memory_space<vmem>>, vector<16x16x4xbf16>,
      %c0_140 = arith.constant 0 : index
      %c2_141 = arith.constant 2 : index
      %c1_142 = arith.constant 1 : index
      %c0_143 = arith.constant 0 : index
      %119 = vector.load %arg13[%c0_140, %c2_141, %c1_142, %c0_143] : memref<1x18x18x4xf32, #tpu.memory_space<vmem>>, vector<1x16x16x4xf32>
      %120 = vector.shape_cast %119 : vector<1x16x16x4xf32> to vector<16x16x4xf32>
      %121 = arith.truncf %120 : vector<16x16x4xf32> to vector<16x16x4xbf16>
      %c0_144 = arith.constant 0 : index
      %c0_145 = arith.constant 0 : index
      %c28_146 = arith.constant 28 : index
      %122 = vector.load %arg14[%c0_144, %c0_145, %c28_146] : memref<16x16x36xbf16, #tpu.memory_space<vmem>>, vector<16x16x4xbf16>
      tpu.vector_store %arg14[%c0_144, %c0_145, %c28_146], %121 {strides = array<i32>} : memref<16x16x36xbf16, #tpu.memory_space<vmem>>, vector<16x16x4xbf16>,
      %c0_147 = arith.constant 0 : index
      %c2_148 = arith.constant 2 : index
      %c2_149 = arith.constant 2 : index
      %c0_150 = arith.constant 0 : index
      %123 = vector.load %arg13[%c0_147, %c2_148, %c2_149, %c0_150] : memref<1x18x18x4xf32, #tpu.memory_space<vmem>>, vector<1x16x16x4xf32>
      %124 = vector.shape_cast %123 : vector<1x16x16x4xf32> to vector<16x16x4xf32>
      %125 = arith.truncf %124 : vector<16x16x4xf32> to vector<16x16x4xbf16>
      %c0_151 = arith.constant 0 : index
      %c0_152 = arith.constant 0 : index
      %c32_153 = arith.constant 32 : index
      %126 = vector.load %arg14[%c0_151, %c0_152, %c32_153] : memref<16x16x36xbf16, #tpu.memory_space<vmem>>, vector<16x16x4xbf16>
      tpu.vector_store %arg14[%c0_151, %c0_152, %c32_153], %125 {strides = array<i32>} : memref<16x16x36xbf16, #tpu.memory_space<vmem>>, vector<16x16x4xbf16>,
      %c0_154 = arith.constant 0 : index
      %c0_155 = arith.constant 0 : index
      %c0_156 = arith.constant 0 : index
      %127 = vector.load %arg14[%c0_154, %c0_155, %c0_156] : memref<16x16x36xbf16, #tpu.memory_space<vmem>>, vector<16x16x36xbf16>
      %c0_157 = arith.constant 0 : index
      %c0_158 = arith.constant 0 : index
      %128 = vector.load %arg5[%c0_157, %c0_158] : memref<36x4xbf16, #tpu.memory_space<vmem>>, vector<36x4xbf16>
      %cst_159 = arith.constant dense<0.000000e+00> : vector<16x16x4xf32>
      %129 = tpu.matmul %127, %128, %cst_159 {dimension_numbers = #tpu.dot_dimension_numbers<[2], [0], [0, 1], [1], [0, 0, 0, 1, 1, 1], [], []>} : vector<16x16x36xbf16>, vector<36x4xbf16>, vector<16x16x4xf32> -> vector<16x16x4xf32>
      %c0_160 = arith.constant 0 : index
      %c0_161 = arith.constant 0 : index
      %c0_162 = arith.constant 0 : index
      %c0_163 = arith.constant 0 : index
      %130 = vector.load %arg11[%c0_160, %c0_161, %c0_162, %c0_163] : memref<2x16x16x4xf32, #tpu.memory_space<vmem>>, vector<1x16x16x4xf32>
      %131 = vector.shape_cast %130 : vector<1x16x16x4xf32> to vector<16x16x4xf32>
      %132 = vector.shape_cast %129 : vector<16x16x4xf32> to vector<1x16x16x4xf32>
      tpu.vector_store %arg11[%c0_160, %c0_161, %c0_162, %c0_163], %132 {strides = array<i32>} : memref<2x16x16x4xf32, #tpu.memory_space<vmem>>, vector<1x16x16x4xf32>,
      %133 = vector.extract_strided_slice %85 {offsets = [1, 0, 0, 0], sizes = [1, 16, 16, 4], strides = [1, 1, 1, 1]} : vector<2x16x16x4xf32> to vector<1x16x16x4xf32>
      %134 = vector.shape_cast %133 : vector<1x16x16x4xf32> to vector<16x16x4xf32>
      %c0_164 = arith.constant 0 : index
      %c1_165 = arith.constant 1 : index
      %c1_166 = arith.constant 1 : index
      %c0_167 = arith.constant 0 : index
      %135 = vector.load %arg13[%c0_164, %c1_165, %c1_166, %c0_167] : memref<1x18x18x4xf32, #tpu.memory_space<vmem>>, vector<1x16x16x4xf32>
      %136 = vector.shape_cast %135 : vector<1x16x16x4xf32> to vector<16x16x4xf32>
      %137 = vector.shape_cast %134 : vector<16x16x4xf32> to vector<1x16x16x4xf32>
      tpu.vector_store %arg13[%c0_164, %c1_165, %c1_166, %c0_167], %137 {strides = array<i32>} : memref<1x18x18x4xf32, #tpu.memory_space<vmem>>, vector<1x16x16x4xf32>,
      %c0_168 = arith.constant 0 : index
      %c0_169 = arith.constant 0 : index
      %c0_170 = arith.constant 0 : index
      %c0_171 = arith.constant 0 : index
      %138 = vector.load %arg13[%c0_168, %c0_169, %c0_170, %c0_171] : memref<1x18x18x4xf32, #tpu.memory_space<vmem>>, vector<1x16x16x4xf32>
      %139 = vector.shape_cast %138 : vector<1x16x16x4xf32> to vector<16x16x4xf32>
      %140 = arith.truncf %139 : vector<16x16x4xf32> to vector<16x16x4xbf16>
      %c0_172 = arith.constant 0 : index
      %c0_173 = arith.constant 0 : index
      %c0_174 = arith.constant 0 : index
      %141 = vector.load %arg14[%c0_172, %c0_173, %c0_174] : memref<16x16x36xbf16, #tpu.memory_space<vmem>>, vector<16x16x4xbf16>
      tpu.vector_store %arg14[%c0_172, %c0_173, %c0_174], %140 {strides = array<i32>} : memref<16x16x36xbf16, #tpu.memory_space<vmem>>, vector<16x16x4xbf16>,
      %c0_175 = arith.constant 0 : index
      %c0_176 = arith.constant 0 : index
      %c1_177 = arith.constant 1 : index
      %c0_178 = arith.constant 0 : index
      %142 = vector.load %arg13[%c0_175, %c0_176, %c1_177, %c0_178] : memref<1x18x18x4xf32, #tpu.memory_space<vmem>>, vector<1x16x16x4xf32>
      %143 = vector.shape_cast %142 : vector<1x16x16x4xf32> to vector<16x16x4xf32>
      %144 = arith.truncf %143 : vector<16x16x4xf32> to vector<16x16x4xbf16>
      %c0_179 = arith.constant 0 : index
      %c0_180 = arith.constant 0 : index
      %c4_181 = arith.constant 4 : index
      %145 = vector.load %arg14[%c0_179, %c0_180, %c4_181] : memref<16x16x36xbf16, #tpu.memory_space<vmem>>, vector<16x16x4xbf16>
      tpu.vector_store %arg14[%c0_179, %c0_180, %c4_181], %144 {strides = array<i32>} : memref<16x16x36xbf16, #tpu.memory_space<vmem>>, vector<16x16x4xbf16>,
      %c0_182 = arith.constant 0 : index
      %c0_183 = arith.constant 0 : index
      %c2_184 = arith.constant 2 : index
      %c0_185 = arith.constant 0 : index
      %146 = vector.load %arg13[%c0_182, %c0_183, %c2_184, %c0_185] : memref<1x18x18x4xf32, #tpu.memory_space<vmem>>, vector<1x16x16x4xf32>
      %147 = vector.shape_cast %146 : vector<1x16x16x4xf32> to vector<16x16x4xf32>
      %148 = arith.truncf %147 : vector<16x16x4xf32> to vector<16x16x4xbf16>
      %c0_186 = arith.constant 0 : index
      %c0_187 = arith.constant 0 : index
      %c8_188 = arith.constant 8 : index
      %149 = vector.load %arg14[%c0_186, %c0_187, %c8_188] : memref<16x16x36xbf16, #tpu.memory_space<vmem>>, vector<16x16x4xbf16>
      tpu.vector_store %arg14[%c0_186, %c0_187, %c8_188], %148 {strides = array<i32>} : memref<16x16x36xbf16, #tpu.memory_space<vmem>>, vector<16x16x4xbf16>,
      %c0_189 = arith.constant 0 : index
      %c1_190 = arith.constant 1 : index
      %c0_191 = arith.constant 0 : index
      %c0_192 = arith.constant 0 : index
      %150 = vector.load %arg13[%c0_189, %c1_190, %c0_191, %c0_192] : memref<1x18x18x4xf32, #tpu.memory_space<vmem>>, vector<1x16x16x4xf32>
      %151 = vector.shape_cast %150 : vector<1x16x16x4xf32> to vector<16x16x4xf32>
      %152 = arith.truncf %151 : vector<16x16x4xf32> to vector<16x16x4xbf16>
      %c0_193 = arith.constant 0 : index
      %c0_194 = arith.constant 0 : index
      %c12_195 = arith.constant 12 : index
      %153 = vector.load %arg14[%c0_193, %c0_194, %c12_195] : memref<16x16x36xbf16, #tpu.memory_space<vmem>>, vector<16x16x4xbf16>
      tpu.vector_store %arg14[%c0_193, %c0_194, %c12_195], %152 {strides = array<i32>} : memref<16x16x36xbf16, #tpu.memory_space<vmem>>, vector<16x16x4xbf16>,
      %c0_196 = arith.constant 0 : index
      %c1_197 = arith.constant 1 : index
      %c1_198 = arith.constant 1 : index
      %c0_199 = arith.constant 0 : index
      %154 = vector.load %arg13[%c0_196, %c1_197, %c1_198, %c0_199] : memref<1x18x18x4xf32, #tpu.memory_space<vmem>>, vector<1x16x16x4xf32>
      %155 = vector.shape_cast %154 : vector<1x16x16x4xf32> to vector<16x16x4xf32>
      %156 = arith.truncf %155 : vector<16x16x4xf32> to vector<16x16x4xbf16>
      %c0_200 = arith.constant 0 : index
      %c0_201 = arith.constant 0 : index
      %c16_202 = arith.constant 16 : index
      %157 = vector.load %arg14[%c0_200, %c0_201, %c16_202] : memref<16x16x36xbf16, #tpu.memory_space<vmem>>, vector<16x16x4xbf16>
      tpu.vector_store %arg14[%c0_200, %c0_201, %c16_202], %156 {strides = array<i32>} : memref<16x16x36xbf16, #tpu.memory_space<vmem>>, vector<16x16x4xbf16>,
      %c0_203 = arith.constant 0 : index
      %c1_204 = arith.constant 1 : index
      %c2_205 = arith.constant 2 : index
      %c0_206 = arith.constant 0 : index
      %158 = vector.load %arg13[%c0_203, %c1_204, %c2_205, %c0_206] : memref<1x18x18x4xf32, #tpu.memory_space<vmem>>, vector<1x16x16x4xf32>
      %159 = vector.shape_cast %158 : vector<1x16x16x4xf32> to vector<16x16x4xf32>
      %160 = arith.truncf %159 : vector<16x16x4xf32> to vector<16x16x4xbf16>
      %c0_207 = arith.constant 0 : index
      %c0_208 = arith.constant 0 : index
      %c20_209 = arith.constant 20 : index
      %161 = vector.load %arg14[%c0_207, %c0_208, %c20_209] : memref<16x16x36xbf16, #tpu.memory_space<vmem>>, vector<16x16x4xbf16>
      tpu.vector_store %arg14[%c0_207, %c0_208, %c20_209], %160 {strides = array<i32>} : memref<16x16x36xbf16, #tpu.memory_space<vmem>>, vector<16x16x4xbf16>,
      %c0_210 = arith.constant 0 : index
      %c2_211 = arith.constant 2 : index
      %c0_212 = arith.constant 0 : index
      %c0_213 = arith.constant 0 : index
      %162 = vector.load %arg13[%c0_210, %c2_211, %c0_212, %c0_213] : memref<1x18x18x4xf32, #tpu.memory_space<vmem>>, vector<1x16x16x4xf32>
      %163 = vector.shape_cast %162 : vector<1x16x16x4xf32> to vector<16x16x4xf32>
      %164 = arith.truncf %163 : vector<16x16x4xf32> to vector<16x16x4xbf16>
      %c0_214 = arith.constant 0 : index
      %c0_215 = arith.constant 0 : index
      %c24_216 = arith.constant 24 : index
      %165 = vector.load %arg14[%c0_214, %c0_215, %c24_216] : memref<16x16x36xbf16, #tpu.memory_space<vmem>>, vector<16x16x4xbf16>
      tpu.vector_store %arg14[%c0_214, %c0_215, %c24_216], %164 {strides = array<i32>} : memref<16x16x36xbf16, #tpu.memory_space<vmem>>, vector<16x16x4xbf16>,
      %c0_217 = arith.constant 0 : index
      %c2_218 = arith.constant 2 : index
      %c1_219 = arith.constant 1 : index
      %c0_220 = arith.constant 0 : index
      %166 = vector.load %arg13[%c0_217, %c2_218, %c1_219, %c0_220] : memref<1x18x18x4xf32, #tpu.memory_space<vmem>>, vector<1x16x16x4xf32>
      %167 = vector.shape_cast %166 : vector<1x16x16x4xf32> to vector<16x16x4xf32>
      %168 = arith.truncf %167 : vector<16x16x4xf32> to vector<16x16x4xbf16>
      %c0_221 = arith.constant 0 : index
      %c0_222 = arith.constant 0 : index
      %c28_223 = arith.constant 28 : index
      %169 = vector.load %arg14[%c0_221, %c0_222, %c28_223] : memref<16x16x36xbf16, #tpu.memory_space<vmem>>, vector<16x16x4xbf16>
      tpu.vector_store %arg14[%c0_221, %c0_222, %c28_223], %168 {strides = array<i32>} : memref<16x16x36xbf16, #tpu.memory_space<vmem>>, vector<16x16x4xbf16>,
      %c0_224 = arith.constant 0 : index
      %c2_225 = arith.constant 2 : index
      %c2_226 = arith.constant 2 : index
      %c0_227 = arith.constant 0 : index
      %170 = vector.load %arg13[%c0_224, %c2_225, %c2_226, %c0_227] : memref<1x18x18x4xf32, #tpu.memory_space<vmem>>, vector<1x16x16x4xf32>
      %171 = vector.shape_cast %170 : vector<1x16x16x4xf32> to vector<16x16x4xf32>
      %172 = arith.truncf %171 : vector<16x16x4xf32> to vector<16x16x4xbf16>
      %c0_228 = arith.constant 0 : index
      %c0_229 = arith.constant 0 : index
      %c32_230 = arith.constant 32 : index
      %173 = vector.load %arg14[%c0_228, %c0_229, %c32_230] : memref<16x16x36xbf16, #tpu.memory_space<vmem>>, vector<16x16x4xbf16>
      tpu.vector_store %arg14[%c0_228, %c0_229, %c32_230], %172 {strides = array<i32>} : memref<16x16x36xbf16, #tpu.memory_space<vmem>>, vector<16x16x4xbf16>,
      %c0_231 = arith.constant 0 : index
      %c0_232 = arith.constant 0 : index
      %c0_233 = arith.constant 0 : index
      %174 = vector.load %arg14[%c0_231, %c0_232, %c0_233] : memref<16x16x36xbf16, #tpu.memory_space<vmem>>, vector<16x16x36xbf16>
      %c0_234 = arith.constant 0 : index
      %c0_235 = arith.constant 0 : index
      %175 = vector.load %arg5[%c0_234, %c0_235] : memref<36x4xbf16, #tpu.memory_space<vmem>>, vector<36x4xbf16>
      %cst_236 = arith.constant dense<0.000000e+00> : vector<16x16x4xf32>
      %176 = tpu.matmul %174, %175, %cst_236 {dimension_numbers = #tpu.dot_dimension_numbers<[2], [0], [0, 1], [1], [0, 0, 0, 1, 1, 1], [], []>} : vector<16x16x36xbf16>, vector<36x4xbf16>, vector<16x16x4xf32> -> vector<16x16x4xf32>
      %c1_237 = arith.constant 1 : index
      %c0_238 = arith.constant 0 : index
      %c0_239 = arith.constant 0 : index
      %c0_240 = arith.constant 0 : index
      %177 = vector.load %arg11[%c1_237, %c0_238, %c0_239, %c0_240] : memref<2x16x16x4xf32, #tpu.memory_space<vmem>>, vector<1x16x16x4xf32>
      %178 = vector.shape_cast %177 : vector<1x16x16x4xf32> to vector<16x16x4xf32>
      %179 = vector.shape_cast %176 : vector<16x16x4xf32> to vector<1x16x16x4xf32>
      tpu.vector_store %arg11[%c1_237, %c0_238, %c0_239, %c0_240], %179 {strides = array<i32>} : memref<2x16x16x4xf32, #tpu.memory_space<vmem>>, vector<1x16x16x4xf32>,
      %c0_241 = arith.constant 0 : index
      %c0_242 = arith.constant 0 : index
      %c0_243 = arith.constant 0 : index
      %c0_244 = arith.constant 0 : index
      %180 = vector.load %arg11[%c0_241, %c0_242, %c0_243, %c0_244] : memref<2x16x16x4xf32, #tpu.memory_space<vmem>>, vector<2x16x16x4xf32>
      %c0_245 = arith.constant 0 : index
      %c0_246 = arith.constant 0 : index
      %181 = vector.load %arg6[%c0_245, %c0_246] : memref<1x4xf32, #tpu.memory_space<vmem>>, vector<1x4xf32>
      %c0_247 = arith.constant 0 : index
      %c0_248 = arith.constant 0 : index
      %182 = vector.load %arg7[%c0_247, %c0_248] : memref<1x4xf32, #tpu.memory_space<vmem>>, vector<1x4xf32>
      %cst_249 = arith.constant dense<0.000000e+00> : vector<4xf32>
      %183 = vector.multi_reduction <add>, %180, %cst_249 [0, 1, 2] : vector<2x16x16x4xf32> to vector<4xf32>
      %184 = vector.shape_cast %183 : vector<4xf32> to vector<1x1x1x4xf32>
      %cst_250 = arith.constant 5.120000e+02 : f32
      %185 = vector.broadcast %cst_250 : f32 to vector<1x1x1x4xf32>
      %186 = arith.divf %184, %185 : vector<1x1x1x4xf32>
      %187 = vector.broadcast %186 : vector<1x1x1x4xf32> to vector<2x16x16x4xf32>
      %188 = arith.subf %180, %187 : vector<2x16x16x4xf32>
      %189 = arith.mulf %188, %188 : vector<2x16x16x4xf32>
      %cst_251 = arith.constant dense<0.000000e+00> : vector<4xf32>
      %190 = vector.multi_reduction <add>, %189, %cst_251 [0, 1, 2] : vector<2x16x16x4xf32> to vector<4xf32>
      %191 = vector.shape_cast %190 : vector<4xf32> to vector<1x1x1x4xf32>
      %cst_252 = arith.constant 5.120000e+02 : f32
      %192 = vector.broadcast %cst_252 : f32 to vector<1x1x1x4xf32>
      %193 = arith.divf %191, %192 : vector<1x1x1x4xf32>
      %194 = vector.shape_cast %181 : vector<1x4xf32> to vector<1x1x1x4xf32>
      %cst_253 = arith.constant 9.99999974E-6 : f32
      %195 = vector.broadcast %cst_253 : f32 to vector<1x1x1x4xf32>
      %196 = arith.addf %193, %195 : vector<1x1x1x4xf32>
      %197 = math.rsqrt %196 : vector<1x1x1x4xf32>
      %198 = arith.mulf %194, %197 : vector<1x1x1x4xf32>
      %199 = vector.shape_cast %182 : vector<1x4xf32> to vector<1x1x1x4xf32>
      %200 = arith.mulf %186, %198 : vector<1x1x1x4xf32>
      %201 = arith.subf %199, %200 : vector<1x1x1x4xf32>
      %202 = vector.broadcast %198 : vector<1x1x1x4xf32> to vector<2x16x16x4xf32>
      %203 = arith.mulf %180, %202 : vector<2x16x16x4xf32>
      %204 = vector.broadcast %201 : vector<1x1x1x4xf32> to vector<2x16x16x4xf32>
      %205 = arith.addf %203, %204 : vector<2x16x16x4xf32>
      %c0_254 = arith.constant 0 : index
      %c0_255 = arith.constant 0 : index
      %c0_256 = arith.constant 0 : index
      %c0_257 = arith.constant 0 : index
      %206 = vector.load %arg12[%c0_254, %c0_255, %c0_256, %c0_257] : memref<2x16x16x4xf32, #tpu.memory_space<vmem>>, vector<2x16x16x4xf32>
      %207 = arith.addf %205, %206 : vector<2x16x16x4xf32>
      %cst_258 = arith.constant 0.000000e+00 : f32
      %208 = vector.broadcast %cst_258 : f32 to vector<2x16x16x4xf32>
      %209 = arith.maximumf %207, %208 : vector<2x16x16x4xf32>
      %c0_259 = arith.constant 0 : index
      %c0_260 = arith.constant 0 : index
      %c0_261 = arith.constant 0 : index
      %c0_262 = arith.constant 0 : index
      %210 = vector.load %arg8[%c0_259, %c0_260, %c0_261, %c0_262] : memref<2x16x16x4xf32, #tpu.memory_space<vmem>>, vector<2x16x16x4xf32>
      tpu.vector_store %arg8[%c0_259, %c0_260, %c0_261, %c0_262], %209 {strides = array<i32>} : memref<2x16x16x4xf32, #tpu.memory_space<vmem>>, vector<2x16x16x4xf32>,
    } else {
    }
    return
  }
  func.func @transform_0(%arg0: i32) -> (i32, i32, i32, i32) {
    %c0_i32 = arith.constant 0 : i32
    %c0_i32_0 = arith.constant 0 : i32
    %c0_i32_1 = arith.constant 0 : i32
    %c0_i32_2 = arith.constant 0 : i32
    return %arg0, %c0_i32, %c0_i32_0, %c0_i32_1 : i32, i32, i32, i32
  }
  func.func @transform_1(%arg0: i32) -> (i32, i32) {
    %c0_i32 = arith.constant 0 : i32
    %c0_i32_0 = arith.constant 0 : i32
    %c0_i32_1 = arith.constant 0 : i32
    return %c0_i32, %c0_i32_0 : i32, i32
  }
  func.func @transform_2(%arg0: i32) -> (i32, i32) {
    %c0_i32 = arith.constant 0 : i32
    %c0_i32_0 = arith.constant 0 : i32
    %c0_i32_1 = arith.constant 0 : i32
    return %c0_i32, %c0_i32_0 : i32, i32
  }
  func.func @transform_3(%arg0: i32) -> (i32, i32) {
    %c0_i32 = arith.constant 0 : i32
    %c0_i32_0 = arith.constant 0 : i32
    %c0_i32_1 = arith.constant 0 : i32
    return %c0_i32, %c0_i32_0 : i32, i32
  }
  func.func @transform_4(%arg0: i32) -> (i32, i32) {
    %c0_i32 = arith.constant 0 : i32
    %c0_i32_0 = arith.constant 0 : i32
    %c0_i32_1 = arith.constant 0 : i32
    return %c0_i32, %c0_i32_0 : i32, i32
  }
  func.func @transform_5(%arg0: i32) -> (i32, i32) {
    %c0_i32 = arith.constant 0 : i32
    %c0_i32_0 = arith.constant 0 : i32
    %c0_i32_1 = arith.constant 0 : i32
    return %c0_i32, %c0_i32_0 : i32, i32
  }
  func.func @transform_6(%arg0: i32) -> (i32, i32) {
    %c0_i32 = arith.constant 0 : i32
    %c0_i32_0 = arith.constant 0 : i32
    %c0_i32_1 = arith.constant 0 : i32
    return %c0_i32, %c0_i32_0 : i32, i32
  }
  func.func @transform_7(%arg0: i32) -> (i32, i32, i32, i32) {
    %c0_i32 = arith.constant 0 : i32
    %c0_i32_0 = arith.constant 0 : i32
    %c0_i32_1 = arith.constant 0 : i32
    %c0_i32_2 = arith.constant 0 : i32
    %c0_i32_3 = arith.constant 0 : i32
    return %c0_i32, %c0_i32_0, %c0_i32_1, %c0_i32_2 : i32, i32, i32, i32
  }
}

</mosaic_0001>

<llo_original>
// kernel: baseblock_forward.1
$region0: #{baseblock_forward.1}
  #allocation0 [shape = 'u32[]', space=smem, size = 0x4, offset = 0x4, fixed_abs, tag = 'smem constant byte address 0x4 - core index']
  #allocation1 [shape = 'u32[72,128]{1,0:T(1,128)}', space=vmem, size = 0x9000, scoped, tag = 'internal scratch']
  #allocation2 [shape = 'f32[1,18,18,4]{3,2,1,0:T(8,128)}', space=vmem, size = 0x36000, scoped, tag = 'scratch operand']
  #allocation3 [shape = 'bf16[16,16,36]{2,1,0:T(8,128)(2,1)}', space=vmem, size = 0x10000, scoped, tag = 'scratch operand']
  #allocation4 [shape = 'f32[2,16,16,4]{3,2,1,0:T(8,128)}', space=vmem, size = 0x40000, scoped, tag = 'scratch operand']
  #allocation5 [shape = 'f32[2,16,16,4]{3,2,1,0:T(8,128)}', space=vmem, size = 0x40000, scoped, tag = 'scratch operand']
  #allocation6 [shape = 'f32[1,18,18,4]{3,2,1,0:T(8,128)}', space=vmem, size = 0x36000, scoped, tag = 'scratch operand']
  #allocation7 [shape = 'bf16[16,16,36]{2,1,0:T(8,128)(2,1)}', space=vmem, size = 0x10000, scoped, tag = 'scratch operand']
  %s0 = inlined_call_operand.vmem [shape: f32[2,16,16,4], index: 0, kind: input, shape index: {}]
  %s1 = inlined_call_operand.vmem [shape: bf16[36,4], index: 1, kind: input, shape index: {}]
  %s2 = inlined_call_operand.vmem [shape: f32[1,4], index: 2, kind: input, shape index: {}]
  %s3 = inlined_call_operand.vmem [shape: f32[1,4], index: 3, kind: input, shape index: {}]
  %s4 = inlined_call_operand.vmem [shape: bf16[36,4], index: 4, kind: input, shape index: {}]
  %s5 = inlined_call_operand.vmem [shape: f32[1,4], index: 5, kind: input, shape index: {}]
  %s6 = inlined_call_operand.vmem [shape: f32[1,4], index: 6, kind: input, shape index: {}]
  %s7 = inlined_call_operand.vmem [shape: f32[2,16,16,4], index: 7, kind: output, shape index: {}]
  %s8 = sld [smem:[#allocation0]]
  $region69: #{baseblock_forward.1} parent=0
    _
  %s10 = ssub.s32 1, %s8
  %s11 = scalar_select 0, %s10, %s8
  loop: start=0, step=1, limit=4
  $region2: #{baseblock_forward.1} parent=0 // loop_pre_header
    _
  $region3: #{baseblock_forward.1} parent=0 // loop_header
    %s13 = sphi 0, %s17
    %p14 = scmp.ge.s32.totalorder %s13, 4
    %s23 = sphi 0, %s25
    %s26 = sphi 0, %s23
    %s27 = sphi 0, %s26
    %s43 = sphi 0, %s27
    %s47 = sphi 0, %s47
    %s49 = sphi 0, %s47
    %s50 = sphi 0, %s49
    %s64 = sphi 0, %s50
    %s68 = sphi 0, %s68
    %s70 = sphi 0, %s68
    %s71 = sphi 0, %s70
    %s85 = sphi 0, %s71
    %s89 = sphi 0, %s89
    %s91 = sphi 0, %s89
    %s92 = sphi 0, %s91
    %s106 = sphi 0, %s92
    %s110 = sphi 0, %s110
    %s112 = sphi 0, %s110
    %s113 = sphi 0, %s112
    %s127 = sphi 0, %s113
    %s131 = sphi 0, %s131
    %s133 = sphi 0, %s131
    %s134 = sphi 0, %s133
    %s148 = sphi 0, %s134
    %s152 = sphi 0, %s152
    %s154 = sphi 0, %s152
    %s155 = sphi 0, %s154
    %s169 = sphi 0, %s155
    %s173 = sphi 0, %s173
    %s175 = sphi 0, %s173
    %s176 = sphi 0, %s175
    %s190 = sphi 0, %s176
  $region4: #{baseblock_forward.1} parent=0 // loop_header_branch
    %16 = sbr.rel (%p14) target = $region8
  $region5: #{baseblock_forward.1} parent=0 // loop_body
    %s18 = ssub.s32 %s13, 1
    %s19 = ssub.s32 %s13, 2
    %s20 = sadd.s32 %s13, 1
    %s21 = ssub.s32 %s13, %s20
    %p22 = scmp.eq.s32.totalorder %s21, 0
    %s24 = sadd.s32 %s23, 1
    %s25 = scalar_select %p22, %s23, %s24
    %p28 = pneg %p22
    %p29 = scmp.eq.s32.totalorder %s13, 1
    %p30 = por %p28, %p29
    %p31 = scmp.ne.s32.totalorder %s23, %s26
    %p32 = scmp.eq.s32.totalorder %s13, 0
    %p33 = por %p31, %p32
    %p34 = scmp.ne.s32.totalorder %s23, %s26
    %p35 = scmp.eq.s32.totalorder %s18, 1
    %p36 = por %p34, %p35
    %p37 = scmp.ne.s32.totalorder %s26, %s27
    %p38 = scmp.eq.s32.totalorder %s18, 0
    %p39 = por %p37, %p38
    %p40 = scmp.ne.s32.totalorder %s26, %s27
    %p41 = scmp.eq.s32.totalorder %s19, 1
    %p42 = por %p40, %p41
    %p44 = scmp.ne.s32.totalorder %s27, %s43
    %p45 = scmp.eq.s32.totalorder %s19, 0
    %p46 = por %p44, %p45
    %s48 = sadd.s32 %s47, 1
    %p51 = scmp.eq.s32.totalorder %s13, 1
    %p52 = scmp.ne.s32.totalorder %s47, %s49
    %p53 = scmp.eq.s32.totalorder %s13, 0
    %p54 = por %p52, %p53
    %p55 = scmp.ne.s32.totalorder %s47, %s49
    %p56 = scmp.eq.s32.totalorder %s18, 1
    %p57 = por %p55, %p56
    %p58 = scmp.ne.s32.totalorder %s49, %s50
    %p59 = scmp.eq.s32.totalorder %s18, 0
    %p60 = por %p58, %p59
    %p61 = scmp.ne.s32.totalorder %s49, %s50
    %p62 = scmp.eq.s32.totalorder %s19, 1
    %p63 = por %p61, %p62
    %p65 = scmp.ne.s32.totalorder %s50, %s64
    %p66 = scmp.eq.s32.totalorder %s19, 0
    %p67 = por %p65, %p66
    %s69 = sadd.s32 %s68, 1
    %p72 = scmp.eq.s32.totalorder %s13, 1
    %p73 = scmp.ne.s32.totalorder %s68, %s70
    %p74 = scmp.eq.s32.totalorder %s13, 0
    %p75 = por %p73, %p74
    %p76 = scmp.ne.s32.totalorder %s68, %s70
    %p77 = scmp.eq.s32.totalorder %s18, 1
    %p78 = por %p76, %p77
    %p79 = scmp.ne.s32.totalorder %s70, %s71
    %p80 = scmp.eq.s32.totalorder %s18, 0
    %p81 = por %p79, %p80
    %p82 = scmp.ne.s32.totalorder %s70, %s71
    %p83 = scmp.eq.s32.totalorder %s19, 1
    %p84 = por %p82, %p83
    %p86 = scmp.ne.s32.totalorder %s71, %s85
    %p87 = scmp.eq.s32.totalorder %s19, 0
    %p88 = por %p86, %p87
    %s90 = sadd.s32 %s89, 1
    %p93 = scmp.eq.s32.totalorder %s13, 1
    %p94 = scmp.ne.s32.totalorder %s89, %s91
    %p95 = scmp.eq.s32.totalorder %s13, 0
    %p96 = por %p94, %p95
    %p97 = scmp.ne.s32.totalorder %s89, %s91
    %p98 = scmp.eq.s32.totalorder %s18, 1
    %p99 = por %p97, %p98
    %p100 = scmp.ne.s32.totalorder %s91, %s92
    %p101 = scmp.eq.s32.totalorder %s18, 0
    %p102 = por %p100, %p101
    %p103 = scmp.ne.s32.totalorder %s91, %s92
    %p104 = scmp.eq.s32.totalorder %s19, 1
    %p105 = por %p103, %p104
    %p107 = scmp.ne.s32.totalorder %s92, %s106
    %p108 = scmp.eq.s32.totalorder %s19, 0
    %p109 = por %p107, %p108
    %s111 = sadd.s32 %s110, 1
    %p114 = scmp.eq.s32.totalorder %s13, 1
    %p115 = scmp.ne.s32.totalorder %s110, %s112
    %p116 = scmp.eq.s32.totalorder %s13, 0
    %p117 = por %p115, %p116
    %p118 = scmp.ne.s32.totalorder %s110, %s112
    %p119 = scmp.eq.s32.totalorder %s18, 1
    %p120 = por %p118, %p119
    %p121 = scmp.ne.s32.totalorder %s112, %s113
    %p122 = scmp.eq.s32.totalorder %s18, 0
    %p123 = por %p121, %p122
    %p124 = scmp.ne.s32.totalorder %s112, %s113
    %p125 = scmp.eq.s32.totalorder %s19, 1
    %p126 = por %p124, %p125
    %p128 = scmp.ne.s32.totalorder %s113, %s127
    %p129 = scmp.eq.s32.totalorder %s19, 0
    %p130 = por %p128, %p129
    %s132 = sadd.s32 %s131, 1
    %p135 = scmp.eq.s32.totalorder %s13, 1
    %p136 = scmp.ne.s32.totalorder %s131, %s133
    %p137 = scmp.eq.s32.totalorder %s13, 0
    %p138 = por %p136, %p137
    %p139 = scmp.ne.s32.totalorder %s131, %s133
    %p140 = scmp.eq.s32.totalorder %s18, 1
    %p141 = por %p139, %p140
    %p142 = scmp.ne.s32.totalorder %s133, %s134
    %p143 = scmp.eq.s32.totalorder %s18, 0
    %p144 = por %p142, %p143
    %p145 = scmp.ne.s32.totalorder %s133, %s134
    %p146 = scmp.eq.s32.totalorder %s19, 1
    %p147 = por %p145, %p146
    %p149 = scmp.ne.s32.totalorder %s134, %s148
    %p150 = scmp.eq.s32.totalorder %s19, 0
    %p151 = por %p149, %p150
    %s153 = sadd.s32 %s152, 1
    %p156 = scmp.eq.s32.totalorder %s13, 1
    %p157 = scmp.ne.s32.totalorder %s152, %s154
    %p158 = scmp.eq.s32.totalorder %s13, 0
    %p159 = por %p157, %p158
    %p160 = scmp.ne.s32.totalorder %s152, %s154
    %p161 = scmp.eq.s32.totalorder %s18, 1
    %p162 = por %p160, %p161
    %p163 = scmp.ne.s32.totalorder %s154, %s155
    %p164 = scmp.eq.s32.totalorder %s18, 0
    %p165 = por %p163, %p164
    %p166 = scmp.ne.s32.totalorder %s154, %s155
    %p167 = scmp.eq.s32.totalorder %s19, 1
    %p168 = por %p166, %p167
    %p170 = scmp.ne.s32.totalorder %s155, %s169
    %p171 = scmp.eq.s32.totalorder %s19, 0
    %p172 = por %p170, %p171
    %s174 = sadd.s32 %s173, 1
    %p177 = scmp.eq.s32.totalorder %s13, 1
    %p178 = scmp.ne.s32.totalorder %s173, %s175
    %p179 = scmp.eq.s32.totalorder %s13, 0
    %p180 = por %p178, %p179
    %p181 = scmp.ne.s32.totalorder %s173, %s175
    %p182 = scmp.eq.s32.totalorder %s18, 1
    %p183 = por %p181, %p182
    %p184 = scmp.ne.s32.totalorder %s175, %s176
    %p185 = scmp.eq.s32.totalorder %s18, 0
    %p186 = por %p184, %p185
    %p187 = scmp.ne.s32.totalorder %s175, %s176
    %p188 = scmp.eq.s32.totalorder %s19, 1
    %p189 = por %p187, %p188
    %p191 = scmp.ne.s32.totalorder %s176, %s190
    %p192 = scmp.eq.s32.totalorder %s19, 0
    %p193 = por %p191, %p192
    %p194 = scmp.le.s32.totalorder 1, %s13
    %p195 = scmp.lt.s32.totalorder %s13, 3
    %p196 = pnand %p194, %p195
    %p197 = pneg %p196
    // Predicated region
    $region9: #{baseblock_forward.1} parent=5 // pred_check
      _
    $region10: #{baseblock_forward.1} parent=5 // pred_check_branch
      %199 = sbr.rel (%p196) target = $region12
    $region11: #{baseblock_forward.1} parent=5 // pred_region
      %s200 = ssub.s32 %s13, 1
      // Predicated region
      $region13: #{baseblock_forward.1} parent=11 // pred_check
        %p201 = pneg %p60
      $region14: #{baseblock_forward.1} parent=11 // pred_check_branch
        %203 = sbr.rel (%p201) target = $region16
      $region15: #{baseblock_forward.1} parent=11 // pred_region
        _
      $region16: #{baseblock_forward.1} parent=11 // pred_fallthru
        _
      // Predicated region
      $region17: #{baseblock_forward.1} parent=11 // pred_check
        %p204 = pneg %p81
      $region18: #{baseblock_forward.1} parent=11 // pred_check_branch
        %206 = sbr.rel (%p204) target = $region20
      $region19: #{baseblock_forward.1} parent=11 // pred_region
        _
      $region20: #{baseblock_forward.1} parent=11 // pred_fallthru
        _
      // Predicated region
      $region21: #{baseblock_forward.1} parent=11 // pred_check
        %p207 = pneg %p102
      $region22: #{baseblock_forward.1} parent=11 // pred_check_branch
        %209 = sbr.rel (%p207) target = $region24
      $region23: #{baseblock_forward.1} parent=11 // pred_region
        _
      $region24: #{baseblock_forward.1} parent=11 // pred_fallthru
        _
      // Predicated region
      $region25: #{baseblock_forward.1} parent=11 // pred_check
        %p210 = pneg %p123
      $region26: #{baseblock_forward.1} parent=11 // pred_check_branch
        %212 = sbr.rel (%p210) target = $region28
      $region27: #{baseblock_forward.1} parent=11 // pred_region
        _
      $region28: #{baseblock_forward.1} parent=11 // pred_fallthru
        _
      // Predicated region
      $region29: #{baseblock_forward.1} parent=11 // pred_check
        %p213 = pneg %p144
      $region30: #{baseblock_forward.1} parent=11 // pred_check_branch
        %215 = sbr.rel (%p213) target = $region32
      $region31: #{baseblock_forward.1} parent=11 // pred_region
        _
      $region32: #{baseblock_forward.1} parent=11 // pred_fallthru
        _
      // Predicated region
      $region33: #{baseblock_forward.1} parent=11 // pred_check
        %p216 = pneg %p165
      $region34: #{baseblock_forward.1} parent=11 // pred_check_branch
        %218 = sbr.rel (%p216) target = $region36
      $region35: #{baseblock_forward.1} parent=11 // pred_region
        _
      $region36: #{baseblock_forward.1} parent=11 // pred_fallthru
        _
    $region12: #{baseblock_forward.1} parent=5 // pred_fallthru
      _
    %p219 = scmp.lt.s32.totalorder %s13, 2
    // Predicated region
    $region37: #{baseblock_forward.1} parent=5 // pred_check
      %p220 = pneg %p219
    $region38: #{baseblock_forward.1} parent=5 // pred_check_branch
      %222 = sbr.rel (%p220) target = $region40
    $region39: #{baseblock_forward.1} parent=5 // pred_region
      // Predicated region
      $region41: #{baseblock_forward.1} parent=39 // pred_check
        %p223 = pneg %p33
      $region42: #{baseblock_forward.1} parent=39 // pred_check_branch
        %225 = sbr.rel (%p223) target = $region44
      $region43: #{baseblock_forward.1} parent=39 // pred_region
        %p226 = scmp.lt.s32.totalorder %s13, 1
        %s227 = scalar_select %p226, %s13, 1
        %s228 = smul.addr %s227, 32
        %s229 = smul.addr %s228, 8
        %s230 = scalar_lea.vmem %s0, %s229
      $region44: #{baseblock_forward.1} parent=39 // pred_fallthru
        _
    $region40: #{baseblock_forward.1} parent=5 // pred_fallthru
      _
    %p231 = scmp.le.s32.totalorder 1, %s13
    %p232 = scmp.lt.s32.totalorder %s13, 3
    %p233 = pnand %p231, %p232
    %p234 = pneg %p233
    // Predicated region
    $region45: #{baseblock_forward.1} parent=5 // pred_check
      _
    $region46: #{baseblock_forward.1} parent=5 // pred_check_branch
      %236 = sbr.rel (%p233) target = $region48
    $region47: #{baseblock_forward.1} parent=5 // pred_region
      %s237 = ssub.s32 %s13, 1
      %p238 = scmp.lt.s32.totalorder %s18, 1
      %s239 = scalar_select %p238, %s18, 1
      %s240 = smul.addr %s239, 32
      %s241 = smul.addr %s240, 8
      %s242 = scalar_lea.vmem %s0, %s241
      %p243 = pneg %p39
      %p244 = pneg %p36
      %p245 = pneg %p60
      %p246 = pneg %p57
      %p247 = pneg %p81
      %p248 = pneg %p78
      %p249 = pneg %p102
      %p250 = pneg %p99
      %p251 = pneg %p123
      %p252 = pneg %p120
      %p253 = pneg %p144
      %p254 = pneg %p141
      %p255 = pneg %p165
      %p256 = pneg %p162
      %p257 = pneg %p186
      %p258 = pneg %p183
      %p259 = scmp.lt.s32.totalorder %s18, 1
      %s260 = scalar_select %p259, %s18, 1
      %s261 = smul.addr %s260, 32
      %s262 = smul.addr %s261, 8
      %s263 = scalar_lea.vmem %s0, %s262
      %p265 = scmp.eq.s32.totalorder %s18, 0
      // Predicated region
      $region49: #{baseblock_forward.1} parent=47 // pred_check
        %p266 = pneg %p265
      $region50: #{baseblock_forward.1} parent=47 // pred_check_branch
        %268 = sbr.rel (%p266) target = $region52
      $region51: #{baseblock_forward.1} parent=47 // pred_region
        %vm269 = vcmask 31744
        %270 = vst.msk [vmem:[#allocation2] sm:$0xff] %vm269, 0.0
        %271 = vst.msk [vmem:[#allocation2 + $0x8] sm:$0xff] %vm269, 0.0
        %vm272 = vcmask 25600
        %273 = vst.msk [vmem:[#allocation2 + $0x10] sm:$0x3] %vm272, 0.0
        %274 = vst.msk [vmem:[#allocation2 + $0x18] sm:$0xff] %vm269, 0.0
        %275 = vst.msk [vmem:[#allocation2 + $0x20] sm:$0xff] %vm269, 0.0
        %276 = vst.msk [vmem:[#allocation2 + $0x28] sm:$0x3] %vm272, 0.0
        %277 = vst.msk [vmem:[#allocation2 + $0x30] sm:$0xff] %vm269, 0.0
        %278 = vst.msk [vmem:[#allocation2 + $0x38] sm:$0xff] %vm269, 0.0
        %279 = vst.msk [vmem:[#allocation2 + $0x40] sm:$0x3] %vm272, 0.0
        %280 = vst.msk [vmem:[#allocation2 + $0x48] sm:$0xff] %vm269, 0.0
        %281 = vst.msk [vmem:[#allocation2 + $0x50] sm:$0xff] %vm269, 0.0
        %282 = vst.msk [vmem:[#allocation2 + $0x58] sm:$0x3] %vm272, 0.0
        %283 = vst.msk [vmem:[#allocation2 + $0x60] sm:$0xff] %vm269, 0.0
        %284 = vst.msk [vmem:[#allocation2 + $0x68] sm:$0xff] %vm269, 0.0
        %285 = vst.msk [vmem:[#allocation2 + $0x70] sm:$0x3] %vm272, 0.0
        %286 = vst.msk [vmem:[#allocation2 + $0x78] sm:$0xff] %vm269, 0.0
        %287 = vst.msk [vmem:[#allocation2 + $0x80] sm:$0xff] %vm269, 0.0
        %288 = vst.msk [vmem:[#allocation2 + $0x88] sm:$0x3] %vm272, 0.0
        %289 = vst.msk [vmem:[#allocation2 + $0x90] sm:$0xff] %vm269, 0.0
        %290 = vst.msk [vmem:[#allocation2 + $0x98] sm:$0xff] %vm269, 0.0
        %291 = vst.msk [vmem:[#allocation2 + $0xa0] sm:$0x3] %vm272, 0.0
        %292 = vst.msk [vmem:[#allocation2 + $0xa8] sm:$0xff] %vm269, 0.0
        %293 = vst.msk [vmem:[#allocation2 + $0xb0] sm:$0xff] %vm269, 0.0
        %294 = vst.msk [vmem:[#allocation2 + $0xb8] sm:$0x3] %vm272, 0.0
        %295 = vst.msk [vmem:[#allocation2 + $0xc0] sm:$0xff] %vm269, 0.0
        %296 = vst.msk [vmem:[#allocation2 + $0xc8] sm:$0xff] %vm269, 0.0
        %297 = vst.msk [vmem:[#allocation2 + $0xd0] sm:$0x3] %vm272, 0.0
        %298 = vst.msk [vmem:[#allocation2 + $0xd8] sm:$0xff] %vm269, 0.0
        %299 = vst.msk [vmem:[#allocation2 + $0xe0] sm:$0xff] %vm269, 0.0
        %300 = vst.msk [vmem:[#allocation2 + $0xe8] sm:$0x3] %vm272, 0.0
        %301 = vst.msk [vmem:[#allocation2 + $0xf0] sm:$0xff] %vm269, 0.0
        %302 = vst.msk [vmem:[#allocation2 + $0xf8] sm:$0xff] %vm269, 0.0
        %303 = vst.msk [vmem:[#allocation2 + $0x100] sm:$0x3] %vm272, 0.0
        %304 = vst.msk [vmem:[#allocation2 + $0x108] sm:$0xff] %vm269, 0.0
        %305 = vst.msk [vmem:[#allocation2 + $0x110] sm:$0xff] %vm269, 0.0
        %306 = vst.msk [vmem:[#allocation2 + $0x118] sm:$0x3] %vm272, 0.0
        %307 = vst.msk [vmem:[#allocation2 + $0x120] sm:$0xff] %vm269, 0.0
        %308 = vst.msk [vmem:[#allocation2 + $0x128] sm:$0xff] %vm269, 0.0
        %309 = vst.msk [vmem:[#allocation2 + $0x130] sm:$0x3] %vm272, 0.0
        %310 = vst.msk [vmem:[#allocation2 + $0x138] sm:$0xff] %vm269, 0.0
        %311 = vst.msk [vmem:[#allocation2 + $0x140] sm:$0xff] %vm269, 0.0
        %312 = vst.msk [vmem:[#allocation2 + $0x148] sm:$0x3] %vm272, 0.0
        %313 = vst.msk [vmem:[#allocation2 + $0x150] sm:$0xff] %vm269, 0.0
        %314 = vst.msk [vmem:[#allocation2 + $0x158] sm:$0xff] %vm269, 0.0
        %315 = vst.msk [vmem:[#allocation2 + $0x160] sm:$0x3] %vm272, 0.0
        %316 = vst.msk [vmem:[#allocation2 + $0x168] sm:$0xff] %vm269, 0.0
        %317 = vst.msk [vmem:[#allocation2 + $0x170] sm:$0xff] %vm269, 0.0
        %318 = vst.msk [vmem:[#allocation2 + $0x178] sm:$0x3] %vm272, 0.0
        %319 = vst.msk [vmem:[#allocation2 + $0x180] sm:$0xff] %vm269, 0.0
        %320 = vst.msk [vmem:[#allocation2 + $0x188] sm:$0xff] %vm269, 0.0
        %321 = vst.msk [vmem:[#allocation2 + $0x190] sm:$0x3] %vm272, 0.0
        %322 = vst.msk [vmem:[#allocation2 + $0x198] sm:$0xff] %vm269, 0.0
        %323 = vst.msk [vmem:[#allocation2 + $0x1a0] sm:$0xff] %vm269, 0.0
        %324 = vst.msk [vmem:[#allocation2 + $0x1a8] sm:$0x3] %vm272, 0.0
        %325 = vst.msk [vmem:[#allocation6] sm:$0xff] %vm269, 0.0
        %326 = vst.msk [vmem:[#allocation6 + $0x8] sm:$0xff] %vm269, 0.0
        %327 = vst.msk [vmem:[#allocation6 + $0x10] sm:$0x3] %vm272, 0.0
        %328 = vst.msk [vmem:[#allocation6 + $0x18] sm:$0xff] %vm269, 0.0
        %329 = vst.msk [vmem:[#allocation6 + $0x20] sm:$0xff] %vm269, 0.0
        %330 = vst.msk [vmem:[#allocation6 + $0x28] sm:$0x3] %vm272, 0.0
        %331 = vst.msk [vmem:[#allocation6 + $0x30] sm:$0xff] %vm269, 0.0
        %332 = vst.msk [vmem:[#allocation6 + $0x38] sm:$0xff] %vm269, 0.0
        %333 = vst.msk [vmem:[#allocation6 + $0x40] sm:$0x3] %vm272, 0.0
        %334 = vst.msk [vmem:[#allocation6 + $0x48] sm:$0xff] %vm269, 0.0
        %335 = vst.msk [vmem:[#allocation6 + $0x50] sm:$0xff] %vm269, 0.0
        %336 = vst.msk [vmem:[#allocation6 + $0x58] sm:$0x3] %vm272, 0.0
        %337 = vst.msk [vmem:[#allocation6 + $0x60] sm:$0xff] %vm269, 0.0
        %338 = vst.msk [vmem:[#allocation6 + $0x68] sm:$0xff] %vm269, 0.0
        %339 = vst.msk [vmem:[#allocation6 + $0x70] sm:$0x3] %vm272, 0.0
        %340 = vst.msk [vmem:[#allocation6 + $0x78] sm:$0xff] %vm269, 0.0
        %341 = vst.msk [vmem:[#allocation6 + $0x80] sm:$0xff] %vm269, 0.0
        %342 = vst.msk [vmem:[#allocation6 + $0x88] sm:$0x3] %vm272, 0.0
        %343 = vst.msk [vmem:[#allocation6 + $0x90] sm:$0xff] %vm269, 0.0
        %344 = vst.msk [vmem:[#allocation6 + $0x98] sm:$0xff] %vm269, 0.0
        %345 = vst.msk [vmem:[#allocation6 + $0xa0] sm:$0x3] %vm272, 0.0
        %346 = vst.msk [vmem:[#allocation6 + $0xa8] sm:$0xff] %vm269, 0.0
        %347 = vst.msk [vmem:[#allocation6 + $0xb0] sm:$0xff] %vm269, 0.0
        %348 = vst.msk [vmem:[#allocation6 + $0xb8] sm:$0x3] %vm272, 0.0
        %349 = vst.msk [vmem:[#allocation6 + $0xc0] sm:$0xff] %vm269, 0.0
        %350 = vst.msk [vmem:[#allocation6 + $0xc8] sm:$0xff] %vm269, 0.0
        %351 = vst.msk [vmem:[#allocation6 + $0xd0] sm:$0x3] %vm272, 0.0
        %352 = vst.msk [vmem:[#allocation6 + $0xd8] sm:$0xff] %vm269, 0.0
        %353 = vst.msk [vmem:[#allocation6 + $0xe0] sm:$0xff] %vm269, 0.0
        %354 = vst.msk [vmem:[#allocation6 + $0xe8] sm:$0x3] %vm272, 0.0
        %355 = vst.msk [vmem:[#allocation6 + $0xf0] sm:$0xff] %vm269, 0.0
        %356 = vst.msk [vmem:[#allocation6 + $0xf8] sm:$0xff] %vm269, 0.0
        %357 = vst.msk [vmem:[#allocation6 + $0x100] sm:$0x3] %vm272, 0.0
        %358 = vst.msk [vmem:[#allocation6 + $0x108] sm:$0xff] %vm269, 0.0
        %359 = vst.msk [vmem:[#allocation6 + $0x110] sm:$0xff] %vm269, 0.0
        %360 = vst.msk [vmem:[#allocation6 + $0x118] sm:$0x3] %vm272, 0.0
        %361 = vst.msk [vmem:[#allocation6 + $0x120] sm:$0xff] %vm269, 0.0
        %362 = vst.msk [vmem:[#allocation6 + $0x128] sm:$0xff] %vm269, 0.0
        %363 = vst.msk [vmem:[#allocation6 + $0x130] sm:$0x3] %vm272, 0.0
        %364 = vst.msk [vmem:[#allocation6 + $0x138] sm:$0xff] %vm269, 0.0
        %365 = vst.msk [vmem:[#allocation6 + $0x140] sm:$0xff] %vm269, 0.0
        %366 = vst.msk [vmem:[#allocation6 + $0x148] sm:$0x3] %vm272, 0.0
        %367 = vst.msk [vmem:[#allocation6 + $0x150] sm:$0xff] %vm269, 0.0
        %368 = vst.msk [vmem:[#allocation6 + $0x158] sm:$0xff] %vm269, 0.0
        %369 = vst.msk [vmem:[#allocation6 + $0x160] sm:$0x3] %vm272, 0.0
        %370 = vst.msk [vmem:[#allocation6 + $0x168] sm:$0xff] %vm269, 0.0
        %371 = vst.msk [vmem:[#allocation6 + $0x170] sm:$0xff] %vm269, 0.0
        %372 = vst.msk [vmem:[#allocation6 + $0x178] sm:$0x3] %vm272, 0.0
        %373 = vst.msk [vmem:[#allocation6 + $0x180] sm:$0xff] %vm269, 0.0
        %374 = vst.msk [vmem:[#allocation6 + $0x188] sm:$0xff] %vm269, 0.0
        %375 = vst.msk [vmem:[#allocation6 + $0x190] sm:$0x3] %vm272, 0.0
        %376 = vst.msk [vmem:[#allocation6 + $0x198] sm:$0xff] %vm269, 0.0
        %377 = vst.msk [vmem:[#allocation6 + $0x1a0] sm:$0xff] %vm269, 0.0
        %378 = vst.msk [vmem:[#allocation6 + $0x1a8] sm:$0x3] %vm272, 0.0
      $region52: #{baseblock_forward.1} parent=47 // pred_fallthru
        _
      %v379 = vld [vmem:[%s263] sm:$0xff]
      %v380 = vld [vmem:[%s263 + $0x8] sm:$0xff]
      %v381 = vld [vmem:[%s263 + $0x10] sm:$0xff]
      %v382 = vld [vmem:[%s263 + $0x18] sm:$0xff]
      %v383 = vld [vmem:[%s263 + $0x20] sm:$0xff]
      %v384 = vld [vmem:[%s263 + $0x28] sm:$0xff]
      %v385 = vld [vmem:[%s263 + $0x30] sm:$0xff]
      %v386 = vld [vmem:[%s263 + $0x38] sm:$0xff]
      %v387 = vld [vmem:[%s263 + $0x40] sm:$0xff]
      %v388 = vld [vmem:[%s263 + $0x48] sm:$0xff]
      %v389 = vld [vmem:[%s263 + $0x50] sm:$0xff]
      %v390 = vld [vmem:[%s263 + $0x58] sm:$0xff]
      %v391 = vld [vmem:[%s263 + $0x60] sm:$0xff]
      %v392 = vld [vmem:[%s263 + $0x68] sm:$0xff]
      %v393 = vld [vmem:[%s263 + $0x70] sm:$0xff]
      %v394 = vld [vmem:[%s263 + $0x78] sm:$0xff]
      %v395 = vld [vmem:[%s263 + $0x80] sm:$0xff]
      %v396 = vld [vmem:[%s263 + $0x88] sm:$0xff]
      %v397 = vld [vmem:[%s263 + $0x90] sm:$0xff]
      %v398 = vld [vmem:[%s263 + $0x98] sm:$0xff]
      %v399 = vld [vmem:[%s263 + $0xa0] sm:$0xff]
      %v400 = vld [vmem:[%s263 + $0xa8] sm:$0xff]
      %v401 = vld [vmem:[%s263 + $0xb0] sm:$0xff]
      %v402 = vld [vmem:[%s263 + $0xb8] sm:$0xff]
      %v403 = vld [vmem:[%s263 + $0xc0] sm:$0xff]
      %v404 = vld [vmem:[%s263 + $0xc8] sm:$0xff]
      %v405 = vld [vmem:[%s263 + $0xd0] sm:$0xff]
      %v406 = vld [vmem:[%s263 + $0xd8] sm:$0xff]
      %v407 = vld [vmem:[%s263 + $0xe0] sm:$0xff]
      %v408 = vld [vmem:[%s263 + $0xe8] sm:$0xff]
      %v409 = vld [vmem:[%s263 + $0xf0] sm:$0xff]
      %v410 = vld [vmem:[%s263 + $0xf8] sm:$0xff]
      %s411 = smul.u32 %s18, 256
      %s412 = scalar_lea.vmem [#allocation5], %s411
      %vm413 = vcmask 31744
      %414 = vst.msk [vmem:[%s412] sm:$0xff] %vm413, %v379
      %415 = vst.msk [vmem:[%s412 + $0x8] sm:$0xff] %vm413, %v380
      %416 = vst.msk [vmem:[%s412 + $0x10] sm:$0xff] %vm413, %v381
      %417 = vst.msk [vmem:[%s412 + $0x18] sm:$0xff] %vm413, %v382
      %418 = vst.msk [vmem:[%s412 + $0x20] sm:$0xff] %vm413, %v383
      %419 = vst.msk [vmem:[%s412 + $0x28] sm:$0xff] %vm413, %v384
      %420 = vst.msk [vmem:[%s412 + $0x30] sm:$0xff] %vm413, %v385
      %421 = vst.msk [vmem:[%s412 + $0x38] sm:$0xff] %vm413, %v386
      %422 = vst.msk [vmem:[%s412 + $0x40] sm:$0xff] %vm413, %v387
      %423 = vst.msk [vmem:[%s412 + $0x48] sm:$0xff] %vm413, %v388
      %424 = vst.msk [vmem:[%s412 + $0x50] sm:$0xff] %vm413, %v389
      %425 = vst.msk [vmem:[%s412 + $0x58] sm:$0xff] %vm413, %v390
      %426 = vst.msk [vmem:[%s412 + $0x60] sm:$0xff] %vm413, %v391
      %427 = vst.msk [vmem:[%s412 + $0x68] sm:$0xff] %vm413, %v392
      %428 = vst.msk [vmem:[%s412 + $0x70] sm:$0xff] %vm413, %v393
      %429 = vst.msk [vmem:[%s412 + $0x78] sm:$0xff] %vm413, %v394
      %430 = vst.msk [vmem:[%s412 + $0x80] sm:$0xff] %vm413, %v395
      %431 = vst.msk [vmem:[%s412 + $0x88] sm:$0xff] %vm413, %v396
      %432 = vst.msk [vmem:[%s412 + $0x90] sm:$0xff] %vm413, %v397
      %433 = vst.msk [vmem:[%s412 + $0x98] sm:$0xff] %vm413, %v398
      %434 = vst.msk [vmem:[%s412 + $0xa0] sm:$0xff] %vm413, %v399
      %435 = vst.msk [vmem:[%s412 + $0xa8] sm:$0xff] %vm413, %v400
      %436 = vst.msk [vmem:[%s412 + $0xb0] sm:$0xff] %vm413, %v401
      %437 = vst.msk [vmem:[%s412 + $0xb8] sm:$0xff] %vm413, %v402
      %438 = vst.msk [vmem:[%s412 + $0xc0] sm:$0xff] %vm413, %v403
      %439 = vst.msk [vmem:[%s412 + $0xc8] sm:$0xff] %vm413, %v404
      %440 = vst.msk [vmem:[%s412 + $0xd0] sm:$0xff] %vm413, %v405
      %441 = vst.msk [vmem:[%s412 + $0xd8] sm:$0xff] %vm413, %v406
      %442 = vst.msk [vmem:[%s412 + $0xe0] sm:$0xff] %vm413, %v407
      %443 = vst.msk [vmem:[%s412 + $0xe8] sm:$0xff] %vm413, %v408
      %444 = vst.msk [vmem:[%s412 + $0xf0] sm:$0xff] %vm413, %v409
      %445 = vst.msk [vmem:[%s412 + $0xf8] sm:$0xff] %vm413, %v410
      %s446 = scalar_lea.vmem [#allocation2], 24
      %447 = vst.msk [vmem:[%s446 + $0x1] sm:$0xff] %vm413, %v379
      %448 = vst.msk [vmem:[%s446 + $0x9] sm:$0xff] %vm413, %v380
      %449 = vst.msk [vmem:[%s446 + $0x19] sm:$0xff] %vm413, %v381
      %450 = vst.msk [vmem:[%s446 + $0x21] sm:$0xff] %vm413, %v382
      %451 = vst.msk [vmem:[%s446 + $0x31] sm:$0xff] %vm413, %v383
      %452 = vst.msk [vmem:[%s446 + $0x39] sm:$0xff] %vm413, %v384
      %453 = vst.msk [vmem:[%s446 + $0x49] sm:$0xff] %vm413, %v385
      %454 = vst.msk [vmem:[%s446 + $0x51] sm:$0xff] %vm413, %v386
      %455 = vst.msk [vmem:[%s446 + $0x61] sm:$0xff] %vm413, %v387
      %456 = vst.msk [vmem:[%s446 + $0x69] sm:$0xff] %vm413, %v388
      %457 = vst.msk [vmem:[%s446 + $0x79] sm:$0xff] %vm413, %v389
      %458 = vst.msk [vmem:[%s446 + $0x81] sm:$0xff] %vm413, %v390
      %459 = vst.msk [vmem:[%s446 + $0x91] sm:$0xff] %vm413, %v391
      %460 = vst.msk [vmem:[%s446 + $0x99] sm:$0xff] %vm413, %v392
      %461 = vst.msk [vmem:[%s446 + $0xa9] sm:$0xff] %vm413, %v393
      %462 = vst.msk [vmem:[%s446 + $0xb1] sm:$0xff] %vm413, %v394
      %463 = vst.msk [vmem:[%s446 + $0xc1] sm:$0xff] %vm413, %v395
      %464 = vst.msk [vmem:[%s446 + $0xc9] sm:$0xff] %vm413, %v396
      %465 = vst.msk [vmem:[%s446 + $0xd9] sm:$0xff] %vm413, %v397
      %466 = vst.msk [vmem:[%s446 + $0xe1] sm:$0xff] %vm413, %v398
      %467 = vst.msk [vmem:[%s446 + $0xf1] sm:$0xff] %vm413, %v399
      %468 = vst.msk [vmem:[%s446 + $0xf9] sm:$0xff] %vm413, %v400
      %469 = vst.msk [vmem:[%s446 + $0x109] sm:$0xff] %vm413, %v401
      %470 = vst.msk [vmem:[%s446 + $0x111] sm:$0xff] %vm413, %v402
      %471 = vst.msk [vmem:[%s446 + $0x121] sm:$0xff] %vm413, %v403
      %472 = vst.msk [vmem:[%s446 + $0x129] sm:$0xff] %vm413, %v404
      %473 = vst.msk [vmem:[%s446 + $0x139] sm:$0xff] %vm413, %v405
      %474 = vst.msk [vmem:[%s446 + $0x141] sm:$0xff] %vm413, %v406
      %475 = vst.msk [vmem:[%s446 + $0x151] sm:$0xff] %vm413, %v407
      %476 = vst.msk [vmem:[%s446 + $0x159] sm:$0xff] %vm413, %v408
      %477 = vst.msk [vmem:[%s446 + $0x169] sm:$0xff] %vm413, %v409
      %478 = vst.msk [vmem:[%s446 + $0x171] sm:$0xff] %vm413, %v410
      %v479 = vld [vmem:[#allocation2] sm:$0xff]
      %v480 = vld [vmem:[#allocation2 + $0x8] sm:$0xff]
      %v481 = vld [vmem:[#allocation2 + $0x18] sm:$0xff]
      %v482 = vld [vmem:[#allocation2 + $0x20] sm:$0xff]
      %v483 = vld [vmem:[#allocation2 + $0x30] sm:$0xff]
      %v484 = vld [vmem:[#allocation2 + $0x38] sm:$0xff]
      %v485 = vld [vmem:[#allocation2 + $0x48] sm:$0xff]
      %v486 = vld [vmem:[#allocation2 + $0x50] sm:$0xff]
      %v487 = vld [vmem:[#allocation2 + $0x60] sm:$0xff]
      %v488 = vld [vmem:[#allocation2 + $0x68] sm:$0xff]
      %v489 = vld [vmem:[#allocation2 + $0x78] sm:$0xff]
      %v490 = vld [vmem:[#allocation2 + $0x80] sm:$0xff]
      %v491 = vld [vmem:[#allocation2 + $0x90] sm:$0xff]
      %v492 = vld [vmem:[#allocation2 + $0x98] sm:$0xff]
      %v493 = vld [vmem:[#allocation2 + $0xa8] sm:$0xff]
      %v494 = vld [vmem:[#allocation2 + $0xb0] sm:$0xff]
      %v495 = vld [vmem:[#allocation2 + $0xc0] sm:$0xff]
      %v496 = vld [vmem:[#allocation2 + $0xc8] sm:$0xff]
      %v497 = vld [vmem:[#allocation2 + $0xd8] sm:$0xff]
      %v498 = vld [vmem:[#allocation2 + $0xe0] sm:$0xff]
      %v499 = vld [vmem:[#allocation2 + $0xf0] sm:$0xff]
      %v500 = vld [vmem:[#allocation2 + $0xf8] sm:$0xff]
      %v501 = vld [vmem:[#allocation2 + $0x108] sm:$0xff]
      %v502 = vld [vmem:[#allocation2 + $0x110] sm:$0xff]
      %v503 = vld [vmem:[#allocation2 + $0x120] sm:$0xff]
      %v504 = vld [vmem:[#allocation2 + $0x128] sm:$0xff]
      %v505 = vld [vmem:[#allocation2 + $0x138] sm:$0xff]
      %v506 = vld [vmem:[#allocation2 + $0x140] sm:$0xff]
      %v507 = vld [vmem:[#allocation2 + $0x150] sm:$0xff]
      %v508 = vld [vmem:[#allocation2 + $0x158] sm:$0xff]
      %v509 = vld [vmem:[#allocation2 + $0x168] sm:$0xff]
      %v510 = vld [vmem:[#allocation2 + $0x170] sm:$0xff]
      %v511 = vpack.c.bf16 %v479, %v479
      %v512 = vpack.c.bf16 %v480, %v480
      %v513 = vpack.c.bf16 %v481, %v481
      %v514 = vpack.c.bf16 %v482, %v482
      %v515 = vpack.c.bf16 %v483, %v483
      %v516 = vpack.c.bf16 %v484, %v484
      %v517 = vpack.c.bf16 %v485, %v485
      %v518 = vpack.c.bf16 %v486, %v486
      %v519 = vpack.c.bf16 %v487, %v487
      %v520 = vpack.c.bf16 %v488, %v488
      %v521 = vpack.c.bf16 %v489, %v489
      %v522 = vpack.c.bf16 %v490, %v490
      %v523 = vpack.c.bf16 %v491, %v491
      %v524 = vpack.c.bf16 %v492, %v492
      %v525 = vpack.c.bf16 %v493, %v493
      %v526 = vpack.c.bf16 %v494, %v494
      %v527 = vpack.c.bf16 %v495, %v495
      %v528 = vpack.c.bf16 %v496, %v496
      %v529 = vpack.c.bf16 %v497, %v497
      %v530 = vpack.c.bf16 %v498, %v498
      %v531 = vpack.c.bf16 %v499, %v499
      %v532 = vpack.c.bf16 %v500, %v500
      %v533 = vpack.c.bf16 %v501, %v501
      %v534 = vpack.c.bf16 %v502, %v502
      %v535 = vpack.c.bf16 %v503, %v503
      %v536 = vpack.c.bf16 %v504, %v504
      %v537 = vpack.c.bf16 %v505, %v505
      %v538 = vpack.c.bf16 %v506, %v506
      %v539 = vpack.c.bf16 %v507, %v507
      %v540 = vpack.c.bf16 %v508, %v508
      %v541 = vpack.c.bf16 %v509, %v509
      %v542 = vpack.c.bf16 %v510, %v510
      %vm543 = vcmask 27648
      %544 = vst.msk [vmem:[#allocation3] sm:$0xf] %vm543, %v511
      %545 = vst.msk [vmem:[#allocation3 + $0x4] sm:$0xf] %vm543, %v512
      %546 = vst.msk [vmem:[#allocation3 + $0x8] sm:$0xf] %vm543, %v513
      %547 = vst.msk [vmem:[#allocation3 + $0xc] sm:$0xf] %vm543, %v514
      %548 = vst.msk [vmem:[#allocation3 + $0x10] sm:$0xf] %vm543, %v515
      %549 = vst.msk [vmem:[#allocation3 + $0x14] sm:$0xf] %vm543, %v516
      %550 = vst.msk [vmem:[#allocation3 + $0x18] sm:$0xf] %vm543, %v517
      %551 = vst.msk [vmem:[#allocation3 + $0x1c] sm:$0xf] %vm543, %v518
      %552 = vst.msk [vmem:[#allocation3 + $0x20] sm:$0xf] %vm543, %v519
      %553 = vst.msk [vmem:[#allocation3 + $0x24] sm:$0xf] %vm543, %v520
      %554 = vst.msk [vmem:[#allocation3 + $0x28] sm:$0xf] %vm543, %v521
      %555 = vst.msk [vmem:[#allocation3 + $0x2c] sm:$0xf] %vm543, %v522
      %556 = vst.msk [vmem:[#allocation3 + $0x30] sm:$0xf] %vm543, %v523
      %557 = vst.msk [vmem:[#allocation3 + $0x34] sm:$0xf] %vm543, %v524
      %558 = vst.msk [vmem:[#allocation3 + $0x38] sm:$0xf] %vm543, %v525
      %559 = vst.msk [vmem:[#allocation3 + $0x3c] sm:$0xf] %vm543, %v526
      %560 = vst.msk [vmem:[#allocation3 + $0x40] sm:$0xf] %vm543, %v527
      %561 = vst.msk [vmem:[#allocation3 + $0x44] sm:$0xf] %vm543, %v528
      %562 = vst.msk [vmem:[#allocation3 + $0x48] sm:$0xf] %vm543, %v529
      %563 = vst.msk [vmem:[#allocation3 + $0x4c] sm:$0xf] %vm543, %v530
      %564 = vst.msk [vmem:[#allocation3 + $0x50] sm:$0xf] %vm543, %v531
      %565 = vst.msk [vmem:[#allocation3 + $0x54] sm:$0xf] %vm543, %v532
      %566 = vst.msk [vmem:[#allocation3 + $0x58] sm:$0xf] %vm543, %v533
      %567 = vst.msk [vmem:[#allocation3 + $0x5c] sm:$0xf] %vm543, %v534
      %568 = vst.msk [vmem:[#allocation3 + $0x60] sm:$0xf] %vm543, %v535
      %569 = vst.msk [vmem:[#allocation3 + $0x64] sm:$0xf] %vm543, %v536
      %570 = vst.msk [vmem:[#allocation3 + $0x68] sm:$0xf] %vm543, %v537
      %571 = vst.msk [vmem:[#allocation3 + $0x6c] sm:$0xf] %vm543, %v538
      %572 = vst.msk [vmem:[#allocation3 + $0x70] sm:$0xf] %vm543, %v539
      %573 = vst.msk [vmem:[#allocation3 + $0x74] sm:$0xf] %vm543, %v540
      %574 = vst.msk [vmem:[#allocation3 + $0x78] sm:$0xf] %vm543, %v541
      %575 = vst.msk [vmem:[#allocation3 + $0x7c] sm:$0xf] %vm543, %v542
      %v576 = vld [vmem:[#allocation2 + $0x1] sm:$0xff]
      %v577 = vld [vmem:[#allocation2 + $0x9] sm:$0xff]
      %v578 = vld [vmem:[#allocation2 + $0x19] sm:$0xff]
      %v579 = vld [vmem:[#allocation2 + $0x21] sm:$0xff]
      %v580 = vld [vmem:[#allocation2 + $0x31] sm:$0xff]
      %v581 = vld [vmem:[#allocation2 + $0x39] sm:$0xff]
      %v582 = vld [vmem:[#allocation2 + $0x49] sm:$0xff]
      %v583 = vld [vmem:[#allocation2 + $0x51] sm:$0xff]
      %v584 = vld [vmem:[#allocation2 + $0x61] sm:$0xff]
      %v585 = vld [vmem:[#allocation2 + $0x69] sm:$0xff]
      %v586 = vld [vmem:[#allocation2 + $0x79] sm:$0xff]
      %v587 = vld [vmem:[#allocation2 + $0x81] sm:$0xff]
      %v588 = vld [vmem:[#allocation2 + $0x91] sm:$0xff]
      %v589 = vld [vmem:[#allocation2 + $0x99] sm:$0xff]
      %v590 = vld [vmem:[#allocation2 + $0xa9] sm:$0xff]
      %v591 = vld [vmem:[#allocation2 + $0xb1] sm:$0xff]
      %v592 = vld [vmem:[#allocation2 + $0xc1] sm:$0xff]
      %v593 = vld [vmem:[#allocation2 + $0xc9] sm:$0xff]
      %v594 = vld [vmem:[#allocation2 + $0xd9] sm:$0xff]
      %v595 = vld [vmem:[#allocation2 + $0xe1] sm:$0xff]
      %v596 = vld [vmem:[#allocation2 + $0xf1] sm:$0xff]
      %v597 = vld [vmem:[#allocation2 + $0xf9] sm:$0xff]
      %v598 = vld [vmem:[#allocation2 + $0x109] sm:$0xff]
      %v599 = vld [vmem:[#allocation2 + $0x111] sm:$0xff]
      %v600 = vld [vmem:[#allocation2 + $0x121] sm:$0xff]
      %v601 = vld [vmem:[#allocation2 + $0x129] sm:$0xff]
      %v602 = vld [vmem:[#allocation2 + $0x139] sm:$0xff]
      %v603 = vld [vmem:[#allocation2 + $0x141] sm:$0xff]
      %v604 = vld [vmem:[#allocation2 + $0x151] sm:$0xff]
      %v605 = vld [vmem:[#allocation2 + $0x159] sm:$0xff]
      %v606 = vld [vmem:[#allocation2 + $0x169] sm:$0xff]
      %v607 = vld [vmem:[#allocation2 + $0x171] sm:$0xff]
      %v608 = vpack.c.bf16 %v576, %v576
      %v609 = vpack.c.bf16 %v577, %v577
      %v610 = vpack.c.bf16 %v578, %v578
      %v611 = vpack.c.bf16 %v579, %v579
      %v612 = vpack.c.bf16 %v580, %v580
      %v613 = vpack.c.bf16 %v581, %v581
      %v614 = vpack.c.bf16 %v582, %v582
      %v615 = vpack.c.bf16 %v583, %v583
      %v616 = vpack.c.bf16 %v584, %v584
      %v617 = vpack.c.bf16 %v585, %v585
      %v618 = vpack.c.bf16 %v586, %v586
      %v619 = vpack.c.bf16 %v587, %v587
      %v620 = vpack.c.bf16 %v588, %v588
      %v621 = vpack.c.bf16 %v589, %v589
      %v622 = vpack.c.bf16 %v590, %v590
      %v623 = vpack.c.bf16 %v591, %v591
      %v624 = vpack.c.bf16 %v592, %v592
      %v625 = vpack.c.bf16 %v593, %v593
      %v626 = vpack.c.bf16 %v594, %v594
      %v627 = vpack.c.bf16 %v595, %v595
      %v628 = vpack.c.bf16 %v596, %v596
      %v629 = vpack.c.bf16 %v597, %v597
      %v630 = vpack.c.bf16 %v598, %v598
      %v631 = vpack.c.bf16 %v599, %v599
      %v632 = vpack.c.bf16 %v600, %v600
      %v633 = vpack.c.bf16 %v601, %v601
      %v634 = vpack.c.bf16 %v602, %v602
      %v635 = vpack.c.bf16 %v603, %v603
      %v636 = vpack.c.bf16 %v604, %v604
      %v637 = vpack.c.bf16 %v605, %v605
      %v638 = vpack.c.bf16 %v606, %v606
      %v639 = vpack.c.bf16 %v607, %v607
      %672 = vrot.lane.b32.xlu0 %v608, 4
      %v673 = vpop.permute.xlu0 %672
      %674 = vrot.lane.b32.xlu0 %v609, 4
      %v675 = vpop.permute.xlu0 %674
      %676 = vrot.lane.b32.xlu0 %v610, 4
      %v677 = vpop.permute.xlu0 %676
      %678 = vrot.lane.b32.xlu0 %v611, 4
      %v679 = vpop.permute.xlu0 %678
      %680 = vrot.lane.b32.xlu0 %v612, 4
      %v681 = vpop.permute.xlu0 %680
      %682 = vrot.lane.b32.xlu0 %v613, 4
      %v683 = vpop.permute.xlu0 %682
      %684 = vrot.lane.b32.xlu0 %v614, 4
      %v685 = vpop.permute.xlu0 %684
      %686 = vrot.lane.b32.xlu0 %v615, 4
      %v687 = vpop.permute.xlu0 %686
      %688 = vrot.lane.b32.xlu0 %v616, 4
      %v689 = vpop.permute.xlu0 %688
      %690 = vrot.lane.b32.xlu0 %v617, 4
      %v691 = vpop.permute.xlu0 %690
      %692 = vrot.lane.b32.xlu0 %v618, 4
      %v693 = vpop.permute.xlu0 %692
      %694 = vrot.lane.b32.xlu0 %v619, 4
      %v695 = vpop.permute.xlu0 %694
      %696 = vrot.lane.b32.xlu0 %v620, 4
      %v697 = vpop.permute.xlu0 %696
      %698 = vrot.lane.b32.xlu0 %v621, 4
      %v699 = vpop.permute.xlu0 %698
      %700 = vrot.lane.b32.xlu0 %v622, 4
      %v701 = vpop.permute.xlu0 %700
      %702 = vrot.lane.b32.xlu0 %v623, 4
      %v703 = vpop.permute.xlu0 %702
      %704 = vrot.lane.b32.xlu0 %v624, 4
      %v705 = vpop.permute.xlu0 %704
      %706 = vrot.lane.b32.xlu0 %v625, 4
      %v707 = vpop.permute.xlu0 %706
      %708 = vrot.lane.b32.xlu0 %v626, 4
      %v709 = vpop.permute.xlu0 %708
      %710 = vrot.lane.b32.xlu0 %v627, 4
      %v711 = vpop.permute.xlu0 %710
      %712 = vrot.lane.b32.xlu0 %v628, 4
      %v713 = vpop.permute.xlu0 %712
      %714 = vrot.lane.b32.xlu0 %v629, 4
      %v715 = vpop.permute.xlu0 %714
      %716 = vrot.lane.b32.xlu0 %v630, 4
      %v717 = vpop.permute.xlu0 %716
      %718 = vrot.lane.b32.xlu0 %v631, 4
      %v719 = vpop.permute.xlu0 %718
      %720 = vrot.lane.b32.xlu0 %v632, 4
      %v721 = vpop.permute.xlu0 %720
      %722 = vrot.lane.b32.xlu0 %v633, 4
      %v723 = vpop.permute.xlu0 %722
      %724 = vrot.lane.b32.xlu0 %v634, 4
      %v725 = vpop.permute.xlu0 %724
      %726 = vrot.lane.b32.xlu0 %v635, 4
      %v727 = vpop.permute.xlu0 %726
      %728 = vrot.lane.b32.xlu0 %v636, 4
      %v729 = vpop.permute.xlu0 %728
      %730 = vrot.lane.b32.xlu0 %v637, 4
      %v731 = vpop.permute.xlu0 %730
      %732 = vrot.lane.b32.xlu0 %v638, 4
      %v733 = vpop.permute.xlu0 %732
      %734 = vrot.lane.b32.xlu0 %v639, 4
      %v735 = vpop.permute.xlu0 %734
      %vm768 = vcmask 60448
      %769 = vst.msk [vmem:[#allocation3] sm:$0xf] %vm768, %v673
      %770 = vst.msk [vmem:[#allocation3 + $0x4] sm:$0xf] %vm768, %v675
      %771 = vst.msk [vmem:[#allocation3 + $0x8] sm:$0xf] %vm768, %v677
      %772 = vst.msk [vmem:[#allocation3 + $0xc] sm:$0xf] %vm768, %v679
      %773 = vst.msk [vmem:[#allocation3 + $0x10] sm:$0xf] %vm768, %v681
      %774 = vst.msk [vmem:[#allocation3 + $0x14] sm:$0xf] %vm768, %v683
      %775 = vst.msk [vmem:[#allocation3 + $0x18] sm:$0xf] %vm768, %v685
      %776 = vst.msk [vmem:[#allocation3 + $0x1c] sm:$0xf] %vm768, %v687
      %777 = vst.msk [vmem:[#allocation3 + $0x20] sm:$0xf] %vm768, %v689
      %778 = vst.msk [vmem:[#allocation3 + $0x24] sm:$0xf] %vm768, %v691
      %779 = vst.msk [vmem:[#allocation3 + $0x28] sm:$0xf] %vm768, %v693
      %780 = vst.msk [vmem:[#allocation3 + $0x2c] sm:$0xf] %vm768, %v695
      %781 = vst.msk [vmem:[#allocation3 + $0x30] sm:$0xf] %vm768, %v697
      %782 = vst.msk [vmem:[#allocation3 + $0x34] sm:$0xf] %vm768, %v699
      %783 = vst.msk [vmem:[#allocation3 + $0x38] sm:$0xf] %vm768, %v701
      %784 = vst.msk [vmem:[#allocation3 + $0x3c] sm:$0xf] %vm768, %v703
      %785 = vst.msk [vmem:[#allocation3 + $0x40] sm:$0xf] %vm768, %v705
      %786 = vst.msk [vmem:[#allocation3 + $0x44] sm:$0xf] %vm768, %v707
      %787 = vst.msk [vmem:[#allocation3 + $0x48] sm:$0xf] %vm768, %v709
      %788 = vst.msk [vmem:[#allocation3 + $0x4c] sm:$0xf] %vm768, %v711
      %789 = vst.msk [vmem:[#allocation3 + $0x50] sm:$0xf] %vm768, %v713
      %790 = vst.msk [vmem:[#allocation3 + $0x54] sm:$0xf] %vm768, %v715
      %791 = vst.msk [vmem:[#allocation3 + $0x58] sm:$0xf] %vm768, %v717
      %792 = vst.msk [vmem:[#allocation3 + $0x5c] sm:$0xf] %vm768, %v719
      %793 = vst.msk [vmem:[#allocation3 + $0x60] sm:$0xf] %vm768, %v721
      %794 = vst.msk [vmem:[#allocation3 + $0x64] sm:$0xf] %vm768, %v723
      %795 = vst.msk [vmem:[#allocation3 + $0x68] sm:$0xf] %vm768, %v725
      %796 = vst.msk [vmem:[#allocation3 + $0x6c] sm:$0xf] %vm768, %v727
      %797 = vst.msk [vmem:[#allocation3 + $0x70] sm:$0xf] %vm768, %v729
      %798 = vst.msk [vmem:[#allocation3 + $0x74] sm:$0xf] %vm768, %v731
      %799 = vst.msk [vmem:[#allocation3 + $0x78] sm:$0xf] %vm768, %v733
      %800 = vst.msk [vmem:[#allocation3 + $0x7c] sm:$0xf] %vm768, %v735
      %v801 = vld [vmem:[#allocation2 + $0x2] sm:$0xff]
      %v802 = vld [vmem:[#allocation2 + $0xa] sm:$0xff]
      %v803 = vld [vmem:[#allocation2 + $0x1a] sm:$0xff]
      %v804 = vld [vmem:[#allocation2 + $0x22] sm:$0xff]
      %v805 = vld [vmem:[#allocation2 + $0x32] sm:$0xff]
      %v806 = vld [vmem:[#allocation2 + $0x3a] sm:$0xff]
      %v807 = vld [vmem:[#allocation2 + $0x4a] sm:$0xff]
      %v808 = vld [vmem:[#allocation2 + $0x52] sm:$0xff]
      %v809 = vld [vmem:[#allocation2 + $0x62] sm:$0xff]
      %v810 = vld [vmem:[#allocation2 + $0x6a] sm:$0xff]
      %v811 = vld [vmem:[#allocation2 + $0x7a] sm:$0xff]
      %v812 = vld [vmem:[#allocation2 + $0x82] sm:$0xff]
      %v813 = vld [vmem:[#allocation2 + $0x92] sm:$0xff]
      %v814 = vld [vmem:[#allocation2 + $0x9a] sm:$0xff]
      %v815 = vld [vmem:[#allocation2 + $0xaa] sm:$0xff]
      %v816 = vld [vmem:[#allocation2 + $0xb2] sm:$0xff]
      %v817 = vld [vmem:[#allocation2 + $0xc2] sm:$0xff]
      %v818 = vld [vmem:[#allocation2 + $0xca] sm:$0xff]
      %v819 = vld [vmem:[#allocation2 + $0xda] sm:$0xff]
      %v820 = vld [vmem:[#allocation2 + $0xe2] sm:$0xff]
      %v821 = vld [vmem:[#allocation2 + $0xf2] sm:$0xff]
      %v822 = vld [vmem:[#allocation2 + $0xfa] sm:$0xff]
      %v823 = vld [vmem:[#allocation2 + $0x10a] sm:$0xff]
      %v824 = vld [vmem:[#allocation2 + $0x112] sm:$0xff]
      %v825 = vld [vmem:[#allocation2 + $0x122] sm:$0xff]
      %v826 = vld [vmem:[#allocation2 + $0x12a] sm:$0xff]
      %v827 = vld [vmem:[#allocation2 + $0x13a] sm:$0xff]
      %v828 = vld [vmem:[#allocation2 + $0x142] sm:$0xff]
      %v829 = vld [vmem:[#allocation2 + $0x152] sm:$0xff]
      %v830 = vld [vmem:[#allocation2 + $0x15a] sm:$0xff]
      %v831 = vld [vmem:[#allocation2 + $0x16a] sm:$0xff]
      %v832 = vld [vmem:[#allocation2 + $0x172] sm:$0xff]
      %v833 = vpack.c.bf16 %v801, %v801
      %v834 = vpack.c.bf16 %v802, %v802
      %v835 = vpack.c.bf16 %v803, %v803
      %v836 = vpack.c.bf16 %v804, %v804
      %v837 = vpack.c.bf16 %v805, %v805
      %v838 = vpack.c.bf16 %v806, %v806
      %v839 = vpack.c.bf16 %v807, %v807
      %v840 = vpack.c.bf16 %v808, %v808
      %v841 = vpack.c.bf16 %v809, %v809
      %v842 = vpack.c.bf16 %v810, %v810
      %v843 = vpack.c.bf16 %v811, %v811
      %v844 = vpack.c.bf16 %v812, %v812
      %v845 = vpack.c.bf16 %v813, %v813
      %v846 = vpack.c.bf16 %v814, %v814
      %v847 = vpack.c.bf16 %v815, %v815
      %v848 = vpack.c.bf16 %v816, %v816
      %v849 = vpack.c.bf16 %v817, %v817
      %v850 = vpack.c.bf16 %v818, %v818
      %v851 = vpack.c.bf16 %v819, %v819
      %v852 = vpack.c.bf16 %v820, %v820
      %v853 = vpack.c.bf16 %v821, %v821
      %v854 = vpack.c.bf16 %v822, %v822
      %v855 = vpack.c.bf16 %v823, %v823
      %v856 = vpack.c.bf16 %v824, %v824
      %v857 = vpack.c.bf16 %v825, %v825
      %v858 = vpack.c.bf16 %v826, %v826
      %v859 = vpack.c.bf16 %v827, %v827
      %v860 = vpack.c.bf16 %v828, %v828
      %v861 = vpack.c.bf16 %v829, %v829
      %v862 = vpack.c.bf16 %v830, %v830
      %v863 = vpack.c.bf16 %v831, %v831
      %v864 = vpack.c.bf16 %v832, %v832
      %897 = vrot.lane.b32.xlu0 %v833, 8
      %v898 = vpop.permute.xlu0 %897
      %899 = vrot.lane.b32.xlu0 %v834, 8
      %v900 = vpop.permute.xlu0 %899
      %901 = vrot.lane.b32.xlu0 %v835, 8
      %v902 = vpop.permute.xlu0 %901
      %903 = vrot.lane.b32.xlu0 %v836, 8
      %v904 = vpop.permute.xlu0 %903
      %905 = vrot.lane.b32.xlu0 %v837, 8
      %v906 = vpop.permute.xlu0 %905
      %907 = vrot.lane.b32.xlu0 %v838, 8
      %v908 = vpop.permute.xlu0 %907
      %909 = vrot.lane.b32.xlu0 %v839, 8
      %v910 = vpop.permute.xlu0 %909
      %911 = vrot.lane.b32.xlu0 %v840, 8
      %v912 = vpop.permute.xlu0 %911
      %913 = vrot.lane.b32.xlu0 %v841, 8
      %v914 = vpop.permute.xlu0 %913
      %915 = vrot.lane.b32.xlu0 %v842, 8
      %v916 = vpop.permute.xlu0 %915
      %917 = vrot.lane.b32.xlu0 %v843, 8
      %v918 = vpop.permute.xlu0 %917
      %919 = vrot.lane.b32.xlu0 %v844, 8
      %v920 = vpop.permute.xlu0 %919
      %921 = vrot.lane.b32.xlu0 %v845, 8
      %v922 = vpop.permute.xlu0 %921
      %923 = vrot.lane.b32.xlu0 %v846, 8
      %v924 = vpop.permute.xlu0 %923
      %925 = vrot.lane.b32.xlu0 %v847, 8
      %v926 = vpop.permute.xlu0 %925
      %927 = vrot.lane.b32.xlu0 %v848, 8
      %v928 = vpop.permute.xlu0 %927
      %929 = vrot.lane.b32.xlu0 %v849, 8
      %v930 = vpop.permute.xlu0 %929
      %931 = vrot.lane.b32.xlu0 %v850, 8
      %v932 = vpop.permute.xlu0 %931
      %933 = vrot.lane.b32.xlu0 %v851, 8
      %v934 = vpop.permute.xlu0 %933
      %935 = vrot.lane.b32.xlu0 %v852, 8
      %v936 = vpop.permute.xlu0 %935
      %937 = vrot.lane.b32.xlu0 %v853, 8
      %v938 = vpop.permute.xlu0 %937
      %939 = vrot.lane.b32.xlu0 %v854, 8
      %v940 = vpop.permute.xlu0 %939
      %941 = vrot.lane.b32.xlu0 %v855, 8
      %v942 = vpop.permute.xlu0 %941
      %943 = vrot.lane.b32.xlu0 %v856, 8
      %v944 = vpop.permute.xlu0 %943
      %945 = vrot.lane.b32.xlu0 %v857, 8
      %v946 = vpop.permute.xlu0 %945
      %947 = vrot.lane.b32.xlu0 %v858, 8
      %v948 = vpop.permute.xlu0 %947
      %949 = vrot.lane.b32.xlu0 %v859, 8
      %v950 = vpop.permute.xlu0 %949
      %951 = vrot.lane.b32.xlu0 %v860, 8
      %v952 = vpop.permute.xlu0 %951
      %953 = vrot.lane.b32.xlu0 %v861, 8
      %v954 = vpop.permute.xlu0 %953
      %955 = vrot.lane.b32.xlu0 %v862, 8
      %v956 = vpop.permute.xlu0 %955
      %957 = vrot.lane.b32.xlu0 %v863, 8
      %v958 = vpop.permute.xlu0 %957
      %959 = vrot.lane.b32.xlu0 %v864, 8
      %v960 = vpop.permute.xlu0 %959
      %vm993 = vcmask 93248
      %994 = vst.msk [vmem:[#allocation3] sm:$0xf] %vm993, %v898
      %995 = vst.msk [vmem:[#allocation3 + $0x4] sm:$0xf] %vm993, %v900
      %996 = vst.msk [vmem:[#allocation3 + $0x8] sm:$0xf] %vm993, %v902
      %997 = vst.msk [vmem:[#allocation3 + $0xc] sm:$0xf] %vm993, %v904
      %998 = vst.msk [vmem:[#allocation3 + $0x10] sm:$0xf] %vm993, %v906
      %999 = vst.msk [vmem:[#allocation3 + $0x14] sm:$0xf] %vm993, %v908
      %1000 = vst.msk [vmem:[#allocation3 + $0x18] sm:$0xf] %vm993, %v910
      %1001 = vst.msk [vmem:[#allocation3 + $0x1c] sm:$0xf] %vm993, %v912
      %1002 = vst.msk [vmem:[#allocation3 + $0x20] sm:$0xf] %vm993, %v914
      %1003 = vst.msk [vmem:[#allocation3 + $0x24] sm:$0xf] %vm993, %v916
      %1004 = vst.msk [vmem:[#allocation3 + $0x28] sm:$0xf] %vm993, %v918
      %1005 = vst.msk [vmem:[#allocation3 + $0x2c] sm:$0xf] %vm993, %v920
      %1006 = vst.msk [vmem:[#allocation3 + $0x30] sm:$0xf] %vm993, %v922
      %1007 = vst.msk [vmem:[#allocation3 + $0x34] sm:$0xf] %vm993, %v924
      %1008 = vst.msk [vmem:[#allocation3 + $0x38] sm:$0xf] %vm993, %v926
      %1009 = vst.msk [vmem:[#allocation3 + $0x3c] sm:$0xf] %vm993, %v928
      %1010 = vst.msk [vmem:[#allocation3 + $0x40] sm:$0xf] %vm993, %v930
      %1011 = vst.msk [vmem:[#allocation3 + $0x44] sm:$0xf] %vm993, %v932
      %1012 = vst.msk [vmem:[#allocation3 + $0x48] sm:$0xf] %vm993, %v934
      %1013 = vst.msk [vmem:[#allocation3 + $0x4c] sm:$0xf] %vm993, %v936
      %1014 = vst.msk [vmem:[#allocation3 + $0x50] sm:$0xf] %vm993, %v938
      %1015 = vst.msk [vmem:[#allocation3 + $0x54] sm:$0xf] %vm993, %v940
      %1016 = vst.msk [vmem:[#allocation3 + $0x58] sm:$0xf] %vm993, %v942
      %1017 = vst.msk [vmem:[#allocation3 + $0x5c] sm:$0xf] %vm993, %v944
      %1018 = vst.msk [vmem:[#allocation3 + $0x60] sm:$0xf] %vm993, %v946
      %1019 = vst.msk [vmem:[#allocation3 + $0x64] sm:$0xf] %vm993, %v948
      %1020 = vst.msk [vmem:[#allocation3 + $0x68] sm:$0xf] %vm993, %v950
      %1021 = vst.msk [vmem:[#allocation3 + $0x6c] sm:$0xf] %vm993, %v952
      %1022 = vst.msk [vmem:[#allocation3 + $0x70] sm:$0xf] %vm993, %v954
      %1023 = vst.msk [vmem:[#allocation3 + $0x74] sm:$0xf] %vm993, %v956
      %1024 = vst.msk [vmem:[#allocation3 + $0x78] sm:$0xf] %vm993, %v958
      %1025 = vst.msk [vmem:[#allocation3 + $0x7c] sm:$0xf] %vm993, %v960
      %v1026 = vld [vmem:[%s446] sm:$0xff]
      %v1027 = vld [vmem:[%s446 + $0x8] sm:$0xff]
      %v1028 = vld [vmem:[%s446 + $0x18] sm:$0xff]
      %v1029 = vld [vmem:[%s446 + $0x20] sm:$0xff]
      %v1030 = vld [vmem:[%s446 + $0x30] sm:$0xff]
      %v1031 = vld [vmem:[%s446 + $0x38] sm:$0xff]
      %v1032 = vld [vmem:[%s446 + $0x48] sm:$0xff]
      %v1033 = vld [vmem:[%s446 + $0x50] sm:$0xff]
      %v1034 = vld [vmem:[%s446 + $0x60] sm:$0xff]
      %v1035 = vld [vmem:[%s446 + $0x68] sm:$0xff]
      %v1036 = vld [vmem:[%s446 + $0x78] sm:$0xff]
      %v1037 = vld [vmem:[%s446 + $0x80] sm:$0xff]
      %v1038 = vld [vmem:[%s446 + $0x90] sm:$0xff]
      %v1039 = vld [vmem:[%s446 + $0x98] sm:$0xff]
      %v1040 = vld [vmem:[%s446 + $0xa8] sm:$0xff]
      %v1041 = vld [vmem:[%s446 + $0xb0] sm:$0xff]
      %v1042 = vld [vmem:[%s446 + $0xc0] sm:$0xff]
      %v1043 = vld [vmem:[%s446 + $0xc8] sm:$0xff]
      %v1044 = vld [vmem:[%s446 + $0xd8] sm:$0xff]
      %v1045 = vld [vmem:[%s446 + $0xe0] sm:$0xff]
      %v1046 = vld [vmem:[%s446 + $0xf0] sm:$0xff]
      %v1047 = vld [vmem:[%s446 + $0xf8] sm:$0xff]
      %v1048 = vld [vmem:[%s446 + $0x108] sm:$0xff]
      %v1049 = vld [vmem:[%s446 + $0x110] sm:$0xff]
      %v1050 = vld [vmem:[%s446 + $0x120] sm:$0xff]
      %v1051 = vld [vmem:[%s446 + $0x128] sm:$0xff]
      %v1052 = vld [vmem:[%s446 + $0x138] sm:$0xff]
      %v1053 = vld [vmem:[%s446 + $0x140] sm:$0xff]
      %v1054 = vld [vmem:[%s446 + $0x150] sm:$0xff]
      %v1055 = vld [vmem:[%s446 + $0x158] sm:$0xff]
      %v1056 = vld [vmem:[%s446 + $0x168] sm:$0xff]
      %v1057 = vld [vmem:[%s446 + $0x170] sm:$0xff]
      %v1058 = vpack.c.bf16 %v1026, %v1026
      %v1059 = vpack.c.bf16 %v1027, %v1027
      %v1060 = vpack.c.bf16 %v1028, %v1028
      %v1061 = vpack.c.bf16 %v1029, %v1029
      %v1062 = vpack.c.bf16 %v1030, %v1030
      %v1063 = vpack.c.bf16 %v1031, %v1031
      %v1064 = vpack.c.bf16 %v1032, %v1032
      %v1065 = vpack.c.bf16 %v1033, %v1033
      %v1066 = vpack.c.bf16 %v1034, %v1034
      %v1067 = vpack.c.bf16 %v1035, %v1035
      %v1068 = vpack.c.bf16 %v1036, %v1036
      %v1069 = vpack.c.bf16 %v1037, %v1037
      %v1070 = vpack.c.bf16 %v1038, %v1038
      %v1071 = vpack.c.bf16 %v1039, %v1039
      %v1072 = vpack.c.bf16 %v1040, %v1040
      %v1073 = vpack.c.bf16 %v1041, %v1041
      %v1074 = vpack.c.bf16 %v1042, %v1042
      %v1075 = vpack.c.bf16 %v1043, %v1043
      %v1076 = vpack.c.bf16 %v1044, %v1044
      %v1077 = vpack.c.bf16 %v1045, %v1045
      %v1078 = vpack.c.bf16 %v1046, %v1046
      %v1079 = vpack.c.bf16 %v1047, %v1047
      %v1080 = vpack.c.bf16 %v1048, %v1048
      %v1081 = vpack.c.bf16 %v1049, %v1049
      %v1082 = vpack.c.bf16 %v1050, %v1050
      %v1083 = vpack.c.bf16 %v1051, %v1051
      %v1084 = vpack.c.bf16 %v1052, %v1052
      %v1085 = vpack.c.bf16 %v1053, %v1053
      %v1086 = vpack.c.bf16 %v1054, %v1054
      %v1087 = vpack.c.bf16 %v1055, %v1055
      %v1088 = vpack.c.bf16 %v1056, %v1056
      %v1089 = vpack.c.bf16 %v1057, %v1057
      %1122 = vrot.lane.b32.xlu0 %v1058, 12
      %v1123 = vpop.permute.xlu0 %1122
      %1124 = vrot.lane.b32.xlu0 %v1059, 12
      %v1125 = vpop.permute.xlu0 %1124
      %1126 = vrot.lane.b32.xlu0 %v1060, 12
      %v1127 = vpop.permute.xlu0 %1126
      %1128 = vrot.lane.b32.xlu0 %v1061, 12
      %v1129 = vpop.permute.xlu0 %1128
      %1130 = vrot.lane.b32.xlu0 %v1062, 12
      %v1131 = vpop.permute.xlu0 %1130
      %1132 = vrot.lane.b32.xlu0 %v1063, 12
      %v1133 = vpop.permute.xlu0 %1132
      %1134 = vrot.lane.b32.xlu0 %v1064, 12
      %v1135 = vpop.permute.xlu0 %1134
      %1136 = vrot.lane.b32.xlu0 %v1065, 12
      %v1137 = vpop.permute.xlu0 %1136
      %1138 = vrot.lane.b32.xlu0 %v1066, 12
      %v1139 = vpop.permute.xlu0 %1138
      %1140 = vrot.lane.b32.xlu0 %v1067, 12
      %v1141 = vpop.permute.xlu0 %1140
      %1142 = vrot.lane.b32.xlu0 %v1068, 12
      %v1143 = vpop.permute.xlu0 %1142
      %1144 = vrot.lane.b32.xlu0 %v1069, 12
      %v1145 = vpop.permute.xlu0 %1144
      %1146 = vrot.lane.b32.xlu0 %v1070, 12
      %v1147 = vpop.permute.xlu0 %1146
      %1148 = vrot.lane.b32.xlu0 %v1071, 12
      %v1149 = vpop.permute.xlu0 %1148
      %1150 = vrot.lane.b32.xlu0 %v1072, 12
      %v1151 = vpop.permute.xlu0 %1150
      %1152 = vrot.lane.b32.xlu0 %v1073, 12
      %v1153 = vpop.permute.xlu0 %1152
      %1154 = vrot.lane.b32.xlu0 %v1074, 12
      %v1155 = vpop.permute.xlu0 %1154
      %1156 = vrot.lane.b32.xlu0 %v1075, 12
      %v1157 = vpop.permute.xlu0 %1156
      %1158 = vrot.lane.b32.xlu0 %v1076, 12
      %v1159 = vpop.permute.xlu0 %1158
      %1160 = vrot.lane.b32.xlu0 %v1077, 12
      %v1161 = vpop.permute.xlu0 %1160
      %1162 = vrot.lane.b32.xlu0 %v1078, 12
      %v1163 = vpop.permute.xlu0 %1162
      %1164 = vrot.lane.b32.xlu0 %v1079, 12
      %v1165 = vpop.permute.xlu0 %1164
      %1166 = vrot.lane.b32.xlu0 %v1080, 12
      %v1167 = vpop.permute.xlu0 %1166
      %1168 = vrot.lane.b32.xlu0 %v1081, 12
      %v1169 = vpop.permute.xlu0 %1168
      %1170 = vrot.lane.b32.xlu0 %v1082, 12
      %v1171 = vpop.permute.xlu0 %1170
      %1172 = vrot.lane.b32.xlu0 %v1083, 12
      %v1173 = vpop.permute.xlu0 %1172
      %1174 = vrot.lane.b32.xlu0 %v1084, 12
      %v1175 = vpop.permute.xlu0 %1174
      %1176 = vrot.lane.b32.xlu0 %v1085, 12
      %v1177 = vpop.permute.xlu0 %1176
      %1178 = vrot.lane.b32.xlu0 %v1086, 12
      %v1179 = vpop.permute.xlu0 %1178
      %1180 = vrot.lane.b32.xlu0 %v1087, 12
      %v1181 = vpop.permute.xlu0 %1180
      %1182 = vrot.lane.b32.xlu0 %v1088, 12
      %v1183 = vpop.permute.xlu0 %1182
      %1184 = vrot.lane.b32.xlu0 %v1089, 12
      %v1185 = vpop.permute.xlu0 %1184
      %vm1218 = vcmask 126048
      %1219 = vst.msk [vmem:[#allocation3] sm:$0xf] %vm1218, %v1123
      %1220 = vst.msk [vmem:[#allocation3 + $0x4] sm:$0xf] %vm1218, %v1125
      %1221 = vst.msk [vmem:[#allocation3 + $0x8] sm:$0xf] %vm1218, %v1127
      %1222 = vst.msk [vmem:[#allocation3 + $0xc] sm:$0xf] %vm1218, %v1129
      %1223 = vst.msk [vmem:[#allocation3 + $0x10] sm:$0xf] %vm1218, %v1131
      %1224 = vst.msk [vmem:[#allocation3 + $0x14] sm:$0xf] %vm1218, %v1133
      %1225 = vst.msk [vmem:[#allocation3 + $0x18] sm:$0xf] %vm1218, %v1135
      %1226 = vst.msk [vmem:[#allocation3 + $0x1c] sm:$0xf] %vm1218, %v1137
      %1227 = vst.msk [vmem:[#allocation3 + $0x20] sm:$0xf] %vm1218, %v1139
      %1228 = vst.msk [vmem:[#allocation3 + $0x24] sm:$0xf] %vm1218, %v1141
      %1229 = vst.msk [vmem:[#allocation3 + $0x28] sm:$0xf] %vm1218, %v1143
      %1230 = vst.msk [vmem:[#allocation3 + $0x2c] sm:$0xf] %vm1218, %v1145
      %1231 = vst.msk [vmem:[#allocation3 + $0x30] sm:$0xf] %vm1218, %v1147
      %1232 = vst.msk [vmem:[#allocation3 + $0x34] sm:$0xf] %vm1218, %v1149
      %1233 = vst.msk [vmem:[#allocation3 + $0x38] sm:$0xf] %vm1218, %v1151
      %1234 = vst.msk [vmem:[#allocation3 + $0x3c] sm:$0xf] %vm1218, %v1153
      %1235 = vst.msk [vmem:[#allocation3 + $0x40] sm:$0xf] %vm1218, %v1155
      %1236 = vst.msk [vmem:[#allocation3 + $0x44] sm:$0xf] %vm1218, %v1157
      %1237 = vst.msk [vmem:[#allocation3 + $0x48] sm:$0xf] %vm1218, %v1159
      %1238 = vst.msk [vmem:[#allocation3 + $0x4c] sm:$0xf] %vm1218, %v1161
      %1239 = vst.msk [vmem:[#allocation3 + $0x50] sm:$0xf] %vm1218, %v1163
      %1240 = vst.msk [vmem:[#allocation3 + $0x54] sm:$0xf] %vm1218, %v1165
      %1241 = vst.msk [vmem:[#allocation3 + $0x58] sm:$0xf] %vm1218, %v1167
      %1242 = vst.msk [vmem:[#allocation3 + $0x5c] sm:$0xf] %vm1218, %v1169
      %1243 = vst.msk [vmem:[#allocation3 + $0x60] sm:$0xf] %vm1218, %v1171
      %1244 = vst.msk [vmem:[#allocation3 + $0x64] sm:$0xf] %vm1218, %v1173
      %1245 = vst.msk [vmem:[#allocation3 + $0x68] sm:$0xf] %vm1218, %v1175
      %1246 = vst.msk [vmem:[#allocation3 + $0x6c] sm:$0xf] %vm1218, %v1177
      %1247 = vst.msk [vmem:[#allocation3 + $0x70] sm:$0xf] %vm1218, %v1179
      %1248 = vst.msk [vmem:[#allocation3 + $0x74] sm:$0xf] %vm1218, %v1181
      %1249 = vst.msk [vmem:[#allocation3 + $0x78] sm:$0xf] %vm1218, %v1183
      %1250 = vst.msk [vmem:[#allocation3 + $0x7c] sm:$0xf] %vm1218, %v1185
      %v1251 = vld [vmem:[%s446 + $0x1] sm:$0xff]
      %v1252 = vld [vmem:[%s446 + $0x9] sm:$0xff]
      %v1253 = vld [vmem:[%s446 + $0x19] sm:$0xff]
      %v1254 = vld [vmem:[%s446 + $0x21] sm:$0xff]
      %v1255 = vld [vmem:[%s446 + $0x31] sm:$0xff]
      %v1256 = vld [vmem:[%s446 + $0x39] sm:$0xff]
      %v1257 = vld [vmem:[%s446 + $0x49] sm:$0xff]
      %v1258 = vld [vmem:[%s446 + $0x51] sm:$0xff]
      %v1259 = vld [vmem:[%s446 + $0x61] sm:$0xff]
      %v1260 = vld [vmem:[%s446 + $0x69] sm:$0xff]
      %v1261 = vld [vmem:[%s446 + $0x79] sm:$0xff]
      %v1262 = vld [vmem:[%s446 + $0x81] sm:$0xff]
      %v1263 = vld [vmem:[%s446 + $0x91] sm:$0xff]
      %v1264 = vld [vmem:[%s446 + $0x99] sm:$0xff]
      %v1265 = vld [vmem:[%s446 + $0xa9] sm:$0xff]
      %v1266 = vld [vmem:[%s446 + $0xb1] sm:$0xff]
      %v1267 = vld [vmem:[%s446 + $0xc1] sm:$0xff]
      %v1268 = vld [vmem:[%s446 + $0xc9] sm:$0xff]
      %v1269 = vld [vmem:[%s446 + $0xd9] sm:$0xff]
      %v1270 = vld [vmem:[%s446 + $0xe1] sm:$0xff]
      %v1271 = vld [vmem:[%s446 + $0xf1] sm:$0xff]
      %v1272 = vld [vmem:[%s446 + $0xf9] sm:$0xff]
      %v1273 = vld [vmem:[%s446 + $0x109] sm:$0xff]
      %v1274 = vld [vmem:[%s446 + $0x111] sm:$0xff]
      %v1275 = vld [vmem:[%s446 + $0x121] sm:$0xff]
      %v1276 = vld [vmem:[%s446 + $0x129] sm:$0xff]
      %v1277 = vld [vmem:[%s446 + $0x139] sm:$0xff]
      %v1278 = vld [vmem:[%s446 + $0x141] sm:$0xff]
      %v1279 = vld [vmem:[%s446 + $0x151] sm:$0xff]
      %v1280 = vld [vmem:[%s446 + $0x159] sm:$0xff]
      %v1281 = vld [vmem:[%s446 + $0x169] sm:$0xff]
      %v1282 = vld [vmem:[%s446 + $0x171] sm:$0xff]
      %v1283 = vpack.c.bf16 %v1251, %v1251
      %v1284 = vpack.c.bf16 %v1252, %v1252
      %v1285 = vpack.c.bf16 %v1253, %v1253
      %v1286 = vpack.c.bf16 %v1254, %v1254
      %v1287 = vpack.c.bf16 %v1255, %v1255
      %v1288 = vpack.c.bf16 %v1256, %v1256
      %v1289 = vpack.c.bf16 %v1257, %v1257
      %v1290 = vpack.c.bf16 %v1258, %v1258
      %v1291 = vpack.c.bf16 %v1259, %v1259
      %v1292 = vpack.c.bf16 %v1260, %v1260
      %v1293 = vpack.c.bf16 %v1261, %v1261
      %v1294 = vpack.c.bf16 %v1262, %v1262
      %v1295 = vpack.c.bf16 %v1263, %v1263
      %v1296 = vpack.c.bf16 %v1264, %v1264
      %v1297 = vpack.c.bf16 %v1265, %v1265
      %v1298 = vpack.c.bf16 %v1266, %v1266
      %v1299 = vpack.c.bf16 %v1267, %v1267
      %v1300 = vpack.c.bf16 %v1268, %v1268
      %v1301 = vpack.c.bf16 %v1269, %v1269
      %v1302 = vpack.c.bf16 %v1270, %v1270
      %v1303 = vpack.c.bf16 %v1271, %v1271
      %v1304 = vpack.c.bf16 %v1272, %v1272
      %v1305 = vpack.c.bf16 %v1273, %v1273
      %v1306 = vpack.c.bf16 %v1274, %v1274
      %v1307 = vpack.c.bf16 %v1275, %v1275
      %v1308 = vpack.c.bf16 %v1276, %v1276
      %v1309 = vpack.c.bf16 %v1277, %v1277
      %v1310 = vpack.c.bf16 %v1278, %v1278
      %v1311 = vpack.c.bf16 %v1279, %v1279
      %v1312 = vpack.c.bf16 %v1280, %v1280
      %v1313 = vpack.c.bf16 %v1281, %v1281
      %v1314 = vpack.c.bf16 %v1282, %v1282
      %1347 = vrot.lane.b32.xlu0 %v1283, 16
      %v1348 = vpop.permute.xlu0 %1347
      %1349 = vrot.lane.b32.xlu0 %v1284, 16
      %v1350 = vpop.permute.xlu0 %1349
      %1351 = vrot.lane.b32.xlu0 %v1285, 16
      %v1352 = vpop.permute.xlu0 %1351
      %1353 = vrot.lane.b32.xlu0 %v1286, 16
      %v1354 = vpop.permute.xlu0 %1353
      %1355 = vrot.lane.b32.xlu0 %v1287, 16
      %v1356 = vpop.permute.xlu0 %1355
      %1357 = vrot.lane.b32.xlu0 %v1288, 16
      %v1358 = vpop.permute.xlu0 %1357
      %1359 = vrot.lane.b32.xlu0 %v1289, 16
      %v1360 = vpop.permute.xlu0 %1359
      %1361 = vrot.lane.b32.xlu0 %v1290, 16
      %v1362 = vpop.permute.xlu0 %1361
      %1363 = vrot.lane.b32.xlu0 %v1291, 16
      %v1364 = vpop.permute.xlu0 %1363
      %1365 = vrot.lane.b32.xlu0 %v1292, 16
      %v1366 = vpop.permute.xlu0 %1365
      %1367 = vrot.lane.b32.xlu0 %v1293, 16
      %v1368 = vpop.permute.xlu0 %1367
      %1369 = vrot.lane.b32.xlu0 %v1294, 16
      %v1370 = vpop.permute.xlu0 %1369
      %1371 = vrot.lane.b32.xlu0 %v1295, 16
      %v1372 = vpop.permute.xlu0 %1371
      %1373 = vrot.lane.b32.xlu0 %v1296, 16
      %v1374 = vpop.permute.xlu0 %1373
      %1375 = vrot.lane.b32.xlu0 %v1297, 16
      %v1376 = vpop.permute.xlu0 %1375
      %1377 = vrot.lane.b32.xlu0 %v1298, 16
      %v1378 = vpop.permute.xlu0 %1377
      %1379 = vrot.lane.b32.xlu0 %v1299, 16
      %v1380 = vpop.permute.xlu0 %1379
      %1381 = vrot.lane.b32.xlu0 %v1300, 16
      %v1382 = vpop.permute.xlu0 %1381
      %1383 = vrot.lane.b32.xlu0 %v1301, 16
      %v1384 = vpop.permute.xlu0 %1383
      %1385 = vrot.lane.b32.xlu0 %v1302, 16
      %v1386 = vpop.permute.xlu0 %1385
      %1387 = vrot.lane.b32.xlu0 %v1303, 16
      %v1388 = vpop.permute.xlu0 %1387
      %1389 = vrot.lane.b32.xlu0 %v1304, 16
      %v1390 = vpop.permute.xlu0 %1389
      %1391 = vrot.lane.b32.xlu0 %v1305, 16
      %v1392 = vpop.permute.xlu0 %1391
      %1393 = vrot.lane.b32.xlu0 %v1306, 16
      %v1394 = vpop.permute.xlu0 %1393
      %1395 = vrot.lane.b32.xlu0 %v1307, 16
      %v1396 = vpop.permute.xlu0 %1395
      %1397 = vrot.lane.b32.xlu0 %v1308, 16
      %v1398 = vpop.permute.xlu0 %1397
      %1399 = vrot.lane.b32.xlu0 %v1309, 16
      %v1400 = vpop.permute.xlu0 %1399
      %1401 = vrot.lane.b32.xlu0 %v1310, 16
      %v1402 = vpop.permute.xlu0 %1401
      %1403 = vrot.lane.b32.xlu0 %v1311, 16
      %v1404 = vpop.permute.xlu0 %1403
      %1405 = vrot.lane.b32.xlu0 %v1312, 16
      %v1406 = vpop.permute.xlu0 %1405
      %1407 = vrot.lane.b32.xlu0 %v1313, 16
      %v1408 = vpop.permute.xlu0 %1407
      %1409 = vrot.lane.b32.xlu0 %v1314, 16
      %v1410 = vpop.permute.xlu0 %1409
      %vm1443 = vcmask 158848
      %1444 = vst.msk [vmem:[#allocation3] sm:$0xf] %vm1443, %v1348
      %1445 = vst.msk [vmem:[#allocation3 + $0x4] sm:$0xf] %vm1443, %v1350
      %1446 = vst.msk [vmem:[#allocation3 + $0x8] sm:$0xf] %vm1443, %v1352
      %1447 = vst.msk [vmem:[#allocation3 + $0xc] sm:$0xf] %vm1443, %v1354
      %1448 = vst.msk [vmem:[#allocation3 + $0x10] sm:$0xf] %vm1443, %v1356
      %1449 = vst.msk [vmem:[#allocation3 + $0x14] sm:$0xf] %vm1443, %v1358
      %1450 = vst.msk [vmem:[#allocation3 + $0x18] sm:$0xf] %vm1443, %v1360
      %1451 = vst.msk [vmem:[#allocation3 + $0x1c] sm:$0xf] %vm1443, %v1362
      %1452 = vst.msk [vmem:[#allocation3 + $0x20] sm:$0xf] %vm1443, %v1364
      %1453 = vst.msk [vmem:[#allocation3 + $0x24] sm:$0xf] %vm1443, %v1366
      %1454 = vst.msk [vmem:[#allocation3 + $0x28] sm:$0xf] %vm1443, %v1368
      %1455 = vst.msk [vmem:[#allocation3 + $0x2c] sm:$0xf] %vm1443, %v1370
      %1456 = vst.msk [vmem:[#allocation3 + $0x30] sm:$0xf] %vm1443, %v1372
      %1457 = vst.msk [vmem:[#allocation3 + $0x34] sm:$0xf] %vm1443, %v1374
      %1458 = vst.msk [vmem:[#allocation3 + $0x38] sm:$0xf] %vm1443, %v1376
      %1459 = vst.msk [vmem:[#allocation3 + $0x3c] sm:$0xf] %vm1443, %v1378
      %1460 = vst.msk [vmem:[#allocation3 + $0x40] sm:$0xf] %vm1443, %v1380
      %1461 = vst.msk [vmem:[#allocation3 + $0x44] sm:$0xf] %vm1443, %v1382
      %1462 = vst.msk [vmem:[#allocation3 + $0x48] sm:$0xf] %vm1443, %v1384
      %1463 = vst.msk [vmem:[#allocation3 + $0x4c] sm:$0xf] %vm1443, %v1386
      %1464 = vst.msk [vmem:[#allocation3 + $0x50] sm:$0xf] %vm1443, %v1388
      %1465 = vst.msk [vmem:[#allocation3 + $0x54] sm:$0xf] %vm1443, %v1390
      %1466 = vst.msk [vmem:[#allocation3 + $0x58] sm:$0xf] %vm1443, %v1392
      %1467 = vst.msk [vmem:[#allocation3 + $0x5c] sm:$0xf] %vm1443, %v1394
      %1468 = vst.msk [vmem:[#allocation3 + $0x60] sm:$0xf] %vm1443, %v1396
      %1469 = vst.msk [vmem:[#allocation3 + $0x64] sm:$0xf] %vm1443, %v1398
      %1470 = vst.msk [vmem:[#allocation3 + $0x68] sm:$0xf] %vm1443, %v1400
      %1471 = vst.msk [vmem:[#allocation3 + $0x6c] sm:$0xf] %vm1443, %v1402
      %1472 = vst.msk [vmem:[#allocation3 + $0x70] sm:$0xf] %vm1443, %v1404
      %1473 = vst.msk [vmem:[#allocation3 + $0x74] sm:$0xf] %vm1443, %v1406
      %1474 = vst.msk [vmem:[#allocation3 + $0x78] sm:$0xf] %vm1443, %v1408
      %1475 = vst.msk [vmem:[#allocation3 + $0x7c] sm:$0xf] %vm1443, %v1410
      %v1476 = vld [vmem:[%s446 + $0x2] sm:$0xff]
      %v1477 = vld [vmem:[%s446 + $0xa] sm:$0xff]
      %v1478 = vld [vmem:[%s446 + $0x1a] sm:$0xff]
      %v1479 = vld [vmem:[%s446 + $0x22] sm:$0xff]
      %v1480 = vld [vmem:[%s446 + $0x32] sm:$0xff]
      %v1481 = vld [vmem:[%s446 + $0x3a] sm:$0xff]
      %v1482 = vld [vmem:[%s446 + $0x4a] sm:$0xff]
      %v1483 = vld [vmem:[%s446 + $0x52] sm:$0xff]
      %v1484 = vld [vmem:[%s446 + $0x62] sm:$0xff]
      %v1485 = vld [vmem:[%s446 + $0x6a] sm:$0xff]
      %v1486 = vld [vmem:[%s446 + $0x7a] sm:$0xff]
      %v1487 = vld [vmem:[%s446 + $0x82] sm:$0xff]
      %v1488 = vld [vmem:[%s446 + $0x92] sm:$0xff]
      %v1489 = vld [vmem:[%s446 + $0x9a] sm:$0xff]
      %v1490 = vld [vmem:[%s446 + $0xaa] sm:$0xff]
      %v1491 = vld [vmem:[%s446 + $0xb2] sm:$0xff]
      %v1492 = vld [vmem:[%s446 + $0xc2] sm:$0xff]
      %v1493 = vld [vmem:[%s446 + $0xca] sm:$0xff]
      %v1494 = vld [vmem:[%s446 + $0xda] sm:$0xff]
      %v1495 = vld [vmem:[%s446 + $0xe2] sm:$0xff]
      %v1496 = vld [vmem:[%s446 + $0xf2] sm:$0xff]
      %v1497 = vld [vmem:[%s446 + $0xfa] sm:$0xff]
      %v1498 = vld [vmem:[%s446 + $0x10a] sm:$0xff]
      %v1499 = vld [vmem:[%s446 + $0x112] sm:$0xff]
      %v1500 = vld [vmem:[%s446 + $0x122] sm:$0xff]
      %v1501 = vld [vmem:[%s446 + $0x12a] sm:$0xff]
      %v1502 = vld [vmem:[%s446 + $0x13a] sm:$0xff]
      %v1503 = vld [vmem:[%s446 + $0x142] sm:$0xff]
      %v1504 = vld [vmem:[%s446 + $0x152] sm:$0xff]
      %v1505 = vld [vmem:[%s446 + $0x15a] sm:$0xff]
      %v1506 = vld [vmem:[%s446 + $0x16a] sm:$0xff]
      %v1507 = vld [vmem:[%s446 + $0x172] sm:$0xff]
      %v1508 = vpack.c.bf16 %v1476, %v1476
      %v1509 = vpack.c.bf16 %v1477, %v1477
      %v1510 = vpack.c.bf16 %v1478, %v1478
      %v1511 = vpack.c.bf16 %v1479, %v1479
      %v1512 = vpack.c.bf16 %v1480, %v1480
      %v1513 = vpack.c.bf16 %v1481, %v1481
      %v1514 = vpack.c.bf16 %v1482, %v1482
      %v1515 = vpack.c.bf16 %v1483, %v1483
      %v1516 = vpack.c.bf16 %v1484, %v1484
      %v1517 = vpack.c.bf16 %v1485, %v1485
      %v1518 = vpack.c.bf16 %v1486, %v1486
      %v1519 = vpack.c.bf16 %v1487, %v1487
      %v1520 = vpack.c.bf16 %v1488, %v1488
      %v1521 = vpack.c.bf16 %v1489, %v1489
      %v1522 = vpack.c.bf16 %v1490, %v1490
      %v1523 = vpack.c.bf16 %v1491, %v1491
      %v1524 = vpack.c.bf16 %v1492, %v1492
      %v1525 = vpack.c.bf16 %v1493, %v1493
      %v1526 = vpack.c.bf16 %v1494, %v1494
      %v1527 = vpack.c.bf16 %v1495, %v1495
      %v1528 = vpack.c.bf16 %v1496, %v1496
      %v1529 = vpack.c.bf16 %v1497, %v1497
      %v1530 = vpack.c.bf16 %v1498, %v1498
      %v1531 = vpack.c.bf16 %v1499, %v1499
      %v1532 = vpack.c.bf16 %v1500, %v1500
      %v1533 = vpack.c.bf16 %v1501, %v1501
      %v1534 = vpack.c.bf16 %v1502, %v1502
      %v1535 = vpack.c.bf16 %v1503, %v1503
      %v1536 = vpack.c.bf16 %v1504, %v1504
      %v1537 = vpack.c.bf16 %v1505, %v1505
      %v1538 = vpack.c.bf16 %v1506, %v1506
      %v1539 = vpack.c.bf16 %v1507, %v1507
      %1572 = vrot.lane.b32.xlu0 %v1508, 20
      %v1573 = vpop.permute.xlu0 %1572
      %1574 = vrot.lane.b32.xlu0 %v1509, 20
      %v1575 = vpop.permute.xlu0 %1574
      %1576 = vrot.lane.b32.xlu0 %v1510, 20
      %v1577 = vpop.permute.xlu0 %1576
      %1578 = vrot.lane.b32.xlu0 %v1511, 20
      %v1579 = vpop.permute.xlu0 %1578
      %1580 = vrot.lane.b32.xlu0 %v1512, 20
      %v1581 = vpop.permute.xlu0 %1580
      %1582 = vrot.lane.b32.xlu0 %v1513, 20
      %v1583 = vpop.permute.xlu0 %1582
      %1584 = vrot.lane.b32.xlu0 %v1514, 20
      %v1585 = vpop.permute.xlu0 %1584
      %1586 = vrot.lane.b32.xlu0 %v1515, 20
      %v1587 = vpop.permute.xlu0 %1586
      %1588 = vrot.lane.b32.xlu0 %v1516, 20
      %v1589 = vpop.permute.xlu0 %1588
      %1590 = vrot.lane.b32.xlu0 %v1517, 20
      %v1591 = vpop.permute.xlu0 %1590
      %1592 = vrot.lane.b32.xlu0 %v1518, 20
      %v1593 = vpop.permute.xlu0 %1592
      %1594 = vrot.lane.b32.xlu0 %v1519, 20
      %v1595 = vpop.permute.xlu0 %1594
      %1596 = vrot.lane.b32.xlu0 %v1520, 20
      %v1597 = vpop.permute.xlu0 %1596
      %1598 = vrot.lane.b32.xlu0 %v1521, 20
      %v1599 = vpop.permute.xlu0 %1598
      %1600 = vrot.lane.b32.xlu0 %v1522, 20
      %v1601 = vpop.permute.xlu0 %1600
      %1602 = vrot.lane.b32.xlu0 %v1523, 20
      %v1603 = vpop.permute.xlu0 %1602
      %1604 = vrot.lane.b32.xlu0 %v1524, 20
      %v1605 = vpop.permute.xlu0 %1604
      %1606 = vrot.lane.b32.xlu0 %v1525, 20
      %v1607 = vpop.permute.xlu0 %1606
      %1608 = vrot.lane.b32.xlu0 %v1526, 20
      %v1609 = vpop.permute.xlu0 %1608
      %1610 = vrot.lane.b32.xlu0 %v1527, 20
      %v1611 = vpop.permute.xlu0 %1610
      %1612 = vrot.lane.b32.xlu0 %v1528, 20
      %v1613 = vpop.permute.xlu0 %1612
      %1614 = vrot.lane.b32.xlu0 %v1529, 20
      %v1615 = vpop.permute.xlu0 %1614
      %1616 = vrot.lane.b32.xlu0 %v1530, 20
      %v1617 = vpop.permute.xlu0 %1616
      %1618 = vrot.lane.b32.xlu0 %v1531, 20
      %v1619 = vpop.permute.xlu0 %1618
      %1620 = vrot.lane.b32.xlu0 %v1532, 20
      %v1621 = vpop.permute.xlu0 %1620
      %1622 = vrot.lane.b32.xlu0 %v1533, 20
      %v1623 = vpop.permute.xlu0 %1622
      %1624 = vrot.lane.b32.xlu0 %v1534, 20
      %v1625 = vpop.permute.xlu0 %1624
      %1626 = vrot.lane.b32.xlu0 %v1535, 20
      %v1627 = vpop.permute.xlu0 %1626
      %1628 = vrot.lane.b32.xlu0 %v1536, 20
      %v1629 = vpop.permute.xlu0 %1628
      %1630 = vrot.lane.b32.xlu0 %v1537, 20
      %v1631 = vpop.permute.xlu0 %1630
      %1632 = vrot.lane.b32.xlu0 %v1538, 20
      %v1633 = vpop.permute.xlu0 %1632
      %1634 = vrot.lane.b32.xlu0 %v1539, 20
      %v1635 = vpop.permute.xlu0 %1634
      %vm1668 = vcmask 191648
      %1669 = vst.msk [vmem:[#allocation3] sm:$0xf] %vm1668, %v1573
      %1670 = vst.msk [vmem:[#allocation3 + $0x4] sm:$0xf] %vm1668, %v1575
      %1671 = vst.msk [vmem:[#allocation3 + $0x8] sm:$0xf] %vm1668, %v1577
      %1672 = vst.msk [vmem:[#allocation3 + $0xc] sm:$0xf] %vm1668, %v1579
      %1673 = vst.msk [vmem:[#allocation3 + $0x10] sm:$0xf] %vm1668, %v1581
      %1674 = vst.msk [vmem:[#allocation3 + $0x14] sm:$0xf] %vm1668, %v1583
      %1675 = vst.msk [vmem:[#allocation3 + $0x18] sm:$0xf] %vm1668, %v1585
      %1676 = vst.msk [vmem:[#allocation3 + $0x1c] sm:$0xf] %vm1668, %v1587
      %1677 = vst.msk [vmem:[#allocation3 + $0x20] sm:$0xf] %vm1668, %v1589
      %1678 = vst.msk [vmem:[#allocation3 + $0x24] sm:$0xf] %vm1668, %v1591
      %1679 = vst.msk [vmem:[#allocation3 + $0x28] sm:$0xf] %vm1668, %v1593
      %1680 = vst.msk [vmem:[#allocation3 + $0x2c] sm:$0xf] %vm1668, %v1595
      %1681 = vst.msk [vmem:[#allocation3 + $0x30] sm:$0xf] %vm1668, %v1597
      %1682 = vst.msk [vmem:[#allocation3 + $0x34] sm:$0xf] %vm1668, %v1599
      %1683 = vst.msk [vmem:[#allocation3 + $0x38] sm:$0xf] %vm1668, %v1601
      %1684 = vst.msk [vmem:[#allocation3 + $0x3c] sm:$0xf] %vm1668, %v1603
      %1685 = vst.msk [vmem:[#allocation3 + $0x40] sm:$0xf] %vm1668, %v1605
      %1686 = vst.msk [vmem:[#allocation3 + $0x44] sm:$0xf] %vm1668, %v1607
      %1687 = vst.msk [vmem:[#allocation3 + $0x48] sm:$0xf] %vm1668, %v1609
      %1688 = vst.msk [vmem:[#allocation3 + $0x4c] sm:$0xf] %vm1668, %v1611
      %1689 = vst.msk [vmem:[#allocation3 + $0x50] sm:$0xf] %vm1668, %v1613
      %1690 = vst.msk [vmem:[#allocation3 + $0x54] sm:$0xf] %vm1668, %v1615
      %1691 = vst.msk [vmem:[#allocation3 + $0x58] sm:$0xf] %vm1668, %v1617
      %1692 = vst.msk [vmem:[#allocation3 + $0x5c] sm:$0xf] %vm1668, %v1619
      %1693 = vst.msk [vmem:[#allocation3 + $0x60] sm:$0xf] %vm1668, %v1621
      %1694 = vst.msk [vmem:[#allocation3 + $0x64] sm:$0xf] %vm1668, %v1623
      %1695 = vst.msk [vmem:[#allocation3 + $0x68] sm:$0xf] %vm1668, %v1625
      %1696 = vst.msk [vmem:[#allocation3 + $0x6c] sm:$0xf] %vm1668, %v1627
      %1697 = vst.msk [vmem:[#allocation3 + $0x70] sm:$0xf] %vm1668, %v1629
      %1698 = vst.msk [vmem:[#allocation3 + $0x74] sm:$0xf] %vm1668, %v1631
      %1699 = vst.msk [vmem:[#allocation3 + $0x78] sm:$0xf] %vm1668, %v1633
      %1700 = vst.msk [vmem:[#allocation3 + $0x7c] sm:$0xf] %vm1668, %v1635
      %s1701 = scalar_lea.vmem [#allocation2], 48
      %v1702 = vld [vmem:[%s1701] sm:$0xff]
      %v1703 = vld [vmem:[%s1701 + $0x8] sm:$0xff]
      %v1704 = vld [vmem:[%s1701 + $0x18] sm:$0xff]
      %v1705 = vld [vmem:[%s1701 + $0x20] sm:$0xff]
      %v1706 = vld [vmem:[%s1701 + $0x30] sm:$0xff]
      %v1707 = vld [vmem:[%s1701 + $0x38] sm:$0xff]
      %v1708 = vld [vmem:[%s1701 + $0x48] sm:$0xff]
      %v1709 = vld [vmem:[%s1701 + $0x50] sm:$0xff]
      %v1710 = vld [vmem:[%s1701 + $0x60] sm:$0xff]
      %v1711 = vld [vmem:[%s1701 + $0x68] sm:$0xff]
      %v1712 = vld [vmem:[%s1701 + $0x78] sm:$0xff]
      %v1713 = vld [vmem:[%s1701 + $0x80] sm:$0xff]
      %v1714 = vld [vmem:[%s1701 + $0x90] sm:$0xff]
      %v1715 = vld [vmem:[%s1701 + $0x98] sm:$0xff]
      %v1716 = vld [vmem:[%s1701 + $0xa8] sm:$0xff]
      %v1717 = vld [vmem:[%s1701 + $0xb0] sm:$0xff]
      %v1718 = vld [vmem:[%s1701 + $0xc0] sm:$0xff]
      %v1719 = vld [vmem:[%s1701 + $0xc8] sm:$0xff]
      %v1720 = vld [vmem:[%s1701 + $0xd8] sm:$0xff]
      %v1721 = vld [vmem:[%s1701 + $0xe0] sm:$0xff]
      %v1722 = vld [vmem:[%s1701 + $0xf0] sm:$0xff]
      %v1723 = vld [vmem:[%s1701 + $0xf8] sm:$0xff]
      %v1724 = vld [vmem:[%s1701 + $0x108] sm:$0xff]
      %v1725 = vld [vmem:[%s1701 + $0x110] sm:$0xff]
      %v1726 = vld [vmem:[%s1701 + $0x120] sm:$0xff]
      %v1727 = vld [vmem:[%s1701 + $0x128] sm:$0xff]
      %v1728 = vld [vmem:[%s1701 + $0x138] sm:$0xff]
      %v1729 = vld [vmem:[%s1701 + $0x140] sm:$0xff]
      %v1730 = vld [vmem:[%s1701 + $0x150] sm:$0xff]
      %v1731 = vld [vmem:[%s1701 + $0x158] sm:$0xff]
      %v1732 = vld [vmem:[%s1701 + $0x168] sm:$0xff]
      %v1733 = vld [vmem:[%s1701 + $0x170] sm:$0xff]
      %v1734 = vpack.c.bf16 %v1702, %v1702
      %v1735 = vpack.c.bf16 %v1703, %v1703
      %v1736 = vpack.c.bf16 %v1704, %v1704
      %v1737 = vpack.c.bf16 %v1705, %v1705
      %v1738 = vpack.c.bf16 %v1706, %v1706
      %v1739 = vpack.c.bf16 %v1707, %v1707
      %v1740 = vpack.c.bf16 %v1708, %v1708
      %v1741 = vpack.c.bf16 %v1709, %v1709
      %v1742 = vpack.c.bf16 %v1710, %v1710
      %v1743 = vpack.c.bf16 %v1711, %v1711
      %v1744 = vpack.c.bf16 %v1712, %v1712
      %v1745 = vpack.c.bf16 %v1713, %v1713
      %v1746 = vpack.c.bf16 %v1714, %v1714
      %v1747 = vpack.c.bf16 %v1715, %v1715
      %v1748 = vpack.c.bf16 %v1716, %v1716
      %v1749 = vpack.c.bf16 %v1717, %v1717
      %v1750 = vpack.c.bf16 %v1718, %v1718
      %v1751 = vpack.c.bf16 %v1719, %v1719
      %v1752 = vpack.c.bf16 %v1720, %v1720
      %v1753 = vpack.c.bf16 %v1721, %v1721
      %v1754 = vpack.c.bf16 %v1722, %v1722
      %v1755 = vpack.c.bf16 %v1723, %v1723
      %v1756 = vpack.c.bf16 %v1724, %v1724
      %v1757 = vpack.c.bf16 %v1725, %v1725
      %v1758 = vpack.c.bf16 %v1726, %v1726
      %v1759 = vpack.c.bf16 %v1727, %v1727
      %v1760 = vpack.c.bf16 %v1728, %v1728
      %v1761 = vpack.c.bf16 %v1729, %v1729
      %v1762 = vpack.c.bf16 %v1730, %v1730
      %v1763 = vpack.c.bf16 %v1731, %v1731
      %v1764 = vpack.c.bf16 %v1732, %v1732
      %v1765 = vpack.c.bf16 %v1733, %v1733
      %1798 = vrot.lane.b32.xlu0 %v1734, 24
      %v1799 = vpop.permute.xlu0 %1798
      %1800 = vrot.lane.b32.xlu0 %v1735, 24
      %v1801 = vpop.permute.xlu0 %1800
      %1802 = vrot.lane.b32.xlu0 %v1736, 24
      %v1803 = vpop.permute.xlu0 %1802
      %1804 = vrot.lane.b32.xlu0 %v1737, 24
      %v1805 = vpop.permute.xlu0 %1804
      %1806 = vrot.lane.b32.xlu0 %v1738, 24
      %v1807 = vpop.permute.xlu0 %1806
      %1808 = vrot.lane.b32.xlu0 %v1739, 24
      %v1809 = vpop.permute.xlu0 %1808
      %1810 = vrot.lane.b32.xlu0 %v1740, 24
      %v1811 = vpop.permute.xlu0 %1810
      %1812 = vrot.lane.b32.xlu0 %v1741, 24
      %v1813 = vpop.permute.xlu0 %1812
      %1814 = vrot.lane.b32.xlu0 %v1742, 24
      %v1815 = vpop.permute.xlu0 %1814
      %1816 = vrot.lane.b32.xlu0 %v1743, 24
      %v1817 = vpop.permute.xlu0 %1816
      %1818 = vrot.lane.b32.xlu0 %v1744, 24
      %v1819 = vpop.permute.xlu0 %1818
      %1820 = vrot.lane.b32.xlu0 %v1745, 24
      %v1821 = vpop.permute.xlu0 %1820
      %1822 = vrot.lane.b32.xlu0 %v1746, 24
      %v1823 = vpop.permute.xlu0 %1822
      %1824 = vrot.lane.b32.xlu0 %v1747, 24
      %v1825 = vpop.permute.xlu0 %1824
      %1826 = vrot.lane.b32.xlu0 %v1748, 24
      %v1827 = vpop.permute.xlu0 %1826
      %1828 = vrot.lane.b32.xlu0 %v1749, 24
      %v1829 = vpop.permute.xlu0 %1828
      %1830 = vrot.lane.b32.xlu0 %v1750, 24
      %v1831 = vpop.permute.xlu0 %1830
      %1832 = vrot.lane.b32.xlu0 %v1751, 24
      %v1833 = vpop.permute.xlu0 %1832
      %1834 = vrot.lane.b32.xlu0 %v1752, 24
      %v1835 = vpop.permute.xlu0 %1834
      %1836 = vrot.lane.b32.xlu0 %v1753, 24
      %v1837 = vpop.permute.xlu0 %1836
      %1838 = vrot.lane.b32.xlu0 %v1754, 24
      %v1839 = vpop.permute.xlu0 %1838
      %1840 = vrot.lane.b32.xlu0 %v1755, 24
      %v1841 = vpop.permute.xlu0 %1840
      %1842 = vrot.lane.b32.xlu0 %v1756, 24
      %v1843 = vpop.permute.xlu0 %1842
      %1844 = vrot.lane.b32.xlu0 %v1757, 24
      %v1845 = vpop.permute.xlu0 %1844
      %1846 = vrot.lane.b32.xlu0 %v1758, 24
      %v1847 = vpop.permute.xlu0 %1846
      %1848 = vrot.lane.b32.xlu0 %v1759, 24
      %v1849 = vpop.permute.xlu0 %1848
      %1850 = vrot.lane.b32.xlu0 %v1760, 24
      %v1851 = vpop.permute.xlu0 %1850
      %1852 = vrot.lane.b32.xlu0 %v1761, 24
      %v1853 = vpop.permute.xlu0 %1852
      %1854 = vrot.lane.b32.xlu0 %v1762, 24
      %v1855 = vpop.permute.xlu0 %1854
      %1856 = vrot.lane.b32.xlu0 %v1763, 24
      %v1857 = vpop.permute.xlu0 %1856
      %1858 = vrot.lane.b32.xlu0 %v1764, 24
      %v1859 = vpop.permute.xlu0 %1858
      %1860 = vrot.lane.b32.xlu0 %v1765, 24
      %v1861 = vpop.permute.xlu0 %1860
      %vm1894 = vcmask 224448
      %1895 = vst.msk [vmem:[#allocation3] sm:$0xf] %vm1894, %v1799
      %1896 = vst.msk [vmem:[#allocation3 + $0x4] sm:$0xf] %vm1894, %v1801
      %1897 = vst.msk [vmem:[#allocation3 + $0x8] sm:$0xf] %vm1894, %v1803
      %1898 = vst.msk [vmem:[#allocation3 + $0xc] sm:$0xf] %vm1894, %v1805
      %1899 = vst.msk [vmem:[#allocation3 + $0x10] sm:$0xf] %vm1894, %v1807
      %1900 = vst.msk [vmem:[#allocation3 + $0x14] sm:$0xf] %vm1894, %v1809
      %1901 = vst.msk [vmem:[#allocation3 + $0x18] sm:$0xf] %vm1894, %v1811
      %1902 = vst.msk [vmem:[#allocation3 + $0x1c] sm:$0xf] %vm1894, %v1813
      %1903 = vst.msk [vmem:[#allocation3 + $0x20] sm:$0xf] %vm1894, %v1815
      %1904 = vst.msk [vmem:[#allocation3 + $0x24] sm:$0xf] %vm1894, %v1817
      %1905 = vst.msk [vmem:[#allocation3 + $0x28] sm:$0xf] %vm1894, %v1819
      %1906 = vst.msk [vmem:[#allocation3 + $0x2c] sm:$0xf] %vm1894, %v1821
      %1907 = vst.msk [vmem:[#allocation3 + $0x30] sm:$0xf] %vm1894, %v1823
      %1908 = vst.msk [vmem:[#allocation3 + $0x34] sm:$0xf] %vm1894, %v1825
      %1909 = vst.msk [vmem:[#allocation3 + $0x38] sm:$0xf] %vm1894, %v1827
      %1910 = vst.msk [vmem:[#allocation3 + $0x3c] sm:$0xf] %vm1894, %v1829
      %1911 = vst.msk [vmem:[#allocation3 + $0x40] sm:$0xf] %vm1894, %v1831
      %1912 = vst.msk [vmem:[#allocation3 + $0x44] sm:$0xf] %vm1894, %v1833
      %1913 = vst.msk [vmem:[#allocation3 + $0x48] sm:$0xf] %vm1894, %v1835
      %1914 = vst.msk [vmem:[#allocation3 + $0x4c] sm:$0xf] %vm1894, %v1837
      %1915 = vst.msk [vmem:[#allocation3 + $0x50] sm:$0xf] %vm1894, %v1839
      %1916 = vst.msk [vmem:[#allocation3 + $0x54] sm:$0xf] %vm1894, %v1841
      %1917 = vst.msk [vmem:[#allocation3 + $0x58] sm:$0xf] %vm1894, %v1843
      %1918 = vst.msk [vmem:[#allocation3 + $0x5c] sm:$0xf] %vm1894, %v1845
      %1919 = vst.msk [vmem:[#allocation3 + $0x60] sm:$0xf] %vm1894, %v1847
      %1920 = vst.msk [vmem:[#allocation3 + $0x64] sm:$0xf] %vm1894, %v1849
      %1921 = vst.msk [vmem:[#allocation3 + $0x68] sm:$0xf] %vm1894, %v1851
      %1922 = vst.msk [vmem:[#allocation3 + $0x6c] sm:$0xf] %vm1894, %v1853
      %1923 = vst.msk [vmem:[#allocation3 + $0x70] sm:$0xf] %vm1894, %v1855
      %1924 = vst.msk [vmem:[#allocation3 + $0x74] sm:$0xf] %vm1894, %v1857
      %1925 = vst.msk [vmem:[#allocation3 + $0x78] sm:$0xf] %vm1894, %v1859
      %1926 = vst.msk [vmem:[#allocation3 + $0x7c] sm:$0xf] %vm1894, %v1861
      %v1927 = vld [vmem:[%s1701 + $0x1] sm:$0xff]
      %v1928 = vld [vmem:[%s1701 + $0x9] sm:$0xff]
      %v1929 = vld [vmem:[%s1701 + $0x19] sm:$0xff]
      %v1930 = vld [vmem:[%s1701 + $0x21] sm:$0xff]
      %v1931 = vld [vmem:[%s1701 + $0x31] sm:$0xff]
      %v1932 = vld [vmem:[%s1701 + $0x39] sm:$0xff]
      %v1933 = vld [vmem:[%s1701 + $0x49] sm:$0xff]
      %v1934 = vld [vmem:[%s1701 + $0x51] sm:$0xff]
      %v1935 = vld [vmem:[%s1701 + $0x61] sm:$0xff]
      %v1936 = vld [vmem:[%s1701 + $0x69] sm:$0xff]
      %v1937 = vld [vmem:[%s1701 + $0x79] sm:$0xff]
      %v1938 = vld [vmem:[%s1701 + $0x81] sm:$0xff]
      %v1939 = vld [vmem:[%s1701 + $0x91] sm:$0xff]
      %v1940 = vld [vmem:[%s1701 + $0x99] sm:$0xff]
      %v1941 = vld [vmem:[%s1701 + $0xa9] sm:$0xff]
      %v1942 = vld [vmem:[%s1701 + $0xb1] sm:$0xff]
      %v1943 = vld [vmem:[%s1701 + $0xc1] sm:$0xff]
      %v1944 = vld [vmem:[%s1701 + $0xc9] sm:$0xff]
      %v1945 = vld [vmem:[%s1701 + $0xd9] sm:$0xff]
      %v1946 = vld [vmem:[%s1701 + $0xe1] sm:$0xff]
      %v1947 = vld [vmem:[%s1701 + $0xf1] sm:$0xff]
      %v1948 = vld [vmem:[%s1701 + $0xf9] sm:$0xff]
      %v1949 = vld [vmem:[%s1701 + $0x109] sm:$0xff]
      %v1950 = vld [vmem:[%s1701 + $0x111] sm:$0xff]
      %v1951 = vld [vmem:[%s1701 + $0x121] sm:$0xff]
      %v1952 = vld [vmem:[%s1701 + $0x129] sm:$0xff]
      %v1953 = vld [vmem:[%s1701 + $0x139] sm:$0xff]
      %v1954 = vld [vmem:[%s1701 + $0x141] sm:$0xff]
      %v1955 = vld [vmem:[%s1701 + $0x151] sm:$0xff]
      %v1956 = vld [vmem:[%s1701 + $0x159] sm:$0xff]
      %v1957 = vld [vmem:[%s1701 + $0x169] sm:$0xff]
      %v1958 = vld [vmem:[%s1701 + $0x171] sm:$0xff]
      %v1959 = vpack.c.bf16 %v1927, %v1927
      %v1960 = vpack.c.bf16 %v1928, %v1928
      %v1961 = vpack.c.bf16 %v1929, %v1929
      %v1962 = vpack.c.bf16 %v1930, %v1930
      %v1963 = vpack.c.bf16 %v1931, %v1931
      %v1964 = vpack.c.bf16 %v1932, %v1932
      %v1965 = vpack.c.bf16 %v1933, %v1933
      %v1966 = vpack.c.bf16 %v1934, %v1934
      %v1967 = vpack.c.bf16 %v1935, %v1935
      %v1968 = vpack.c.bf16 %v1936, %v1936
      %v1969 = vpack.c.bf16 %v1937, %v1937
      %v1970 = vpack.c.bf16 %v1938, %v1938
      %v1971 = vpack.c.bf16 %v1939, %v1939
      %v1972 = vpack.c.bf16 %v1940, %v1940
      %v1973 = vpack.c.bf16 %v1941, %v1941
      %v1974 = vpack.c.bf16 %v1942, %v1942
      %v1975 = vpack.c.bf16 %v1943, %v1943
      %v1976 = vpack.c.bf16 %v1944, %v1944
      %v1977 = vpack.c.bf16 %v1945, %v1945
      %v1978 = vpack.c.bf16 %v1946, %v1946
      %v1979 = vpack.c.bf16 %v1947, %v1947
      %v1980 = vpack.c.bf16 %v1948, %v1948
      %v1981 = vpack.c.bf16 %v1949, %v1949
      %v1982 = vpack.c.bf16 %v1950, %v1950
      %v1983 = vpack.c.bf16 %v1951, %v1951
      %v1984 = vpack.c.bf16 %v1952, %v1952
      %v1985 = vpack.c.bf16 %v1953, %v1953
      %v1986 = vpack.c.bf16 %v1954, %v1954
      %v1987 = vpack.c.bf16 %v1955, %v1955
      %v1988 = vpack.c.bf16 %v1956, %v1956
      %v1989 = vpack.c.bf16 %v1957, %v1957
      %v1990 = vpack.c.bf16 %v1958, %v1958
      %2023 = vrot.lane.b32.xlu0 %v1959, 28
      %v2024 = vpop.permute.xlu0 %2023
      %2025 = vrot.lane.b32.xlu0 %v1960, 28
      %v2026 = vpop.permute.xlu0 %2025
      %2027 = vrot.lane.b32.xlu0 %v1961, 28
      %v2028 = vpop.permute.xlu0 %2027
      %2029 = vrot.lane.b32.xlu0 %v1962, 28
      %v2030 = vpop.permute.xlu0 %2029
      %2031 = vrot.lane.b32.xlu0 %v1963, 28
      %v2032 = vpop.permute.xlu0 %2031
      %2033 = vrot.lane.b32.xlu0 %v1964, 28
      %v2034 = vpop.permute.xlu0 %2033
      %2035 = vrot.lane.b32.xlu0 %v1965, 28
      %v2036 = vpop.permute.xlu0 %2035
      %2037 = vrot.lane.b32.xlu0 %v1966, 28
      %v2038 = vpop.permute.xlu0 %2037
      %2039 = vrot.lane.b32.xlu0 %v1967, 28
      %v2040 = vpop.permute.xlu0 %2039
      %2041 = vrot.lane.b32.xlu0 %v1968, 28
      %v2042 = vpop.permute.xlu0 %2041
      %2043 = vrot.lane.b32.xlu0 %v1969, 28
      %v2044 = vpop.permute.xlu0 %2043
      %2045 = vrot.lane.b32.xlu0 %v1970, 28
      %v2046 = vpop.permute.xlu0 %2045
      %2047 = vrot.lane.b32.xlu0 %v1971, 28
      %v2048 = vpop.permute.xlu0 %2047
      %2049 = vrot.lane.b32.xlu0 %v1972, 28
      %v2050 = vpop.permute.xlu0 %2049
      %2051 = vrot.lane.b32.xlu0 %v1973, 28
      %v2052 = vpop.permute.xlu0 %2051
      %2053 = vrot.lane.b32.xlu0 %v1974, 28
      %v2054 = vpop.permute.xlu0 %2053
      %2055 = vrot.lane.b32.xlu0 %v1975, 28
      %v2056 = vpop.permute.xlu0 %2055
      %2057 = vrot.lane.b32.xlu0 %v1976, 28
      %v2058 = vpop.permute.xlu0 %2057
      %2059 = vrot.lane.b32.xlu0 %v1977, 28
      %v2060 = vpop.permute.xlu0 %2059
      %2061 = vrot.lane.b32.xlu0 %v1978, 28
      %v2062 = vpop.permute.xlu0 %2061
      %2063 = vrot.lane.b32.xlu0 %v1979, 28
      %v2064 = vpop.permute.xlu0 %2063
      %2065 = vrot.lane.b32.xlu0 %v1980, 28
      %v2066 = vpop.permute.xlu0 %2065
      %2067 = vrot.lane.b32.xlu0 %v1981, 28
      %v2068 = vpop.permute.xlu0 %2067
      %2069 = vrot.lane.b32.xlu0 %v1982, 28
      %v2070 = vpop.permute.xlu0 %2069
      %2071 = vrot.lane.b32.xlu0 %v1983, 28
      %v2072 = vpop.permute.xlu0 %2071
      %2073 = vrot.lane.b32.xlu0 %v1984, 28
      %v2074 = vpop.permute.xlu0 %2073
      %2075 = vrot.lane.b32.xlu0 %v1985, 28
      %v2076 = vpop.permute.xlu0 %2075
      %2077 = vrot.lane.b32.xlu0 %v1986, 28
      %v2078 = vpop.permute.xlu0 %2077
      %2079 = vrot.lane.b32.xlu0 %v1987, 28
      %v2080 = vpop.permute.xlu0 %2079
      %2081 = vrot.lane.b32.xlu0 %v1988, 28
      %v2082 = vpop.permute.xlu0 %2081
      %2083 = vrot.lane.b32.xlu0 %v1989, 28
      %v2084 = vpop.permute.xlu0 %2083
      %2085 = vrot.lane.b32.xlu0 %v1990, 28
      %v2086 = vpop.permute.xlu0 %2085
      %vm2119 = vcmask 257248
      %2120 = vst.msk [vmem:[#allocation3] sm:$0xf] %vm2119, %v2024
      %2121 = vst.msk [vmem:[#allocation3 + $0x4] sm:$0xf] %vm2119, %v2026
      %2122 = vst.msk [vmem:[#allocation3 + $0x8] sm:$0xf] %vm2119, %v2028
      %2123 = vst.msk [vmem:[#allocation3 + $0xc] sm:$0xf] %vm2119, %v2030
      %2124 = vst.msk [vmem:[#allocation3 + $0x10] sm:$0xf] %vm2119, %v2032
      %2125 = vst.msk [vmem:[#allocation3 + $0x14] sm:$0xf] %vm2119, %v2034
      %2126 = vst.msk [vmem:[#allocation3 + $0x18] sm:$0xf] %vm2119, %v2036
      %2127 = vst.msk [vmem:[#allocation3 + $0x1c] sm:$0xf] %vm2119, %v2038
      %2128 = vst.msk [vmem:[#allocation3 + $0x20] sm:$0xf] %vm2119, %v2040
      %2129 = vst.msk [vmem:[#allocation3 + $0x24] sm:$0xf] %vm2119, %v2042
      %2130 = vst.msk [vmem:[#allocation3 + $0x28] sm:$0xf] %vm2119, %v2044
      %2131 = vst.msk [vmem:[#allocation3 + $0x2c] sm:$0xf] %vm2119, %v2046
      %2132 = vst.msk [vmem:[#allocation3 + $0x30] sm:$0xf] %vm2119, %v2048
      %2133 = vst.msk [vmem:[#allocation3 + $0x34] sm:$0xf] %vm2119, %v2050
      %2134 = vst.msk [vmem:[#allocation3 + $0x38] sm:$0xf] %vm2119, %v2052
      %2135 = vst.msk [vmem:[#allocation3 + $0x3c] sm:$0xf] %vm2119, %v2054
      %2136 = vst.msk [vmem:[#allocation3 + $0x40] sm:$0xf] %vm2119, %v2056
      %2137 = vst.msk [vmem:[#allocation3 + $0x44] sm:$0xf] %vm2119, %v2058
      %2138 = vst.msk [vmem:[#allocation3 + $0x48] sm:$0xf] %vm2119, %v2060
      %2139 = vst.msk [vmem:[#allocation3 + $0x4c] sm:$0xf] %vm2119, %v2062
      %2140 = vst.msk [vmem:[#allocation3 + $0x50] sm:$0xf] %vm2119, %v2064
      %2141 = vst.msk [vmem:[#allocation3 + $0x54] sm:$0xf] %vm2119, %v2066
      %2142 = vst.msk [vmem:[#allocation3 + $0x58] sm:$0xf] %vm2119, %v2068
      %2143 = vst.msk [vmem:[#allocation3 + $0x5c] sm:$0xf] %vm2119, %v2070
      %2144 = vst.msk [vmem:[#allocation3 + $0x60] sm:$0xf] %vm2119, %v2072
      %2145 = vst.msk [vmem:[#allocation3 + $0x64] sm:$0xf] %vm2119, %v2074
      %2146 = vst.msk [vmem:[#allocation3 + $0x68] sm:$0xf] %vm2119, %v2076
      %2147 = vst.msk [vmem:[#allocation3 + $0x6c] sm:$0xf] %vm2119, %v2078
      %2148 = vst.msk [vmem:[#allocation3 + $0x70] sm:$0xf] %vm2119, %v2080
      %2149 = vst.msk [vmem:[#allocation3 + $0x74] sm:$0xf] %vm2119, %v2082
      %2150 = vst.msk [vmem:[#allocation3 + $0x78] sm:$0xf] %vm2119, %v2084
      %2151 = vst.msk [vmem:[#allocation3 + $0x7c] sm:$0xf] %vm2119, %v2086
      %v2152 = vld [vmem:[%s1701 + $0x2] sm:$0xff]
      %v2153 = vld [vmem:[%s1701 + $0xa] sm:$0xff]
      %v2154 = vld [vmem:[%s1701 + $0x1a] sm:$0xff]
      %v2155 = vld [vmem:[%s1701 + $0x22] sm:$0xff]
      %v2156 = vld [vmem:[%s1701 + $0x32] sm:$0xff]
      %v2157 = vld [vmem:[%s1701 + $0x3a] sm:$0xff]
      %v2158 = vld [vmem:[%s1701 + $0x4a] sm:$0xff]
      %v2159 = vld [vmem:[%s1701 + $0x52] sm:$0xff]
      %v2160 = vld [vmem:[%s1701 + $0x62] sm:$0xff]
      %v2161 = vld [vmem:[%s1701 + $0x6a] sm:$0xff]
      %v2162 = vld [vmem:[%s1701 + $0x7a] sm:$0xff]
      %v2163 = vld [vmem:[%s1701 + $0x82] sm:$0xff]
      %v2164 = vld [vmem:[%s1701 + $0x92] sm:$0xff]
      %v2165 = vld [vmem:[%s1701 + $0x9a] sm:$0xff]
      %v2166 = vld [vmem:[%s1701 + $0xaa] sm:$0xff]
      %v2167 = vld [vmem:[%s1701 + $0xb2] sm:$0xff]
      %v2168 = vld [vmem:[%s1701 + $0xc2] sm:$0xff]
      %v2169 = vld [vmem:[%s1701 + $0xca] sm:$0xff]
      %v2170 = vld [vmem:[%s1701 + $0xda] sm:$0xff]
      %v2171 = vld [vmem:[%s1701 + $0xe2] sm:$0xff]
      %v2172 = vld [vmem:[%s1701 + $0xf2] sm:$0xff]
      %v2173 = vld [vmem:[%s1701 + $0xfa] sm:$0xff]
      %v2174 = vld [vmem:[%s1701 + $0x10a] sm:$0xff]
      %v2175 = vld [vmem:[%s1701 + $0x112] sm:$0xff]
      %v2176 = vld [vmem:[%s1701 + $0x122] sm:$0xff]
      %v2177 = vld [vmem:[%s1701 + $0x12a] sm:$0xff]
      %v2178 = vld [vmem:[%s1701 + $0x13a] sm:$0xff]
      %v2179 = vld [vmem:[%s1701 + $0x142] sm:$0xff]
      %v2180 = vld [vmem:[%s1701 + $0x152] sm:$0xff]
      %v2181 = vld [vmem:[%s1701 + $0x15a] sm:$0xff]
      %v2182 = vld [vmem:[%s1701 + $0x16a] sm:$0xff]
      %v2183 = vld [vmem:[%s1701 + $0x172] sm:$0xff]
      %v2184 = vpack.c.bf16 %v2152, %v2152
      %v2185 = vpack.c.bf16 %v2153, %v2153
      %v2186 = vpack.c.bf16 %v2154, %v2154
      %v2187 = vpack.c.bf16 %v2155, %v2155
      %v2188 = vpack.c.bf16 %v2156, %v2156
      %v2189 = vpack.c.bf16 %v2157, %v2157
      %v2190 = vpack.c.bf16 %v2158, %v2158
      %v2191 = vpack.c.bf16 %v2159, %v2159
      %v2192 = vpack.c.bf16 %v2160, %v2160
      %v2193 = vpack.c.bf16 %v2161, %v2161
      %v2194 = vpack.c.bf16 %v2162, %v2162
      %v2195 = vpack.c.bf16 %v2163, %v2163
      %v2196 = vpack.c.bf16 %v2164, %v2164
      %v2197 = vpack.c.bf16 %v2165, %v2165
      %v2198 = vpack.c.bf16 %v2166, %v2166
      %v2199 = vpack.c.bf16 %v2167, %v2167
      %v2200 = vpack.c.bf16 %v2168, %v2168
      %v2201 = vpack.c.bf16 %v2169, %v2169
      %v2202 = vpack.c.bf16 %v2170, %v2170
      %v2203 = vpack.c.bf16 %v2171, %v2171
      %v2204 = vpack.c.bf16 %v2172, %v2172
      %v2205 = vpack.c.bf16 %v2173, %v2173
      %v2206 = vpack.c.bf16 %v2174, %v2174
      %v2207 = vpack.c.bf16 %v2175, %v2175
      %v2208 = vpack.c.bf16 %v2176, %v2176
      %v2209 = vpack.c.bf16 %v2177, %v2177
      %v2210 = vpack.c.bf16 %v2178, %v2178
      %v2211 = vpack.c.bf16 %v2179, %v2179
      %v2212 = vpack.c.bf16 %v2180, %v2180
      %v2213 = vpack.c.bf16 %v2181, %v2181
      %v2214 = vpack.c.bf16 %v2182, %v2182
      %v2215 = vpack.c.bf16 %v2183, %v2183
      %2248 = vrot.lane.b32.xlu0 %v2184, 32
      %v2249 = vpop.permute.xlu0 %2248
      %2250 = vrot.lane.b32.xlu0 %v2185, 32
      %v2251 = vpop.permute.xlu0 %2250
      %2252 = vrot.lane.b32.xlu0 %v2186, 32
      %v2253 = vpop.permute.xlu0 %2252
      %2254 = vrot.lane.b32.xlu0 %v2187, 32
      %v2255 = vpop.permute.xlu0 %2254
      %2256 = vrot.lane.b32.xlu0 %v2188, 32
      %v2257 = vpop.permute.xlu0 %2256
      %2258 = vrot.lane.b32.xlu0 %v2189, 32
      %v2259 = vpop.permute.xlu0 %2258
      %2260 = vrot.lane.b32.xlu0 %v2190, 32
      %v2261 = vpop.permute.xlu0 %2260
      %2262 = vrot.lane.b32.xlu0 %v2191, 32
      %v2263 = vpop.permute.xlu0 %2262
      %2264 = vrot.lane.b32.xlu0 %v2192, 32
      %v2265 = vpop.permute.xlu0 %2264
      %2266 = vrot.lane.b32.xlu0 %v2193, 32
      %v2267 = vpop.permute.xlu0 %2266
      %2268 = vrot.lane.b32.xlu0 %v2194, 32
      %v2269 = vpop.permute.xlu0 %2268
      %2270 = vrot.lane.b32.xlu0 %v2195, 32
      %v2271 = vpop.permute.xlu0 %2270
      %2272 = vrot.lane.b32.xlu0 %v2196, 32
      %v2273 = vpop.permute.xlu0 %2272
      %2274 = vrot.lane.b32.xlu0 %v2197, 32
      %v2275 = vpop.permute.xlu0 %2274
      %2276 = vrot.lane.b32.xlu0 %v2198, 32
      %v2277 = vpop.permute.xlu0 %2276
      %2278 = vrot.lane.b32.xlu0 %v2199, 32
      %v2279 = vpop.permute.xlu0 %2278
      %2280 = vrot.lane.b32.xlu0 %v2200, 32
      %v2281 = vpop.permute.xlu0 %2280
      %2282 = vrot.lane.b32.xlu0 %v2201, 32
      %v2283 = vpop.permute.xlu0 %2282
      %2284 = vrot.lane.b32.xlu0 %v2202, 32
      %v2285 = vpop.permute.xlu0 %2284
      %2286 = vrot.lane.b32.xlu0 %v2203, 32
      %v2287 = vpop.permute.xlu0 %2286
      %2288 = vrot.lane.b32.xlu0 %v2204, 32
      %v2289 = vpop.permute.xlu0 %2288
      %2290 = vrot.lane.b32.xlu0 %v2205, 32
      %v2291 = vpop.permute.xlu0 %2290
      %2292 = vrot.lane.b32.xlu0 %v2206, 32
      %v2293 = vpop.permute.xlu0 %2292
      %2294 = vrot.lane.b32.xlu0 %v2207, 32
      %v2295 = vpop.permute.xlu0 %2294
      %2296 = vrot.lane.b32.xlu0 %v2208, 32
      %v2297 = vpop.permute.xlu0 %2296
      %2298 = vrot.lane.b32.xlu0 %v2209, 32
      %v2299 = vpop.permute.xlu0 %2298
      %2300 = vrot.lane.b32.xlu0 %v2210, 32
      %v2301 = vpop.permute.xlu0 %2300
      %2302 = vrot.lane.b32.xlu0 %v2211, 32
      %v2303 = vpop.permute.xlu0 %2302
      %2304 = vrot.lane.b32.xlu0 %v2212, 32
      %v2305 = vpop.permute.xlu0 %2304
      %2306 = vrot.lane.b32.xlu0 %v2213, 32
      %v2307 = vpop.permute.xlu0 %2306
      %2308 = vrot.lane.b32.xlu0 %v2214, 32
      %v2309 = vpop.permute.xlu0 %2308
      %2310 = vrot.lane.b32.xlu0 %v2215, 32
      %v2311 = vpop.permute.xlu0 %2310
      %vm2344 = vcmask 290048
      %2345 = vst.msk [vmem:[#allocation3] sm:$0xf] %vm2344, %v2249
      %2346 = vst.msk [vmem:[#allocation3 + $0x4] sm:$0xf] %vm2344, %v2251
      %2347 = vst.msk [vmem:[#allocation3 + $0x8] sm:$0xf] %vm2344, %v2253
      %2348 = vst.msk [vmem:[#allocation3 + $0xc] sm:$0xf] %vm2344, %v2255
      %2349 = vst.msk [vmem:[#allocation3 + $0x10] sm:$0xf] %vm2344, %v2257
      %2350 = vst.msk [vmem:[#allocation3 + $0x14] sm:$0xf] %vm2344, %v2259
      %2351 = vst.msk [vmem:[#allocation3 + $0x18] sm:$0xf] %vm2344, %v2261
      %2352 = vst.msk [vmem:[#allocation3 + $0x1c] sm:$0xf] %vm2344, %v2263
      %2353 = vst.msk [vmem:[#allocation3 + $0x20] sm:$0xf] %vm2344, %v2265
      %2354 = vst.msk [vmem:[#allocation3 + $0x24] sm:$0xf] %vm2344, %v2267
      %2355 = vst.msk [vmem:[#allocation3 + $0x28] sm:$0xf] %vm2344, %v2269
      %2356 = vst.msk [vmem:[#allocation3 + $0x2c] sm:$0xf] %vm2344, %v2271
      %2357 = vst.msk [vmem:[#allocation3 + $0x30] sm:$0xf] %vm2344, %v2273
      %2358 = vst.msk [vmem:[#allocation3 + $0x34] sm:$0xf] %vm2344, %v2275
      %2359 = vst.msk [vmem:[#allocation3 + $0x38] sm:$0xf] %vm2344, %v2277
      %2360 = vst.msk [vmem:[#allocation3 + $0x3c] sm:$0xf] %vm2344, %v2279
      %2361 = vst.msk [vmem:[#allocation3 + $0x40] sm:$0xf] %vm2344, %v2281
      %2362 = vst.msk [vmem:[#allocation3 + $0x44] sm:$0xf] %vm2344, %v2283
      %2363 = vst.msk [vmem:[#allocation3 + $0x48] sm:$0xf] %vm2344, %v2285
      %2364 = vst.msk [vmem:[#allocation3 + $0x4c] sm:$0xf] %vm2344, %v2287
      %2365 = vst.msk [vmem:[#allocation3 + $0x50] sm:$0xf] %vm2344, %v2289
      %2366 = vst.msk [vmem:[#allocation3 + $0x54] sm:$0xf] %vm2344, %v2291
      %2367 = vst.msk [vmem:[#allocation3 + $0x58] sm:$0xf] %vm2344, %v2293
      %2368 = vst.msk [vmem:[#allocation3 + $0x5c] sm:$0xf] %vm2344, %v2295
      %2369 = vst.msk [vmem:[#allocation3 + $0x60] sm:$0xf] %vm2344, %v2297
      %2370 = vst.msk [vmem:[#allocation3 + $0x64] sm:$0xf] %vm2344, %v2299
      %2371 = vst.msk [vmem:[#allocation3 + $0x68] sm:$0xf] %vm2344, %v2301
      %2372 = vst.msk [vmem:[#allocation3 + $0x6c] sm:$0xf] %vm2344, %v2303
      %2373 = vst.msk [vmem:[#allocation3 + $0x70] sm:$0xf] %vm2344, %v2305
      %2374 = vst.msk [vmem:[#allocation3 + $0x74] sm:$0xf] %vm2344, %v2307
      %2375 = vst.msk [vmem:[#allocation3 + $0x78] sm:$0xf] %vm2344, %v2309
      %2376 = vst.msk [vmem:[#allocation3 + $0x7c] sm:$0xf] %vm2344, %v2311
      %v2377 = vld [vmem:[#allocation3] sm:$0xf]
      %v2378 = vld [vmem:[#allocation3 + $0x4] sm:$0xf]
      %v2379 = vld [vmem:[#allocation3 + $0x8] sm:$0xf]
      %v2380 = vld [vmem:[#allocation3 + $0xc] sm:$0xf]
      %v2381 = vld [vmem:[#allocation3 + $0x10] sm:$0xf]
      %v2382 = vld [vmem:[#allocation3 + $0x14] sm:$0xf]
      %v2383 = vld [vmem:[#allocation3 + $0x18] sm:$0xf]
      %v2384 = vld [vmem:[#allocation3 + $0x1c] sm:$0xf]
      %v2385 = vld [vmem:[#allocation3 + $0x20] sm:$0xf]
      %v2386 = vld [vmem:[#allocation3 + $0x24] sm:$0xf]
      %v2387 = vld [vmem:[#allocation3 + $0x28] sm:$0xf]
      %v2388 = vld [vmem:[#allocation3 + $0x2c] sm:$0xf]
      %v2389 = vld [vmem:[#allocation3 + $0x30] sm:$0xf]
      %v2390 = vld [vmem:[#allocation3 + $0x34] sm:$0xf]
      %v2391 = vld [vmem:[#allocation3 + $0x38] sm:$0xf]
      %v2392 = vld [vmem:[#allocation3 + $0x3c] sm:$0xf]
      %v2393 = vld [vmem:[#allocation3 + $0x40] sm:$0xf]
      %v2394 = vld [vmem:[#allocation3 + $0x44] sm:$0xf]
      %v2395 = vld [vmem:[#allocation3 + $0x48] sm:$0xf]
      %v2396 = vld [vmem:[#allocation3 + $0x4c] sm:$0xf]
      %v2397 = vld [vmem:[#allocation3 + $0x50] sm:$0xf]
      %v2398 = vld [vmem:[#allocation3 + $0x54] sm:$0xf]
      %v2399 = vld [vmem:[#allocation3 + $0x58] sm:$0xf]
      %v2400 = vld [vmem:[#allocation3 + $0x5c] sm:$0xf]
      %v2401 = vld [vmem:[#allocation3 + $0x60] sm:$0xf]
      %v2402 = vld [vmem:[#allocation3 + $0x64] sm:$0xf]
      %v2403 = vld [vmem:[#allocation3 + $0x68] sm:$0xf]
      %v2404 = vld [vmem:[#allocation3 + $0x6c] sm:$0xf]
      %v2405 = vld [vmem:[#allocation3 + $0x70] sm:$0xf]
      %v2406 = vld [vmem:[#allocation3 + $0x74] sm:$0xf]
      %v2407 = vld [vmem:[#allocation3 + $0x78] sm:$0xf]
      %v2408 = vld [vmem:[#allocation3 + $0x7c] sm:$0xf]
      %v2409 = vld [vmem:[%s1] sm:$0xf]
      %v2410 = vld [vmem:[%s1 + $0x4] sm:$0xf]
      %v2411 = vld [vmem:[%s1 + $0x8] sm:$0xf]
      %v2412 = vld [vmem:[%s1 + $0xc] sm:$0xf]
      %v2413 = vld [vmem:[%s1 + $0x10] sm:$0x3]
      %v2446 = vunpack.c.l.b16 %v2377
      %v2447 = vunpack.c.l.b16 %v2378
      %v2448 = vunpack.c.l.b16 %v2379
      %v2449 = vunpack.c.l.b16 %v2380
      %v2450 = vunpack.c.l.b16 %v2381
      %v2451 = vunpack.c.l.b16 %v2382
      %v2452 = vunpack.c.l.b16 %v2383
      %v2453 = vunpack.c.l.b16 %v2384
      %v2454 = vunpack.c.l.b16 %v2385
      %v2455 = vunpack.c.l.b16 %v2386
      %v2456 = vunpack.c.l.b16 %v2387
      %v2457 = vunpack.c.l.b16 %v2388
      %v2458 = vunpack.c.l.b16 %v2389
      %v2459 = vunpack.c.l.b16 %v2390
      %v2460 = vunpack.c.l.b16 %v2391
      %v2461 = vunpack.c.l.b16 %v2392
      %v2462 = vunpack.c.l.b16 %v2393
      %v2463 = vunpack.c.l.b16 %v2394
      %v2464 = vunpack.c.l.b16 %v2395
      %v2465 = vunpack.c.l.b16 %v2396
      %v2466 = vunpack.c.l.b16 %v2397
      %v2467 = vunpack.c.l.b16 %v2398
      %v2468 = vunpack.c.l.b16 %v2399
      %v2469 = vunpack.c.l.b16 %v2400
      %v2470 = vunpack.c.l.b16 %v2401
      %v2471 = vunpack.c.l.b16 %v2402
      %v2472 = vunpack.c.l.b16 %v2403
      %v2473 = vunpack.c.l.b16 %v2404
      %v2474 = vunpack.c.l.b16 %v2405
      %v2475 = vunpack.c.l.b16 %v2406
      %v2476 = vunpack.c.l.b16 %v2407
      %v2477 = vunpack.c.l.b16 %v2408
      %v2478 = vpack.c.b16 %v2447, %v2446
      %v2479 = vpack.c.b16 %v2449, %v2448
      %v2480 = vpack.c.b16 %v2451, %v2450
      %v2481 = vpack.c.b16 %v2453, %v2452
      %v2482 = vpack.c.b16 %v2455, %v2454
      %v2483 = vpack.c.b16 %v2457, %v2456
      %v2484 = vpack.c.b16 %v2459, %v2458
      %v2485 = vpack.c.b16 %v2461, %v2460
      %v2486 = vpack.c.b16 %v2463, %v2462
      %v2487 = vpack.c.b16 %v2465, %v2464
      %v2488 = vpack.c.b16 %v2467, %v2466
      %v2489 = vpack.c.b16 %v2469, %v2468
      %v2490 = vpack.c.b16 %v2471, %v2470
      %v2491 = vpack.c.b16 %v2473, %v2472
      %v2492 = vpack.c.b16 %v2475, %v2474
      %v2493 = vpack.c.b16 %v2477, %v2476
      %v2499 = vunpack.c.l.b16 %v2409
      %v2500 = vunpack.c.l.b16 %v2410
      %v2501 = vunpack.c.l.b16 %v2411
      %v2502 = vunpack.c.l.b16 %v2412
      %v2503 = vunpack.c.l.b16 %v2413
      %v2504 = vpack.c.b16 %v2500, %v2499
      %v2505 = vpack.c.b16 %v2502, %v2501
      %v2506 = vpack.c.b16 %v2503, %v2503
      %vm2509 = vcmask 293888
      %v2511 = vsel %vm2509, %v2478, 0
      %v2514 = vsel %vm2509, %v2479, 0
      %v2517 = vsel %vm2509, %v2480, 0
      %v2520 = vsel %vm2509, %v2481, 0
      %v2523 = vsel %vm2509, %v2482, 0
      %v2526 = vsel %vm2509, %v2483, 0
      %v2529 = vsel %vm2509, %v2484, 0
      %v2532 = vsel %vm2509, %v2485, 0
      %v2535 = vsel %vm2509, %v2486, 0
      %v2538 = vsel %vm2509, %v2487, 0
      %v2541 = vsel %vm2509, %v2488, 0
      %v2544 = vsel %vm2509, %v2489, 0
      %v2547 = vsel %vm2509, %v2490, 0
      %v2550 = vsel %vm2509, %v2491, 0
      %v2553 = vsel %vm2509, %v2492, 0
      %v2556 = vsel %vm2509, %v2493, 0
      %vm2558 = vcmask 1041408
      %v2560 = vsel %vm2558, %v2506, 0
      %2562 = vmatpush.bf16.msra.mxu0 0
      %2563 = vmatpush.bf16.msra.mxu0 0
      %2564 = vmatpush.bf16.msra.mxu0 0
      %2565 = vmatpush.bf16.msra.mxu0 0
      %2566 = vmatpush.bf16.msra.mxu0 0
      %2567 = vmatpush.bf16.msra.mxu0 %v2560
      %2568 = vmatpush.bf16.msra.mxu0 %v2505
      %2569 = vmatpush.bf16.msra.mxu0 %v2504
      %2570 = vmatmul.bf16.gmra.mxu0 %v2511
      %v2571 = vpop.f32.mrf.mxu0
      %v2572 = vadd.f32 0.0, %v2571
      %v2573 = vpop.f32.mrf.mxu0
      %v2574 = vadd.f32 0.0, %v2573
      %2575 = vmatmul.bf16.gmra.mxu0 %v2514
      %v2576 = vpop.f32.mrf.mxu0
      %v2577 = vadd.f32 0.0, %v2576
      %v2578 = vpop.f32.mrf.mxu0
      %v2579 = vadd.f32 0.0, %v2578
      %2580 = vmatmul.bf16.gmra.mxu0 %v2517
      %v2581 = vpop.f32.mrf.mxu0
      %v2582 = vadd.f32 0.0, %v2581
      %v2583 = vpop.f32.mrf.mxu0
      %v2584 = vadd.f32 0.0, %v2583
      %2585 = vmatmul.bf16.gmra.mxu0 %v2520
      %v2586 = vpop.f32.mrf.mxu0
      %v2587 = vadd.f32 0.0, %v2586
      %v2588 = vpop.f32.mrf.mxu0
      %v2589 = vadd.f32 0.0, %v2588
      %2590 = vmatmul.bf16.gmra.mxu0 %v2523
      %v2591 = vpop.f32.mrf.mxu0
      %v2592 = vadd.f32 0.0, %v2591
      %v2593 = vpop.f32.mrf.mxu0
      %v2594 = vadd.f32 0.0, %v2593
      %2595 = vmatmul.bf16.gmra.mxu0 %v2526
      %v2596 = vpop.f32.mrf.mxu0
      %v2597 = vadd.f32 0.0, %v2596
      %v2598 = vpop.f32.mrf.mxu0
      %v2599 = vadd.f32 0.0, %v2598
      %2600 = vmatmul.bf16.gmra.mxu0 %v2529
      %v2601 = vpop.f32.mrf.mxu0
      %v2602 = vadd.f32 0.0, %v2601
      %v2603 = vpop.f32.mrf.mxu0
      %v2604 = vadd.f32 0.0, %v2603
      %2605 = vmatmul.bf16.gmra.mxu0 %v2532
      %v2606 = vpop.f32.mrf.mxu0
      %v2607 = vadd.f32 0.0, %v2606
      %v2608 = vpop.f32.mrf.mxu0
      %v2609 = vadd.f32 0.0, %v2608
      %2610 = vmatmul.bf16.gmra.mxu0 %v2535
      %v2611 = vpop.f32.mrf.mxu0
      %v2612 = vadd.f32 0.0, %v2611
      %v2613 = vpop.f32.mrf.mxu0
      %v2614 = vadd.f32 0.0, %v2613
      %2615 = vmatmul.bf16.gmra.mxu0 %v2538
      %v2616 = vpop.f32.mrf.mxu0
      %v2617 = vadd.f32 0.0, %v2616
      %v2618 = vpop.f32.mrf.mxu0
      %v2619 = vadd.f32 0.0, %v2618
      %2620 = vmatmul.bf16.gmra.mxu0 %v2541
      %v2621 = vpop.f32.mrf.mxu0
      %v2622 = vadd.f32 0.0, %v2621
      %v2623 = vpop.f32.mrf.mxu0
      %v2624 = vadd.f32 0.0, %v2623
      %2625 = vmatmul.bf16.gmra.mxu0 %v2544
      %v2626 = vpop.f32.mrf.mxu0
      %v2627 = vadd.f32 0.0, %v2626
      %v2628 = vpop.f32.mrf.mxu0
      %v2629 = vadd.f32 0.0, %v2628
      %2630 = vmatmul.bf16.gmra.mxu0 %v2547
      %v2631 = vpop.f32.mrf.mxu0
      %v2632 = vadd.f32 0.0, %v2631
      %v2633 = vpop.f32.mrf.mxu0
      %v2634 = vadd.f32 0.0, %v2633
      %2635 = vmatmul.bf16.gmra.mxu0 %v2550
      %v2636 = vpop.f32.mrf.mxu0
      %v2637 = vadd.f32 0.0, %v2636
      %v2638 = vpop.f32.mrf.mxu0
      %v2639 = vadd.f32 0.0, %v2638
      %2640 = vmatmul.bf16.gmra.mxu0 %v2553
      %v2641 = vpop.f32.mrf.mxu0
      %v2642 = vadd.f32 0.0, %v2641
      %v2643 = vpop.f32.mrf.mxu0
      %v2644 = vadd.f32 0.0, %v2643
      %2645 = vmatmul.bf16.gmra.mxu0 %v2556
      %v2646 = vpop.f32.mrf.mxu0
      %v2647 = vadd.f32 0.0, %v2646
      %v2648 = vpop.f32.mrf.mxu0
      %v2649 = vadd.f32 0.0, %v2648
      %2650 = vdwg.mxu0
      %s2651 = scalar_lea.vmem [#allocation4], %s411
      %2652 = vst.msk [vmem:[%s2651] sm:$0xff] %vm413, %v2572
      %2653 = vst.msk [vmem:[%s2651 + $0x8] sm:$0xff] %vm413, %v2574
      %2654 = vst.msk [vmem:[%s2651 + $0x10] sm:$0xff] %vm413, %v2577
      %2655 = vst.msk [vmem:[%s2651 + $0x18] sm:$0xff] %vm413, %v2579
      %2656 = vst.msk [vmem:[%s2651 + $0x20] sm:$0xff] %vm413, %v2582
      %2657 = vst.msk [vmem:[%s2651 + $0x28] sm:$0xff] %vm413, %v2584
      %2658 = vst.msk [vmem:[%s2651 + $0x30] sm:$0xff] %vm413, %v2587
      %2659 = vst.msk [vmem:[%s2651 + $0x38] sm:$0xff] %vm413, %v2589
      %2660 = vst.msk [vmem:[%s2651 + $0x40] sm:$0xff] %vm413, %v2592
      %2661 = vst.msk [vmem:[%s2651 + $0x48] sm:$0xff] %vm413, %v2594
      %2662 = vst.msk [vmem:[%s2651 + $0x50] sm:$0xff] %vm413, %v2597
      %2663 = vst.msk [vmem:[%s2651 + $0x58] sm:$0xff] %vm413, %v2599
      %2664 = vst.msk [vmem:[%s2651 + $0x60] sm:$0xff] %vm413, %v2602
      %2665 = vst.msk [vmem:[%s2651 + $0x68] sm:$0xff] %vm413, %v2604
      %2666 = vst.msk [vmem:[%s2651 + $0x70] sm:$0xff] %vm413, %v2607
      %2667 = vst.msk [vmem:[%s2651 + $0x78] sm:$0xff] %vm413, %v2609
      %2668 = vst.msk [vmem:[%s2651 + $0x80] sm:$0xff] %vm413, %v2612
      %2669 = vst.msk [vmem:[%s2651 + $0x88] sm:$0xff] %vm413, %v2614
      %2670 = vst.msk [vmem:[%s2651 + $0x90] sm:$0xff] %vm413, %v2617
      %2671 = vst.msk [vmem:[%s2651 + $0x98] sm:$0xff] %vm413, %v2619
      %2672 = vst.msk [vmem:[%s2651 + $0xa0] sm:$0xff] %vm413, %v2622
      %2673 = vst.msk [vmem:[%s2651 + $0xa8] sm:$0xff] %vm413, %v2624
      %2674 = vst.msk [vmem:[%s2651 + $0xb0] sm:$0xff] %vm413, %v2627
      %2675 = vst.msk [vmem:[%s2651 + $0xb8] sm:$0xff] %vm413, %v2629
      %2676 = vst.msk [vmem:[%s2651 + $0xc0] sm:$0xff] %vm413, %v2632
      %2677 = vst.msk [vmem:[%s2651 + $0xc8] sm:$0xff] %vm413, %v2634
      %2678 = vst.msk [vmem:[%s2651 + $0xd0] sm:$0xff] %vm413, %v2637
      %2679 = vst.msk [vmem:[%s2651 + $0xd8] sm:$0xff] %vm413, %v2639
      %2680 = vst.msk [vmem:[%s2651 + $0xe0] sm:$0xff] %vm413, %v2642
      %2681 = vst.msk [vmem:[%s2651 + $0xe8] sm:$0xff] %vm413, %v2644
      %2682 = vst.msk [vmem:[%s2651 + $0xf0] sm:$0xff] %vm413, %v2647
      %2683 = vst.msk [vmem:[%s2651 + $0xf8] sm:$0xff] %vm413, %v2649
      %p2684 = scmp.eq.s32.totalorder %s18, 1
      // Predicated region
      $region53: #{baseblock_forward.1} parent=47 // pred_check
        %p2685 = pneg %p2684
      $region54: #{baseblock_forward.1} parent=47 // pred_check_branch
        %2687 = sbr.rel (%p2685) target = $region56
      $region55: #{baseblock_forward.1} parent=47 // pred_region
        %v2688 = vld [vmem:[#allocation4] sm:$0xff]
        %v2689 = vld [vmem:[#allocation4 + $0x8] sm:$0xff]
        %v2690 = vld [vmem:[#allocation4 + $0x10] sm:$0xff]
        %v2691 = vld [vmem:[#allocation4 + $0x18] sm:$0xff]
        %v2692 = vld [vmem:[#allocation4 + $0x20] sm:$0xff]
        %v2693 = vld [vmem:[#allocation4 + $0x28] sm:$0xff]
        %v2694 = vld [vmem:[#allocation4 + $0x30] sm:$0xff]
        %v2695 = vld [vmem:[#allocation4 + $0x38] sm:$0xff]
        %v2696 = vld [vmem:[#allocation4 + $0x40] sm:$0xff]
        %v2697 = vld [vmem:[#allocation4 + $0x48] sm:$0xff]
        %v2698 = vld [vmem:[#allocation4 + $0x50] sm:$0xff]
        %v2699 = vld [vmem:[#allocation4 + $0x58] sm:$0xff]
        %v2700 = vld [vmem:[#allocation4 + $0x60] sm:$0xff]
        %v2701 = vld [vmem:[#allocation4 + $0x68] sm:$0xff]
        %v2702 = vld [vmem:[#allocation4 + $0x70] sm:$0xff]
        %v2703 = vld [vmem:[#allocation4 + $0x78] sm:$0xff]
        %v2704 = vld [vmem:[#allocation4 + $0x80] sm:$0xff]
        %v2705 = vld [vmem:[#allocation4 + $0x88] sm:$0xff]
        %v2706 = vld [vmem:[#allocation4 + $0x90] sm:$0xff]
        %v2707 = vld [vmem:[#allocation4 + $0x98] sm:$0xff]
        %v2708 = vld [vmem:[#allocation4 + $0xa0] sm:$0xff]
        %v2709 = vld [vmem:[#allocation4 + $0xa8] sm:$0xff]
        %v2710 = vld [vmem:[#allocation4 + $0xb0] sm:$0xff]
        %v2711 = vld [vmem:[#allocation4 + $0xb8] sm:$0xff]
        %v2712 = vld [vmem:[#allocation4 + $0xc0] sm:$0xff]
        %v2713 = vld [vmem:[#allocation4 + $0xc8] sm:$0xff]
        %v2714 = vld [vmem:[#allocation4 + $0xd0] sm:$0xff]
        %v2715 = vld [vmem:[#allocation4 + $0xd8] sm:$0xff]
        %v2716 = vld [vmem:[#allocation4 + $0xe0] sm:$0xff]
        %v2717 = vld [vmem:[#allocation4 + $0xe8] sm:$0xff]
        %v2718 = vld [vmem:[#allocation4 + $0xf0] sm:$0xff]
        %v2719 = vld [vmem:[#allocation4 + $0xf8] sm:$0xff]
        %v2720 = vld [vmem:[#allocation4 + $0x100] sm:$0xff]
        %v2721 = vld [vmem:[#allocation4 + $0x108] sm:$0xff]
        %v2722 = vld [vmem:[#allocation4 + $0x110] sm:$0xff]
        %v2723 = vld [vmem:[#allocation4 + $0x118] sm:$0xff]
        %v2724 = vld [vmem:[#allocation4 + $0x120] sm:$0xff]
        %v2725 = vld [vmem:[#allocation4 + $0x128] sm:$0xff]
        %v2726 = vld [vmem:[#allocation4 + $0x130] sm:$0xff]
        %v2727 = vld [vmem:[#allocation4 + $0x138] sm:$0xff]
        %v2728 = vld [vmem:[#allocation4 + $0x140] sm:$0xff]
        %v2729 = vld [vmem:[#allocation4 + $0x148] sm:$0xff]
        %v2730 = vld [vmem:[#allocation4 + $0x150] sm:$0xff]
        %v2731 = vld [vmem:[#allocation4 + $0x158] sm:$0xff]
        %v2732 = vld [vmem:[#allocation4 + $0x160] sm:$0xff]
        %v2733 = vld [vmem:[#allocation4 + $0x168] sm:$0xff]
        %v2734 = vld [vmem:[#allocation4 + $0x170] sm:$0xff]
        %v2735 = vld [vmem:[#allocation4 + $0x178] sm:$0xff]
        %v2736 = vld [vmem:[#allocation4 + $0x180] sm:$0xff]
        %v2737 = vld [vmem:[#allocation4 + $0x188] sm:$0xff]
        %v2738 = vld [vmem:[#allocation4 + $0x190] sm:$0xff]
        %v2739 = vld [vmem:[#allocation4 + $0x198] sm:$0xff]
        %v2740 = vld [vmem:[#allocation4 + $0x1a0] sm:$0xff]
        %v2741 = vld [vmem:[#allocation4 + $0x1a8] sm:$0xff]
        %v2742 = vld [vmem:[#allocation4 + $0x1b0] sm:$0xff]
        %v2743 = vld [vmem:[#allocation4 + $0x1b8] sm:$0xff]
        %v2744 = vld [vmem:[#allocation4 + $0x1c0] sm:$0xff]
        %v2745 = vld [vmem:[#allocation4 + $0x1c8] sm:$0xff]
        %v2746 = vld [vmem:[#allocation4 + $0x1d0] sm:$0xff]
        %v2747 = vld [vmem:[#allocation4 + $0x1d8] sm:$0xff]
        %v2748 = vld [vmem:[#allocation4 + $0x1e0] sm:$0xff]
        %v2749 = vld [vmem:[#allocation4 + $0x1e8] sm:$0xff]
        %v2750 = vld [vmem:[#allocation4 + $0x1f0] sm:$0xff]
        %v2751 = vld [vmem:[#allocation4 + $0x1f8] sm:$0xff]
        %v2752 = vld [vmem:[%s2] sm:$0x1]
        %v2753 = vld [vmem:[%s3] sm:$0x1]
        %v2754 = vsel %vm413, %v2688, 0.0
        %v2755 = vsel %vm413, %v2689, 0.0
        %v2756 = vadd.f32 %v2754, %v2755
        %v2757 = vsel %vm413, %v2690, 0.0
        %v2758 = vadd.f32 %v2756, %v2757
        %v2759 = vsel %vm413, %v2691, 0.0
        %v2760 = vadd.f32 %v2758, %v2759
        %v2761 = vsel %vm413, %v2692, 0.0
        %v2762 = vadd.f32 %v2760, %v2761
        %v2763 = vsel %vm413, %v2693, 0.0
        %v2764 = vadd.f32 %v2762, %v2763
        %v2765 = vsel %vm413, %v2694, 0.0
        %v2766 = vadd.f32 %v2764, %v2765
        %v2767 = vsel %vm413, %v2695, 0.0
        %v2768 = vadd.f32 %v2766, %v2767
        %v2769 = vsel %vm413, %v2696, 0.0
        %v2770 = vadd.f32 %v2768, %v2769
        %v2771 = vsel %vm413, %v2697, 0.0
        %v2772 = vadd.f32 %v2770, %v2771
        %v2773 = vsel %vm413, %v2698, 0.0
        %v2774 = vadd.f32 %v2772, %v2773
        %v2775 = vsel %vm413, %v2699, 0.0
        %v2776 = vadd.f32 %v2774, %v2775
        %v2777 = vsel %vm413, %v2700, 0.0
        %v2778 = vadd.f32 %v2776, %v2777
        %v2779 = vsel %vm413, %v2701, 0.0
        %v2780 = vadd.f32 %v2778, %v2779
        %v2781 = vsel %vm413, %v2702, 0.0
        %v2782 = vadd.f32 %v2780, %v2781
        %v2783 = vsel %vm413, %v2703, 0.0
        %v2784 = vadd.f32 %v2782, %v2783
        %v2785 = vsel %vm413, %v2704, 0.0
        %v2786 = vadd.f32 %v2784, %v2785
        %v2787 = vsel %vm413, %v2705, 0.0
        %v2788 = vadd.f32 %v2786, %v2787
        %v2789 = vsel %vm413, %v2706, 0.0
        %v2790 = vadd.f32 %v2788, %v2789
        %v2791 = vsel %vm413, %v2707, 0.0
        %v2792 = vadd.f32 %v2790, %v2791
        %v2793 = vsel %vm413, %v2708, 0.0
        %v2794 = vadd.f32 %v2792, %v2793
        %v2795 = vsel %vm413, %v2709, 0.0
        %v2796 = vadd.f32 %v2794, %v2795
        %v2797 = vsel %vm413, %v2710, 0.0
        %v2798 = vadd.f32 %v2796, %v2797
        %v2799 = vsel %vm413, %v2711, 0.0
        %v2800 = vadd.f32 %v2798, %v2799
        %v2801 = vsel %vm413, %v2712, 0.0
        %v2802 = vadd.f32 %v2800, %v2801
        %v2803 = vsel %vm413, %v2713, 0.0
        %v2804 = vadd.f32 %v2802, %v2803
        %v2805 = vsel %vm413, %v2714, 0.0
        %v2806 = vadd.f32 %v2804, %v2805
        %v2807 = vsel %vm413, %v2715, 0.0
        %v2808 = vadd.f32 %v2806, %v2807
        %v2809 = vsel %vm413, %v2716, 0.0
        %v2810 = vadd.f32 %v2808, %v2809
        %v2811 = vsel %vm413, %v2717, 0.0
        %v2812 = vadd.f32 %v2810, %v2811
        %v2813 = vsel %vm413, %v2718, 0.0
        %v2814 = vadd.f32 %v2812, %v2813
        %v2815 = vsel %vm413, %v2719, 0.0
        %v2816 = vadd.f32 %v2814, %v2815
        %v2817 = vsel %vm413, %v2720, 0.0
        %v2818 = vadd.f32 %v2816, %v2817
        %v2819 = vsel %vm413, %v2721, 0.0
        %v2820 = vadd.f32 %v2818, %v2819
        %v2821 = vsel %vm413, %v2722, 0.0
        %v2822 = vadd.f32 %v2820, %v2821
        %v2823 = vsel %vm413, %v2723, 0.0
        %v2824 = vadd.f32 %v2822, %v2823
        %v2825 = vsel %vm413, %v2724, 0.0
        %v2826 = vadd.f32 %v2824, %v2825
        %v2827 = vsel %vm413, %v2725, 0.0
        %v2828 = vadd.f32 %v2826, %v2827
        %v2829 = vsel %vm413, %v2726, 0.0
        %v2830 = vadd.f32 %v2828, %v2829
        %v2831 = vsel %vm413, %v2727, 0.0
        %v2832 = vadd.f32 %v2830, %v2831
        %v2833 = vsel %vm413, %v2728, 0.0
        %v2834 = vadd.f32 %v2832, %v2833
        %v2835 = vsel %vm413, %v2729, 0.0
        %v2836 = vadd.f32 %v2834, %v2835
        %v2837 = vsel %vm413, %v2730, 0.0
        %v2838 = vadd.f32 %v2836, %v2837
        %v2839 = vsel %vm413, %v2731, 0.0
        %v2840 = vadd.f32 %v2838, %v2839
        %v2841 = vsel %vm413, %v2732, 0.0
        %v2842 = vadd.f32 %v2840, %v2841
        %v2843 = vsel %vm413, %v2733, 0.0
        %v2844 = vadd.f32 %v2842, %v2843
        %v2845 = vsel %vm413, %v2734, 0.0
        %v2846 = vadd.f32 %v2844, %v2845
        %v2847 = vsel %vm413, %v2735, 0.0
        %v2848 = vadd.f32 %v2846, %v2847
        %v2849 = vsel %vm413, %v2736, 0.0
        %v2850 = vadd.f32 %v2848, %v2849
        %v2851 = vsel %vm413, %v2737, 0.0
        %v2852 = vadd.f32 %v2850, %v2851
        %v2853 = vsel %vm413, %v2738, 0.0
        %v2854 = vadd.f32 %v2852, %v2853
        %v2855 = vsel %vm413, %v2739, 0.0
        %v2856 = vadd.f32 %v2854, %v2855
        %v2857 = vsel %vm413, %v2740, 0.0
        %v2858 = vadd.f32 %v2856, %v2857
        %v2859 = vsel %vm413, %v2741, 0.0
        %v2860 = vadd.f32 %v2858, %v2859
        %v2861 = vsel %vm413, %v2742, 0.0
        %v2862 = vadd.f32 %v2860, %v2861
        %v2863 = vsel %vm413, %v2743, 0.0
        %v2864 = vadd.f32 %v2862, %v2863
        %v2865 = vsel %vm413, %v2744, 0.0
        %v2866 = vadd.f32 %v2864, %v2865
        %v2867 = vsel %vm413, %v2745, 0.0
        %v2868 = vadd.f32 %v2866, %v2867
        %v2869 = vsel %vm413, %v2746, 0.0
        %v2870 = vadd.f32 %v2868, %v2869
        %v2871 = vsel %vm413, %v2747, 0.0
        %v2872 = vadd.f32 %v2870, %v2871
        %v2873 = vsel %vm413, %v2748, 0.0
        %v2874 = vadd.f32 %v2872, %v2873
        %v2875 = vsel %vm413, %v2749, 0.0
        %v2876 = vadd.f32 %v2874, %v2875
        %v2877 = vsel %vm413, %v2750, 0.0
        %v2878 = vadd.f32 %v2876, %v2877
        %v2879 = vsel %vm413, %v2751, 0.0
        %v2880 = vadd.f32 %v2878, %v2879
        %v2881 = vrot.slane %v2880, 4
        %v2882 = vadd.f32 %v2880, %v2881
        %v2883 = vrot.slane %v2882, 2
        %v2884 = vadd.f32 %v2882, %v2883
        %v2885 = vrot.slane %v2884, 1
        %v2886 = vadd.f32 %v2884, %v2885
        %v2887 = vrcp.pop 512.0
        %v2888 = vmul.f32 512.0, %v2887
        %v2889 = vsub.f32 1.0, %v2888
        %v2890 = vmul.f32 %v2887, %v2889
        %v2891 = vadd.f32 %v2887, %v2890
        %vm2892 = vweird.f32 %v2887
        %v2893 = vsel %vm2892, %v2887, %v2891
        %v2894 = vmul.f32 %v2886, %v2893
        %v2895 = vsub.f32 %v2688, %v2894
        %v2896 = vsub.f32 %v2689, %v2894
        %v2897 = vsub.f32 %v2690, %v2894
        %v2898 = vsub.f32 %v2691, %v2894
        %v2899 = vsub.f32 %v2692, %v2894
        %v2900 = vsub.f32 %v2693, %v2894
        %v2901 = vsub.f32 %v2694, %v2894
        %v2902 = vsub.f32 %v2695, %v2894
        %v2903 = vsub.f32 %v2696, %v2894
        %v2904 = vsub.f32 %v2697, %v2894
        %v2905 = vsub.f32 %v2698, %v2894
        %v2906 = vsub.f32 %v2699, %v2894
        %v2907 = vsub.f32 %v2700, %v2894
        %v2908 = vsub.f32 %v2701, %v2894
        %v2909 = vsub.f32 %v2702, %v2894
        %v2910 = vsub.f32 %v2703, %v2894
        %v2911 = vsub.f32 %v2704, %v2894
        %v2912 = vsub.f32 %v2705, %v2894
        %v2913 = vsub.f32 %v2706, %v2894
        %v2914 = vsub.f32 %v2707, %v2894
        %v2915 = vsub.f32 %v2708, %v2894
        %v2916 = vsub.f32 %v2709, %v2894
        %v2917 = vsub.f32 %v2710, %v2894
        %v2918 = vsub.f32 %v2711, %v2894
        %v2919 = vsub.f32 %v2712, %v2894
        %v2920 = vsub.f32 %v2713, %v2894
        %v2921 = vsub.f32 %v2714, %v2894
        %v2922 = vsub.f32 %v2715, %v2894
        %v2923 = vsub.f32 %v2716, %v2894
        %v2924 = vsub.f32 %v2717, %v2894
        %v2925 = vsub.f32 %v2718, %v2894
        %v2926 = vsub.f32 %v2719, %v2894
        %v2927 = vsub.f32 %v2720, %v2894
        %v2928 = vsub.f32 %v2721, %v2894
        %v2929 = vsub.f32 %v2722, %v2894
        %v2930 = vsub.f32 %v2723, %v2894
        %v2931 = vsub.f32 %v2724, %v2894
        %v2932 = vsub.f32 %v2725, %v2894
        %v2933 = vsub.f32 %v2726, %v2894
        %v2934 = vsub.f32 %v2727, %v2894
        %v2935 = vsub.f32 %v2728, %v2894
        %v2936 = vsub.f32 %v2729, %v2894
        %v2937 = vsub.f32 %v2730, %v2894
        %v2938 = vsub.f32 %v2731, %v2894
        %v2939 = vsub.f32 %v2732, %v2894
        %v2940 = vsub.f32 %v2733, %v2894
        %v2941 = vsub.f32 %v2734, %v2894
        %v2942 = vsub.f32 %v2735, %v2894
        %v2943 = vsub.f32 %v2736, %v2894
        %v2944 = vsub.f32 %v2737, %v2894
        %v2945 = vsub.f32 %v2738, %v2894
        %v2946 = vsub.f32 %v2739, %v2894
        %v2947 = vsub.f32 %v2740, %v2894
        %v2948 = vsub.f32 %v2741, %v2894
        %v2949 = vsub.f32 %v2742, %v2894
        %v2950 = vsub.f32 %v2743, %v2894
        %v2951 = vsub.f32 %v2744, %v2894
        %v2952 = vsub.f32 %v2745, %v2894
        %v2953 = vsub.f32 %v2746, %v2894
        %v2954 = vsub.f32 %v2747, %v2894
        %v2955 = vsub.f32 %v2748, %v2894
        %v2956 = vsub.f32 %v2749, %v2894
        %v2957 = vsub.f32 %v2750, %v2894
        %v2958 = vsub.f32 %v2751, %v2894
        %v2959 = vmul.f32 %v2895, %v2895
        %v2960 = vmul.f32 %v2896, %v2896
        %v2961 = vmul.f32 %v2897, %v2897
        %v2962 = vmul.f32 %v2898, %v2898
        %v2963 = vmul.f32 %v2899, %v2899
        %v2964 = vmul.f32 %v2900, %v2900
        %v2965 = vmul.f32 %v2901, %v2901
        %v2966 = vmul.f32 %v2902, %v2902
        %v2967 = vmul.f32 %v2903, %v2903
        %v2968 = vmul.f32 %v2904, %v2904
        %v2969 = vmul.f32 %v2905, %v2905
        %v2970 = vmul.f32 %v2906, %v2906
        %v2971 = vmul.f32 %v2907, %v2907
        %v2972 = vmul.f32 %v2908, %v2908
        %v2973 = vmul.f32 %v2909, %v2909
        %v2974 = vmul.f32 %v2910, %v2910
        %v2975 = vmul.f32 %v2911, %v2911
        %v2976 = vmul.f32 %v2912, %v2912
        %v2977 = vmul.f32 %v2913, %v2913
        %v2978 = vmul.f32 %v2914, %v2914
        %v2979 = vmul.f32 %v2915, %v2915
        %v2980 = vmul.f32 %v2916, %v2916
        %v2981 = vmul.f32 %v2917, %v2917
        %v2982 = vmul.f32 %v2918, %v2918
        %v2983 = vmul.f32 %v2919, %v2919
        %v2984 = vmul.f32 %v2920, %v2920
        %v2985 = vmul.f32 %v2921, %v2921
        %v2986 = vmul.f32 %v2922, %v2922
        %v2987 = vmul.f32 %v2923, %v2923
        %v2988 = vmul.f32 %v2924, %v2924
        %v2989 = vmul.f32 %v2925, %v2925
        %v2990 = vmul.f32 %v2926, %v2926
        %v2991 = vmul.f32 %v2927, %v2927
        %v2992 = vmul.f32 %v2928, %v2928
        %v2993 = vmul.f32 %v2929, %v2929
        %v2994 = vmul.f32 %v2930, %v2930
        %v2995 = vmul.f32 %v2931, %v2931
        %v2996 = vmul.f32 %v2932, %v2932
        %v2997 = vmul.f32 %v2933, %v2933
        %v2998 = vmul.f32 %v2934, %v2934
        %v2999 = vmul.f32 %v2935, %v2935
        %v3000 = vmul.f32 %v2936, %v2936
        %v3001 = vmul.f32 %v2937, %v2937
        %v3002 = vmul.f32 %v2938, %v2938
        %v3003 = vmul.f32 %v2939, %v2939
        %v3004 = vmul.f32 %v2940, %v2940
        %v3005 = vmul.f32 %v2941, %v2941
        %v3006 = vmul.f32 %v2942, %v2942
        %v3007 = vmul.f32 %v2943, %v2943
        %v3008 = vmul.f32 %v2944, %v2944
        %v3009 = vmul.f32 %v2945, %v2945
        %v3010 = vmul.f32 %v2946, %v2946
        %v3011 = vmul.f32 %v2947, %v2947
        %v3012 = vmul.f32 %v2948, %v2948
        %v3013 = vmul.f32 %v2949, %v2949
        %v3014 = vmul.f32 %v2950, %v2950
        %v3015 = vmul.f32 %v2951, %v2951
        %v3016 = vmul.f32 %v2952, %v2952
        %v3017 = vmul.f32 %v2953, %v2953
        %v3018 = vmul.f32 %v2954, %v2954
        %v3019 = vmul.f32 %v2955, %v2955
        %v3020 = vmul.f32 %v2956, %v2956
        %v3021 = vmul.f32 %v2957, %v2957
        %v3022 = vmul.f32 %v2958, %v2958
        %v3023 = vsel %vm413, %v2959, 0.0
        %v3024 = vsel %vm413, %v2960, 0.0
        %v3025 = vadd.f32 %v3023, %v3024
        %v3026 = vsel %vm413, %v2961, 0.0
        %v3027 = vadd.f32 %v3025, %v3026
        %v3028 = vsel %vm413, %v2962, 0.0
        %v3029 = vadd.f32 %v3027, %v3028
        %v3030 = vsel %vm413, %v2963, 0.0
        %v3031 = vadd.f32 %v3029, %v3030
        %v3032 = vsel %vm413, %v2964, 0.0
        %v3033 = vadd.f32 %v3031, %v3032
        %v3034 = vsel %vm413, %v2965, 0.0
        %v3035 = vadd.f32 %v3033, %v3034
        %v3036 = vsel %vm413, %v2966, 0.0
        %v3037 = vadd.f32 %v3035, %v3036
        %v3038 = vsel %vm413, %v2967, 0.0
        %v3039 = vadd.f32 %v3037, %v3038
        %v3040 = vsel %vm413, %v2968, 0.0
        %v3041 = vadd.f32 %v3039, %v3040
        %v3042 = vsel %vm413, %v2969, 0.0
        %v3043 = vadd.f32 %v3041, %v3042
        %v3044 = vsel %vm413, %v2970, 0.0
        %v3045 = vadd.f32 %v3043, %v3044
        %v3046 = vsel %vm413, %v2971, 0.0
        %v3047 = vadd.f32 %v3045, %v3046
        %v3048 = vsel %vm413, %v2972, 0.0
        %v3049 = vadd.f32 %v3047, %v3048
        %v3050 = vsel %vm413, %v2973, 0.0
        %v3051 = vadd.f32 %v3049, %v3050
        %v3052 = vsel %vm413, %v2974, 0.0
        %v3053 = vadd.f32 %v3051, %v3052
        %v3054 = vsel %vm413, %v2975, 0.0
        %v3055 = vadd.f32 %v3053, %v3054
        %v3056 = vsel %vm413, %v2976, 0.0
        %v3057 = vadd.f32 %v3055, %v3056
        %v3058 = vsel %vm413, %v2977, 0.0
        %v3059 = vadd.f32 %v3057, %v3058
        %v3060 = vsel %vm413, %v2978, 0.0
        %v3061 = vadd.f32 %v3059, %v3060
        %v3062 = vsel %vm413, %v2979, 0.0
        %v3063 = vadd.f32 %v3061, %v3062
        %v3064 = vsel %vm413, %v2980, 0.0
        %v3065 = vadd.f32 %v3063, %v3064
        %v3066 = vsel %vm413, %v2981, 0.0
        %v3067 = vadd.f32 %v3065, %v3066
        %v3068 = vsel %vm413, %v2982, 0.0
        %v3069 = vadd.f32 %v3067, %v3068
        %v3070 = vsel %vm413, %v2983, 0.0
        %v3071 = vadd.f32 %v3069, %v3070
        %v3072 = vsel %vm413, %v2984, 0.0
        %v3073 = vadd.f32 %v3071, %v3072
        %v3074 = vsel %vm413, %v2985, 0.0
        %v3075 = vadd.f32 %v3073, %v3074
        %v3076 = vsel %vm413, %v2986, 0.0
        %v3077 = vadd.f32 %v3075, %v3076
        %v3078 = vsel %vm413, %v2987, 0.0
        %v3079 = vadd.f32 %v3077, %v3078
        %v3080 = vsel %vm413, %v2988, 0.0
        %v3081 = vadd.f32 %v3079, %v3080
        %v3082 = vsel %vm413, %v2989, 0.0
        %v3083 = vadd.f32 %v3081, %v3082
        %v3084 = vsel %vm413, %v2990, 0.0
        %v3085 = vadd.f32 %v3083, %v3084
        %v3086 = vsel %vm413, %v2991, 0.0
        %v3087 = vadd.f32 %v3085, %v3086
        %v3088 = vsel %vm413, %v2992, 0.0
        %v3089 = vadd.f32 %v3087, %v3088
        %v3090 = vsel %vm413, %v2993, 0.0
        %v3091 = vadd.f32 %v3089, %v3090
        %v3092 = vsel %vm413, %v2994, 0.0
        %v3093 = vadd.f32 %v3091, %v3092
        %v3094 = vsel %vm413, %v2995, 0.0
        %v3095 = vadd.f32 %v3093, %v3094
        %v3096 = vsel %vm413, %v2996, 0.0
        %v3097 = vadd.f32 %v3095, %v3096
        %v3098 = vsel %vm413, %v2997, 0.0
        %v3099 = vadd.f32 %v3097, %v3098
        %v3100 = vsel %vm413, %v2998, 0.0
        %v3101 = vadd.f32 %v3099, %v3100
        %v3102 = vsel %vm413, %v2999, 0.0
        %v3103 = vadd.f32 %v3101, %v3102
        %v3104 = vsel %vm413, %v3000, 0.0
        %v3105 = vadd.f32 %v3103, %v3104
        %v3106 = vsel %vm413, %v3001, 0.0
        %v3107 = vadd.f32 %v3105, %v3106
        %v3108 = vsel %vm413, %v3002, 0.0
        %v3109 = vadd.f32 %v3107, %v3108
        %v3110 = vsel %vm413, %v3003, 0.0
        %v3111 = vadd.f32 %v3109, %v3110
        %v3112 = vsel %vm413, %v3004, 0.0
        %v3113 = vadd.f32 %v3111, %v3112
        %v3114 = vsel %vm413, %v3005, 0.0
        %v3115 = vadd.f32 %v3113, %v3114
        %v3116 = vsel %vm413, %v3006, 0.0
        %v3117 = vadd.f32 %v3115, %v3116
        %v3118 = vsel %vm413, %v3007, 0.0
        %v3119 = vadd.f32 %v3117, %v3118
        %v3120 = vsel %vm413, %v3008, 0.0
        %v3121 = vadd.f32 %v3119, %v3120
        %v3122 = vsel %vm413, %v3009, 0.0
        %v3123 = vadd.f32 %v3121, %v3122
        %v3124 = vsel %vm413, %v3010, 0.0
        %v3125 = vadd.f32 %v3123, %v3124
        %v3126 = vsel %vm413, %v3011, 0.0
        %v3127 = vadd.f32 %v3125, %v3126
        %v3128 = vsel %vm413, %v3012, 0.0
        %v3129 = vadd.f32 %v3127, %v3128
        %v3130 = vsel %vm413, %v3013, 0.0
        %v3131 = vadd.f32 %v3129, %v3130
        %v3132 = vsel %vm413, %v3014, 0.0
        %v3133 = vadd.f32 %v3131, %v3132
        %v3134 = vsel %vm413, %v3015, 0.0
        %v3135 = vadd.f32 %v3133, %v3134
        %v3136 = vsel %vm413, %v3016, 0.0
        %v3137 = vadd.f32 %v3135, %v3136
        %v3138 = vsel %vm413, %v3017, 0.0
        %v3139 = vadd.f32 %v3137, %v3138
        %v3140 = vsel %vm413, %v3018, 0.0
        %v3141 = vadd.f32 %v3139, %v3140
        %v3142 = vsel %vm413, %v3019, 0.0
        %v3143 = vadd.f32 %v3141, %v3142
        %v3144 = vsel %vm413, %v3020, 0.0
        %v3145 = vadd.f32 %v3143, %v3144
        %v3146 = vsel %vm413, %v3021, 0.0
        %v3147 = vadd.f32 %v3145, %v3146
        %v3148 = vsel %vm413, %v3022, 0.0
        %v3149 = vadd.f32 %v3147, %v3148
        %v3150 = vrot.slane %v3149, 4
        %v3151 = vadd.f32 %v3149, %v3150
        %v3152 = vrot.slane %v3151, 2
        %v3153 = vadd.f32 %v3151, %v3152
        %v3154 = vrot.slane %v3153, 1
        %v3155 = vadd.f32 %v3153, %v3154
        %v3156 = vmul.f32 %v3155, %v2893
        %v3157 = vadd.f32 %v3156, 1e-05
        %v3158 = vrsqrt.pop %v3157
        %v3159 = vmul.f32 %v3158, %v3157
        %v3160 = vmul.f32 %v3159, %v3158
        %v3161 = vmul.f32 0.5, %v3160
        %v3162 = vsub.f32 1.5, %v3161
        %v3163 = vmul.f32 %v3158, %v3162
        %vm3164 = vweird.f32 %v3157
        %vm3165 = vweird.f32 %v3158
        %vm3166 = vmor %vm3164, %vm3165
        %v3167 = vsel %vm3166, %v3158, %v3163
        %v3168 = vmul.f32 %v2752, %v3167
        %v3169 = vmul.f32 %v2894, %v3168
        %v3170 = vsub.f32 %v2753, %v3169
        %v3172 = vperm.slane %v3168, 0
        %v3174 = vmul.f32 %v2688, %v3172
        %v3175 = vmul.f32 %v2689, %v3172
        %v3176 = vmul.f32 %v2690, %v3172
        %v3177 = vmul.f32 %v2691, %v3172
        %v3178 = vmul.f32 %v2692, %v3172
        %v3179 = vmul.f32 %v2693, %v3172
        %v3180 = vmul.f32 %v2694, %v3172
        %v3181 = vmul.f32 %v2695, %v3172
        %v3182 = vmul.f32 %v2696, %v3172
        %v3183 = vmul.f32 %v2697, %v3172
        %v3184 = vmul.f32 %v2698, %v3172
        %v3185 = vmul.f32 %v2699, %v3172
        %v3186 = vmul.f32 %v2700, %v3172
        %v3187 = vmul.f32 %v2701, %v3172
        %v3188 = vmul.f32 %v2702, %v3172
        %v3189 = vmul.f32 %v2703, %v3172
        %v3190 = vmul.f32 %v2704, %v3172
        %v3191 = vmul.f32 %v2705, %v3172
        %v3192 = vmul.f32 %v2706, %v3172
        %v3193 = vmul.f32 %v2707, %v3172
        %v3194 = vmul.f32 %v2708, %v3172
        %v3195 = vmul.f32 %v2709, %v3172
        %v3196 = vmul.f32 %v2710, %v3172
        %v3197 = vmul.f32 %v2711, %v3172
        %v3198 = vmul.f32 %v2712, %v3172
        %v3199 = vmul.f32 %v2713, %v3172
        %v3200 = vmul.f32 %v2714, %v3172
        %v3201 = vmul.f32 %v2715, %v3172
        %v3202 = vmul.f32 %v2716, %v3172
        %v3203 = vmul.f32 %v2717, %v3172
        %v3204 = vmul.f32 %v2718, %v3172
        %v3205 = vmul.f32 %v2719, %v3172
        %v3206 = vmul.f32 %v2720, %v3172
        %v3207 = vmul.f32 %v2721, %v3172
        %v3208 = vmul.f32 %v2722, %v3172
        %v3209 = vmul.f32 %v2723, %v3172
        %v3210 = vmul.f32 %v2724, %v3172
        %v3211 = vmul.f32 %v2725, %v3172
        %v3212 = vmul.f32 %v2726, %v3172
        %v3213 = vmul.f32 %v2727, %v3172
        %v3214 = vmul.f32 %v2728, %v3172
        %v3215 = vmul.f32 %v2729, %v3172
        %v3216 = vmul.f32 %v2730, %v3172
        %v3217 = vmul.f32 %v2731, %v3172
        %v3218 = vmul.f32 %v2732, %v3172
        %v3219 = vmul.f32 %v2733, %v3172
        %v3220 = vmul.f32 %v2734, %v3172
        %v3221 = vmul.f32 %v2735, %v3172
        %v3222 = vmul.f32 %v2736, %v3172
        %v3223 = vmul.f32 %v2737, %v3172
        %v3224 = vmul.f32 %v2738, %v3172
        %v3225 = vmul.f32 %v2739, %v3172
        %v3226 = vmul.f32 %v2740, %v3172
        %v3227 = vmul.f32 %v2741, %v3172
        %v3228 = vmul.f32 %v2742, %v3172
        %v3229 = vmul.f32 %v2743, %v3172
        %v3230 = vmul.f32 %v2744, %v3172
        %v3231 = vmul.f32 %v2745, %v3172
        %v3232 = vmul.f32 %v2746, %v3172
        %v3233 = vmul.f32 %v2747, %v3172
        %v3234 = vmul.f32 %v2748, %v3172
        %v3235 = vmul.f32 %v2749, %v3172
        %v3236 = vmul.f32 %v2750, %v3172
        %v3237 = vmul.f32 %v2751, %v3172
        %v3239 = vperm.slane %v3170, 0
        %v3241 = vadd.f32 %v3174, %v3239
        %v3242 = vadd.f32 %v3175, %v3239
        %v3243 = vadd.f32 %v3176, %v3239
        %v3244 = vadd.f32 %v3177, %v3239
        %v3245 = vadd.f32 %v3178, %v3239
        %v3246 = vadd.f32 %v3179, %v3239
        %v3247 = vadd.f32 %v3180, %v3239
        %v3248 = vadd.f32 %v3181, %v3239
        %v3249 = vadd.f32 %v3182, %v3239
        %v3250 = vadd.f32 %v3183, %v3239
        %v3251 = vadd.f32 %v3184, %v3239
        %v3252 = vadd.f32 %v3185, %v3239
        %v3253 = vadd.f32 %v3186, %v3239
        %v3254 = vadd.f32 %v3187, %v3239
        %v3255 = vadd.f32 %v3188, %v3239
        %v3256 = vadd.f32 %v3189, %v3239
        %v3257 = vadd.f32 %v3190, %v3239
        %v3258 = vadd.f32 %v3191, %v3239
        %v3259 = vadd.f32 %v3192, %v3239
        %v3260 = vadd.f32 %v3193, %v3239
        %v3261 = vadd.f32 %v3194, %v3239
        %v3262 = vadd.f32 %v3195, %v3239
        %v3263 = vadd.f32 %v3196, %v3239
        %v3264 = vadd.f32 %v3197, %v3239
        %v3265 = vadd.f32 %v3198, %v3239
        %v3266 = vadd.f32 %v3199, %v3239
        %v3267 = vadd.f32 %v3200, %v3239
        %v3268 = vadd.f32 %v3201, %v3239
        %v3269 = vadd.f32 %v3202, %v3239
        %v3270 = vadd.f32 %v3203, %v3239
        %v3271 = vadd.f32 %v3204, %v3239
        %v3272 = vadd.f32 %v3205, %v3239
        %v3273 = vadd.f32 %v3206, %v3239
        %v3274 = vadd.f32 %v3207, %v3239
        %v3275 = vadd.f32 %v3208, %v3239
        %v3276 = vadd.f32 %v3209, %v3239
        %v3277 = vadd.f32 %v3210, %v3239
        %v3278 = vadd.f32 %v3211, %v3239
        %v3279 = vadd.f32 %v3212, %v3239
        %v3280 = vadd.f32 %v3213, %v3239
        %v3281 = vadd.f32 %v3214, %v3239
        %v3282 = vadd.f32 %v3215, %v3239
        %v3283 = vadd.f32 %v3216, %v3239
        %v3284 = vadd.f32 %v3217, %v3239
        %v3285 = vadd.f32 %v3218, %v3239
        %v3286 = vadd.f32 %v3219, %v3239
        %v3287 = vadd.f32 %v3220, %v3239
        %v3288 = vadd.f32 %v3221, %v3239
        %v3289 = vadd.f32 %v3222, %v3239
        %v3290 = vadd.f32 %v3223, %v3239
        %v3291 = vadd.f32 %v3224, %v3239
        %v3292 = vadd.f32 %v3225, %v3239
        %v3293 = vadd.f32 %v3226, %v3239
        %v3294 = vadd.f32 %v3227, %v3239
        %v3295 = vadd.f32 %v3228, %v3239
        %v3296 = vadd.f32 %v3229, %v3239
        %v3297 = vadd.f32 %v3230, %v3239
        %v3298 = vadd.f32 %v3231, %v3239
        %v3299 = vadd.f32 %v3232, %v3239
        %v3300 = vadd.f32 %v3233, %v3239
        %v3301 = vadd.f32 %v3234, %v3239
        %v3302 = vadd.f32 %v3235, %v3239
        %v3303 = vadd.f32 %v3236, %v3239
        %v3304 = vadd.f32 %v3237, %v3239
        %v3305 = vmax.f32 %v3241, 0.0
        %v3306 = vmax.f32 %v3242, 0.0
        %v3307 = vmax.f32 %v3243, 0.0
        %v3308 = vmax.f32 %v3244, 0.0
        %v3309 = vmax.f32 %v3245, 0.0
        %v3310 = vmax.f32 %v3246, 0.0
        %v3311 = vmax.f32 %v3247, 0.0
        %v3312 = vmax.f32 %v3248, 0.0
        %v3313 = vmax.f32 %v3249, 0.0
        %v3314 = vmax.f32 %v3250, 0.0
        %v3315 = vmax.f32 %v3251, 0.0
        %v3316 = vmax.f32 %v3252, 0.0
        %v3317 = vmax.f32 %v3253, 0.0
        %v3318 = vmax.f32 %v3254, 0.0
        %v3319 = vmax.f32 %v3255, 0.0
        %v3320 = vmax.f32 %v3256, 0.0
        %v3321 = vmax.f32 %v3257, 0.0
        %v3322 = vmax.f32 %v3258, 0.0
        %v3323 = vmax.f32 %v3259, 0.0
        %v3324 = vmax.f32 %v3260, 0.0
        %v3325 = vmax.f32 %v3261, 0.0
        %v3326 = vmax.f32 %v3262, 0.0
        %v3327 = vmax.f32 %v3263, 0.0
        %v3328 = vmax.f32 %v3264, 0.0
        %v3329 = vmax.f32 %v3265, 0.0
        %v3330 = vmax.f32 %v3266, 0.0
        %v3331 = vmax.f32 %v3267, 0.0
        %v3332 = vmax.f32 %v3268, 0.0
        %v3333 = vmax.f32 %v3269, 0.0
        %v3334 = vmax.f32 %v3270, 0.0
        %v3335 = vmax.f32 %v3271, 0.0
        %v3336 = vmax.f32 %v3272, 0.0
        %v3337 = vmax.f32 %v3273, 0.0
        %v3338 = vmax.f32 %v3274, 0.0
        %v3339 = vmax.f32 %v3275, 0.0
        %v3340 = vmax.f32 %v3276, 0.0
        %v3341 = vmax.f32 %v3277, 0.0
        %v3342 = vmax.f32 %v3278, 0.0
        %v3343 = vmax.f32 %v3279, 0.0
        %v3344 = vmax.f32 %v3280, 0.0
        %v3345 = vmax.f32 %v3281, 0.0
        %v3346 = vmax.f32 %v3282, 0.0
        %v3347 = vmax.f32 %v3283, 0.0
        %v3348 = vmax.f32 %v3284, 0.0
        %v3349 = vmax.f32 %v3285, 0.0
        %v3350 = vmax.f32 %v3286, 0.0
        %v3351 = vmax.f32 %v3287, 0.0
        %v3352 = vmax.f32 %v3288, 0.0
        %v3353 = vmax.f32 %v3289, 0.0
        %v3354 = vmax.f32 %v3290, 0.0
        %v3355 = vmax.f32 %v3291, 0.0
        %v3356 = vmax.f32 %v3292, 0.0
        %v3357 = vmax.f32 %v3293, 0.0
        %v3358 = vmax.f32 %v3294, 0.0
        %v3359 = vmax.f32 %v3295, 0.0
        %v3360 = vmax.f32 %v3296, 0.0
        %v3361 = vmax.f32 %v3297, 0.0
        %v3362 = vmax.f32 %v3298, 0.0
        %v3363 = vmax.f32 %v3299, 0.0
        %v3364 = vmax.f32 %v3300, 0.0
        %v3365 = vmax.f32 %v3301, 0.0
        %v3366 = vmax.f32 %v3302, 0.0
        %v3367 = vmax.f32 %v3303, 0.0
        %v3368 = vmax.f32 %v3304, 0.0
        %s3369 = scalar_lea.vmem [#allocation6], 24
        %3370 = vst.msk [vmem:[%s3369 + $0x1] sm:$0xff] %vm413, %v3305
        %3371 = vst.msk [vmem:[%s3369 + $0x9] sm:$0xff] %vm413, %v3306
        %3372 = vst.msk [vmem:[%s3369 + $0x19] sm:$0xff] %vm413, %v3307
        %3373 = vst.msk [vmem:[%s3369 + $0x21] sm:$0xff] %vm413, %v3308
        %3374 = vst.msk [vmem:[%s3369 + $0x31] sm:$0xff] %vm413, %v3309
        %3375 = vst.msk [vmem:[%s3369 + $0x39] sm:$0xff] %vm413, %v3310
        %3376 = vst.msk [vmem:[%s3369 + $0x49] sm:$0xff] %vm413, %v3311
        %3377 = vst.msk [vmem:[%s3369 + $0x51] sm:$0xff] %vm413, %v3312
        %3378 = vst.msk [vmem:[%s3369 + $0x61] sm:$0xff] %vm413, %v3313
        %3379 = vst.msk [vmem:[%s3369 + $0x69] sm:$0xff] %vm413, %v3314
        %3380 = vst.msk [vmem:[%s3369 + $0x79] sm:$0xff] %vm413, %v3315
        %3381 = vst.msk [vmem:[%s3369 + $0x81] sm:$0xff] %vm413, %v3316
        %3382 = vst.msk [vmem:[%s3369 + $0x91] sm:$0xff] %vm413, %v3317
        %3383 = vst.msk [vmem:[%s3369 + $0x99] sm:$0xff] %vm413, %v3318
        %3384 = vst.msk [vmem:[%s3369 + $0xa9] sm:$0xff] %vm413, %v3319
        %3385 = vst.msk [vmem:[%s3369 + $0xb1] sm:$0xff] %vm413, %v3320
        %3386 = vst.msk [vmem:[%s3369 + $0xc1] sm:$0xff] %vm413, %v3321
        %3387 = vst.msk [vmem:[%s3369 + $0xc9] sm:$0xff] %vm413, %v3322
        %3388 = vst.msk [vmem:[%s3369 + $0xd9] sm:$0xff] %vm413, %v3323
        %3389 = vst.msk [vmem:[%s3369 + $0xe1] sm:$0xff] %vm413, %v3324
        %3390 = vst.msk [vmem:[%s3369 + $0xf1] sm:$0xff] %vm413, %v3325
        %3391 = vst.msk [vmem:[%s3369 + $0xf9] sm:$0xff] %vm413, %v3326
        %3392 = vst.msk [vmem:[%s3369 + $0x109] sm:$0xff] %vm413, %v3327
        %3393 = vst.msk [vmem:[%s3369 + $0x111] sm:$0xff] %vm413, %v3328
        %3394 = vst.msk [vmem:[%s3369 + $0x121] sm:$0xff] %vm413, %v3329
        %3395 = vst.msk [vmem:[%s3369 + $0x129] sm:$0xff] %vm413, %v3330
        %3396 = vst.msk [vmem:[%s3369 + $0x139] sm:$0xff] %vm413, %v3331
        %3397 = vst.msk [vmem:[%s3369 + $0x141] sm:$0xff] %vm413, %v3332
        %3398 = vst.msk [vmem:[%s3369 + $0x151] sm:$0xff] %vm413, %v3333
        %3399 = vst.msk [vmem:[%s3369 + $0x159] sm:$0xff] %vm413, %v3334
        %3400 = vst.msk [vmem:[%s3369 + $0x169] sm:$0xff] %vm413, %v3335
        %3401 = vst.msk [vmem:[%s3369 + $0x171] sm:$0xff] %vm413, %v3336
        %v3402 = vld [vmem:[#allocation6] sm:$0xff]
        %v3403 = vld [vmem:[#allocation6 + $0x8] sm:$0xff]
        %v3404 = vld [vmem:[#allocation6 + $0x18] sm:$0xff]
        %v3405 = vld [vmem:[#allocation6 + $0x20] sm:$0xff]
        %v3406 = vld [vmem:[#allocation6 + $0x30] sm:$0xff]
        %v3407 = vld [vmem:[#allocation6 + $0x38] sm:$0xff]
        %v3408 = vld [vmem:[#allocation6 + $0x48] sm:$0xff]
        %v3409 = vld [vmem:[#allocation6 + $0x50] sm:$0xff]
        %v3410 = vld [vmem:[#allocation6 + $0x60] sm:$0xff]
        %v3411 = vld [vmem:[#allocation6 + $0x68] sm:$0xff]
        %v3412 = vld [vmem:[#allocation6 + $0x78] sm:$0xff]
        %v3413 = vld [vmem:[#allocation6 + $0x80] sm:$0xff]
        %v3414 = vld [vmem:[#allocation6 + $0x90] sm:$0xff]
        %v3415 = vld [vmem:[#allocation6 + $0x98] sm:$0xff]
        %v3416 = vld [vmem:[#allocation6 + $0xa8] sm:$0xff]
        %v3417 = vld [vmem:[#allocation6 + $0xb0] sm:$0xff]
        %v3418 = vld [vmem:[#allocation6 + $0xc0] sm:$0xff]
        %v3419 = vld [vmem:[#allocation6 + $0xc8] sm:$0xff]
        %v3420 = vld [vmem:[#allocation6 + $0xd8] sm:$0xff]
        %v3421 = vld [vmem:[#allocation6 + $0xe0] sm:$0xff]
        %v3422 = vld [vmem:[#allocation6 + $0xf0] sm:$0xff]
        %v3423 = vld [vmem:[#allocation6 + $0xf8] sm:$0xff]
        %v3424 = vld [vmem:[#allocation6 + $0x108] sm:$0xff]
        %v3425 = vld [vmem:[#allocation6 + $0x110] sm:$0xff]
        %v3426 = vld [vmem:[#allocation6 + $0x120] sm:$0xff]
        %v3427 = vld [vmem:[#allocation6 + $0x128] sm:$0xff]
        %v3428 = vld [vmem:[#allocation6 + $0x138] sm:$0xff]
        %v3429 = vld [vmem:[#allocation6 + $0x140] sm:$0xff]
        %v3430 = vld [vmem:[#allocation6 + $0x150] sm:$0xff]
        %v3431 = vld [vmem:[#allocation6 + $0x158] sm:$0xff]
        %v3432 = vld [vmem:[#allocation6 + $0x168] sm:$0xff]
        %v3433 = vld [vmem:[#allocation6 + $0x170] sm:$0xff]
        %v3434 = vpack.c.bf16 %v3402, %v3402
        %v3435 = vpack.c.bf16 %v3403, %v3403
        %v3436 = vpack.c.bf16 %v3404, %v3404
        %v3437 = vpack.c.bf16 %v3405, %v3405
        %v3438 = vpack.c.bf16 %v3406, %v3406
        %v3439 = vpack.c.bf16 %v3407, %v3407
        %v3440 = vpack.c.bf16 %v3408, %v3408
        %v3441 = vpack.c.bf16 %v3409, %v3409
        %v3442 = vpack.c.bf16 %v3410, %v3410
        %v3443 = vpack.c.bf16 %v3411, %v3411
        %v3444 = vpack.c.bf16 %v3412, %v3412
        %v3445 = vpack.c.bf16 %v3413, %v3413
        %v3446 = vpack.c.bf16 %v3414, %v3414
        %v3447 = vpack.c.bf16 %v3415, %v3415
        %v3448 = vpack.c.bf16 %v3416, %v3416
        %v3449 = vpack.c.bf16 %v3417, %v3417
        %v3450 = vpack.c.bf16 %v3418, %v3418
        %v3451 = vpack.c.bf16 %v3419, %v3419
        %v3452 = vpack.c.bf16 %v3420, %v3420
        %v3453 = vpack.c.bf16 %v3421, %v3421
        %v3454 = vpack.c.bf16 %v3422, %v3422
        %v3455 = vpack.c.bf16 %v3423, %v3423
        %v3456 = vpack.c.bf16 %v3424, %v3424
        %v3457 = vpack.c.bf16 %v3425, %v3425
        %v3458 = vpack.c.bf16 %v3426, %v3426
        %v3459 = vpack.c.bf16 %v3427, %v3427
        %v3460 = vpack.c.bf16 %v3428, %v3428
        %v3461 = vpack.c.bf16 %v3429, %v3429
        %v3462 = vpack.c.bf16 %v3430, %v3430
        %v3463 = vpack.c.bf16 %v3431, %v3431
        %v3464 = vpack.c.bf16 %v3432, %v3432
        %v3465 = vpack.c.bf16 %v3433, %v3433
        %3466 = vst.msk [vmem:[#allocation7] sm:$0xf] %vm543, %v3434
        %3467 = vst.msk [vmem:[#allocation7 + $0x4] sm:$0xf] %vm543, %v3435
        %3468 = vst.msk [vmem:[#allocation7 + $0x8] sm:$0xf] %vm543, %v3436
        %3469 = vst.msk [vmem:[#allocation7 + $0xc] sm:$0xf] %vm543, %v3437
        %3470 = vst.msk [vmem:[#allocation7 + $0x10] sm:$0xf] %vm543, %v3438
        %3471 = vst.msk [vmem:[#allocation7 + $0x14] sm:$0xf] %vm543, %v3439
        %3472 = vst.msk [vmem:[#allocation7 + $0x18] sm:$0xf] %vm543, %v3440
        %3473 = vst.msk [vmem:[#allocation7 + $0x1c] sm:$0xf] %vm543, %v3441
        %3474 = vst.msk [vmem:[#allocation7 + $0x20] sm:$0xf] %vm543, %v3442
        %3475 = vst.msk [vmem:[#allocation7 + $0x24] sm:$0xf] %vm543, %v3443
        %3476 = vst.msk [vmem:[#allocation7 + $0x28] sm:$0xf] %vm543, %v3444
        %3477 = vst.msk [vmem:[#allocation7 + $0x2c] sm:$0xf] %vm543, %v3445
        %3478 = vst.msk [vmem:[#allocation7 + $0x30] sm:$0xf] %vm543, %v3446
        %3479 = vst.msk [vmem:[#allocation7 + $0x34] sm:$0xf] %vm543, %v3447
        %3480 = vst.msk [vmem:[#allocation7 + $0x38] sm:$0xf] %vm543, %v3448
        %3481 = vst.msk [vmem:[#allocation7 + $0x3c] sm:$0xf] %vm543, %v3449
        %3482 = vst.msk [vmem:[#allocation7 + $0x40] sm:$0xf] %vm543, %v3450
        %3483 = vst.msk [vmem:[#allocation7 + $0x44] sm:$0xf] %vm543, %v3451
        %3484 = vst.msk [vmem:[#allocation7 + $0x48] sm:$0xf] %vm543, %v3452
        %3485 = vst.msk [vmem:[#allocation7 + $0x4c] sm:$0xf] %vm543, %v3453
        %3486 = vst.msk [vmem:[#allocation7 + $0x50] sm:$0xf] %vm543, %v3454
        %3487 = vst.msk [vmem:[#allocation7 + $0x54] sm:$0xf] %vm543, %v3455
        %3488 = vst.msk [vmem:[#allocation7 + $0x58] sm:$0xf] %vm543, %v3456
        %3489 = vst.msk [vmem:[#allocation7 + $0x5c] sm:$0xf] %vm543, %v3457
        %3490 = vst.msk [vmem:[#allocation7 + $0x60] sm:$0xf] %vm543, %v3458
        %3491 = vst.msk [vmem:[#allocation7 + $0x64] sm:$0xf] %vm543, %v3459
        %3492 = vst.msk [vmem:[#allocation7 + $0x68] sm:$0xf] %vm543, %v3460
        %3493 = vst.msk [vmem:[#allocation7 + $0x6c] sm:$0xf] %vm543, %v3461
        %3494 = vst.msk [vmem:[#allocation7 + $0x70] sm:$0xf] %vm543, %v3462
        %3495 = vst.msk [vmem:[#allocation7 + $0x74] sm:$0xf] %vm543, %v3463
        %3496 = vst.msk [vmem:[#allocation7 + $0x78] sm:$0xf] %vm543, %v3464
        %3497 = vst.msk [vmem:[#allocation7 + $0x7c] sm:$0xf] %vm543, %v3465
        %v3498 = vld [vmem:[#allocation6 + $0x1] sm:$0xff]
        %v3499 = vld [vmem:[#allocation6 + $0x9] sm:$0xff]
        %v3500 = vld [vmem:[#allocation6 + $0x19] sm:$0xff]
        %v3501 = vld [vmem:[#allocation6 + $0x21] sm:$0xff]
        %v3502 = vld [vmem:[#allocation6 + $0x31] sm:$0xff]
        %v3503 = vld [vmem:[#allocation6 + $0x39] sm:$0xff]
        %v3504 = vld [vmem:[#allocation6 + $0x49] sm:$0xff]
        %v3505 = vld [vmem:[#allocation6 + $0x51] sm:$0xff]
        %v3506 = vld [vmem:[#allocation6 + $0x61] sm:$0xff]
        %v3507 = vld [vmem:[#allocation6 + $0x69] sm:$0xff]
        %v3508 = vld [vmem:[#allocation6 + $0x79] sm:$0xff]
        %v3509 = vld [vmem:[#allocation6 + $0x81] sm:$0xff]
        %v3510 = vld [vmem:[#allocation6 + $0x91] sm:$0xff]
        %v3511 = vld [vmem:[#allocation6 + $0x99] sm:$0xff]
        %v3512 = vld [vmem:[#allocation6 + $0xa9] sm:$0xff]
        %v3513 = vld [vmem:[#allocation6 + $0xb1] sm:$0xff]
        %v3514 = vld [vmem:[#allocation6 + $0xc1] sm:$0xff]
        %v3515 = vld [vmem:[#allocation6 + $0xc9] sm:$0xff]
        %v3516 = vld [vmem:[#allocation6 + $0xd9] sm:$0xff]
        %v3517 = vld [vmem:[#allocation6 + $0xe1] sm:$0xff]
        %v3518 = vld [vmem:[#allocation6 + $0xf1] sm:$0xff]
        %v3519 = vld [vmem:[#allocation6 + $0xf9] sm:$0xff]
        %v3520 = vld [vmem:[#allocation6 + $0x109] sm:$0xff]
        %v3521 = vld [vmem:[#allocation6 + $0x111] sm:$0xff]
        %v3522 = vld [vmem:[#allocation6 + $0x121] sm:$0xff]
        %v3523 = vld [vmem:[#allocation6 + $0x129] sm:$0xff]
        %v3524 = vld [vmem:[#allocation6 + $0x139] sm:$0xff]
        %v3525 = vld [vmem:[#allocation6 + $0x141] sm:$0xff]
        %v3526 = vld [vmem:[#allocation6 + $0x151] sm:$0xff]
        %v3527 = vld [vmem:[#allocation6 + $0x159] sm:$0xff]
        %v3528 = vld [vmem:[#allocation6 + $0x169] sm:$0xff]
        %v3529 = vld [vmem:[#allocation6 + $0x171] sm:$0xff]
        %v3530 = vpack.c.bf16 %v3498, %v3498
        %v3531 = vpack.c.bf16 %v3499, %v3499
        %v3532 = vpack.c.bf16 %v3500, %v3500
        %v3533 = vpack.c.bf16 %v3501, %v3501
        %v3534 = vpack.c.bf16 %v3502, %v3502
        %v3535 = vpack.c.bf16 %v3503, %v3503
        %v3536 = vpack.c.bf16 %v3504, %v3504
        %v3537 = vpack.c.bf16 %v3505, %v3505
        %v3538 = vpack.c.bf16 %v3506, %v3506
        %v3539 = vpack.c.bf16 %v3507, %v3507
        %v3540 = vpack.c.bf16 %v3508, %v3508
        %v3541 = vpack.c.bf16 %v3509, %v3509
        %v3542 = vpack.c.bf16 %v3510, %v3510
        %v3543 = vpack.c.bf16 %v3511, %v3511
        %v3544 = vpack.c.bf16 %v3512, %v3512
        %v3545 = vpack.c.bf16 %v3513, %v3513
        %v3546 = vpack.c.bf16 %v3514, %v3514
        %v3547 = vpack.c.bf16 %v3515, %v3515
        %v3548 = vpack.c.bf16 %v3516, %v3516
        %v3549 = vpack.c.bf16 %v3517, %v3517
        %v3550 = vpack.c.bf16 %v3518, %v3518
        %v3551 = vpack.c.bf16 %v3519, %v3519
        %v3552 = vpack.c.bf16 %v3520, %v3520
        %v3553 = vpack.c.bf16 %v3521, %v3521
        %v3554 = vpack.c.bf16 %v3522, %v3522
        %v3555 = vpack.c.bf16 %v3523, %v3523
        %v3556 = vpack.c.bf16 %v3524, %v3524
        %v3557 = vpack.c.bf16 %v3525, %v3525
        %v3558 = vpack.c.bf16 %v3526, %v3526
        %v3559 = vpack.c.bf16 %v3527, %v3527
        %v3560 = vpack.c.bf16 %v3528, %v3528
        %v3561 = vpack.c.bf16 %v3529, %v3529
        %3594 = vrot.lane.b32.xlu0 %v3530, 4
        %v3595 = vpop.permute.xlu0 %3594
        %3596 = vrot.lane.b32.xlu0 %v3531, 4
        %v3597 = vpop.permute.xlu0 %3596
        %3598 = vrot.lane.b32.xlu0 %v3532, 4
        %v3599 = vpop.permute.xlu0 %3598
        %3600 = vrot.lane.b32.xlu0 %v3533, 4
        %v3601 = vpop.permute.xlu0 %3600
        %3602 = vrot.lane.b32.xlu0 %v3534, 4
        %v3603 = vpop.permute.xlu0 %3602
        %3604 = vrot.lane.b32.xlu0 %v3535, 4
        %v3605 = vpop.permute.xlu0 %3604
        %3606 = vrot.lane.b32.xlu0 %v3536, 4
        %v3607 = vpop.permute.xlu0 %3606
        %3608 = vrot.lane.b32.xlu0 %v3537, 4
        %v3609 = vpop.permute.xlu0 %3608
        %3610 = vrot.lane.b32.xlu0 %v3538, 4
        %v3611 = vpop.permute.xlu0 %3610
        %3612 = vrot.lane.b32.xlu0 %v3539, 4
        %v3613 = vpop.permute.xlu0 %3612
        %3614 = vrot.lane.b32.xlu0 %v3540, 4
        %v3615 = vpop.permute.xlu0 %3614
        %3616 = vrot.lane.b32.xlu0 %v3541, 4
        %v3617 = vpop.permute.xlu0 %3616
        %3618 = vrot.lane.b32.xlu0 %v3542, 4
        %v3619 = vpop.permute.xlu0 %3618
        %3620 = vrot.lane.b32.xlu0 %v3543, 4
        %v3621 = vpop.permute.xlu0 %3620
        %3622 = vrot.lane.b32.xlu0 %v3544, 4
        %v3623 = vpop.permute.xlu0 %3622
        %3624 = vrot.lane.b32.xlu0 %v3545, 4
        %v3625 = vpop.permute.xlu0 %3624
        %3626 = vrot.lane.b32.xlu0 %v3546, 4
        %v3627 = vpop.permute.xlu0 %3626
        %3628 = vrot.lane.b32.xlu0 %v3547, 4
        %v3629 = vpop.permute.xlu0 %3628
        %3630 = vrot.lane.b32.xlu0 %v3548, 4
        %v3631 = vpop.permute.xlu0 %3630
        %3632 = vrot.lane.b32.xlu0 %v3549, 4
        %v3633 = vpop.permute.xlu0 %3632
        %3634 = vrot.lane.b32.xlu0 %v3550, 4
        %v3635 = vpop.permute.xlu0 %3634
        %3636 = vrot.lane.b32.xlu0 %v3551, 4
        %v3637 = vpop.permute.xlu0 %3636
        %3638 = vrot.lane.b32.xlu0 %v3552, 4
        %v3639 = vpop.permute.xlu0 %3638
        %3640 = vrot.lane.b32.xlu0 %v3553, 4
        %v3641 = vpop.permute.xlu0 %3640
        %3642 = vrot.lane.b32.xlu0 %v3554, 4
        %v3643 = vpop.permute.xlu0 %3642
        %3644 = vrot.lane.b32.xlu0 %v3555, 4
        %v3645 = vpop.permute.xlu0 %3644
        %3646 = vrot.lane.b32.xlu0 %v3556, 4
        %v3647 = vpop.permute.xlu0 %3646
        %3648 = vrot.lane.b32.xlu0 %v3557, 4
        %v3649 = vpop.permute.xlu0 %3648
        %3650 = vrot.lane.b32.xlu0 %v3558, 4
        %v3651 = vpop.permute.xlu0 %3650
        %3652 = vrot.lane.b32.xlu0 %v3559, 4
        %v3653 = vpop.permute.xlu0 %3652
        %3654 = vrot.lane.b32.xlu0 %v3560, 4
        %v3655 = vpop.permute.xlu0 %3654
        %3656 = vrot.lane.b32.xlu0 %v3561, 4
        %v3657 = vpop.permute.xlu0 %3656
        %3690 = vst.msk [vmem:[#allocation7] sm:$0xf] %vm768, %v3595
        %3691 = vst.msk [vmem:[#allocation7 + $0x4] sm:$0xf] %vm768, %v3597
        %3692 = vst.msk [vmem:[#allocation7 + $0x8] sm:$0xf] %vm768, %v3599
        %3693 = vst.msk [vmem:[#allocation7 + $0xc] sm:$0xf] %vm768, %v3601
        %3694 = vst.msk [vmem:[#allocation7 + $0x10] sm:$0xf] %vm768, %v3603
        %3695 = vst.msk [vmem:[#allocation7 + $0x14] sm:$0xf] %vm768, %v3605
        %3696 = vst.msk [vmem:[#allocation7 + $0x18] sm:$0xf] %vm768, %v3607
        %3697 = vst.msk [vmem:[#allocation7 + $0x1c] sm:$0xf] %vm768, %v3609
        %3698 = vst.msk [vmem:[#allocation7 + $0x20] sm:$0xf] %vm768, %v3611
        %3699 = vst.msk [vmem:[#allocation7 + $0x24] sm:$0xf] %vm768, %v3613
        %3700 = vst.msk [vmem:[#allocation7 + $0x28] sm:$0xf] %vm768, %v3615
        %3701 = vst.msk [vmem:[#allocation7 + $0x2c] sm:$0xf] %vm768, %v3617
        %3702 = vst.msk [vmem:[#allocation7 + $0x30] sm:$0xf] %vm768, %v3619
        %3703 = vst.msk [vmem:[#allocation7 + $0x34] sm:$0xf] %vm768, %v3621
        %3704 = vst.msk [vmem:[#allocation7 + $0x38] sm:$0xf] %vm768, %v3623
        %3705 = vst.msk [vmem:[#allocation7 + $0x3c] sm:$0xf] %vm768, %v3625
        %3706 = vst.msk [vmem:[#allocation7 + $0x40] sm:$0xf] %vm768, %v3627
        %3707 = vst.msk [vmem:[#allocation7 + $0x44] sm:$0xf] %vm768, %v3629
        %3708 = vst.msk [vmem:[#allocation7 + $0x48] sm:$0xf] %vm768, %v3631
        %3709 = vst.msk [vmem:[#allocation7 + $0x4c] sm:$0xf] %vm768, %v3633
        %3710 = vst.msk [vmem:[#allocation7 + $0x50] sm:$0xf] %vm768, %v3635
        %3711 = vst.msk [vmem:[#allocation7 + $0x54] sm:$0xf] %vm768, %v3637
        %3712 = vst.msk [vmem:[#allocation7 + $0x58] sm:$0xf] %vm768, %v3639
        %3713 = vst.msk [vmem:[#allocation7 + $0x5c] sm:$0xf] %vm768, %v3641
        %3714 = vst.msk [vmem:[#allocation7 + $0x60] sm:$0xf] %vm768, %v3643
        %3715 = vst.msk [vmem:[#allocation7 + $0x64] sm:$0xf] %vm768, %v3645
        %3716 = vst.msk [vmem:[#allocation7 + $0x68] sm:$0xf] %vm768, %v3647
        %3717 = vst.msk [vmem:[#allocation7 + $0x6c] sm:$0xf] %vm768, %v3649
        %3718 = vst.msk [vmem:[#allocation7 + $0x70] sm:$0xf] %vm768, %v3651
        %3719 = vst.msk [vmem:[#allocation7 + $0x74] sm:$0xf] %vm768, %v3653
        %3720 = vst.msk [vmem:[#allocation7 + $0x78] sm:$0xf] %vm768, %v3655
        %3721 = vst.msk [vmem:[#allocation7 + $0x7c] sm:$0xf] %vm768, %v3657
        %v3722 = vld [vmem:[#allocation6 + $0x2] sm:$0xff]
        %v3723 = vld [vmem:[#allocation6 + $0xa] sm:$0xff]
        %v3724 = vld [vmem:[#allocation6 + $0x1a] sm:$0xff]
        %v3725 = vld [vmem:[#allocation6 + $0x22] sm:$0xff]
        %v3726 = vld [vmem:[#allocation6 + $0x32] sm:$0xff]
        %v3727 = vld [vmem:[#allocation6 + $0x3a] sm:$0xff]
        %v3728 = vld [vmem:[#allocation6 + $0x4a] sm:$0xff]
        %v3729 = vld [vmem:[#allocation6 + $0x52] sm:$0xff]
        %v3730 = vld [vmem:[#allocation6 + $0x62] sm:$0xff]
        %v3731 = vld [vmem:[#allocation6 + $0x6a] sm:$0xff]
        %v3732 = vld [vmem:[#allocation6 + $0x7a] sm:$0xff]
        %v3733 = vld [vmem:[#allocation6 + $0x82] sm:$0xff]
        %v3734 = vld [vmem:[#allocation6 + $0x92] sm:$0xff]
        %v3735 = vld [vmem:[#allocation6 + $0x9a] sm:$0xff]
        %v3736 = vld [vmem:[#allocation6 + $0xaa] sm:$0xff]
        %v3737 = vld [vmem:[#allocation6 + $0xb2] sm:$0xff]
        %v3738 = vld [vmem:[#allocation6 + $0xc2] sm:$0xff]
        %v3739 = vld [vmem:[#allocation6 + $0xca] sm:$0xff]
        %v3740 = vld [vmem:[#allocation6 + $0xda] sm:$0xff]
        %v3741 = vld [vmem:[#allocation6 + $0xe2] sm:$0xff]
        %v3742 = vld [vmem:[#allocation6 + $0xf2] sm:$0xff]
        %v3743 = vld [vmem:[#allocation6 + $0xfa] sm:$0xff]
        %v3744 = vld [vmem:[#allocation6 + $0x10a] sm:$0xff]
        %v3745 = vld [vmem:[#allocation6 + $0x112] sm:$0xff]
        %v3746 = vld [vmem:[#allocation6 + $0x122] sm:$0xff]
        %v3747 = vld [vmem:[#allocation6 + $0x12a] sm:$0xff]
        %v3748 = vld [vmem:[#allocation6 + $0x13a] sm:$0xff]
        %v3749 = vld [vmem:[#allocation6 + $0x142] sm:$0xff]
        %v3750 = vld [vmem:[#allocation6 + $0x152] sm:$0xff]
        %v3751 = vld [vmem:[#allocation6 + $0x15a] sm:$0xff]
        %v3752 = vld [vmem:[#allocation6 + $0x16a] sm:$0xff]
        %v3753 = vld [vmem:[#allocation6 + $0x172] sm:$0xff]
        %v3754 = vpack.c.bf16 %v3722, %v3722
        %v3755 = vpack.c.bf16 %v3723, %v3723
        %v3756 = vpack.c.bf16 %v3724, %v3724
        %v3757 = vpack.c.bf16 %v3725, %v3725
        %v3758 = vpack.c.bf16 %v3726, %v3726
        %v3759 = vpack.c.bf16 %v3727, %v3727
        %v3760 = vpack.c.bf16 %v3728, %v3728
        %v3761 = vpack.c.bf16 %v3729, %v3729
        %v3762 = vpack.c.bf16 %v3730, %v3730
        %v3763 = vpack.c.bf16 %v3731, %v3731
        %v3764 = vpack.c.bf16 %v3732, %v3732
        %v3765 = vpack.c.bf16 %v3733, %v3733
        %v3766 = vpack.c.bf16 %v3734, %v3734
        %v3767 = vpack.c.bf16 %v3735, %v3735
        %v3768 = vpack.c.bf16 %v3736, %v3736
        %v3769 = vpack.c.bf16 %v3737, %v3737
        %v3770 = vpack.c.bf16 %v3738, %v3738
        %v3771 = vpack.c.bf16 %v3739, %v3739
        %v3772 = vpack.c.bf16 %v3740, %v3740
        %v3773 = vpack.c.bf16 %v3741, %v3741
        %v3774 = vpack.c.bf16 %v3742, %v3742
        %v3775 = vpack.c.bf16 %v3743, %v3743
        %v3776 = vpack.c.bf16 %v3744, %v3744
        %v3777 = vpack.c.bf16 %v3745, %v3745
        %v3778 = vpack.c.bf16 %v3746, %v3746
        %v3779 = vpack.c.bf16 %v3747, %v3747
        %v3780 = vpack.c.bf16 %v3748, %v3748
        %v3781 = vpack.c.bf16 %v3749, %v3749
        %v3782 = vpack.c.bf16 %v3750, %v3750
        %v3783 = vpack.c.bf16 %v3751, %v3751
        %v3784 = vpack.c.bf16 %v3752, %v3752
        %v3785 = vpack.c.bf16 %v3753, %v3753
        %3818 = vrot.lane.b32.xlu0 %v3754, 8
        %v3819 = vpop.permute.xlu0 %3818
        %3820 = vrot.lane.b32.xlu0 %v3755, 8
        %v3821 = vpop.permute.xlu0 %3820
        %3822 = vrot.lane.b32.xlu0 %v3756, 8
        %v3823 = vpop.permute.xlu0 %3822
        %3824 = vrot.lane.b32.xlu0 %v3757, 8
        %v3825 = vpop.permute.xlu0 %3824
        %3826 = vrot.lane.b32.xlu0 %v3758, 8
        %v3827 = vpop.permute.xlu0 %3826
        %3828 = vrot.lane.b32.xlu0 %v3759, 8
        %v3829 = vpop.permute.xlu0 %3828
        %3830 = vrot.lane.b32.xlu0 %v3760, 8
        %v3831 = vpop.permute.xlu0 %3830
        %3832 = vrot.lane.b32.xlu0 %v3761, 8
        %v3833 = vpop.permute.xlu0 %3832
        %3834 = vrot.lane.b32.xlu0 %v3762, 8
        %v3835 = vpop.permute.xlu0 %3834
        %3836 = vrot.lane.b32.xlu0 %v3763, 8
        %v3837 = vpop.permute.xlu0 %3836
        %3838 = vrot.lane.b32.xlu0 %v3764, 8
        %v3839 = vpop.permute.xlu0 %3838
        %3840 = vrot.lane.b32.xlu0 %v3765, 8
        %v3841 = vpop.permute.xlu0 %3840
        %3842 = vrot.lane.b32.xlu0 %v3766, 8
        %v3843 = vpop.permute.xlu0 %3842
        %3844 = vrot.lane.b32.xlu0 %v3767, 8
        %v3845 = vpop.permute.xlu0 %3844
        %3846 = vrot.lane.b32.xlu0 %v3768, 8
        %v3847 = vpop.permute.xlu0 %3846
        %3848 = vrot.lane.b32.xlu0 %v3769, 8
        %v3849 = vpop.permute.xlu0 %3848
        %3850 = vrot.lane.b32.xlu0 %v3770, 8
        %v3851 = vpop.permute.xlu0 %3850
        %3852 = vrot.lane.b32.xlu0 %v3771, 8
        %v3853 = vpop.permute.xlu0 %3852
        %3854 = vrot.lane.b32.xlu0 %v3772, 8
        %v3855 = vpop.permute.xlu0 %3854
        %3856 = vrot.lane.b32.xlu0 %v3773, 8
        %v3857 = vpop.permute.xlu0 %3856
        %3858 = vrot.lane.b32.xlu0 %v3774, 8
        %v3859 = vpop.permute.xlu0 %3858
        %3860 = vrot.lane.b32.xlu0 %v3775, 8
        %v3861 = vpop.permute.xlu0 %3860
        %3862 = vrot.lane.b32.xlu0 %v3776, 8
        %v3863 = vpop.permute.xlu0 %3862
        %3864 = vrot.lane.b32.xlu0 %v3777, 8
        %v3865 = vpop.permute.xlu0 %3864
        %3866 = vrot.lane.b32.xlu0 %v3778, 8
        %v3867 = vpop.permute.xlu0 %3866
        %3868 = vrot.lane.b32.xlu0 %v3779, 8
        %v3869 = vpop.permute.xlu0 %3868
        %3870 = vrot.lane.b32.xlu0 %v3780, 8
        %v3871 = vpop.permute.xlu0 %3870
        %3872 = vrot.lane.b32.xlu0 %v3781, 8
        %v3873 = vpop.permute.xlu0 %3872
        %3874 = vrot.lane.b32.xlu0 %v3782, 8
        %v3875 = vpop.permute.xlu0 %3874
        %3876 = vrot.lane.b32.xlu0 %v3783, 8
        %v3877 = vpop.permute.xlu0 %3876
        %3878 = vrot.lane.b32.xlu0 %v3784, 8
        %v3879 = vpop.permute.xlu0 %3878
        %3880 = vrot.lane.b32.xlu0 %v3785, 8
        %v3881 = vpop.permute.xlu0 %3880
        %3914 = vst.msk [vmem:[#allocation7] sm:$0xf] %vm993, %v3819
        %3915 = vst.msk [vmem:[#allocation7 + $0x4] sm:$0xf] %vm993, %v3821
        %3916 = vst.msk [vmem:[#allocation7 + $0x8] sm:$0xf] %vm993, %v3823
        %3917 = vst.msk [vmem:[#allocation7 + $0xc] sm:$0xf] %vm993, %v3825
        %3918 = vst.msk [vmem:[#allocation7 + $0x10] sm:$0xf] %vm993, %v3827
        %3919 = vst.msk [vmem:[#allocation7 + $0x14] sm:$0xf] %vm993, %v3829
        %3920 = vst.msk [vmem:[#allocation7 + $0x18] sm:$0xf] %vm993, %v3831
        %3921 = vst.msk [vmem:[#allocation7 + $0x1c] sm:$0xf] %vm993, %v3833
        %3922 = vst.msk [vmem:[#allocation7 + $0x20] sm:$0xf] %vm993, %v3835
        %3923 = vst.msk [vmem:[#allocation7 + $0x24] sm:$0xf] %vm993, %v3837
        %3924 = vst.msk [vmem:[#allocation7 + $0x28] sm:$0xf] %vm993, %v3839
        %3925 = vst.msk [vmem:[#allocation7 + $0x2c] sm:$0xf] %vm993, %v3841
        %3926 = vst.msk [vmem:[#allocation7 + $0x30] sm:$0xf] %vm993, %v3843
        %3927 = vst.msk [vmem:[#allocation7 + $0x34] sm:$0xf] %vm993, %v3845
        %3928 = vst.msk [vmem:[#allocation7 + $0x38] sm:$0xf] %vm993, %v3847
        %3929 = vst.msk [vmem:[#allocation7 + $0x3c] sm:$0xf] %vm993, %v3849
        %3930 = vst.msk [vmem:[#allocation7 + $0x40] sm:$0xf] %vm993, %v3851
        %3931 = vst.msk [vmem:[#allocation7 + $0x44] sm:$0xf] %vm993, %v3853
        %3932 = vst.msk [vmem:[#allocation7 + $0x48] sm:$0xf] %vm993, %v3855
        %3933 = vst.msk [vmem:[#allocation7 + $0x4c] sm:$0xf] %vm993, %v3857
        %3934 = vst.msk [vmem:[#allocation7 + $0x50] sm:$0xf] %vm993, %v3859
        %3935 = vst.msk [vmem:[#allocation7 + $0x54] sm:$0xf] %vm993, %v3861
        %3936 = vst.msk [vmem:[#allocation7 + $0x58] sm:$0xf] %vm993, %v3863
        %3937 = vst.msk [vmem:[#allocation7 + $0x5c] sm:$0xf] %vm993, %v3865
        %3938 = vst.msk [vmem:[#allocation7 + $0x60] sm:$0xf] %vm993, %v3867
        %3939 = vst.msk [vmem:[#allocation7 + $0x64] sm:$0xf] %vm993, %v3869
        %3940 = vst.msk [vmem:[#allocation7 + $0x68] sm:$0xf] %vm993, %v3871
        %3941 = vst.msk [vmem:[#allocation7 + $0x6c] sm:$0xf] %vm993, %v3873
        %3942 = vst.msk [vmem:[#allocation7 + $0x70] sm:$0xf] %vm993, %v3875
        %3943 = vst.msk [vmem:[#allocation7 + $0x74] sm:$0xf] %vm993, %v3877
        %3944 = vst.msk [vmem:[#allocation7 + $0x78] sm:$0xf] %vm993, %v3879
        %3945 = vst.msk [vmem:[#allocation7 + $0x7c] sm:$0xf] %vm993, %v3881
        %v3946 = vld [vmem:[%s3369] sm:$0xff]
        %v3947 = vld [vmem:[%s3369 + $0x8] sm:$0xff]
        %v3948 = vld [vmem:[%s3369 + $0x18] sm:$0xff]
        %v3949 = vld [vmem:[%s3369 + $0x20] sm:$0xff]
        %v3950 = vld [vmem:[%s3369 + $0x30] sm:$0xff]
        %v3951 = vld [vmem:[%s3369 + $0x38] sm:$0xff]
        %v3952 = vld [vmem:[%s3369 + $0x48] sm:$0xff]
        %v3953 = vld [vmem:[%s3369 + $0x50] sm:$0xff]
        %v3954 = vld [vmem:[%s3369 + $0x60] sm:$0xff]
        %v3955 = vld [vmem:[%s3369 + $0x68] sm:$0xff]
        %v3956 = vld [vmem:[%s3369 + $0x78] sm:$0xff]
        %v3957 = vld [vmem:[%s3369 + $0x80] sm:$0xff]
        %v3958 = vld [vmem:[%s3369 + $0x90] sm:$0xff]
        %v3959 = vld [vmem:[%s3369 + $0x98] sm:$0xff]
        %v3960 = vld [vmem:[%s3369 + $0xa8] sm:$0xff]
        %v3961 = vld [vmem:[%s3369 + $0xb0] sm:$0xff]
        %v3962 = vld [vmem:[%s3369 + $0xc0] sm:$0xff]
        %v3963 = vld [vmem:[%s3369 + $0xc8] sm:$0xff]
        %v3964 = vld [vmem:[%s3369 + $0xd8] sm:$0xff]
        %v3965 = vld [vmem:[%s3369 + $0xe0] sm:$0xff]
        %v3966 = vld [vmem:[%s3369 + $0xf0] sm:$0xff]
        %v3967 = vld [vmem:[%s3369 + $0xf8] sm:$0xff]
        %v3968 = vld [vmem:[%s3369 + $0x108] sm:$0xff]
        %v3969 = vld [vmem:[%s3369 + $0x110] sm:$0xff]
        %v3970 = vld [vmem:[%s3369 + $0x120] sm:$0xff]
        %v3971 = vld [vmem:[%s3369 + $0x128] sm:$0xff]
        %v3972 = vld [vmem:[%s3369 + $0x138] sm:$0xff]
        %v3973 = vld [vmem:[%s3369 + $0x140] sm:$0xff]
        %v3974 = vld [vmem:[%s3369 + $0x150] sm:$0xff]
        %v3975 = vld [vmem:[%s3369 + $0x158] sm:$0xff]
        %v3976 = vld [vmem:[%s3369 + $0x168] sm:$0xff]
        %v3977 = vld [vmem:[%s3369 + $0x170] sm:$0xff]
        %v3978 = vpack.c.bf16 %v3946, %v3946
        %v3979 = vpack.c.bf16 %v3947, %v3947
        %v3980 = vpack.c.bf16 %v3948, %v3948
        %v3981 = vpack.c.bf16 %v3949, %v3949
        %v3982 = vpack.c.bf16 %v3950, %v3950
        %v3983 = vpack.c.bf16 %v3951, %v3951
        %v3984 = vpack.c.bf16 %v3952, %v3952
        %v3985 = vpack.c.bf16 %v3953, %v3953
        %v3986 = vpack.c.bf16 %v3954, %v3954
        %v3987 = vpack.c.bf16 %v3955, %v3955
        %v3988 = vpack.c.bf16 %v3956, %v3956
        %v3989 = vpack.c.bf16 %v3957, %v3957
        %v3990 = vpack.c.bf16 %v3958, %v3958
        %v3991 = vpack.c.bf16 %v3959, %v3959
        %v3992 = vpack.c.bf16 %v3960, %v3960
        %v3993 = vpack.c.bf16 %v3961, %v3961
        %v3994 = vpack.c.bf16 %v3962, %v3962
        %v3995 = vpack.c.bf16 %v3963, %v3963
        %v3996 = vpack.c.bf16 %v3964, %v3964
        %v3997 = vpack.c.bf16 %v3965, %v3965
        %v3998 = vpack.c.bf16 %v3966, %v3966
        %v3999 = vpack.c.bf16 %v3967, %v3967
        %v4000 = vpack.c.bf16 %v3968, %v3968
        %v4001 = vpack.c.bf16 %v3969, %v3969
        %v4002 = vpack.c.bf16 %v3970, %v3970
        %v4003 = vpack.c.bf16 %v3971, %v3971
        %v4004 = vpack.c.bf16 %v3972, %v3972
        %v4005 = vpack.c.bf16 %v3973, %v3973
        %v4006 = vpack.c.bf16 %v3974, %v3974
        %v4007 = vpack.c.bf16 %v3975, %v3975
        %v4008 = vpack.c.bf16 %v3976, %v3976
        %v4009 = vpack.c.bf16 %v3977, %v3977
        %4042 = vrot.lane.b32.xlu0 %v3978, 12
        %v4043 = vpop.permute.xlu0 %4042
        %4044 = vrot.lane.b32.xlu0 %v3979, 12
        %v4045 = vpop.permute.xlu0 %4044
        %4046 = vrot.lane.b32.xlu0 %v3980, 12
        %v4047 = vpop.permute.xlu0 %4046
        %4048 = vrot.lane.b32.xlu0 %v3981, 12
        %v4049 = vpop.permute.xlu0 %4048
        %4050 = vrot.lane.b32.xlu0 %v3982, 12
        %v4051 = vpop.permute.xlu0 %4050
        %4052 = vrot.lane.b32.xlu0 %v3983, 12
        %v4053 = vpop.permute.xlu0 %4052
        %4054 = vrot.lane.b32.xlu0 %v3984, 12
        %v4055 = vpop.permute.xlu0 %4054
        %4056 = vrot.lane.b32.xlu0 %v3985, 12
        %v4057 = vpop.permute.xlu0 %4056
        %4058 = vrot.lane.b32.xlu0 %v3986, 12
        %v4059 = vpop.permute.xlu0 %4058
        %4060 = vrot.lane.b32.xlu0 %v3987, 12
        %v4061 = vpop.permute.xlu0 %4060
        %4062 = vrot.lane.b32.xlu0 %v3988, 12
        %v4063 = vpop.permute.xlu0 %4062
        %4064 = vrot.lane.b32.xlu0 %v3989, 12
        %v4065 = vpop.permute.xlu0 %4064
        %4066 = vrot.lane.b32.xlu0 %v3990, 12
        %v4067 = vpop.permute.xlu0 %4066
        %4068 = vrot.lane.b32.xlu0 %v3991, 12
        %v4069 = vpop.permute.xlu0 %4068
        %4070 = vrot.lane.b32.xlu0 %v3992, 12
        %v4071 = vpop.permute.xlu0 %4070
        %4072 = vrot.lane.b32.xlu0 %v3993, 12
        %v4073 = vpop.permute.xlu0 %4072
        %4074 = vrot.lane.b32.xlu0 %v3994, 12
        %v4075 = vpop.permute.xlu0 %4074
        %4076 = vrot.lane.b32.xlu0 %v3995, 12
        %v4077 = vpop.permute.xlu0 %4076
        %4078 = vrot.lane.b32.xlu0 %v3996, 12
        %v4079 = vpop.permute.xlu0 %4078
        %4080 = vrot.lane.b32.xlu0 %v3997, 12
        %v4081 = vpop.permute.xlu0 %4080
        %4082 = vrot.lane.b32.xlu0 %v3998, 12
        %v4083 = vpop.permute.xlu0 %4082
        %4084 = vrot.lane.b32.xlu0 %v3999, 12
        %v4085 = vpop.permute.xlu0 %4084
        %4086 = vrot.lane.b32.xlu0 %v4000, 12
        %v4087 = vpop.permute.xlu0 %4086
        %4088 = vrot.lane.b32.xlu0 %v4001, 12
        %v4089 = vpop.permute.xlu0 %4088
        %4090 = vrot.lane.b32.xlu0 %v4002, 12
        %v4091 = vpop.permute.xlu0 %4090
        %4092 = vrot.lane.b32.xlu0 %v4003, 12
        %v4093 = vpop.permute.xlu0 %4092
        %4094 = vrot.lane.b32.xlu0 %v4004, 12
        %v4095 = vpop.permute.xlu0 %4094
        %4096 = vrot.lane.b32.xlu0 %v4005, 12
        %v4097 = vpop.permute.xlu0 %4096
        %4098 = vrot.lane.b32.xlu0 %v4006, 12
        %v4099 = vpop.permute.xlu0 %4098
        %4100 = vrot.lane.b32.xlu0 %v4007, 12
        %v4101 = vpop.permute.xlu0 %4100
        %4102 = vrot.lane.b32.xlu0 %v4008, 12
        %v4103 = vpop.permute.xlu0 %4102
        %4104 = vrot.lane.b32.xlu0 %v4009, 12
        %v4105 = vpop.permute.xlu0 %4104
        %4138 = vst.msk [vmem:[#allocation7] sm:$0xf] %vm1218, %v4043
        %4139 = vst.msk [vmem:[#allocation7 + $0x4] sm:$0xf] %vm1218, %v4045
        %4140 = vst.msk [vmem:[#allocation7 + $0x8] sm:$0xf] %vm1218, %v4047
        %4141 = vst.msk [vmem:[#allocation7 + $0xc] sm:$0xf] %vm1218, %v4049
        %4142 = vst.msk [vmem:[#allocation7 + $0x10] sm:$0xf] %vm1218, %v4051
        %4143 = vst.msk [vmem:[#allocation7 + $0x14] sm:$0xf] %vm1218, %v4053
        %4144 = vst.msk [vmem:[#allocation7 + $0x18] sm:$0xf] %vm1218, %v4055
        %4145 = vst.msk [vmem:[#allocation7 + $0x1c] sm:$0xf] %vm1218, %v4057
        %4146 = vst.msk [vmem:[#allocation7 + $0x20] sm:$0xf] %vm1218, %v4059
        %4147 = vst.msk [vmem:[#allocation7 + $0x24] sm:$0xf] %vm1218, %v4061
        %4148 = vst.msk [vmem:[#allocation7 + $0x28] sm:$0xf] %vm1218, %v4063
        %4149 = vst.msk [vmem:[#allocation7 + $0x2c] sm:$0xf] %vm1218, %v4065
        %4150 = vst.msk [vmem:[#allocation7 + $0x30] sm:$0xf] %vm1218, %v4067
        %4151 = vst.msk [vmem:[#allocation7 + $0x34] sm:$0xf] %vm1218, %v4069
        %4152 = vst.msk [vmem:[#allocation7 + $0x38] sm:$0xf] %vm1218, %v4071
        %4153 = vst.msk [vmem:[#allocation7 + $0x3c] sm:$0xf] %vm1218, %v4073
        %4154 = vst.msk [vmem:[#allocation7 + $0x40] sm:$0xf] %vm1218, %v4075
        %4155 = vst.msk [vmem:[#allocation7 + $0x44] sm:$0xf] %vm1218, %v4077
        %4156 = vst.msk [vmem:[#allocation7 + $0x48] sm:$0xf] %vm1218, %v4079
        %4157 = vst.msk [vmem:[#allocation7 + $0x4c] sm:$0xf] %vm1218, %v4081
        %4158 = vst.msk [vmem:[#allocation7 + $0x50] sm:$0xf] %vm1218, %v4083
        %4159 = vst.msk [vmem:[#allocation7 + $0x54] sm:$0xf] %vm1218, %v4085
        %4160 = vst.msk [vmem:[#allocation7 + $0x58] sm:$0xf] %vm1218, %v4087
        %4161 = vst.msk [vmem:[#allocation7 + $0x5c] sm:$0xf] %vm1218, %v4089
        %4162 = vst.msk [vmem:[#allocation7 + $0x60] sm:$0xf] %vm1218, %v4091
        %4163 = vst.msk [vmem:[#allocation7 + $0x64] sm:$0xf] %vm1218, %v4093
        %4164 = vst.msk [vmem:[#allocation7 + $0x68] sm:$0xf] %vm1218, %v4095
        %4165 = vst.msk [vmem:[#allocation7 + $0x6c] sm:$0xf] %vm1218, %v4097
        %4166 = vst.msk [vmem:[#allocation7 + $0x70] sm:$0xf] %vm1218, %v4099
        %4167 = vst.msk [vmem:[#allocation7 + $0x74] sm:$0xf] %vm1218, %v4101
        %4168 = vst.msk [vmem:[#allocation7 + $0x78] sm:$0xf] %vm1218, %v4103
        %4169 = vst.msk [vmem:[#allocation7 + $0x7c] sm:$0xf] %vm1218, %v4105
        %v4170 = vld [vmem:[%s3369 + $0x1] sm:$0xff]
        %v4171 = vld [vmem:[%s3369 + $0x9] sm:$0xff]
        %v4172 = vld [vmem:[%s3369 + $0x19] sm:$0xff]
        %v4173 = vld [vmem:[%s3369 + $0x21] sm:$0xff]
        %v4174 = vld [vmem:[%s3369 + $0x31] sm:$0xff]
        %v4175 = vld [vmem:[%s3369 + $0x39] sm:$0xff]
        %v4176 = vld [vmem:[%s3369 + $0x49] sm:$0xff]
        %v4177 = vld [vmem:[%s3369 + $0x51] sm:$0xff]
        %v4178 = vld [vmem:[%s3369 + $0x61] sm:$0xff]
        %v4179 = vld [vmem:[%s3369 + $0x69] sm:$0xff]
        %v4180 = vld [vmem:[%s3369 + $0x79] sm:$0xff]
        %v4181 = vld [vmem:[%s3369 + $0x81] sm:$0xff]
        %v4182 = vld [vmem:[%s3369 + $0x91] sm:$0xff]
        %v4183 = vld [vmem:[%s3369 + $0x99] sm:$0xff]
        %v4184 = vld [vmem:[%s3369 + $0xa9] sm:$0xff]
        %v4185 = vld [vmem:[%s3369 + $0xb1] sm:$0xff]
        %v4186 = vld [vmem:[%s3369 + $0xc1] sm:$0xff]
        %v4187 = vld [vmem:[%s3369 + $0xc9] sm:$0xff]
        %v4188 = vld [vmem:[%s3369 + $0xd9] sm:$0xff]
        %v4189 = vld [vmem:[%s3369 + $0xe1] sm:$0xff]
        %v4190 = vld [vmem:[%s3369 + $0xf1] sm:$0xff]
        %v4191 = vld [vmem:[%s3369 + $0xf9] sm:$0xff]
        %v4192 = vld [vmem:[%s3369 + $0x109] sm:$0xff]
        %v4193 = vld [vmem:[%s3369 + $0x111] sm:$0xff]
        %v4194 = vld [vmem:[%s3369 + $0x121] sm:$0xff]
        %v4195 = vld [vmem:[%s3369 + $0x129] sm:$0xff]
        %v4196 = vld [vmem:[%s3369 + $0x139] sm:$0xff]
        %v4197 = vld [vmem:[%s3369 + $0x141] sm:$0xff]
        %v4198 = vld [vmem:[%s3369 + $0x151] sm:$0xff]
        %v4199 = vld [vmem:[%s3369 + $0x159] sm:$0xff]
        %v4200 = vld [vmem:[%s3369 + $0x169] sm:$0xff]
        %v4201 = vld [vmem:[%s3369 + $0x171] sm:$0xff]
        %v4202 = vpack.c.bf16 %v4170, %v4170
        %v4203 = vpack.c.bf16 %v4171, %v4171
        %v4204 = vpack.c.bf16 %v4172, %v4172
        %v4205 = vpack.c.bf16 %v4173, %v4173
        %v4206 = vpack.c.bf16 %v4174, %v4174
        %v4207 = vpack.c.bf16 %v4175, %v4175
        %v4208 = vpack.c.bf16 %v4176, %v4176
        %v4209 = vpack.c.bf16 %v4177, %v4177
        %v4210 = vpack.c.bf16 %v4178, %v4178
        %v4211 = vpack.c.bf16 %v4179, %v4179
        %v4212 = vpack.c.bf16 %v4180, %v4180
        %v4213 = vpack.c.bf16 %v4181, %v4181
        %v4214 = vpack.c.bf16 %v4182, %v4182
        %v4215 = vpack.c.bf16 %v4183, %v4183
        %v4216 = vpack.c.bf16 %v4184, %v4184
        %v4217 = vpack.c.bf16 %v4185, %v4185
        %v4218 = vpack.c.bf16 %v4186, %v4186
        %v4219 = vpack.c.bf16 %v4187, %v4187
        %v4220 = vpack.c.bf16 %v4188, %v4188
        %v4221 = vpack.c.bf16 %v4189, %v4189
        %v4222 = vpack.c.bf16 %v4190, %v4190
        %v4223 = vpack.c.bf16 %v4191, %v4191
        %v4224 = vpack.c.bf16 %v4192, %v4192
        %v4225 = vpack.c.bf16 %v4193, %v4193
        %v4226 = vpack.c.bf16 %v4194, %v4194
        %v4227 = vpack.c.bf16 %v4195, %v4195
        %v4228 = vpack.c.bf16 %v4196, %v4196
        %v4229 = vpack.c.bf16 %v4197, %v4197
        %v4230 = vpack.c.bf16 %v4198, %v4198
        %v4231 = vpack.c.bf16 %v4199, %v4199
        %v4232 = vpack.c.bf16 %v4200, %v4200
        %v4233 = vpack.c.bf16 %v4201, %v4201
        %4266 = vrot.lane.b32.xlu0 %v4202, 16
        %v4267 = vpop.permute.xlu0 %4266
        %4268 = vrot.lane.b32.xlu0 %v4203, 16
        %v4269 = vpop.permute.xlu0 %4268
        %4270 = vrot.lane.b32.xlu0 %v4204, 16
        %v4271 = vpop.permute.xlu0 %4270
        %4272 = vrot.lane.b32.xlu0 %v4205, 16
        %v4273 = vpop.permute.xlu0 %4272
        %4274 = vrot.lane.b32.xlu0 %v4206, 16
        %v4275 = vpop.permute.xlu0 %4274
        %4276 = vrot.lane.b32.xlu0 %v4207, 16
        %v4277 = vpop.permute.xlu0 %4276
        %4278 = vrot.lane.b32.xlu0 %v4208, 16
        %v4279 = vpop.permute.xlu0 %4278
        %4280 = vrot.lane.b32.xlu0 %v4209, 16
        %v4281 = vpop.permute.xlu0 %4280
        %4282 = vrot.lane.b32.xlu0 %v4210, 16
        %v4283 = vpop.permute.xlu0 %4282
        %4284 = vrot.lane.b32.xlu0 %v4211, 16
        %v4285 = vpop.permute.xlu0 %4284
        %4286 = vrot.lane.b32.xlu0 %v4212, 16
        %v4287 = vpop.permute.xlu0 %4286
        %4288 = vrot.lane.b32.xlu0 %v4213, 16
        %v4289 = vpop.permute.xlu0 %4288
        %4290 = vrot.lane.b32.xlu0 %v4214, 16
        %v4291 = vpop.permute.xlu0 %4290
        %4292 = vrot.lane.b32.xlu0 %v4215, 16
        %v4293 = vpop.permute.xlu0 %4292
        %4294 = vrot.lane.b32.xlu0 %v4216, 16
        %v4295 = vpop.permute.xlu0 %4294
        %4296 = vrot.lane.b32.xlu0 %v4217, 16
        %v4297 = vpop.permute.xlu0 %4296
        %4298 = vrot.lane.b32.xlu0 %v4218, 16
        %v4299 = vpop.permute.xlu0 %4298
        %4300 = vrot.lane.b32.xlu0 %v4219, 16
        %v4301 = vpop.permute.xlu0 %4300
        %4302 = vrot.lane.b32.xlu0 %v4220, 16
        %v4303 = vpop.permute.xlu0 %4302
        %4304 = vrot.lane.b32.xlu0 %v4221, 16
        %v4305 = vpop.permute.xlu0 %4304
        %4306 = vrot.lane.b32.xlu0 %v4222, 16
        %v4307 = vpop.permute.xlu0 %4306
        %4308 = vrot.lane.b32.xlu0 %v4223, 16
        %v4309 = vpop.permute.xlu0 %4308
        %4310 = vrot.lane.b32.xlu0 %v4224, 16
        %v4311 = vpop.permute.xlu0 %4310
        %4312 = vrot.lane.b32.xlu0 %v4225, 16
        %v4313 = vpop.permute.xlu0 %4312
        %4314 = vrot.lane.b32.xlu0 %v4226, 16
        %v4315 = vpop.permute.xlu0 %4314
        %4316 = vrot.lane.b32.xlu0 %v4227, 16
        %v4317 = vpop.permute.xlu0 %4316
        %4318 = vrot.lane.b32.xlu0 %v4228, 16
        %v4319 = vpop.permute.xlu0 %4318
        %4320 = vrot.lane.b32.xlu0 %v4229, 16
        %v4321 = vpop.permute.xlu0 %4320
        %4322 = vrot.lane.b32.xlu0 %v4230, 16
        %v4323 = vpop.permute.xlu0 %4322
        %4324 = vrot.lane.b32.xlu0 %v4231, 16
        %v4325 = vpop.permute.xlu0 %4324
        %4326 = vrot.lane.b32.xlu0 %v4232, 16
        %v4327 = vpop.permute.xlu0 %4326
        %4328 = vrot.lane.b32.xlu0 %v4233, 16
        %v4329 = vpop.permute.xlu0 %4328
        %4362 = vst.msk [vmem:[#allocation7] sm:$0xf] %vm1443, %v4267
        %4363 = vst.msk [vmem:[#allocation7 + $0x4] sm:$0xf] %vm1443, %v4269
        %4364 = vst.msk [vmem:[#allocation7 + $0x8] sm:$0xf] %vm1443, %v4271
        %4365 = vst.msk [vmem:[#allocation7 + $0xc] sm:$0xf] %vm1443, %v4273
        %4366 = vst.msk [vmem:[#allocation7 + $0x10] sm:$0xf] %vm1443, %v4275
        %4367 = vst.msk [vmem:[#allocation7 + $0x14] sm:$0xf] %vm1443, %v4277
        %4368 = vst.msk [vmem:[#allocation7 + $0x18] sm:$0xf] %vm1443, %v4279
        %4369 = vst.msk [vmem:[#allocation7 + $0x1c] sm:$0xf] %vm1443, %v4281
        %4370 = vst.msk [vmem:[#allocation7 + $0x20] sm:$0xf] %vm1443, %v4283
        %4371 = vst.msk [vmem:[#allocation7 + $0x24] sm:$0xf] %vm1443, %v4285
        %4372 = vst.msk [vmem:[#allocation7 + $0x28] sm:$0xf] %vm1443, %v4287
        %4373 = vst.msk [vmem:[#allocation7 + $0x2c] sm:$0xf] %vm1443, %v4289
        %4374 = vst.msk [vmem:[#allocation7 + $0x30] sm:$0xf] %vm1443, %v4291
        %4375 = vst.msk [vmem:[#allocation7 + $0x34] sm:$0xf] %vm1443, %v4293
        %4376 = vst.msk [vmem:[#allocation7 + $0x38] sm:$0xf] %vm1443, %v4295
        %4377 = vst.msk [vmem:[#allocation7 + $0x3c] sm:$0xf] %vm1443, %v4297
        %4378 = vst.msk [vmem:[#allocation7 + $0x40] sm:$0xf] %vm1443, %v4299
        %4379 = vst.msk [vmem:[#allocation7 + $0x44] sm:$0xf] %vm1443, %v4301
        %4380 = vst.msk [vmem:[#allocation7 + $0x48] sm:$0xf] %vm1443, %v4303
        %4381 = vst.msk [vmem:[#allocation7 + $0x4c] sm:$0xf] %vm1443, %v4305
        %4382 = vst.msk [vmem:[#allocation7 + $0x50] sm:$0xf] %vm1443, %v4307
        %4383 = vst.msk [vmem:[#allocation7 + $0x54] sm:$0xf] %vm1443, %v4309
        %4384 = vst.msk [vmem:[#allocation7 + $0x58] sm:$0xf] %vm1443, %v4311
        %4385 = vst.msk [vmem:[#allocation7 + $0x5c] sm:$0xf] %vm1443, %v4313
        %4386 = vst.msk [vmem:[#allocation7 + $0x60] sm:$0xf] %vm1443, %v4315
        %4387 = vst.msk [vmem:[#allocation7 + $0x64] sm:$0xf] %vm1443, %v4317
        %4388 = vst.msk [vmem:[#allocation7 + $0x68] sm:$0xf] %vm1443, %v4319
        %4389 = vst.msk [vmem:[#allocation7 + $0x6c] sm:$0xf] %vm1443, %v4321
        %4390 = vst.msk [vmem:[#allocation7 + $0x70] sm:$0xf] %vm1443, %v4323
        %4391 = vst.msk [vmem:[#allocation7 + $0x74] sm:$0xf] %vm1443, %v4325
        %4392 = vst.msk [vmem:[#allocation7 + $0x78] sm:$0xf] %vm1443, %v4327
        %4393 = vst.msk [vmem:[#allocation7 + $0x7c] sm:$0xf] %vm1443, %v4329
        %v4394 = vld [vmem:[%s3369 + $0x2] sm:$0xff]
        %v4395 = vld [vmem:[%s3369 + $0xa] sm:$0xff]
        %v4396 = vld [vmem:[%s3369 + $0x1a] sm:$0xff]
        %v4397 = vld [vmem:[%s3369 + $0x22] sm:$0xff]
        %v4398 = vld [vmem:[%s3369 + $0x32] sm:$0xff]
        %v4399 = vld [vmem:[%s3369 + $0x3a] sm:$0xff]
        %v4400 = vld [vmem:[%s3369 + $0x4a] sm:$0xff]
        %v4401 = vld [vmem:[%s3369 + $0x52] sm:$0xff]
        %v4402 = vld [vmem:[%s3369 + $0x62] sm:$0xff]
        %v4403 = vld [vmem:[%s3369 + $0x6a] sm:$0xff]
        %v4404 = vld [vmem:[%s3369 + $0x7a] sm:$0xff]
        %v4405 = vld [vmem:[%s3369 + $0x82] sm:$0xff]
        %v4406 = vld [vmem:[%s3369 + $0x92] sm:$0xff]
        %v4407 = vld [vmem:[%s3369 + $0x9a] sm:$0xff]
        %v4408 = vld [vmem:[%s3369 + $0xaa] sm:$0xff]
        %v4409 = vld [vmem:[%s3369 + $0xb2] sm:$0xff]
        %v4410 = vld [vmem:[%s3369 + $0xc2] sm:$0xff]
        %v4411 = vld [vmem:[%s3369 + $0xca] sm:$0xff]
        %v4412 = vld [vmem:[%s3369 + $0xda] sm:$0xff]
        %v4413 = vld [vmem:[%s3369 + $0xe2] sm:$0xff]
        %v4414 = vld [vmem:[%s3369 + $0xf2] sm:$0xff]
        %v4415 = vld [vmem:[%s3369 + $0xfa] sm:$0xff]
        %v4416 = vld [vmem:[%s3369 + $0x10a] sm:$0xff]
        %v4417 = vld [vmem:[%s3369 + $0x112] sm:$0xff]
        %v4418 = vld [vmem:[%s3369 + $0x122] sm:$0xff]
        %v4419 = vld [vmem:[%s3369 + $0x12a] sm:$0xff]
        %v4420 = vld [vmem:[%s3369 + $0x13a] sm:$0xff]
        %v4421 = vld [vmem:[%s3369 + $0x142] sm:$0xff]
        %v4422 = vld [vmem:[%s3369 + $0x152] sm:$0xff]
        %v4423 = vld [vmem:[%s3369 + $0x15a] sm:$0xff]
        %v4424 = vld [vmem:[%s3369 + $0x16a] sm:$0xff]
        %v4425 = vld [vmem:[%s3369 + $0x172] sm:$0xff]
        %v4426 = vpack.c.bf16 %v4394, %v4394
        %v4427 = vpack.c.bf16 %v4395, %v4395
        %v4428 = vpack.c.bf16 %v4396, %v4396
        %v4429 = vpack.c.bf16 %v4397, %v4397
        %v4430 = vpack.c.bf16 %v4398, %v4398
        %v4431 = vpack.c.bf16 %v4399, %v4399
        %v4432 = vpack.c.bf16 %v4400, %v4400
        %v4433 = vpack.c.bf16 %v4401, %v4401
        %v4434 = vpack.c.bf16 %v4402, %v4402
        %v4435 = vpack.c.bf16 %v4403, %v4403
        %v4436 = vpack.c.bf16 %v4404, %v4404
        %v4437 = vpack.c.bf16 %v4405, %v4405
        %v4438 = vpack.c.bf16 %v4406, %v4406
        %v4439 = vpack.c.bf16 %v4407, %v4407
        %v4440 = vpack.c.bf16 %v4408, %v4408
        %v4441 = vpack.c.bf16 %v4409, %v4409
        %v4442 = vpack.c.bf16 %v4410, %v4410
        %v4443 = vpack.c.bf16 %v4411, %v4411
        %v4444 = vpack.c.bf16 %v4412, %v4412
        %v4445 = vpack.c.bf16 %v4413, %v4413
        %v4446 = vpack.c.bf16 %v4414, %v4414
        %v4447 = vpack.c.bf16 %v4415, %v4415
        %v4448 = vpack.c.bf16 %v4416, %v4416
        %v4449 = vpack.c.bf16 %v4417, %v4417
        %v4450 = vpack.c.bf16 %v4418, %v4418
        %v4451 = vpack.c.bf16 %v4419, %v4419
        %v4452 = vpack.c.bf16 %v4420, %v4420
        %v4453 = vpack.c.bf16 %v4421, %v4421
        %v4454 = vpack.c.bf16 %v4422, %v4422
        %v4455 = vpack.c.bf16 %v4423, %v4423
        %v4456 = vpack.c.bf16 %v4424, %v4424
        %v4457 = vpack.c.bf16 %v4425, %v4425
        %4490 = vrot.lane.b32.xlu0 %v4426, 20
        %v4491 = vpop.permute.xlu0 %4490
        %4492 = vrot.lane.b32.xlu0 %v4427, 20
        %v4493 = vpop.permute.xlu0 %4492
        %4494 = vrot.lane.b32.xlu0 %v4428, 20
        %v4495 = vpop.permute.xlu0 %4494
        %4496 = vrot.lane.b32.xlu0 %v4429, 20
        %v4497 = vpop.permute.xlu0 %4496
        %4498 = vrot.lane.b32.xlu0 %v4430, 20
        %v4499 = vpop.permute.xlu0 %4498
        %4500 = vrot.lane.b32.xlu0 %v4431, 20
        %v4501 = vpop.permute.xlu0 %4500
        %4502 = vrot.lane.b32.xlu0 %v4432, 20
        %v4503 = vpop.permute.xlu0 %4502
        %4504 = vrot.lane.b32.xlu0 %v4433, 20
        %v4505 = vpop.permute.xlu0 %4504
        %4506 = vrot.lane.b32.xlu0 %v4434, 20
        %v4507 = vpop.permute.xlu0 %4506
        %4508 = vrot.lane.b32.xlu0 %v4435, 20
        %v4509 = vpop.permute.xlu0 %4508
        %4510 = vrot.lane.b32.xlu0 %v4436, 20
        %v4511 = vpop.permute.xlu0 %4510
        %4512 = vrot.lane.b32.xlu0 %v4437, 20
        %v4513 = vpop.permute.xlu0 %4512
        %4514 = vrot.lane.b32.xlu0 %v4438, 20
        %v4515 = vpop.permute.xlu0 %4514
        %4516 = vrot.lane.b32.xlu0 %v4439, 20
        %v4517 = vpop.permute.xlu0 %4516
        %4518 = vrot.lane.b32.xlu0 %v4440, 20
        %v4519 = vpop.permute.xlu0 %4518
        %4520 = vrot.lane.b32.xlu0 %v4441, 20
        %v4521 = vpop.permute.xlu0 %4520
        %4522 = vrot.lane.b32.xlu0 %v4442, 20
        %v4523 = vpop.permute.xlu0 %4522
        %4524 = vrot.lane.b32.xlu0 %v4443, 20
        %v4525 = vpop.permute.xlu0 %4524
        %4526 = vrot.lane.b32.xlu0 %v4444, 20
        %v4527 = vpop.permute.xlu0 %4526
        %4528 = vrot.lane.b32.xlu0 %v4445, 20
        %v4529 = vpop.permute.xlu0 %4528
        %4530 = vrot.lane.b32.xlu0 %v4446, 20
        %v4531 = vpop.permute.xlu0 %4530
        %4532 = vrot.lane.b32.xlu0 %v4447, 20
        %v4533 = vpop.permute.xlu0 %4532
        %4534 = vrot.lane.b32.xlu0 %v4448, 20
        %v4535 = vpop.permute.xlu0 %4534
        %4536 = vrot.lane.b32.xlu0 %v4449, 20
        %v4537 = vpop.permute.xlu0 %4536
        %4538 = vrot.lane.b32.xlu0 %v4450, 20
        %v4539 = vpop.permute.xlu0 %4538
        %4540 = vrot.lane.b32.xlu0 %v4451, 20
        %v4541 = vpop.permute.xlu0 %4540
        %4542 = vrot.lane.b32.xlu0 %v4452, 20
        %v4543 = vpop.permute.xlu0 %4542
        %4544 = vrot.lane.b32.xlu0 %v4453, 20
        %v4545 = vpop.permute.xlu0 %4544
        %4546 = vrot.lane.b32.xlu0 %v4454, 20
        %v4547 = vpop.permute.xlu0 %4546
        %4548 = vrot.lane.b32.xlu0 %v4455, 20
        %v4549 = vpop.permute.xlu0 %4548
        %4550 = vrot.lane.b32.xlu0 %v4456, 20
        %v4551 = vpop.permute.xlu0 %4550
        %4552 = vrot.lane.b32.xlu0 %v4457, 20
        %v4553 = vpop.permute.xlu0 %4552
        %4586 = vst.msk [vmem:[#allocation7] sm:$0xf] %vm1668, %v4491
        %4587 = vst.msk [vmem:[#allocation7 + $0x4] sm:$0xf] %vm1668, %v4493
        %4588 = vst.msk [vmem:[#allocation7 + $0x8] sm:$0xf] %vm1668, %v4495
        %4589 = vst.msk [vmem:[#allocation7 + $0xc] sm:$0xf] %vm1668, %v4497
        %4590 = vst.msk [vmem:[#allocation7 + $0x10] sm:$0xf] %vm1668, %v4499
        %4591 = vst.msk [vmem:[#allocation7 + $0x14] sm:$0xf] %vm1668, %v4501
        %4592 = vst.msk [vmem:[#allocation7 + $0x18] sm:$0xf] %vm1668, %v4503
        %4593 = vst.msk [vmem:[#allocation7 + $0x1c] sm:$0xf] %vm1668, %v4505
        %4594 = vst.msk [vmem:[#allocation7 + $0x20] sm:$0xf] %vm1668, %v4507
        %4595 = vst.msk [vmem:[#allocation7 + $0x24] sm:$0xf] %vm1668, %v4509
        %4596 = vst.msk [vmem:[#allocation7 + $0x28] sm:$0xf] %vm1668, %v4511
        %4597 = vst.msk [vmem:[#allocation7 + $0x2c] sm:$0xf] %vm1668, %v4513
        %4598 = vst.msk [vmem:[#allocation7 + $0x30] sm:$0xf] %vm1668, %v4515
        %4599 = vst.msk [vmem:[#allocation7 + $0x34] sm:$0xf] %vm1668, %v4517
        %4600 = vst.msk [vmem:[#allocation7 + $0x38] sm:$0xf] %vm1668, %v4519
        %4601 = vst.msk [vmem:[#allocation7 + $0x3c] sm:$0xf] %vm1668, %v4521
        %4602 = vst.msk [vmem:[#allocation7 + $0x40] sm:$0xf] %vm1668, %v4523
        %4603 = vst.msk [vmem:[#allocation7 + $0x44] sm:$0xf] %vm1668, %v4525
        %4604 = vst.msk [vmem:[#allocation7 + $0x48] sm:$0xf] %vm1668, %v4527
        %4605 = vst.msk [vmem:[#allocation7 + $0x4c] sm:$0xf] %vm1668, %v4529
        %4606 = vst.msk [vmem:[#allocation7 + $0x50] sm:$0xf] %vm1668, %v4531
        %4607 = vst.msk [vmem:[#allocation7 + $0x54] sm:$0xf] %vm1668, %v4533
        %4608 = vst.msk [vmem:[#allocation7 + $0x58] sm:$0xf] %vm1668, %v4535
        %4609 = vst.msk [vmem:[#allocation7 + $0x5c] sm:$0xf] %vm1668, %v4537
        %4610 = vst.msk [vmem:[#allocation7 + $0x60] sm:$0xf] %vm1668, %v4539
        %4611 = vst.msk [vmem:[#allocation7 + $0x64] sm:$0xf] %vm1668, %v4541
        %4612 = vst.msk [vmem:[#allocation7 + $0x68] sm:$0xf] %vm1668, %v4543
        %4613 = vst.msk [vmem:[#allocation7 + $0x6c] sm:$0xf] %vm1668, %v4545
        %4614 = vst.msk [vmem:[#allocation7 + $0x70] sm:$0xf] %vm1668, %v4547
        %4615 = vst.msk [vmem:[#allocation7 + $0x74] sm:$0xf] %vm1668, %v4549
        %4616 = vst.msk [vmem:[#allocation7 + $0x78] sm:$0xf] %vm1668, %v4551
        %4617 = vst.msk [vmem:[#allocation7 + $0x7c] sm:$0xf] %vm1668, %v4553
        %s4618 = scalar_lea.vmem [#allocation6], 48
        %v4619 = vld [vmem:[%s4618] sm:$0xff]
        %v4620 = vld [vmem:[%s4618 + $0x8] sm:$0xff]
        %v4621 = vld [vmem:[%s4618 + $0x18] sm:$0xff]
        %v4622 = vld [vmem:[%s4618 + $0x20] sm:$0xff]
        %v4623 = vld [vmem:[%s4618 + $0x30] sm:$0xff]
        %v4624 = vld [vmem:[%s4618 + $0x38] sm:$0xff]
        %v4625 = vld [vmem:[%s4618 + $0x48] sm:$0xff]
        %v4626 = vld [vmem:[%s4618 + $0x50] sm:$0xff]
        %v4627 = vld [vmem:[%s4618 + $0x60] sm:$0xff]
        %v4628 = vld [vmem:[%s4618 + $0x68] sm:$0xff]
        %v4629 = vld [vmem:[%s4618 + $0x78] sm:$0xff]
        %v4630 = vld [vmem:[%s4618 + $0x80] sm:$0xff]
        %v4631 = vld [vmem:[%s4618 + $0x90] sm:$0xff]
        %v4632 = vld [vmem:[%s4618 + $0x98] sm:$0xff]
        %v4633 = vld [vmem:[%s4618 + $0xa8] sm:$0xff]
        %v4634 = vld [vmem:[%s4618 + $0xb0] sm:$0xff]
        %v4635 = vld [vmem:[%s4618 + $0xc0] sm:$0xff]
        %v4636 = vld [vmem:[%s4618 + $0xc8] sm:$0xff]
        %v4637 = vld [vmem:[%s4618 + $0xd8] sm:$0xff]
        %v4638 = vld [vmem:[%s4618 + $0xe0] sm:$0xff]
        %v4639 = vld [vmem:[%s4618 + $0xf0] sm:$0xff]
        %v4640 = vld [vmem:[%s4618 + $0xf8] sm:$0xff]
        %v4641 = vld [vmem:[%s4618 + $0x108] sm:$0xff]
        %v4642 = vld [vmem:[%s4618 + $0x110] sm:$0xff]
        %v4643 = vld [vmem:[%s4618 + $0x120] sm:$0xff]
        %v4644 = vld [vmem:[%s4618 + $0x128] sm:$0xff]
        %v4645 = vld [vmem:[%s4618 + $0x138] sm:$0xff]
        %v4646 = vld [vmem:[%s4618 + $0x140] sm:$0xff]
        %v4647 = vld [vmem:[%s4618 + $0x150] sm:$0xff]
        %v4648 = vld [vmem:[%s4618 + $0x158] sm:$0xff]
        %v4649 = vld [vmem:[%s4618 + $0x168] sm:$0xff]
        %v4650 = vld [vmem:[%s4618 + $0x170] sm:$0xff]
        %v4651 = vpack.c.bf16 %v4619, %v4619
        %v4652 = vpack.c.bf16 %v4620, %v4620
        %v4653 = vpack.c.bf16 %v4621, %v4621
        %v4654 = vpack.c.bf16 %v4622, %v4622
        %v4655 = vpack.c.bf16 %v4623, %v4623
        %v4656 = vpack.c.bf16 %v4624, %v4624
        %v4657 = vpack.c.bf16 %v4625, %v4625
        %v4658 = vpack.c.bf16 %v4626, %v4626
        %v4659 = vpack.c.bf16 %v4627, %v4627
        %v4660 = vpack.c.bf16 %v4628, %v4628
        %v4661 = vpack.c.bf16 %v4629, %v4629
        %v4662 = vpack.c.bf16 %v4630, %v4630
        %v4663 = vpack.c.bf16 %v4631, %v4631
        %v4664 = vpack.c.bf16 %v4632, %v4632
        %v4665 = vpack.c.bf16 %v4633, %v4633
        %v4666 = vpack.c.bf16 %v4634, %v4634
        %v4667 = vpack.c.bf16 %v4635, %v4635
        %v4668 = vpack.c.bf16 %v4636, %v4636
        %v4669 = vpack.c.bf16 %v4637, %v4637
        %v4670 = vpack.c.bf16 %v4638, %v4638
        %v4671 = vpack.c.bf16 %v4639, %v4639
        %v4672 = vpack.c.bf16 %v4640, %v4640
        %v4673 = vpack.c.bf16 %v4641, %v4641
        %v4674 = vpack.c.bf16 %v4642, %v4642
        %v4675 = vpack.c.bf16 %v4643, %v4643
        %v4676 = vpack.c.bf16 %v4644, %v4644
        %v4677 = vpack.c.bf16 %v4645, %v4645
        %v4678 = vpack.c.bf16 %v4646, %v4646
        %v4679 = vpack.c.bf16 %v4647, %v4647
        %v4680 = vpack.c.bf16 %v4648, %v4648
        %v4681 = vpack.c.bf16 %v4649, %v4649
        %v4682 = vpack.c.bf16 %v4650, %v4650
        %4715 = vrot.lane.b32.xlu0 %v4651, 24
        %v4716 = vpop.permute.xlu0 %4715
        %4717 = vrot.lane.b32.xlu0 %v4652, 24
        %v4718 = vpop.permute.xlu0 %4717
        %4719 = vrot.lane.b32.xlu0 %v4653, 24
        %v4720 = vpop.permute.xlu0 %4719
        %4721 = vrot.lane.b32.xlu0 %v4654, 24
        %v4722 = vpop.permute.xlu0 %4721
        %4723 = vrot.lane.b32.xlu0 %v4655, 24
        %v4724 = vpop.permute.xlu0 %4723
        %4725 = vrot.lane.b32.xlu0 %v4656, 24
        %v4726 = vpop.permute.xlu0 %4725
        %4727 = vrot.lane.b32.xlu0 %v4657, 24
        %v4728 = vpop.permute.xlu0 %4727
        %4729 = vrot.lane.b32.xlu0 %v4658, 24
        %v4730 = vpop.permute.xlu0 %4729
        %4731 = vrot.lane.b32.xlu0 %v4659, 24
        %v4732 = vpop.permute.xlu0 %4731
        %4733 = vrot.lane.b32.xlu0 %v4660, 24
        %v4734 = vpop.permute.xlu0 %4733
        %4735 = vrot.lane.b32.xlu0 %v4661, 24
        %v4736 = vpop.permute.xlu0 %4735
        %4737 = vrot.lane.b32.xlu0 %v4662, 24
        %v4738 = vpop.permute.xlu0 %4737
        %4739 = vrot.lane.b32.xlu0 %v4663, 24
        %v4740 = vpop.permute.xlu0 %4739
        %4741 = vrot.lane.b32.xlu0 %v4664, 24
        %v4742 = vpop.permute.xlu0 %4741
        %4743 = vrot.lane.b32.xlu0 %v4665, 24
        %v4744 = vpop.permute.xlu0 %4743
        %4745 = vrot.lane.b32.xlu0 %v4666, 24
        %v4746 = vpop.permute.xlu0 %4745
        %4747 = vrot.lane.b32.xlu0 %v4667, 24
        %v4748 = vpop.permute.xlu0 %4747
        %4749 = vrot.lane.b32.xlu0 %v4668, 24
        %v4750 = vpop.permute.xlu0 %4749
        %4751 = vrot.lane.b32.xlu0 %v4669, 24
        %v4752 = vpop.permute.xlu0 %4751
        %4753 = vrot.lane.b32.xlu0 %v4670, 24
        %v4754 = vpop.permute.xlu0 %4753
        %4755 = vrot.lane.b32.xlu0 %v4671, 24
        %v4756 = vpop.permute.xlu0 %4755
        %4757 = vrot.lane.b32.xlu0 %v4672, 24
        %v4758 = vpop.permute.xlu0 %4757
        %4759 = vrot.lane.b32.xlu0 %v4673, 24
        %v4760 = vpop.permute.xlu0 %4759
        %4761 = vrot.lane.b32.xlu0 %v4674, 24
        %v4762 = vpop.permute.xlu0 %4761
        %4763 = vrot.lane.b32.xlu0 %v4675, 24
        %v4764 = vpop.permute.xlu0 %4763
        %4765 = vrot.lane.b32.xlu0 %v4676, 24
        %v4766 = vpop.permute.xlu0 %4765
        %4767 = vrot.lane.b32.xlu0 %v4677, 24
        %v4768 = vpop.permute.xlu0 %4767
        %4769 = vrot.lane.b32.xlu0 %v4678, 24
        %v4770 = vpop.permute.xlu0 %4769
        %4771 = vrot.lane.b32.xlu0 %v4679, 24
        %v4772 = vpop.permute.xlu0 %4771
        %4773 = vrot.lane.b32.xlu0 %v4680, 24
        %v4774 = vpop.permute.xlu0 %4773
        %4775 = vrot.lane.b32.xlu0 %v4681, 24
        %v4776 = vpop.permute.xlu0 %4775
        %4777 = vrot.lane.b32.xlu0 %v4682, 24
        %v4778 = vpop.permute.xlu0 %4777
        %4811 = vst.msk [vmem:[#allocation7] sm:$0xf] %vm1894, %v4716
        %4812 = vst.msk [vmem:[#allocation7 + $0x4] sm:$0xf] %vm1894, %v4718
        %4813 = vst.msk [vmem:[#allocation7 + $0x8] sm:$0xf] %vm1894, %v4720
        %4814 = vst.msk [vmem:[#allocation7 + $0xc] sm:$0xf] %vm1894, %v4722
        %4815 = vst.msk [vmem:[#allocation7 + $0x10] sm:$0xf] %vm1894, %v4724
        %4816 = vst.msk [vmem:[#allocation7 + $0x14] sm:$0xf] %vm1894, %v4726
        %4817 = vst.msk [vmem:[#allocation7 + $0x18] sm:$0xf] %vm1894, %v4728
        %4818 = vst.msk [vmem:[#allocation7 + $0x1c] sm:$0xf] %vm1894, %v4730
        %4819 = vst.msk [vmem:[#allocation7 + $0x20] sm:$0xf] %vm1894, %v4732
        %4820 = vst.msk [vmem:[#allocation7 + $0x24] sm:$0xf] %vm1894, %v4734
        %4821 = vst.msk [vmem:[#allocation7 + $0x28] sm:$0xf] %vm1894, %v4736
        %4822 = vst.msk [vmem:[#allocation7 + $0x2c] sm:$0xf] %vm1894, %v4738
        %4823 = vst.msk [vmem:[#allocation7 + $0x30] sm:$0xf] %vm1894, %v4740
        %4824 = vst.msk [vmem:[#allocation7 + $0x34] sm:$0xf] %vm1894, %v4742
        %4825 = vst.msk [vmem:[#allocation7 + $0x38] sm:$0xf] %vm1894, %v4744
        %4826 = vst.msk [vmem:[#allocation7 + $0x3c] sm:$0xf] %vm1894, %v4746
        %4827 = vst.msk [vmem:[#allocation7 + $0x40] sm:$0xf] %vm1894, %v4748
        %4828 = vst.msk [vmem:[#allocation7 + $0x44] sm:$0xf] %vm1894, %v4750
        %4829 = vst.msk [vmem:[#allocation7 + $0x48] sm:$0xf] %vm1894, %v4752
        %4830 = vst.msk [vmem:[#allocation7 + $0x4c] sm:$0xf] %vm1894, %v4754
        %4831 = vst.msk [vmem:[#allocation7 + $0x50] sm:$0xf] %vm1894, %v4756
        %4832 = vst.msk [vmem:[#allocation7 + $0x54] sm:$0xf] %vm1894, %v4758
        %4833 = vst.msk [vmem:[#allocation7 + $0x58] sm:$0xf] %vm1894, %v4760
        %4834 = vst.msk [vmem:[#allocation7 + $0x5c] sm:$0xf] %vm1894, %v4762
        %4835 = vst.msk [vmem:[#allocation7 + $0x60] sm:$0xf] %vm1894, %v4764
        %4836 = vst.msk [vmem:[#allocation7 + $0x64] sm:$0xf] %vm1894, %v4766
        %4837 = vst.msk [vmem:[#allocation7 + $0x68] sm:$0xf] %vm1894, %v4768
        %4838 = vst.msk [vmem:[#allocation7 + $0x6c] sm:$0xf] %vm1894, %v4770
        %4839 = vst.msk [vmem:[#allocation7 + $0x70] sm:$0xf] %vm1894, %v4772
        %4840 = vst.msk [vmem:[#allocation7 + $0x74] sm:$0xf] %vm1894, %v4774
        %4841 = vst.msk [vmem:[#allocation7 + $0x78] sm:$0xf] %vm1894, %v4776
        %4842 = vst.msk [vmem:[#allocation7 + $0x7c] sm:$0xf] %vm1894, %v4778
        %v4843 = vld [vmem:[%s4618 + $0x1] sm:$0xff]
        %v4844 = vld [vmem:[%s4618 + $0x9] sm:$0xff]
        %v4845 = vld [vmem:[%s4618 + $0x19] sm:$0xff]
        %v4846 = vld [vmem:[%s4618 + $0x21] sm:$0xff]
        %v4847 = vld [vmem:[%s4618 + $0x31] sm:$0xff]
        %v4848 = vld [vmem:[%s4618 + $0x39] sm:$0xff]
        %v4849 = vld [vmem:[%s4618 + $0x49] sm:$0xff]
        %v4850 = vld [vmem:[%s4618 + $0x51] sm:$0xff]
        %v4851 = vld [vmem:[%s4618 + $0x61] sm:$0xff]
        %v4852 = vld [vmem:[%s4618 + $0x69] sm:$0xff]
        %v4853 = vld [vmem:[%s4618 + $0x79] sm:$0xff]
        %v4854 = vld [vmem:[%s4618 + $0x81] sm:$0xff]
        %v4855 = vld [vmem:[%s4618 + $0x91] sm:$0xff]
        %v4856 = vld [vmem:[%s4618 + $0x99] sm:$0xff]
        %v4857 = vld [vmem:[%s4618 + $0xa9] sm:$0xff]
        %v4858 = vld [vmem:[%s4618 + $0xb1] sm:$0xff]
        %v4859 = vld [vmem:[%s4618 + $0xc1] sm:$0xff]
        %v4860 = vld [vmem:[%s4618 + $0xc9] sm:$0xff]
        %v4861 = vld [vmem:[%s4618 + $0xd9] sm:$0xff]
        %v4862 = vld [vmem:[%s4618 + $0xe1] sm:$0xff]
        %v4863 = vld [vmem:[%s4618 + $0xf1] sm:$0xff]
        %v4864 = vld [vmem:[%s4618 + $0xf9] sm:$0xff]
        %v4865 = vld [vmem:[%s4618 + $0x109] sm:$0xff]
        %v4866 = vld [vmem:[%s4618 + $0x111] sm:$0xff]
        %v4867 = vld [vmem:[%s4618 + $0x121] sm:$0xff]
        %v4868 = vld [vmem:[%s4618 + $0x129] sm:$0xff]
        %v4869 = vld [vmem:[%s4618 + $0x139] sm:$0xff]
        %v4870 = vld [vmem:[%s4618 + $0x141] sm:$0xff]
        %v4871 = vld [vmem:[%s4618 + $0x151] sm:$0xff]
        %v4872 = vld [vmem:[%s4618 + $0x159] sm:$0xff]
        %v4873 = vld [vmem:[%s4618 + $0x169] sm:$0xff]
        %v4874 = vld [vmem:[%s4618 + $0x171] sm:$0xff]
        %v4875 = vpack.c.bf16 %v4843, %v4843
        %v4876 = vpack.c.bf16 %v4844, %v4844
        %v4877 = vpack.c.bf16 %v4845, %v4845
        %v4878 = vpack.c.bf16 %v4846, %v4846
        %v4879 = vpack.c.bf16 %v4847, %v4847
        %v4880 = vpack.c.bf16 %v4848, %v4848
        %v4881 = vpack.c.bf16 %v4849, %v4849
        %v4882 = vpack.c.bf16 %v4850, %v4850
        %v4883 = vpack.c.bf16 %v4851, %v4851
        %v4884 = vpack.c.bf16 %v4852, %v4852
        %v4885 = vpack.c.bf16 %v4853, %v4853
        %v4886 = vpack.c.bf16 %v4854, %v4854
        %v4887 = vpack.c.bf16 %v4855, %v4855
        %v4888 = vpack.c.bf16 %v4856, %v4856
        %v4889 = vpack.c.bf16 %v4857, %v4857
        %v4890 = vpack.c.bf16 %v4858, %v4858
        %v4891 = vpack.c.bf16 %v4859, %v4859
        %v4892 = vpack.c.bf16 %v4860, %v4860
        %v4893 = vpack.c.bf16 %v4861, %v4861
        %v4894 = vpack.c.bf16 %v4862, %v4862
        %v4895 = vpack.c.bf16 %v4863, %v4863
        %v4896 = vpack.c.bf16 %v4864, %v4864
        %v4897 = vpack.c.bf16 %v4865, %v4865
        %v4898 = vpack.c.bf16 %v4866, %v4866
        %v4899 = vpack.c.bf16 %v4867, %v4867
        %v4900 = vpack.c.bf16 %v4868, %v4868
        %v4901 = vpack.c.bf16 %v4869, %v4869
        %v4902 = vpack.c.bf16 %v4870, %v4870
        %v4903 = vpack.c.bf16 %v4871, %v4871
        %v4904 = vpack.c.bf16 %v4872, %v4872
        %v4905 = vpack.c.bf16 %v4873, %v4873
        %v4906 = vpack.c.bf16 %v4874, %v4874
        %4939 = vrot.lane.b32.xlu0 %v4875, 28
        %v4940 = vpop.permute.xlu0 %4939
        %4941 = vrot.lane.b32.xlu0 %v4876, 28
        %v4942 = vpop.permute.xlu0 %4941
        %4943 = vrot.lane.b32.xlu0 %v4877, 28
        %v4944 = vpop.permute.xlu0 %4943
        %4945 = vrot.lane.b32.xlu0 %v4878, 28
        %v4946 = vpop.permute.xlu0 %4945
        %4947 = vrot.lane.b32.xlu0 %v4879, 28
        %v4948 = vpop.permute.xlu0 %4947
        %4949 = vrot.lane.b32.xlu0 %v4880, 28
        %v4950 = vpop.permute.xlu0 %4949
        %4951 = vrot.lane.b32.xlu0 %v4881, 28
        %v4952 = vpop.permute.xlu0 %4951
        %4953 = vrot.lane.b32.xlu0 %v4882, 28
        %v4954 = vpop.permute.xlu0 %4953
        %4955 = vrot.lane.b32.xlu0 %v4883, 28
        %v4956 = vpop.permute.xlu0 %4955
        %4957 = vrot.lane.b32.xlu0 %v4884, 28
        %v4958 = vpop.permute.xlu0 %4957
        %4959 = vrot.lane.b32.xlu0 %v4885, 28
        %v4960 = vpop.permute.xlu0 %4959
        %4961 = vrot.lane.b32.xlu0 %v4886, 28
        %v4962 = vpop.permute.xlu0 %4961
        %4963 = vrot.lane.b32.xlu0 %v4887, 28
        %v4964 = vpop.permute.xlu0 %4963
        %4965 = vrot.lane.b32.xlu0 %v4888, 28
        %v4966 = vpop.permute.xlu0 %4965
        %4967 = vrot.lane.b32.xlu0 %v4889, 28
        %v4968 = vpop.permute.xlu0 %4967
        %4969 = vrot.lane.b32.xlu0 %v4890, 28
        %v4970 = vpop.permute.xlu0 %4969
        %4971 = vrot.lane.b32.xlu0 %v4891, 28
        %v4972 = vpop.permute.xlu0 %4971
        %4973 = vrot.lane.b32.xlu0 %v4892, 28
        %v4974 = vpop.permute.xlu0 %4973
        %4975 = vrot.lane.b32.xlu0 %v4893, 28
        %v4976 = vpop.permute.xlu0 %4975
        %4977 = vrot.lane.b32.xlu0 %v4894, 28
        %v4978 = vpop.permute.xlu0 %4977
        %4979 = vrot.lane.b32.xlu0 %v4895, 28
        %v4980 = vpop.permute.xlu0 %4979
        %4981 = vrot.lane.b32.xlu0 %v4896, 28
        %v4982 = vpop.permute.xlu0 %4981
        %4983 = vrot.lane.b32.xlu0 %v4897, 28
        %v4984 = vpop.permute.xlu0 %4983
        %4985 = vrot.lane.b32.xlu0 %v4898, 28
        %v4986 = vpop.permute.xlu0 %4985
        %4987 = vrot.lane.b32.xlu0 %v4899, 28
        %v4988 = vpop.permute.xlu0 %4987
        %4989 = vrot.lane.b32.xlu0 %v4900, 28
        %v4990 = vpop.permute.xlu0 %4989
        %4991 = vrot.lane.b32.xlu0 %v4901, 28
        %v4992 = vpop.permute.xlu0 %4991
        %4993 = vrot.lane.b32.xlu0 %v4902, 28
        %v4994 = vpop.permute.xlu0 %4993
        %4995 = vrot.lane.b32.xlu0 %v4903, 28
        %v4996 = vpop.permute.xlu0 %4995
        %4997 = vrot.lane.b32.xlu0 %v4904, 28
        %v4998 = vpop.permute.xlu0 %4997
        %4999 = vrot.lane.b32.xlu0 %v4905, 28
        %v5000 = vpop.permute.xlu0 %4999
        %5001 = vrot.lane.b32.xlu0 %v4906, 28
        %v5002 = vpop.permute.xlu0 %5001
        %5035 = vst.msk [vmem:[#allocation7] sm:$0xf] %vm2119, %v4940
        %5036 = vst.msk [vmem:[#allocation7 + $0x4] sm:$0xf] %vm2119, %v4942
        %5037 = vst.msk [vmem:[#allocation7 + $0x8] sm:$0xf] %vm2119, %v4944
        %5038 = vst.msk [vmem:[#allocation7 + $0xc] sm:$0xf] %vm2119, %v4946
        %5039 = vst.msk [vmem:[#allocation7 + $0x10] sm:$0xf] %vm2119, %v4948
        %5040 = vst.msk [vmem:[#allocation7 + $0x14] sm:$0xf] %vm2119, %v4950
        %5041 = vst.msk [vmem:[#allocation7 + $0x18] sm:$0xf] %vm2119, %v4952
        %5042 = vst.msk [vmem:[#allocation7 + $0x1c] sm:$0xf] %vm2119, %v4954
        %5043 = vst.msk [vmem:[#allocation7 + $0x20] sm:$0xf] %vm2119, %v4956
        %5044 = vst.msk [vmem:[#allocation7 + $0x24] sm:$0xf] %vm2119, %v4958
        %5045 = vst.msk [vmem:[#allocation7 + $0x28] sm:$0xf] %vm2119, %v4960
        %5046 = vst.msk [vmem:[#allocation7 + $0x2c] sm:$0xf] %vm2119, %v4962
        %5047 = vst.msk [vmem:[#allocation7 + $0x30] sm:$0xf] %vm2119, %v4964
        %5048 = vst.msk [vmem:[#allocation7 + $0x34] sm:$0xf] %vm2119, %v4966
        %5049 = vst.msk [vmem:[#allocation7 + $0x38] sm:$0xf] %vm2119, %v4968
        %5050 = vst.msk [vmem:[#allocation7 + $0x3c] sm:$0xf] %vm2119, %v4970
        %5051 = vst.msk [vmem:[#allocation7 + $0x40] sm:$0xf] %vm2119, %v4972
        %5052 = vst.msk [vmem:[#allocation7 + $0x44] sm:$0xf] %vm2119, %v4974
        %5053 = vst.msk [vmem:[#allocation7 + $0x48] sm:$0xf] %vm2119, %v4976
        %5054 = vst.msk [vmem:[#allocation7 + $0x4c] sm:$0xf] %vm2119, %v4978
        %5055 = vst.msk [vmem:[#allocation7 + $0x50] sm:$0xf] %vm2119, %v4980
        %5056 = vst.msk [vmem:[#allocation7 + $0x54] sm:$0xf] %vm2119, %v4982
        %5057 = vst.msk [vmem:[#allocation7 + $0x58] sm:$0xf] %vm2119, %v4984
        %5058 = vst.msk [vmem:[#allocation7 + $0x5c] sm:$0xf] %vm2119, %v4986
        %5059 = vst.msk [vmem:[#allocation7 + $0x60] sm:$0xf] %vm2119, %v4988
        %5060 = vst.msk [vmem:[#allocation7 + $0x64] sm:$0xf] %vm2119, %v4990
        %5061 = vst.msk [vmem:[#allocation7 + $0x68] sm:$0xf] %vm2119, %v4992
        %5062 = vst.msk [vmem:[#allocation7 + $0x6c] sm:$0xf] %vm2119, %v4994
        %5063 = vst.msk [vmem:[#allocation7 + $0x70] sm:$0xf] %vm2119, %v4996
        %5064 = vst.msk [vmem:[#allocation7 + $0x74] sm:$0xf] %vm2119, %v4998
        %5065 = vst.msk [vmem:[#allocation7 + $0x78] sm:$0xf] %vm2119, %v5000
        %5066 = vst.msk [vmem:[#allocation7 + $0x7c] sm:$0xf] %vm2119, %v5002
        %v5067 = vld [vmem:[%s4618 + $0x2] sm:$0xff]
        %v5068 = vld [vmem:[%s4618 + $0xa] sm:$0xff]
        %v5069 = vld [vmem:[%s4618 + $0x1a] sm:$0xff]
        %v5070 = vld [vmem:[%s4618 + $0x22] sm:$0xff]
        %v5071 = vld [vmem:[%s4618 + $0x32] sm:$0xff]
        %v5072 = vld [vmem:[%s4618 + $0x3a] sm:$0xff]
        %v5073 = vld [vmem:[%s4618 + $0x4a] sm:$0xff]
        %v5074 = vld [vmem:[%s4618 + $0x52] sm:$0xff]
        %v5075 = vld [vmem:[%s4618 + $0x62] sm:$0xff]
        %v5076 = vld [vmem:[%s4618 + $0x6a] sm:$0xff]
        %v5077 = vld [vmem:[%s4618 + $0x7a] sm:$0xff]
        %v5078 = vld [vmem:[%s4618 + $0x82] sm:$0xff]
        %v5079 = vld [vmem:[%s4618 + $0x92] sm:$0xff]
        %v5080 = vld [vmem:[%s4618 + $0x9a] sm:$0xff]
        %v5081 = vld [vmem:[%s4618 + $0xaa] sm:$0xff]
        %v5082 = vld [vmem:[%s4618 + $0xb2] sm:$0xff]
        %v5083 = vld [vmem:[%s4618 + $0xc2] sm:$0xff]
        %v5084 = vld [vmem:[%s4618 + $0xca] sm:$0xff]
        %v5085 = vld [vmem:[%s4618 + $0xda] sm:$0xff]
        %v5086 = vld [vmem:[%s4618 + $0xe2] sm:$0xff]
        %v5087 = vld [vmem:[%s4618 + $0xf2] sm:$0xff]
        %v5088 = vld [vmem:[%s4618 + $0xfa] sm:$0xff]
        %v5089 = vld [vmem:[%s4618 + $0x10a] sm:$0xff]
        %v5090 = vld [vmem:[%s4618 + $0x112] sm:$0xff]
        %v5091 = vld [vmem:[%s4618 + $0x122] sm:$0xff]
        %v5092 = vld [vmem:[%s4618 + $0x12a] sm:$0xff]
        %v5093 = vld [vmem:[%s4618 + $0x13a] sm:$0xff]
        %v5094 = vld [vmem:[%s4618 + $0x142] sm:$0xff]
        %v5095 = vld [vmem:[%s4618 + $0x152] sm:$0xff]
        %v5096 = vld [vmem:[%s4618 + $0x15a] sm:$0xff]
        %v5097 = vld [vmem:[%s4618 + $0x16a] sm:$0xff]
        %v5098 = vld [vmem:[%s4618 + $0x172] sm:$0xff]
        %v5099 = vpack.c.bf16 %v5067, %v5067
        %v5100 = vpack.c.bf16 %v5068, %v5068
        %v5101 = vpack.c.bf16 %v5069, %v5069
        %v5102 = vpack.c.bf16 %v5070, %v5070
        %v5103 = vpack.c.bf16 %v5071, %v5071
        %v5104 = vpack.c.bf16 %v5072, %v5072
        %v5105 = vpack.c.bf16 %v5073, %v5073
        %v5106 = vpack.c.bf16 %v5074, %v5074
        %v5107 = vpack.c.bf16 %v5075, %v5075
        %v5108 = vpack.c.bf16 %v5076, %v5076
        %v5109 = vpack.c.bf16 %v5077, %v5077
        %v5110 = vpack.c.bf16 %v5078, %v5078
        %v5111 = vpack.c.bf16 %v5079, %v5079
        %v5112 = vpack.c.bf16 %v5080, %v5080
        %v5113 = vpack.c.bf16 %v5081, %v5081
        %v5114 = vpack.c.bf16 %v5082, %v5082
        %v5115 = vpack.c.bf16 %v5083, %v5083
        %v5116 = vpack.c.bf16 %v5084, %v5084
        %v5117 = vpack.c.bf16 %v5085, %v5085
        %v5118 = vpack.c.bf16 %v5086, %v5086
        %v5119 = vpack.c.bf16 %v5087, %v5087
        %v5120 = vpack.c.bf16 %v5088, %v5088
        %v5121 = vpack.c.bf16 %v5089, %v5089
        %v5122 = vpack.c.bf16 %v5090, %v5090
        %v5123 = vpack.c.bf16 %v5091, %v5091
        %v5124 = vpack.c.bf16 %v5092, %v5092
        %v5125 = vpack.c.bf16 %v5093, %v5093
        %v5126 = vpack.c.bf16 %v5094, %v5094
        %v5127 = vpack.c.bf16 %v5095, %v5095
        %v5128 = vpack.c.bf16 %v5096, %v5096
        %v5129 = vpack.c.bf16 %v5097, %v5097
        %v5130 = vpack.c.bf16 %v5098, %v5098
        %5163 = vrot.lane.b32.xlu0 %v5099, 32
        %v5164 = vpop.permute.xlu0 %5163
        %5165 = vrot.lane.b32.xlu0 %v5100, 32
        %v5166 = vpop.permute.xlu0 %5165
        %5167 = vrot.lane.b32.xlu0 %v5101, 32
        %v5168 = vpop.permute.xlu0 %5167
        %5169 = vrot.lane.b32.xlu0 %v5102, 32
        %v5170 = vpop.permute.xlu0 %5169
        %5171 = vrot.lane.b32.xlu0 %v5103, 32
        %v5172 = vpop.permute.xlu0 %5171
        %5173 = vrot.lane.b32.xlu0 %v5104, 32
        %v5174 = vpop.permute.xlu0 %5173
        %5175 = vrot.lane.b32.xlu0 %v5105, 32
        %v5176 = vpop.permute.xlu0 %5175
        %5177 = vrot.lane.b32.xlu0 %v5106, 32
        %v5178 = vpop.permute.xlu0 %5177
        %5179 = vrot.lane.b32.xlu0 %v5107, 32
        %v5180 = vpop.permute.xlu0 %5179
        %5181 = vrot.lane.b32.xlu0 %v5108, 32
        %v5182 = vpop.permute.xlu0 %5181
        %5183 = vrot.lane.b32.xlu0 %v5109, 32
        %v5184 = vpop.permute.xlu0 %5183
        %5185 = vrot.lane.b32.xlu0 %v5110, 32
        %v5186 = vpop.permute.xlu0 %5185
        %5187 = vrot.lane.b32.xlu0 %v5111, 32
        %v5188 = vpop.permute.xlu0 %5187
        %5189 = vrot.lane.b32.xlu0 %v5112, 32
        %v5190 = vpop.permute.xlu0 %5189
        %5191 = vrot.lane.b32.xlu0 %v5113, 32
        %v5192 = vpop.permute.xlu0 %5191
        %5193 = vrot.lane.b32.xlu0 %v5114, 32
        %v5194 = vpop.permute.xlu0 %5193
        %5195 = vrot.lane.b32.xlu0 %v5115, 32
        %v5196 = vpop.permute.xlu0 %5195
        %5197 = vrot.lane.b32.xlu0 %v5116, 32
        %v5198 = vpop.permute.xlu0 %5197
        %5199 = vrot.lane.b32.xlu0 %v5117, 32
        %v5200 = vpop.permute.xlu0 %5199
        %5201 = vrot.lane.b32.xlu0 %v5118, 32
        %v5202 = vpop.permute.xlu0 %5201
        %5203 = vrot.lane.b32.xlu0 %v5119, 32
        %v5204 = vpop.permute.xlu0 %5203
        %5205 = vrot.lane.b32.xlu0 %v5120, 32
        %v5206 = vpop.permute.xlu0 %5205
        %5207 = vrot.lane.b32.xlu0 %v5121, 32
        %v5208 = vpop.permute.xlu0 %5207
        %5209 = vrot.lane.b32.xlu0 %v5122, 32
        %v5210 = vpop.permute.xlu0 %5209
        %5211 = vrot.lane.b32.xlu0 %v5123, 32
        %v5212 = vpop.permute.xlu0 %5211
        %5213 = vrot.lane.b32.xlu0 %v5124, 32
        %v5214 = vpop.permute.xlu0 %5213
        %5215 = vrot.lane.b32.xlu0 %v5125, 32
        %v5216 = vpop.permute.xlu0 %5215
        %5217 = vrot.lane.b32.xlu0 %v5126, 32
        %v5218 = vpop.permute.xlu0 %5217
        %5219 = vrot.lane.b32.xlu0 %v5127, 32
        %v5220 = vpop.permute.xlu0 %5219
        %5221 = vrot.lane.b32.xlu0 %v5128, 32
        %v5222 = vpop.permute.xlu0 %5221
        %5223 = vrot.lane.b32.xlu0 %v5129, 32
        %v5224 = vpop.permute.xlu0 %5223
        %5225 = vrot.lane.b32.xlu0 %v5130, 32
        %v5226 = vpop.permute.xlu0 %5225
        %5259 = vst.msk [vmem:[#allocation7] sm:$0xf] %vm2344, %v5164
        %5260 = vst.msk [vmem:[#allocation7 + $0x4] sm:$0xf] %vm2344, %v5166
        %5261 = vst.msk [vmem:[#allocation7 + $0x8] sm:$0xf] %vm2344, %v5168
        %5262 = vst.msk [vmem:[#allocation7 + $0xc] sm:$0xf] %vm2344, %v5170
        %5263 = vst.msk [vmem:[#allocation7 + $0x10] sm:$0xf] %vm2344, %v5172
        %5264 = vst.msk [vmem:[#allocation7 + $0x14] sm:$0xf] %vm2344, %v5174
        %5265 = vst.msk [vmem:[#allocation7 + $0x18] sm:$0xf] %vm2344, %v5176
        %5266 = vst.msk [vmem:[#allocation7 + $0x1c] sm:$0xf] %vm2344, %v5178
        %5267 = vst.msk [vmem:[#allocation7 + $0x20] sm:$0xf] %vm2344, %v5180
        %5268 = vst.msk [vmem:[#allocation7 + $0x24] sm:$0xf] %vm2344, %v5182
        %5269 = vst.msk [vmem:[#allocation7 + $0x28] sm:$0xf] %vm2344, %v5184
        %5270 = vst.msk [vmem:[#allocation7 + $0x2c] sm:$0xf] %vm2344, %v5186
        %5271 = vst.msk [vmem:[#allocation7 + $0x30] sm:$0xf] %vm2344, %v5188
        %5272 = vst.msk [vmem:[#allocation7 + $0x34] sm:$0xf] %vm2344, %v5190
        %5273 = vst.msk [vmem:[#allocation7 + $0x38] sm:$0xf] %vm2344, %v5192
        %5274 = vst.msk [vmem:[#allocation7 + $0x3c] sm:$0xf] %vm2344, %v5194
        %5275 = vst.msk [vmem:[#allocation7 + $0x40] sm:$0xf] %vm2344, %v5196
        %5276 = vst.msk [vmem:[#allocation7 + $0x44] sm:$0xf] %vm2344, %v5198
        %5277 = vst.msk [vmem:[#allocation7 + $0x48] sm:$0xf] %vm2344, %v5200
        %5278 = vst.msk [vmem:[#allocation7 + $0x4c] sm:$0xf] %vm2344, %v5202
        %5279 = vst.msk [vmem:[#allocation7 + $0x50] sm:$0xf] %vm2344, %v5204
        %5280 = vst.msk [vmem:[#allocation7 + $0x54] sm:$0xf] %vm2344, %v5206
        %5281 = vst.msk [vmem:[#allocation7 + $0x58] sm:$0xf] %vm2344, %v5208
        %5282 = vst.msk [vmem:[#allocation7 + $0x5c] sm:$0xf] %vm2344, %v5210
        %5283 = vst.msk [vmem:[#allocation7 + $0x60] sm:$0xf] %vm2344, %v5212
        %5284 = vst.msk [vmem:[#allocation7 + $0x64] sm:$0xf] %vm2344, %v5214
        %5285 = vst.msk [vmem:[#allocation7 + $0x68] sm:$0xf] %vm2344, %v5216
        %5286 = vst.msk [vmem:[#allocation7 + $0x6c] sm:$0xf] %vm2344, %v5218
        %5287 = vst.msk [vmem:[#allocation7 + $0x70] sm:$0xf] %vm2344, %v5220
        %5288 = vst.msk [vmem:[#allocation7 + $0x74] sm:$0xf] %vm2344, %v5222
        %5289 = vst.msk [vmem:[#allocation7 + $0x78] sm:$0xf] %vm2344, %v5224
        %5290 = vst.msk [vmem:[#allocation7 + $0x7c] sm:$0xf] %vm2344, %v5226
        %v5291 = vld [vmem:[#allocation7] sm:$0xf]
        %v5292 = vld [vmem:[#allocation7 + $0x4] sm:$0xf]
        %v5293 = vld [vmem:[#allocation7 + $0x8] sm:$0xf]
        %v5294 = vld [vmem:[#allocation7 + $0xc] sm:$0xf]
        %v5295 = vld [vmem:[#allocation7 + $0x10] sm:$0xf]
        %v5296 = vld [vmem:[#allocation7 + $0x14] sm:$0xf]
        %v5297 = vld [vmem:[#allocation7 + $0x18] sm:$0xf]
        %v5298 = vld [vmem:[#allocation7 + $0x1c] sm:$0xf]
        %v5299 = vld [vmem:[#allocation7 + $0x20] sm:$0xf]
        %v5300 = vld [vmem:[#allocation7 + $0x24] sm:$0xf]
        %v5301 = vld [vmem:[#allocation7 + $0x28] sm:$0xf]
        %v5302 = vld [vmem:[#allocation7 + $0x2c] sm:$0xf]
        %v5303 = vld [vmem:[#allocation7 + $0x30] sm:$0xf]
        %v5304 = vld [vmem:[#allocation7 + $0x34] sm:$0xf]
        %v5305 = vld [vmem:[#allocation7 + $0x38] sm:$0xf]
        %v5306 = vld [vmem:[#allocation7 + $0x3c] sm:$0xf]
        %v5307 = vld [vmem:[#allocation7 + $0x40] sm:$0xf]
        %v5308 = vld [vmem:[#allocation7 + $0x44] sm:$0xf]
        %v5309 = vld [vmem:[#allocation7 + $0x48] sm:$0xf]
        %v5310 = vld [vmem:[#allocation7 + $0x4c] sm:$0xf]
        %v5311 = vld [vmem:[#allocation7 + $0x50] sm:$0xf]
        %v5312 = vld [vmem:[#allocation7 + $0x54] sm:$0xf]
        %v5313 = vld [vmem:[#allocation7 + $0x58] sm:$0xf]
        %v5314 = vld [vmem:[#allocation7 + $0x5c] sm:$0xf]
        %v5315 = vld [vmem:[#allocation7 + $0x60] sm:$0xf]
        %v5316 = vld [vmem:[#allocation7 + $0x64] sm:$0xf]
        %v5317 = vld [vmem:[#allocation7 + $0x68] sm:$0xf]
        %v5318 = vld [vmem:[#allocation7 + $0x6c] sm:$0xf]
        %v5319 = vld [vmem:[#allocation7 + $0x70] sm:$0xf]
        %v5320 = vld [vmem:[#allocation7 + $0x74] sm:$0xf]
        %v5321 = vld [vmem:[#allocation7 + $0x78] sm:$0xf]
        %v5322 = vld [vmem:[#allocation7 + $0x7c] sm:$0xf]
        %v5323 = vld [vmem:[%s4] sm:$0xf]
        %v5324 = vld [vmem:[%s4 + $0x4] sm:$0xf]
        %v5325 = vld [vmem:[%s4 + $0x8] sm:$0xf]
        %v5326 = vld [vmem:[%s4 + $0xc] sm:$0xf]
        %v5327 = vld [vmem:[%s4 + $0x10] sm:$0x3]
        %v5360 = vunpack.c.l.b16 %v5291
        %v5361 = vunpack.c.l.b16 %v5292
        %v5362 = vunpack.c.l.b16 %v5293
        %v5363 = vunpack.c.l.b16 %v5294
        %v5364 = vunpack.c.l.b16 %v5295
        %v5365 = vunpack.c.l.b16 %v5296
        %v5366 = vunpack.c.l.b16 %v5297
        %v5367 = vunpack.c.l.b16 %v5298
        %v5368 = vunpack.c.l.b16 %v5299
        %v5369 = vunpack.c.l.b16 %v5300
        %v5370 = vunpack.c.l.b16 %v5301
        %v5371 = vunpack.c.l.b16 %v5302
        %v5372 = vunpack.c.l.b16 %v5303
        %v5373 = vunpack.c.l.b16 %v5304
        %v5374 = vunpack.c.l.b16 %v5305
        %v5375 = vunpack.c.l.b16 %v5306
        %v5376 = vunpack.c.l.b16 %v5307
        %v5377 = vunpack.c.l.b16 %v5308
        %v5378 = vunpack.c.l.b16 %v5309
        %v5379 = vunpack.c.l.b16 %v5310
        %v5380 = vunpack.c.l.b16 %v5311
        %v5381 = vunpack.c.l.b16 %v5312
        %v5382 = vunpack.c.l.b16 %v5313
        %v5383 = vunpack.c.l.b16 %v5314
        %v5384 = vunpack.c.l.b16 %v5315
        %v5385 = vunpack.c.l.b16 %v5316
        %v5386 = vunpack.c.l.b16 %v5317
        %v5387 = vunpack.c.l.b16 %v5318
        %v5388 = vunpack.c.l.b16 %v5319
        %v5389 = vunpack.c.l.b16 %v5320
        %v5390 = vunpack.c.l.b16 %v5321
        %v5391 = vunpack.c.l.b16 %v5322
        %v5392 = vpack.c.b16 %v5361, %v5360
        %v5393 = vpack.c.b16 %v5363, %v5362
        %v5394 = vpack.c.b16 %v5365, %v5364
        %v5395 = vpack.c.b16 %v5367, %v5366
        %v5396 = vpack.c.b16 %v5369, %v5368
        %v5397 = vpack.c.b16 %v5371, %v5370
        %v5398 = vpack.c.b16 %v5373, %v5372
        %v5399 = vpack.c.b16 %v5375, %v5374
        %v5400 = vpack.c.b16 %v5377, %v5376
        %v5401 = vpack.c.b16 %v5379, %v5378
        %v5402 = vpack.c.b16 %v5381, %v5380
        %v5403 = vpack.c.b16 %v5383, %v5382
        %v5404 = vpack.c.b16 %v5385, %v5384
        %v5405 = vpack.c.b16 %v5387, %v5386
        %v5406 = vpack.c.b16 %v5389, %v5388
        %v5407 = vpack.c.b16 %v5391, %v5390
        %v5413 = vunpack.c.l.b16 %v5323
        %v5414 = vunpack.c.l.b16 %v5324
        %v5415 = vunpack.c.l.b16 %v5325
        %v5416 = vunpack.c.l.b16 %v5326
        %v5417 = vunpack.c.l.b16 %v5327
        %v5418 = vpack.c.b16 %v5414, %v5413
        %v5419 = vpack.c.b16 %v5416, %v5415
        %v5420 = vpack.c.b16 %v5417, %v5417
        %v5424 = vsel %vm2509, %v5392, 0
        %v5427 = vsel %vm2509, %v5393, 0
        %v5430 = vsel %vm2509, %v5394, 0
        %v5433 = vsel %vm2509, %v5395, 0
        %v5436 = vsel %vm2509, %v5396, 0
        %v5439 = vsel %vm2509, %v5397, 0
        %v5442 = vsel %vm2509, %v5398, 0
        %v5445 = vsel %vm2509, %v5399, 0
        %v5448 = vsel %vm2509, %v5400, 0
        %v5451 = vsel %vm2509, %v5401, 0
        %v5454 = vsel %vm2509, %v5402, 0
        %v5457 = vsel %vm2509, %v5403, 0
        %v5460 = vsel %vm2509, %v5404, 0
        %v5463 = vsel %vm2509, %v5405, 0
        %v5466 = vsel %vm2509, %v5406, 0
        %v5469 = vsel %vm2509, %v5407, 0
        %v5472 = vsel %vm2558, %v5420, 0
        %5474 = vmatpush.bf16.msra.mxu0 0
        %5475 = vmatpush.bf16.msra.mxu0 0
        %5476 = vmatpush.bf16.msra.mxu0 0
        %5477 = vmatpush.bf16.msra.mxu0 0
        %5478 = vmatpush.bf16.msra.mxu0 0
        %5479 = vmatpush.bf16.msra.mxu0 %v5472
        %5480 = vmatpush.bf16.msra.mxu0 %v5419
        %5481 = vmatpush.bf16.msra.mxu0 %v5418
        %5482 = vmatmul.bf16.gmra.mxu0 %v5424
        %v5483 = vpop.f32.mrf.mxu0
        %v5484 = vadd.f32 0.0, %v5483
        %v5485 = vpop.f32.mrf.mxu0
        %v5486 = vadd.f32 0.0, %v5485
        %5487 = vmatmul.bf16.gmra.mxu0 %v5427
        %v5488 = vpop.f32.mrf.mxu0
        %v5489 = vadd.f32 0.0, %v5488
        %v5490 = vpop.f32.mrf.mxu0
        %v5491 = vadd.f32 0.0, %v5490
        %5492 = vmatmul.bf16.gmra.mxu0 %v5430
        %v5493 = vpop.f32.mrf.mxu0
        %v5494 = vadd.f32 0.0, %v5493
        %v5495 = vpop.f32.mrf.mxu0
        %v5496 = vadd.f32 0.0, %v5495
        %5497 = vmatmul.bf16.gmra.mxu0 %v5433
        %v5498 = vpop.f32.mrf.mxu0
        %v5499 = vadd.f32 0.0, %v5498
        %v5500 = vpop.f32.mrf.mxu0
        %v5501 = vadd.f32 0.0, %v5500
        %5502 = vmatmul.bf16.gmra.mxu0 %v5436
        %v5503 = vpop.f32.mrf.mxu0
        %v5504 = vadd.f32 0.0, %v5503
        %v5505 = vpop.f32.mrf.mxu0
        %v5506 = vadd.f32 0.0, %v5505
        %5507 = vmatmul.bf16.gmra.mxu0 %v5439
        %v5508 = vpop.f32.mrf.mxu0
        %v5509 = vadd.f32 0.0, %v5508
        %v5510 = vpop.f32.mrf.mxu0
        %v5511 = vadd.f32 0.0, %v5510
        %5512 = vmatmul.bf16.gmra.mxu0 %v5442
        %v5513 = vpop.f32.mrf.mxu0
        %v5514 = vadd.f32 0.0, %v5513
        %v5515 = vpop.f32.mrf.mxu0
        %v5516 = vadd.f32 0.0, %v5515
        %5517 = vmatmul.bf16.gmra.mxu0 %v5445
        %v5518 = vpop.f32.mrf.mxu0
        %v5519 = vadd.f32 0.0, %v5518
        %v5520 = vpop.f32.mrf.mxu0
        %v5521 = vadd.f32 0.0, %v5520
        %5522 = vmatmul.bf16.gmra.mxu0 %v5448
        %v5523 = vpop.f32.mrf.mxu0
        %v5524 = vadd.f32 0.0, %v5523
        %v5525 = vpop.f32.mrf.mxu0
        %v5526 = vadd.f32 0.0, %v5525
        %5527 = vmatmul.bf16.gmra.mxu0 %v5451
        %v5528 = vpop.f32.mrf.mxu0
        %v5529 = vadd.f32 0.0, %v5528
        %v5530 = vpop.f32.mrf.mxu0
        %v5531 = vadd.f32 0.0, %v5530
        %5532 = vmatmul.bf16.gmra.mxu0 %v5454
        %v5533 = vpop.f32.mrf.mxu0
        %v5534 = vadd.f32 0.0, %v5533
        %v5535 = vpop.f32.mrf.mxu0
        %v5536 = vadd.f32 0.0, %v5535
        %5537 = vmatmul.bf16.gmra.mxu0 %v5457
        %v5538 = vpop.f32.mrf.mxu0
        %v5539 = vadd.f32 0.0, %v5538
        %v5540 = vpop.f32.mrf.mxu0
        %v5541 = vadd.f32 0.0, %v5540
        %5542 = vmatmul.bf16.gmra.mxu0 %v5460
        %v5543 = vpop.f32.mrf.mxu0
        %v5544 = vadd.f32 0.0, %v5543
        %v5545 = vpop.f32.mrf.mxu0
        %v5546 = vadd.f32 0.0, %v5545
        %5547 = vmatmul.bf16.gmra.mxu0 %v5463
        %v5548 = vpop.f32.mrf.mxu0
        %v5549 = vadd.f32 0.0, %v5548
        %v5550 = vpop.f32.mrf.mxu0
        %v5551 = vadd.f32 0.0, %v5550
        %5552 = vmatmul.bf16.gmra.mxu0 %v5466
        %v5553 = vpop.f32.mrf.mxu0
        %v5554 = vadd.f32 0.0, %v5553
        %v5555 = vpop.f32.mrf.mxu0
        %v5556 = vadd.f32 0.0, %v5555
        %5557 = vmatmul.bf16.gmra.mxu0 %v5469
        %v5558 = vpop.f32.mrf.mxu0
        %v5559 = vadd.f32 0.0, %v5558
        %v5560 = vpop.f32.mrf.mxu0
        %v5561 = vadd.f32 0.0, %v5560
        %5562 = vdwg.mxu0
        %5563 = vst.msk [vmem:[#allocation4] sm:$0xff] %vm413, %v5484
        %5564 = vst.msk [vmem:[#allocation4 + $0x8] sm:$0xff] %vm413, %v5486
        %5565 = vst.msk [vmem:[#allocation4 + $0x10] sm:$0xff] %vm413, %v5489
        %5566 = vst.msk [vmem:[#allocation4 + $0x18] sm:$0xff] %vm413, %v5491
        %5567 = vst.msk [vmem:[#allocation4 + $0x20] sm:$0xff] %vm413, %v5494
        %5568 = vst.msk [vmem:[#allocation4 + $0x28] sm:$0xff] %vm413, %v5496
        %5569 = vst.msk [vmem:[#allocation4 + $0x30] sm:$0xff] %vm413, %v5499
        %5570 = vst.msk [vmem:[#allocation4 + $0x38] sm:$0xff] %vm413, %v5501
        %5571 = vst.msk [vmem:[#allocation4 + $0x40] sm:$0xff] %vm413, %v5504
        %5572 = vst.msk [vmem:[#allocation4 + $0x48] sm:$0xff] %vm413, %v5506
        %5573 = vst.msk [vmem:[#allocation4 + $0x50] sm:$0xff] %vm413, %v5509
        %5574 = vst.msk [vmem:[#allocation4 + $0x58] sm:$0xff] %vm413, %v5511
        %5575 = vst.msk [vmem:[#allocation4 + $0x60] sm:$0xff] %vm413, %v5514
        %5576 = vst.msk [vmem:[#allocation4 + $0x68] sm:$0xff] %vm413, %v5516
        %5577 = vst.msk [vmem:[#allocation4 + $0x70] sm:$0xff] %vm413, %v5519
        %5578 = vst.msk [vmem:[#allocation4 + $0x78] sm:$0xff] %vm413, %v5521
        %5579 = vst.msk [vmem:[#allocation4 + $0x80] sm:$0xff] %vm413, %v5524
        %5580 = vst.msk [vmem:[#allocation4 + $0x88] sm:$0xff] %vm413, %v5526
        %5581 = vst.msk [vmem:[#allocation4 + $0x90] sm:$0xff] %vm413, %v5529
        %5582 = vst.msk [vmem:[#allocation4 + $0x98] sm:$0xff] %vm413, %v5531
        %5583 = vst.msk [vmem:[#allocation4 + $0xa0] sm:$0xff] %vm413, %v5534
        %5584 = vst.msk [vmem:[#allocation4 + $0xa8] sm:$0xff] %vm413, %v5536
        %5585 = vst.msk [vmem:[#allocation4 + $0xb0] sm:$0xff] %vm413, %v5539
        %5586 = vst.msk [vmem:[#allocation4 + $0xb8] sm:$0xff] %vm413, %v5541
        %5587 = vst.msk [vmem:[#allocation4 + $0xc0] sm:$0xff] %vm413, %v5544
        %5588 = vst.msk [vmem:[#allocation4 + $0xc8] sm:$0xff] %vm413, %v5546
        %5589 = vst.msk [vmem:[#allocation4 + $0xd0] sm:$0xff] %vm413, %v5549
        %5590 = vst.msk [vmem:[#allocation4 + $0xd8] sm:$0xff] %vm413, %v5551
        %5591 = vst.msk [vmem:[#allocation4 + $0xe0] sm:$0xff] %vm413, %v5554
        %5592 = vst.msk [vmem:[#allocation4 + $0xe8] sm:$0xff] %vm413, %v5556
        %5593 = vst.msk [vmem:[#allocation4 + $0xf0] sm:$0xff] %vm413, %v5559
        %5594 = vst.msk [vmem:[#allocation4 + $0xf8] sm:$0xff] %vm413, %v5561
        %5595 = vst.msk [vmem:[%s3369 + $0x1] sm:$0xff] %vm413, %v3337
        %5596 = vst.msk [vmem:[%s3369 + $0x9] sm:$0xff] %vm413, %v3338
        %5597 = vst.msk [vmem:[%s3369 + $0x19] sm:$0xff] %vm413, %v3339
        %5598 = vst.msk [vmem:[%s3369 + $0x21] sm:$0xff] %vm413, %v3340
        %5599 = vst.msk [vmem:[%s3369 + $0x31] sm:$0xff] %vm413, %v3341
        %5600 = vst.msk [vmem:[%s3369 + $0x39] sm:$0xff] %vm413, %v3342
        %5601 = vst.msk [vmem:[%s3369 + $0x49] sm:$0xff] %vm413, %v3343
        %5602 = vst.msk [vmem:[%s3369 + $0x51] sm:$0xff] %vm413, %v3344
        %5603 = vst.msk [vmem:[%s3369 + $0x61] sm:$0xff] %vm413, %v3345
        %5604 = vst.msk [vmem:[%s3369 + $0x69] sm:$0xff] %vm413, %v3346
        %5605 = vst.msk [vmem:[%s3369 + $0x79] sm:$0xff] %vm413, %v3347
        %5606 = vst.msk [vmem:[%s3369 + $0x81] sm:$0xff] %vm413, %v3348
        %5607 = vst.msk [vmem:[%s3369 + $0x91] sm:$0xff] %vm413, %v3349
        %5608 = vst.msk [vmem:[%s3369 + $0x99] sm:$0xff] %vm413, %v3350
        %5609 = vst.msk [vmem:[%s3369 + $0xa9] sm:$0xff] %vm413, %v3351
        %5610 = vst.msk [vmem:[%s3369 + $0xb1] sm:$0xff] %vm413, %v3352
        %5611 = vst.msk [vmem:[%s3369 + $0xc1] sm:$0xff] %vm413, %v3353
        %5612 = vst.msk [vmem:[%s3369 + $0xc9] sm:$0xff] %vm413, %v3354
        %5613 = vst.msk [vmem:[%s3369 + $0xd9] sm:$0xff] %vm413, %v3355
        %5614 = vst.msk [vmem:[%s3369 + $0xe1] sm:$0xff] %vm413, %v3356
        %5615 = vst.msk [vmem:[%s3369 + $0xf1] sm:$0xff] %vm413, %v3357
        %5616 = vst.msk [vmem:[%s3369 + $0xf9] sm:$0xff] %vm413, %v3358
        %5617 = vst.msk [vmem:[%s3369 + $0x109] sm:$0xff] %vm413, %v3359
        %5618 = vst.msk [vmem:[%s3369 + $0x111] sm:$0xff] %vm413, %v3360
        %5619 = vst.msk [vmem:[%s3369 + $0x121] sm:$0xff] %vm413, %v3361
        %5620 = vst.msk [vmem:[%s3369 + $0x129] sm:$0xff] %vm413, %v3362
        %5621 = vst.msk [vmem:[%s3369 + $0x139] sm:$0xff] %vm413, %v3363
        %5622 = vst.msk [vmem:[%s3369 + $0x141] sm:$0xff] %vm413, %v3364
        %5623 = vst.msk [vmem:[%s3369 + $0x151] sm:$0xff] %vm413, %v3365
        %5624 = vst.msk [vmem:[%s3369 + $0x159] sm:$0xff] %vm413, %v3366
        %5625 = vst.msk [vmem:[%s3369 + $0x169] sm:$0xff] %vm413, %v3367
        %5626 = vst.msk [vmem:[%s3369 + $0x171] sm:$0xff] %vm413, %v3368
        %v5627 = vld [vmem:[#allocation6] sm:$0xff]
        %v5628 = vld [vmem:[#allocation6 + $0x8] sm:$0xff]
        %v5629 = vld [vmem:[#allocation6 + $0x18] sm:$0xff]
        %v5630 = vld [vmem:[#allocation6 + $0x20] sm:$0xff]
        %v5631 = vld [vmem:[#allocation6 + $0x30] sm:$0xff]
        %v5632 = vld [vmem:[#allocation6 + $0x38] sm:$0xff]
        %v5633 = vld [vmem:[#allocation6 + $0x48] sm:$0xff]
        %v5634 = vld [vmem:[#allocation6 + $0x50] sm:$0xff]
        %v5635 = vld [vmem:[#allocation6 + $0x60] sm:$0xff]
        %v5636 = vld [vmem:[#allocation6 + $0x68] sm:$0xff]
        %v5637 = vld [vmem:[#allocation6 + $0x78] sm:$0xff]
        %v5638 = vld [vmem:[#allocation6 + $0x80] sm:$0xff]
        %v5639 = vld [vmem:[#allocation6 + $0x90] sm:$0xff]
        %v5640 = vld [vmem:[#allocation6 + $0x98] sm:$0xff]
        %v5641 = vld [vmem:[#allocation6 + $0xa8] sm:$0xff]
        %v5642 = vld [vmem:[#allocation6 + $0xb0] sm:$0xff]
        %v5643 = vld [vmem:[#allocation6 + $0xc0] sm:$0xff]
        %v5644 = vld [vmem:[#allocation6 + $0xc8] sm:$0xff]
        %v5645 = vld [vmem:[#allocation6 + $0xd8] sm:$0xff]
        %v5646 = vld [vmem:[#allocation6 + $0xe0] sm:$0xff]
        %v5647 = vld [vmem:[#allocation6 + $0xf0] sm:$0xff]
        %v5648 = vld [vmem:[#allocation6 + $0xf8] sm:$0xff]
        %v5649 = vld [vmem:[#allocation6 + $0x108] sm:$0xff]
        %v5650 = vld [vmem:[#allocation6 + $0x110] sm:$0xff]
        %v5651 = vld [vmem:[#allocation6 + $0x120] sm:$0xff]
        %v5652 = vld [vmem:[#allocation6 + $0x128] sm:$0xff]
        %v5653 = vld [vmem:[#allocation6 + $0x138] sm:$0xff]
        %v5654 = vld [vmem:[#allocation6 + $0x140] sm:$0xff]
        %v5655 = vld [vmem:[#allocation6 + $0x150] sm:$0xff]
        %v5656 = vld [vmem:[#allocation6 + $0x158] sm:$0xff]
        %v5657 = vld [vmem:[#allocation6 + $0x168] sm:$0xff]
        %v5658 = vld [vmem:[#allocation6 + $0x170] sm:$0xff]
        %v5659 = vpack.c.bf16 %v5627, %v5627
        %v5660 = vpack.c.bf16 %v5628, %v5628
        %v5661 = vpack.c.bf16 %v5629, %v5629
        %v5662 = vpack.c.bf16 %v5630, %v5630
        %v5663 = vpack.c.bf16 %v5631, %v5631
        %v5664 = vpack.c.bf16 %v5632, %v5632
        %v5665 = vpack.c.bf16 %v5633, %v5633
        %v5666 = vpack.c.bf16 %v5634, %v5634
        %v5667 = vpack.c.bf16 %v5635, %v5635
        %v5668 = vpack.c.bf16 %v5636, %v5636
        %v5669 = vpack.c.bf16 %v5637, %v5637
        %v5670 = vpack.c.bf16 %v5638, %v5638
        %v5671 = vpack.c.bf16 %v5639, %v5639
        %v5672 = vpack.c.bf16 %v5640, %v5640
        %v5673 = vpack.c.bf16 %v5641, %v5641
        %v5674 = vpack.c.bf16 %v5642, %v5642
        %v5675 = vpack.c.bf16 %v5643, %v5643
        %v5676 = vpack.c.bf16 %v5644, %v5644
        %v5677 = vpack.c.bf16 %v5645, %v5645
        %v5678 = vpack.c.bf16 %v5646, %v5646
        %v5679 = vpack.c.bf16 %v5647, %v5647
        %v5680 = vpack.c.bf16 %v5648, %v5648
        %v5681 = vpack.c.bf16 %v5649, %v5649
        %v5682 = vpack.c.bf16 %v5650, %v5650
        %v5683 = vpack.c.bf16 %v5651, %v5651
        %v5684 = vpack.c.bf16 %v5652, %v5652
        %v5685 = vpack.c.bf16 %v5653, %v5653
        %v5686 = vpack.c.bf16 %v5654, %v5654
        %v5687 = vpack.c.bf16 %v5655, %v5655
        %v5688 = vpack.c.bf16 %v5656, %v5656
        %v5689 = vpack.c.bf16 %v5657, %v5657
        %v5690 = vpack.c.bf16 %v5658, %v5658
        %5691 = vst.msk [vmem:[#allocation7] sm:$0xf] %vm543, %v5659
        %5692 = vst.msk [vmem:[#allocation7 + $0x4] sm:$0xf] %vm543, %v5660
        %5693 = vst.msk [vmem:[#allocation7 + $0x8] sm:$0xf] %vm543, %v5661
        %5694 = vst.msk [vmem:[#allocation7 + $0xc] sm:$0xf] %vm543, %v5662
        %5695 = vst.msk [vmem:[#allocation7 + $0x10] sm:$0xf] %vm543, %v5663
        %5696 = vst.msk [vmem:[#allocation7 + $0x14] sm:$0xf] %vm543, %v5664
        %5697 = vst.msk [vmem:[#allocation7 + $0x18] sm:$0xf] %vm543, %v5665
        %5698 = vst.msk [vmem:[#allocation7 + $0x1c] sm:$0xf] %vm543, %v5666
        %5699 = vst.msk [vmem:[#allocation7 + $0x20] sm:$0xf] %vm543, %v5667
        %5700 = vst.msk [vmem:[#allocation7 + $0x24] sm:$0xf] %vm543, %v5668
        %5701 = vst.msk [vmem:[#allocation7 + $0x28] sm:$0xf] %vm543, %v5669
        %5702 = vst.msk [vmem:[#allocation7 + $0x2c] sm:$0xf] %vm543, %v5670
        %5703 = vst.msk [vmem:[#allocation7 + $0x30] sm:$0xf] %vm543, %v5671
        %5704 = vst.msk [vmem:[#allocation7 + $0x34] sm:$0xf] %vm543, %v5672
        %5705 = vst.msk [vmem:[#allocation7 + $0x38] sm:$0xf] %vm543, %v5673
        %5706 = vst.msk [vmem:[#allocation7 + $0x3c] sm:$0xf] %vm543, %v5674
        %5707 = vst.msk [vmem:[#allocation7 + $0x40] sm:$0xf] %vm543, %v5675
        %5708 = vst.msk [vmem:[#allocation7 + $0x44] sm:$0xf] %vm543, %v5676
        %5709 = vst.msk [vmem:[#allocation7 + $0x48] sm:$0xf] %vm543, %v5677
        %5710 = vst.msk [vmem:[#allocation7 + $0x4c] sm:$0xf] %vm543, %v5678
        %5711 = vst.msk [vmem:[#allocation7 + $0x50] sm:$0xf] %vm543, %v5679
        %5712 = vst.msk [vmem:[#allocation7 + $0x54] sm:$0xf] %vm543, %v5680
        %5713 = vst.msk [vmem:[#allocation7 + $0x58] sm:$0xf] %vm543, %v5681
        %5714 = vst.msk [vmem:[#allocation7 + $0x5c] sm:$0xf] %vm543, %v5682
        %5715 = vst.msk [vmem:[#allocation7 + $0x60] sm:$0xf] %vm543, %v5683
        %5716 = vst.msk [vmem:[#allocation7 + $0x64] sm:$0xf] %vm543, %v5684
        %5717 = vst.msk [vmem:[#allocation7 + $0x68] sm:$0xf] %vm543, %v5685
        %5718 = vst.msk [vmem:[#allocation7 + $0x6c] sm:$0xf] %vm543, %v5686
        %5719 = vst.msk [vmem:[#allocation7 + $0x70] sm:$0xf] %vm543, %v5687
        %5720 = vst.msk [vmem:[#allocation7 + $0x74] sm:$0xf] %vm543, %v5688
        %5721 = vst.msk [vmem:[#allocation7 + $0x78] sm:$0xf] %vm543, %v5689
        %5722 = vst.msk [vmem:[#allocation7 + $0x7c] sm:$0xf] %vm543, %v5690
        %v5723 = vld [vmem:[#allocation6 + $0x1] sm:$0xff]
        %v5724 = vld [vmem:[#allocation6 + $0x9] sm:$0xff]
        %v5725 = vld [vmem:[#allocation6 + $0x19] sm:$0xff]
        %v5726 = vld [vmem:[#allocation6 + $0x21] sm:$0xff]
        %v5727 = vld [vmem:[#allocation6 + $0x31] sm:$0xff]
        %v5728 = vld [vmem:[#allocation6 + $0x39] sm:$0xff]
        %v5729 = vld [vmem:[#allocation6 + $0x49] sm:$0xff]
        %v5730 = vld [vmem:[#allocation6 + $0x51] sm:$0xff]
        %v5731 = vld [vmem:[#allocation6 + $0x61] sm:$0xff]
        %v5732 = vld [vmem:[#allocation6 + $0x69] sm:$0xff]
        %v5733 = vld [vmem:[#allocation6 + $0x79] sm:$0xff]
        %v5734 = vld [vmem:[#allocation6 + $0x81] sm:$0xff]
        %v5735 = vld [vmem:[#allocation6 + $0x91] sm:$0xff]
        %v5736 = vld [vmem:[#allocation6 + $0x99] sm:$0xff]
        %v5737 = vld [vmem:[#allocation6 + $0xa9] sm:$0xff]
        %v5738 = vld [vmem:[#allocation6 + $0xb1] sm:$0xff]
        %v5739 = vld [vmem:[#allocation6 + $0xc1] sm:$0xff]
        %v5740 = vld [vmem:[#allocation6 + $0xc9] sm:$0xff]
        %v5741 = vld [vmem:[#allocation6 + $0xd9] sm:$0xff]
        %v5742 = vld [vmem:[#allocation6 + $0xe1] sm:$0xff]
        %v5743 = vld [vmem:[#allocation6 + $0xf1] sm:$0xff]
        %v5744 = vld [vmem:[#allocation6 + $0xf9] sm:$0xff]
        %v5745 = vld [vmem:[#allocation6 + $0x109] sm:$0xff]
        %v5746 = vld [vmem:[#allocation6 + $0x111] sm:$0xff]
        %v5747 = vld [vmem:[#allocation6 + $0x121] sm:$0xff]
        %v5748 = vld [vmem:[#allocation6 + $0x129] sm:$0xff]
        %v5749 = vld [vmem:[#allocation6 + $0x139] sm:$0xff]
        %v5750 = vld [vmem:[#allocation6 + $0x141] sm:$0xff]
        %v5751 = vld [vmem:[#allocation6 + $0x151] sm:$0xff]
        %v5752 = vld [vmem:[#allocation6 + $0x159] sm:$0xff]
        %v5753 = vld [vmem:[#allocation6 + $0x169] sm:$0xff]
        %v5754 = vld [vmem:[#allocation6 + $0x171] sm:$0xff]
        %v5755 = vpack.c.bf16 %v5723, %v5723
        %v5756 = vpack.c.bf16 %v5724, %v5724
        %v5757 = vpack.c.bf16 %v5725, %v5725
        %v5758 = vpack.c.bf16 %v5726, %v5726
        %v5759 = vpack.c.bf16 %v5727, %v5727
        %v5760 = vpack.c.bf16 %v5728, %v5728
        %v5761 = vpack.c.bf16 %v5729, %v5729
        %v5762 = vpack.c.bf16 %v5730, %v5730
        %v5763 = vpack.c.bf16 %v5731, %v5731
        %v5764 = vpack.c.bf16 %v5732, %v5732
        %v5765 = vpack.c.bf16 %v5733, %v5733
        %v5766 = vpack.c.bf16 %v5734, %v5734
        %v5767 = vpack.c.bf16 %v5735, %v5735
        %v5768 = vpack.c.bf16 %v5736, %v5736
        %v5769 = vpack.c.bf16 %v5737, %v5737
        %v5770 = vpack.c.bf16 %v5738, %v5738
        %v5771 = vpack.c.bf16 %v5739, %v5739
        %v5772 = vpack.c.bf16 %v5740, %v5740
        %v5773 = vpack.c.bf16 %v5741, %v5741
        %v5774 = vpack.c.bf16 %v5742, %v5742
        %v5775 = vpack.c.bf16 %v5743, %v5743
        %v5776 = vpack.c.bf16 %v5744, %v5744
        %v5777 = vpack.c.bf16 %v5745, %v5745
        %v5778 = vpack.c.bf16 %v5746, %v5746
        %v5779 = vpack.c.bf16 %v5747, %v5747
        %v5780 = vpack.c.bf16 %v5748, %v5748
        %v5781 = vpack.c.bf16 %v5749, %v5749
        %v5782 = vpack.c.bf16 %v5750, %v5750
        %v5783 = vpack.c.bf16 %v5751, %v5751
        %v5784 = vpack.c.bf16 %v5752, %v5752
        %v5785 = vpack.c.bf16 %v5753, %v5753
        %v5786 = vpack.c.bf16 %v5754, %v5754
        %5819 = vrot.lane.b32.xlu0 %v5755, 4
        %v5820 = vpop.permute.xlu0 %5819
        %5821 = vrot.lane.b32.xlu0 %v5756, 4
        %v5822 = vpop.permute.xlu0 %5821
        %5823 = vrot.lane.b32.xlu0 %v5757, 4
        %v5824 = vpop.permute.xlu0 %5823
        %5825 = vrot.lane.b32.xlu0 %v5758, 4
        %v5826 = vpop.permute.xlu0 %5825
        %5827 = vrot.lane.b32.xlu0 %v5759, 4
        %v5828 = vpop.permute.xlu0 %5827
        %5829 = vrot.lane.b32.xlu0 %v5760, 4
        %v5830 = vpop.permute.xlu0 %5829
        %5831 = vrot.lane.b32.xlu0 %v5761, 4
        %v5832 = vpop.permute.xlu0 %5831
        %5833 = vrot.lane.b32.xlu0 %v5762, 4
        %v5834 = vpop.permute.xlu0 %5833
        %5835 = vrot.lane.b32.xlu0 %v5763, 4
        %v5836 = vpop.permute.xlu0 %5835
        %5837 = vrot.lane.b32.xlu0 %v5764, 4
        %v5838 = vpop.permute.xlu0 %5837
        %5839 = vrot.lane.b32.xlu0 %v5765, 4
        %v5840 = vpop.permute.xlu0 %5839
        %5841 = vrot.lane.b32.xlu0 %v5766, 4
        %v5842 = vpop.permute.xlu0 %5841
        %5843 = vrot.lane.b32.xlu0 %v5767, 4
        %v5844 = vpop.permute.xlu0 %5843
        %5845 = vrot.lane.b32.xlu0 %v5768, 4
        %v5846 = vpop.permute.xlu0 %5845
        %5847 = vrot.lane.b32.xlu0 %v5769, 4
        %v5848 = vpop.permute.xlu0 %5847
        %5849 = vrot.lane.b32.xlu0 %v5770, 4
        %v5850 = vpop.permute.xlu0 %5849
        %5851 = vrot.lane.b32.xlu0 %v5771, 4
        %v5852 = vpop.permute.xlu0 %5851
        %5853 = vrot.lane.b32.xlu0 %v5772, 4
        %v5854 = vpop.permute.xlu0 %5853
        %5855 = vrot.lane.b32.xlu0 %v5773, 4
        %v5856 = vpop.permute.xlu0 %5855
        %5857 = vrot.lane.b32.xlu0 %v5774, 4
        %v5858 = vpop.permute.xlu0 %5857
        %5859 = vrot.lane.b32.xlu0 %v5775, 4
        %v5860 = vpop.permute.xlu0 %5859
        %5861 = vrot.lane.b32.xlu0 %v5776, 4
        %v5862 = vpop.permute.xlu0 %5861
        %5863 = vrot.lane.b32.xlu0 %v5777, 4
        %v5864 = vpop.permute.xlu0 %5863
        %5865 = vrot.lane.b32.xlu0 %v5778, 4
        %v5866 = vpop.permute.xlu0 %5865
        %5867 = vrot.lane.b32.xlu0 %v5779, 4
        %v5868 = vpop.permute.xlu0 %5867
        %5869 = vrot.lane.b32.xlu0 %v5780, 4
        %v5870 = vpop.permute.xlu0 %5869
        %5871 = vrot.lane.b32.xlu0 %v5781, 4
        %v5872 = vpop.permute.xlu0 %5871
        %5873 = vrot.lane.b32.xlu0 %v5782, 4
        %v5874 = vpop.permute.xlu0 %5873
        %5875 = vrot.lane.b32.xlu0 %v5783, 4
        %v5876 = vpop.permute.xlu0 %5875
        %5877 = vrot.lane.b32.xlu0 %v5784, 4
        %v5878 = vpop.permute.xlu0 %5877
        %5879 = vrot.lane.b32.xlu0 %v5785, 4
        %v5880 = vpop.permute.xlu0 %5879
        %5881 = vrot.lane.b32.xlu0 %v5786, 4
        %v5882 = vpop.permute.xlu0 %5881
        %5915 = vst.msk [vmem:[#allocation7] sm:$0xf] %vm768, %v5820
        %5916 = vst.msk [vmem:[#allocation7 + $0x4] sm:$0xf] %vm768, %v5822
        %5917 = vst.msk [vmem:[#allocation7 + $0x8] sm:$0xf] %vm768, %v5824
        %5918 = vst.msk [vmem:[#allocation7 + $0xc] sm:$0xf] %vm768, %v5826
        %5919 = vst.msk [vmem:[#allocation7 + $0x10] sm:$0xf] %vm768, %v5828
        %5920 = vst.msk [vmem:[#allocation7 + $0x14] sm:$0xf] %vm768, %v5830
        %5921 = vst.msk [vmem:[#allocation7 + $0x18] sm:$0xf] %vm768, %v5832
        %5922 = vst.msk [vmem:[#allocation7 + $0x1c] sm:$0xf] %vm768, %v5834
        %5923 = vst.msk [vmem:[#allocation7 + $0x20] sm:$0xf] %vm768, %v5836
        %5924 = vst.msk [vmem:[#allocation7 + $0x24] sm:$0xf] %vm768, %v5838
        %5925 = vst.msk [vmem:[#allocation7 + $0x28] sm:$0xf] %vm768, %v5840
        %5926 = vst.msk [vmem:[#allocation7 + $0x2c] sm:$0xf] %vm768, %v5842
        %5927 = vst.msk [vmem:[#allocation7 + $0x30] sm:$0xf] %vm768, %v5844
        %5928 = vst.msk [vmem:[#allocation7 + $0x34] sm:$0xf] %vm768, %v5846
        %5929 = vst.msk [vmem:[#allocation7 + $0x38] sm:$0xf] %vm768, %v5848
        %5930 = vst.msk [vmem:[#allocation7 + $0x3c] sm:$0xf] %vm768, %v5850
        %5931 = vst.msk [vmem:[#allocation7 + $0x40] sm:$0xf] %vm768, %v5852
        %5932 = vst.msk [vmem:[#allocation7 + $0x44] sm:$0xf] %vm768, %v5854
        %5933 = vst.msk [vmem:[#allocation7 + $0x48] sm:$0xf] %vm768, %v5856
        %5934 = vst.msk [vmem:[#allocation7 + $0x4c] sm:$0xf] %vm768, %v5858
        %5935 = vst.msk [vmem:[#allocation7 + $0x50] sm:$0xf] %vm768, %v5860
        %5936 = vst.msk [vmem:[#allocation7 + $0x54] sm:$0xf] %vm768, %v5862
        %5937 = vst.msk [vmem:[#allocation7 + $0x58] sm:$0xf] %vm768, %v5864
        %5938 = vst.msk [vmem:[#allocation7 + $0x5c] sm:$0xf] %vm768, %v5866
        %5939 = vst.msk [vmem:[#allocation7 + $0x60] sm:$0xf] %vm768, %v5868
        %5940 = vst.msk [vmem:[#allocation7 + $0x64] sm:$0xf] %vm768, %v5870
        %5941 = vst.msk [vmem:[#allocation7 + $0x68] sm:$0xf] %vm768, %v5872
        %5942 = vst.msk [vmem:[#allocation7 + $0x6c] sm:$0xf] %vm768, %v5874
        %5943 = vst.msk [vmem:[#allocation7 + $0x70] sm:$0xf] %vm768, %v5876
        %5944 = vst.msk [vmem:[#allocation7 + $0x74] sm:$0xf] %vm768, %v5878
        %5945 = vst.msk [vmem:[#allocation7 + $0x78] sm:$0xf] %vm768, %v5880
        %5946 = vst.msk [vmem:[#allocation7 + $0x7c] sm:$0xf] %vm768, %v5882
        %v5947 = vld [vmem:[#allocation6 + $0x2] sm:$0xff]
        %v5948 = vld [vmem:[#allocation6 + $0xa] sm:$0xff]
        %v5949 = vld [vmem:[#allocation6 + $0x1a] sm:$0xff]
        %v5950 = vld [vmem:[#allocation6 + $0x22] sm:$0xff]
        %v5951 = vld [vmem:[#allocation6 + $0x32] sm:$0xff]
        %v5952 = vld [vmem:[#allocation6 + $0x3a] sm:$0xff]
        %v5953 = vld [vmem:[#allocation6 + $0x4a] sm:$0xff]
        %v5954 = vld [vmem:[#allocation6 + $0x52] sm:$0xff]
        %v5955 = vld [vmem:[#allocation6 + $0x62] sm:$0xff]
        %v5956 = vld [vmem:[#allocation6 + $0x6a] sm:$0xff]
        %v5957 = vld [vmem:[#allocation6 + $0x7a] sm:$0xff]
        %v5958 = vld [vmem:[#allocation6 + $0x82] sm:$0xff]
        %v5959 = vld [vmem:[#allocation6 + $0x92] sm:$0xff]
        %v5960 = vld [vmem:[#allocation6 + $0x9a] sm:$0xff]
        %v5961 = vld [vmem:[#allocation6 + $0xaa] sm:$0xff]
        %v5962 = vld [vmem:[#allocation6 + $0xb2] sm:$0xff]
        %v5963 = vld [vmem:[#allocation6 + $0xc2] sm:$0xff]
        %v5964 = vld [vmem:[#allocation6 + $0xca] sm:$0xff]
        %v5965 = vld [vmem:[#allocation6 + $0xda] sm:$0xff]
        %v5966 = vld [vmem:[#allocation6 + $0xe2] sm:$0xff]
        %v5967 = vld [vmem:[#allocation6 + $0xf2] sm:$0xff]
        %v5968 = vld [vmem:[#allocation6 + $0xfa] sm:$0xff]
        %v5969 = vld [vmem:[#allocation6 + $0x10a] sm:$0xff]
        %v5970 = vld [vmem:[#allocation6 + $0x112] sm:$0xff]
        %v5971 = vld [vmem:[#allocation6 + $0x122] sm:$0xff]
        %v5972 = vld [vmem:[#allocation6 + $0x12a] sm:$0xff]
        %v5973 = vld [vmem:[#allocation6 + $0x13a] sm:$0xff]
        %v5974 = vld [vmem:[#allocation6 + $0x142] sm:$0xff]
        %v5975 = vld [vmem:[#allocation6 + $0x152] sm:$0xff]
        %v5976 = vld [vmem:[#allocation6 + $0x15a] sm:$0xff]
        %v5977 = vld [vmem:[#allocation6 + $0x16a] sm:$0xff]
        %v5978 = vld [vmem:[#allocation6 + $0x172] sm:$0xff]
        %v5979 = vpack.c.bf16 %v5947, %v5947
        %v5980 = vpack.c.bf16 %v5948, %v5948
        %v5981 = vpack.c.bf16 %v5949, %v5949
        %v5982 = vpack.c.bf16 %v5950, %v5950
        %v5983 = vpack.c.bf16 %v5951, %v5951
        %v5984 = vpack.c.bf16 %v5952, %v5952
        %v5985 = vpack.c.bf16 %v5953, %v5953
        %v5986 = vpack.c.bf16 %v5954, %v5954
        %v5987 = vpack.c.bf16 %v5955, %v5955
        %v5988 = vpack.c.bf16 %v5956, %v5956
        %v5989 = vpack.c.bf16 %v5957, %v5957
        %v5990 = vpack.c.bf16 %v5958, %v5958
        %v5991 = vpack.c.bf16 %v5959, %v5959
        %v5992 = vpack.c.bf16 %v5960, %v5960
        %v5993 = vpack.c.bf16 %v5961, %v5961
        %v5994 = vpack.c.bf16 %v5962, %v5962
        %v5995 = vpack.c.bf16 %v5963, %v5963
        %v5996 = vpack.c.bf16 %v5964, %v5964
        %v5997 = vpack.c.bf16 %v5965, %v5965
        %v5998 = vpack.c.bf16 %v5966, %v5966
        %v5999 = vpack.c.bf16 %v5967, %v5967
        %v6000 = vpack.c.bf16 %v5968, %v5968
        %v6001 = vpack.c.bf16 %v5969, %v5969
        %v6002 = vpack.c.bf16 %v5970, %v5970
        %v6003 = vpack.c.bf16 %v5971, %v5971
        %v6004 = vpack.c.bf16 %v5972, %v5972
        %v6005 = vpack.c.bf16 %v5973, %v5973
        %v6006 = vpack.c.bf16 %v5974, %v5974
        %v6007 = vpack.c.bf16 %v5975, %v5975
        %v6008 = vpack.c.bf16 %v5976, %v5976
        %v6009 = vpack.c.bf16 %v5977, %v5977
        %v6010 = vpack.c.bf16 %v5978, %v5978
        %6043 = vrot.lane.b32.xlu0 %v5979, 8
        %v6044 = vpop.permute.xlu0 %6043
        %6045 = vrot.lane.b32.xlu0 %v5980, 8
        %v6046 = vpop.permute.xlu0 %6045
        %6047 = vrot.lane.b32.xlu0 %v5981, 8
        %v6048 = vpop.permute.xlu0 %6047
        %6049 = vrot.lane.b32.xlu0 %v5982, 8
        %v6050 = vpop.permute.xlu0 %6049
        %6051 = vrot.lane.b32.xlu0 %v5983, 8
        %v6052 = vpop.permute.xlu0 %6051
        %6053 = vrot.lane.b32.xlu0 %v5984, 8
        %v6054 = vpop.permute.xlu0 %6053
        %6055 = vrot.lane.b32.xlu0 %v5985, 8
        %v6056 = vpop.permute.xlu0 %6055
        %6057 = vrot.lane.b32.xlu0 %v5986, 8
        %v6058 = vpop.permute.xlu0 %6057
        %6059 = vrot.lane.b32.xlu0 %v5987, 8
        %v6060 = vpop.permute.xlu0 %6059
        %6061 = vrot.lane.b32.xlu0 %v5988, 8
        %v6062 = vpop.permute.xlu0 %6061
        %6063 = vrot.lane.b32.xlu0 %v5989, 8
        %v6064 = vpop.permute.xlu0 %6063
        %6065 = vrot.lane.b32.xlu0 %v5990, 8
        %v6066 = vpop.permute.xlu0 %6065
        %6067 = vrot.lane.b32.xlu0 %v5991, 8
        %v6068 = vpop.permute.xlu0 %6067
        %6069 = vrot.lane.b32.xlu0 %v5992, 8
        %v6070 = vpop.permute.xlu0 %6069
        %6071 = vrot.lane.b32.xlu0 %v5993, 8
        %v6072 = vpop.permute.xlu0 %6071
        %6073 = vrot.lane.b32.xlu0 %v5994, 8
        %v6074 = vpop.permute.xlu0 %6073
        %6075 = vrot.lane.b32.xlu0 %v5995, 8
        %v6076 = vpop.permute.xlu0 %6075
        %6077 = vrot.lane.b32.xlu0 %v5996, 8
        %v6078 = vpop.permute.xlu0 %6077
        %6079 = vrot.lane.b32.xlu0 %v5997, 8
        %v6080 = vpop.permute.xlu0 %6079
        %6081 = vrot.lane.b32.xlu0 %v5998, 8
        %v6082 = vpop.permute.xlu0 %6081
        %6083 = vrot.lane.b32.xlu0 %v5999, 8
        %v6084 = vpop.permute.xlu0 %6083
        %6085 = vrot.lane.b32.xlu0 %v6000, 8
        %v6086 = vpop.permute.xlu0 %6085
        %6087 = vrot.lane.b32.xlu0 %v6001, 8
        %v6088 = vpop.permute.xlu0 %6087
        %6089 = vrot.lane.b32.xlu0 %v6002, 8
        %v6090 = vpop.permute.xlu0 %6089
        %6091 = vrot.lane.b32.xlu0 %v6003, 8
        %v6092 = vpop.permute.xlu0 %6091
        %6093 = vrot.lane.b32.xlu0 %v6004, 8
        %v6094 = vpop.permute.xlu0 %6093
        %6095 = vrot.lane.b32.xlu0 %v6005, 8
        %v6096 = vpop.permute.xlu0 %6095
        %6097 = vrot.lane.b32.xlu0 %v6006, 8
        %v6098 = vpop.permute.xlu0 %6097
        %6099 = vrot.lane.b32.xlu0 %v6007, 8
        %v6100 = vpop.permute.xlu0 %6099
        %6101 = vrot.lane.b32.xlu0 %v6008, 8
        %v6102 = vpop.permute.xlu0 %6101
        %6103 = vrot.lane.b32.xlu0 %v6009, 8
        %v6104 = vpop.permute.xlu0 %6103
        %6105 = vrot.lane.b32.xlu0 %v6010, 8
        %v6106 = vpop.permute.xlu0 %6105
        %6139 = vst.msk [vmem:[#allocation7] sm:$0xf] %vm993, %v6044
        %6140 = vst.msk [vmem:[#allocation7 + $0x4] sm:$0xf] %vm993, %v6046
        %6141 = vst.msk [vmem:[#allocation7 + $0x8] sm:$0xf] %vm993, %v6048
        %6142 = vst.msk [vmem:[#allocation7 + $0xc] sm:$0xf] %vm993, %v6050
        %6143 = vst.msk [vmem:[#allocation7 + $0x10] sm:$0xf] %vm993, %v6052
        %6144 = vst.msk [vmem:[#allocation7 + $0x14] sm:$0xf] %vm993, %v6054
        %6145 = vst.msk [vmem:[#allocation7 + $0x18] sm:$0xf] %vm993, %v6056
        %6146 = vst.msk [vmem:[#allocation7 + $0x1c] sm:$0xf] %vm993, %v6058
        %6147 = vst.msk [vmem:[#allocation7 + $0x20] sm:$0xf] %vm993, %v6060
        %6148 = vst.msk [vmem:[#allocation7 + $0x24] sm:$0xf] %vm993, %v6062
        %6149 = vst.msk [vmem:[#allocation7 + $0x28] sm:$0xf] %vm993, %v6064
        %6150 = vst.msk [vmem:[#allocation7 + $0x2c] sm:$0xf] %vm993, %v6066
        %6151 = vst.msk [vmem:[#allocation7 + $0x30] sm:$0xf] %vm993, %v6068
        %6152 = vst.msk [vmem:[#allocation7 + $0x34] sm:$0xf] %vm993, %v6070
        %6153 = vst.msk [vmem:[#allocation7 + $0x38] sm:$0xf] %vm993, %v6072
        %6154 = vst.msk [vmem:[#allocation7 + $0x3c] sm:$0xf] %vm993, %v6074
        %6155 = vst.msk [vmem:[#allocation7 + $0x40] sm:$0xf] %vm993, %v6076
        %6156 = vst.msk [vmem:[#allocation7 + $0x44] sm:$0xf] %vm993, %v6078
        %6157 = vst.msk [vmem:[#allocation7 + $0x48] sm:$0xf] %vm993, %v6080
        %6158 = vst.msk [vmem:[#allocation7 + $0x4c] sm:$0xf] %vm993, %v6082
        %6159 = vst.msk [vmem:[#allocation7 + $0x50] sm:$0xf] %vm993, %v6084
        %6160 = vst.msk [vmem:[#allocation7 + $0x54] sm:$0xf] %vm993, %v6086
        %6161 = vst.msk [vmem:[#allocation7 + $0x58] sm:$0xf] %vm993, %v6088
        %6162 = vst.msk [vmem:[#allocation7 + $0x5c] sm:$0xf] %vm993, %v6090
        %6163 = vst.msk [vmem:[#allocation7 + $0x60] sm:$0xf] %vm993, %v6092
        %6164 = vst.msk [vmem:[#allocation7 + $0x64] sm:$0xf] %vm993, %v6094
        %6165 = vst.msk [vmem:[#allocation7 + $0x68] sm:$0xf] %vm993, %v6096
        %6166 = vst.msk [vmem:[#allocation7 + $0x6c] sm:$0xf] %vm993, %v6098
        %6167 = vst.msk [vmem:[#allocation7 + $0x70] sm:$0xf] %vm993, %v6100
        %6168 = vst.msk [vmem:[#allocation7 + $0x74] sm:$0xf] %vm993, %v6102
        %6169 = vst.msk [vmem:[#allocation7 + $0x78] sm:$0xf] %vm993, %v6104
        %6170 = vst.msk [vmem:[#allocation7 + $0x7c] sm:$0xf] %vm993, %v6106
        %v6171 = vld [vmem:[%s3369] sm:$0xff]
        %v6172 = vld [vmem:[%s3369 + $0x8] sm:$0xff]
        %v6173 = vld [vmem:[%s3369 + $0x18] sm:$0xff]
        %v6174 = vld [vmem:[%s3369 + $0x20] sm:$0xff]
        %v6175 = vld [vmem:[%s3369 + $0x30] sm:$0xff]
        %v6176 = vld [vmem:[%s3369 + $0x38] sm:$0xff]
        %v6177 = vld [vmem:[%s3369 + $0x48] sm:$0xff]
        %v6178 = vld [vmem:[%s3369 + $0x50] sm:$0xff]
        %v6179 = vld [vmem:[%s3369 + $0x60] sm:$0xff]
        %v6180 = vld [vmem:[%s3369 + $0x68] sm:$0xff]
        %v6181 = vld [vmem:[%s3369 + $0x78] sm:$0xff]
        %v6182 = vld [vmem:[%s3369 + $0x80] sm:$0xff]
        %v6183 = vld [vmem:[%s3369 + $0x90] sm:$0xff]
        %v6184 = vld [vmem:[%s3369 + $0x98] sm:$0xff]
        %v6185 = vld [vmem:[%s3369 + $0xa8] sm:$0xff]
        %v6186 = vld [vmem:[%s3369 + $0xb0] sm:$0xff]
        %v6187 = vld [vmem:[%s3369 + $0xc0] sm:$0xff]
        %v6188 = vld [vmem:[%s3369 + $0xc8] sm:$0xff]
        %v6189 = vld [vmem:[%s3369 + $0xd8] sm:$0xff]
        %v6190 = vld [vmem:[%s3369 + $0xe0] sm:$0xff]
        %v6191 = vld [vmem:[%s3369 + $0xf0] sm:$0xff]
        %v6192 = vld [vmem:[%s3369 + $0xf8] sm:$0xff]
        %v6193 = vld [vmem:[%s3369 + $0x108] sm:$0xff]
        %v6194 = vld [vmem:[%s3369 + $0x110] sm:$0xff]
        %v6195 = vld [vmem:[%s3369 + $0x120] sm:$0xff]
        %v6196 = vld [vmem:[%s3369 + $0x128] sm:$0xff]
        %v6197 = vld [vmem:[%s3369 + $0x138] sm:$0xff]
        %v6198 = vld [vmem:[%s3369 + $0x140] sm:$0xff]
        %v6199 = vld [vmem:[%s3369 + $0x150] sm:$0xff]
        %v6200 = vld [vmem:[%s3369 + $0x158] sm:$0xff]
        %v6201 = vld [vmem:[%s3369 + $0x168] sm:$0xff]
        %v6202 = vld [vmem:[%s3369 + $0x170] sm:$0xff]
        %v6203 = vpack.c.bf16 %v6171, %v6171
        %v6204 = vpack.c.bf16 %v6172, %v6172
        %v6205 = vpack.c.bf16 %v6173, %v6173
        %v6206 = vpack.c.bf16 %v6174, %v6174
        %v6207 = vpack.c.bf16 %v6175, %v6175
        %v6208 = vpack.c.bf16 %v6176, %v6176
        %v6209 = vpack.c.bf16 %v6177, %v6177
        %v6210 = vpack.c.bf16 %v6178, %v6178
        %v6211 = vpack.c.bf16 %v6179, %v6179
        %v6212 = vpack.c.bf16 %v6180, %v6180
        %v6213 = vpack.c.bf16 %v6181, %v6181
        %v6214 = vpack.c.bf16 %v6182, %v6182
        %v6215 = vpack.c.bf16 %v6183, %v6183
        %v6216 = vpack.c.bf16 %v6184, %v6184
        %v6217 = vpack.c.bf16 %v6185, %v6185
        %v6218 = vpack.c.bf16 %v6186, %v6186
        %v6219 = vpack.c.bf16 %v6187, %v6187
        %v6220 = vpack.c.bf16 %v6188, %v6188
        %v6221 = vpack.c.bf16 %v6189, %v6189
        %v6222 = vpack.c.bf16 %v6190, %v6190
        %v6223 = vpack.c.bf16 %v6191, %v6191
        %v6224 = vpack.c.bf16 %v6192, %v6192
        %v6225 = vpack.c.bf16 %v6193, %v6193
        %v6226 = vpack.c.bf16 %v6194, %v6194
        %v6227 = vpack.c.bf16 %v6195, %v6195
        %v6228 = vpack.c.bf16 %v6196, %v6196
        %v6229 = vpack.c.bf16 %v6197, %v6197
        %v6230 = vpack.c.bf16 %v6198, %v6198
        %v6231 = vpack.c.bf16 %v6199, %v6199
        %v6232 = vpack.c.bf16 %v6200, %v6200
        %v6233 = vpack.c.bf16 %v6201, %v6201
        %v6234 = vpack.c.bf16 %v6202, %v6202
        %6267 = vrot.lane.b32.xlu0 %v6203, 12
        %v6268 = vpop.permute.xlu0 %6267
        %6269 = vrot.lane.b32.xlu0 %v6204, 12
        %v6270 = vpop.permute.xlu0 %6269
        %6271 = vrot.lane.b32.xlu0 %v6205, 12
        %v6272 = vpop.permute.xlu0 %6271
        %6273 = vrot.lane.b32.xlu0 %v6206, 12
        %v6274 = vpop.permute.xlu0 %6273
        %6275 = vrot.lane.b32.xlu0 %v6207, 12
        %v6276 = vpop.permute.xlu0 %6275
        %6277 = vrot.lane.b32.xlu0 %v6208, 12
        %v6278 = vpop.permute.xlu0 %6277
        %6279 = vrot.lane.b32.xlu0 %v6209, 12
        %v6280 = vpop.permute.xlu0 %6279
        %6281 = vrot.lane.b32.xlu0 %v6210, 12
        %v6282 = vpop.permute.xlu0 %6281
        %6283 = vrot.lane.b32.xlu0 %v6211, 12
        %v6284 = vpop.permute.xlu0 %6283
        %6285 = vrot.lane.b32.xlu0 %v6212, 12
        %v6286 = vpop.permute.xlu0 %6285
        %6287 = vrot.lane.b32.xlu0 %v6213, 12
        %v6288 = vpop.permute.xlu0 %6287
        %6289 = vrot.lane.b32.xlu0 %v6214, 12
        %v6290 = vpop.permute.xlu0 %6289
        %6291 = vrot.lane.b32.xlu0 %v6215, 12
        %v6292 = vpop.permute.xlu0 %6291
        %6293 = vrot.lane.b32.xlu0 %v6216, 12
        %v6294 = vpop.permute.xlu0 %6293
        %6295 = vrot.lane.b32.xlu0 %v6217, 12
        %v6296 = vpop.permute.xlu0 %6295
        %6297 = vrot.lane.b32.xlu0 %v6218, 12
        %v6298 = vpop.permute.xlu0 %6297
        %6299 = vrot.lane.b32.xlu0 %v6219, 12
        %v6300 = vpop.permute.xlu0 %6299
        %6301 = vrot.lane.b32.xlu0 %v6220, 12
        %v6302 = vpop.permute.xlu0 %6301
        %6303 = vrot.lane.b32.xlu0 %v6221, 12
        %v6304 = vpop.permute.xlu0 %6303
        %6305 = vrot.lane.b32.xlu0 %v6222, 12
        %v6306 = vpop.permute.xlu0 %6305
        %6307 = vrot.lane.b32.xlu0 %v6223, 12
        %v6308 = vpop.permute.xlu0 %6307
        %6309 = vrot.lane.b32.xlu0 %v6224, 12
        %v6310 = vpop.permute.xlu0 %6309
        %6311 = vrot.lane.b32.xlu0 %v6225, 12
        %v6312 = vpop.permute.xlu0 %6311
        %6313 = vrot.lane.b32.xlu0 %v6226, 12
        %v6314 = vpop.permute.xlu0 %6313
        %6315 = vrot.lane.b32.xlu0 %v6227, 12
        %v6316 = vpop.permute.xlu0 %6315
        %6317 = vrot.lane.b32.xlu0 %v6228, 12
        %v6318 = vpop.permute.xlu0 %6317
        %6319 = vrot.lane.b32.xlu0 %v6229, 12
        %v6320 = vpop.permute.xlu0 %6319
        %6321 = vrot.lane.b32.xlu0 %v6230, 12
        %v6322 = vpop.permute.xlu0 %6321
        %6323 = vrot.lane.b32.xlu0 %v6231, 12
        %v6324 = vpop.permute.xlu0 %6323
        %6325 = vrot.lane.b32.xlu0 %v6232, 12
        %v6326 = vpop.permute.xlu0 %6325
        %6327 = vrot.lane.b32.xlu0 %v6233, 12
        %v6328 = vpop.permute.xlu0 %6327
        %6329 = vrot.lane.b32.xlu0 %v6234, 12
        %v6330 = vpop.permute.xlu0 %6329
        %6363 = vst.msk [vmem:[#allocation7] sm:$0xf] %vm1218, %v6268
        %6364 = vst.msk [vmem:[#allocation7 + $0x4] sm:$0xf] %vm1218, %v6270
        %6365 = vst.msk [vmem:[#allocation7 + $0x8] sm:$0xf] %vm1218, %v6272
        %6366 = vst.msk [vmem:[#allocation7 + $0xc] sm:$0xf] %vm1218, %v6274
        %6367 = vst.msk [vmem:[#allocation7 + $0x10] sm:$0xf] %vm1218, %v6276
        %6368 = vst.msk [vmem:[#allocation7 + $0x14] sm:$0xf] %vm1218, %v6278
        %6369 = vst.msk [vmem:[#allocation7 + $0x18] sm:$0xf] %vm1218, %v6280
        %6370 = vst.msk [vmem:[#allocation7 + $0x1c] sm:$0xf] %vm1218, %v6282
        %6371 = vst.msk [vmem:[#allocation7 + $0x20] sm:$0xf] %vm1218, %v6284
        %6372 = vst.msk [vmem:[#allocation7 + $0x24] sm:$0xf] %vm1218, %v6286
        %6373 = vst.msk [vmem:[#allocation7 + $0x28] sm:$0xf] %vm1218, %v6288
        %6374 = vst.msk [vmem:[#allocation7 + $0x2c] sm:$0xf] %vm1218, %v6290
        %6375 = vst.msk [vmem:[#allocation7 + $0x30] sm:$0xf] %vm1218, %v6292
        %6376 = vst.msk [vmem:[#allocation7 + $0x34] sm:$0xf] %vm1218, %v6294
        %6377 = vst.msk [vmem:[#allocation7 + $0x38] sm:$0xf] %vm1218, %v6296
        %6378 = vst.msk [vmem:[#allocation7 + $0x3c] sm:$0xf] %vm1218, %v6298
        %6379 = vst.msk [vmem:[#allocation7 + $0x40] sm:$0xf] %vm1218, %v6300
        %6380 = vst.msk [vmem:[#allocation7 + $0x44] sm:$0xf] %vm1218, %v6302
        %6381 = vst.msk [vmem:[#allocation7 + $0x48] sm:$0xf] %vm1218, %v6304
        %6382 = vst.msk [vmem:[#allocation7 + $0x4c] sm:$0xf] %vm1218, %v6306
        %6383 = vst.msk [vmem:[#allocation7 + $0x50] sm:$0xf] %vm1218, %v6308
        %6384 = vst.msk [vmem:[#allocation7 + $0x54] sm:$0xf] %vm1218, %v6310
        %6385 = vst.msk [vmem:[#allocation7 + $0x58] sm:$0xf] %vm1218, %v6312
        %6386 = vst.msk [vmem:[#allocation7 + $0x5c] sm:$0xf] %vm1218, %v6314
        %6387 = vst.msk [vmem:[#allocation7 + $0x60] sm:$0xf] %vm1218, %v6316
        %6388 = vst.msk [vmem:[#allocation7 + $0x64] sm:$0xf] %vm1218, %v6318
        %6389 = vst.msk [vmem:[#allocation7 + $0x68] sm:$0xf] %vm1218, %v6320
        %6390 = vst.msk [vmem:[#allocation7 + $0x6c] sm:$0xf] %vm1218, %v6322
        %6391 = vst.msk [vmem:[#allocation7 + $0x70] sm:$0xf] %vm1218, %v6324
        %6392 = vst.msk [vmem:[#allocation7 + $0x74] sm:$0xf] %vm1218, %v6326
        %6393 = vst.msk [vmem:[#allocation7 + $0x78] sm:$0xf] %vm1218, %v6328
        %6394 = vst.msk [vmem:[#allocation7 + $0x7c] sm:$0xf] %vm1218, %v6330
        %v6395 = vld [vmem:[%s3369 + $0x1] sm:$0xff]
        %v6396 = vld [vmem:[%s3369 + $0x9] sm:$0xff]
        %v6397 = vld [vmem:[%s3369 + $0x19] sm:$0xff]
        %v6398 = vld [vmem:[%s3369 + $0x21] sm:$0xff]
        %v6399 = vld [vmem:[%s3369 + $0x31] sm:$0xff]
        %v6400 = vld [vmem:[%s3369 + $0x39] sm:$0xff]
        %v6401 = vld [vmem:[%s3369 + $0x49] sm:$0xff]
        %v6402 = vld [vmem:[%s3369 + $0x51] sm:$0xff]
        %v6403 = vld [vmem:[%s3369 + $0x61] sm:$0xff]
        %v6404 = vld [vmem:[%s3369 + $0x69] sm:$0xff]
        %v6405 = vld [vmem:[%s3369 + $0x79] sm:$0xff]
        %v6406 = vld [vmem:[%s3369 + $0x81] sm:$0xff]
        %v6407 = vld [vmem:[%s3369 + $0x91] sm:$0xff]
        %v6408 = vld [vmem:[%s3369 + $0x99] sm:$0xff]
        %v6409 = vld [vmem:[%s3369 + $0xa9] sm:$0xff]
        %v6410 = vld [vmem:[%s3369 + $0xb1] sm:$0xff]
        %v6411 = vld [vmem:[%s3369 + $0xc1] sm:$0xff]
        %v6412 = vld [vmem:[%s3369 + $0xc9] sm:$0xff]
        %v6413 = vld [vmem:[%s3369 + $0xd9] sm:$0xff]
        %v6414 = vld [vmem:[%s3369 + $0xe1] sm:$0xff]
        %v6415 = vld [vmem:[%s3369 + $0xf1] sm:$0xff]
        %v6416 = vld [vmem:[%s3369 + $0xf9] sm:$0xff]
        %v6417 = vld [vmem:[%s3369 + $0x109] sm:$0xff]
        %v6418 = vld [vmem:[%s3369 + $0x111] sm:$0xff]
        %v6419 = vld [vmem:[%s3369 + $0x121] sm:$0xff]
        %v6420 = vld [vmem:[%s3369 + $0x129] sm:$0xff]
        %v6421 = vld [vmem:[%s3369 + $0x139] sm:$0xff]
        %v6422 = vld [vmem:[%s3369 + $0x141] sm:$0xff]
        %v6423 = vld [vmem:[%s3369 + $0x151] sm:$0xff]
        %v6424 = vld [vmem:[%s3369 + $0x159] sm:$0xff]
        %v6425 = vld [vmem:[%s3369 + $0x169] sm:$0xff]
        %v6426 = vld [vmem:[%s3369 + $0x171] sm:$0xff]
        %v6427 = vpack.c.bf16 %v6395, %v6395
        %v6428 = vpack.c.bf16 %v6396, %v6396
        %v6429 = vpack.c.bf16 %v6397, %v6397
        %v6430 = vpack.c.bf16 %v6398, %v6398
        %v6431 = vpack.c.bf16 %v6399, %v6399
        %v6432 = vpack.c.bf16 %v6400, %v6400
        %v6433 = vpack.c.bf16 %v6401, %v6401
        %v6434 = vpack.c.bf16 %v6402, %v6402
        %v6435 = vpack.c.bf16 %v6403, %v6403
        %v6436 = vpack.c.bf16 %v6404, %v6404
        %v6437 = vpack.c.bf16 %v6405, %v6405
        %v6438 = vpack.c.bf16 %v6406, %v6406
        %v6439 = vpack.c.bf16 %v6407, %v6407
        %v6440 = vpack.c.bf16 %v6408, %v6408
        %v6441 = vpack.c.bf16 %v6409, %v6409
        %v6442 = vpack.c.bf16 %v6410, %v6410
        %v6443 = vpack.c.bf16 %v6411, %v6411
        %v6444 = vpack.c.bf16 %v6412, %v6412
        %v6445 = vpack.c.bf16 %v6413, %v6413
        %v6446 = vpack.c.bf16 %v6414, %v6414
        %v6447 = vpack.c.bf16 %v6415, %v6415
        %v6448 = vpack.c.bf16 %v6416, %v6416
        %v6449 = vpack.c.bf16 %v6417, %v6417
        %v6450 = vpack.c.bf16 %v6418, %v6418
        %v6451 = vpack.c.bf16 %v6419, %v6419
        %v6452 = vpack.c.bf16 %v6420, %v6420
        %v6453 = vpack.c.bf16 %v6421, %v6421
        %v6454 = vpack.c.bf16 %v6422, %v6422
        %v6455 = vpack.c.bf16 %v6423, %v6423
        %v6456 = vpack.c.bf16 %v6424, %v6424
        %v6457 = vpack.c.bf16 %v6425, %v6425
        %v6458 = vpack.c.bf16 %v6426, %v6426
        %6491 = vrot.lane.b32.xlu0 %v6427, 16
        %v6492 = vpop.permute.xlu0 %6491
        %6493 = vrot.lane.b32.xlu0 %v6428, 16
        %v6494 = vpop.permute.xlu0 %6493
        %6495 = vrot.lane.b32.xlu0 %v6429, 16
        %v6496 = vpop.permute.xlu0 %6495
        %6497 = vrot.lane.b32.xlu0 %v6430, 16
        %v6498 = vpop.permute.xlu0 %6497
        %6499 = vrot.lane.b32.xlu0 %v6431, 16
        %v6500 = vpop.permute.xlu0 %6499
        %6501 = vrot.lane.b32.xlu0 %v6432, 16
        %v6502 = vpop.permute.xlu0 %6501
        %6503 = vrot.lane.b32.xlu0 %v6433, 16
        %v6504 = vpop.permute.xlu0 %6503
        %6505 = vrot.lane.b32.xlu0 %v6434, 16
        %v6506 = vpop.permute.xlu0 %6505
        %6507 = vrot.lane.b32.xlu0 %v6435, 16
        %v6508 = vpop.permute.xlu0 %6507
        %6509 = vrot.lane.b32.xlu0 %v6436, 16
        %v6510 = vpop.permute.xlu0 %6509
        %6511 = vrot.lane.b32.xlu0 %v6437, 16
        %v6512 = vpop.permute.xlu0 %6511
        %6513 = vrot.lane.b32.xlu0 %v6438, 16
        %v6514 = vpop.permute.xlu0 %6513
        %6515 = vrot.lane.b32.xlu0 %v6439, 16
        %v6516 = vpop.permute.xlu0 %6515
        %6517 = vrot.lane.b32.xlu0 %v6440, 16
        %v6518 = vpop.permute.xlu0 %6517
        %6519 = vrot.lane.b32.xlu0 %v6441, 16
        %v6520 = vpop.permute.xlu0 %6519
        %6521 = vrot.lane.b32.xlu0 %v6442, 16
        %v6522 = vpop.permute.xlu0 %6521
        %6523 = vrot.lane.b32.xlu0 %v6443, 16
        %v6524 = vpop.permute.xlu0 %6523
        %6525 = vrot.lane.b32.xlu0 %v6444, 16
        %v6526 = vpop.permute.xlu0 %6525
        %6527 = vrot.lane.b32.xlu0 %v6445, 16
        %v6528 = vpop.permute.xlu0 %6527
        %6529 = vrot.lane.b32.xlu0 %v6446, 16
        %v6530 = vpop.permute.xlu0 %6529
        %6531 = vrot.lane.b32.xlu0 %v6447, 16
        %v6532 = vpop.permute.xlu0 %6531
        %6533 = vrot.lane.b32.xlu0 %v6448, 16
        %v6534 = vpop.permute.xlu0 %6533
        %6535 = vrot.lane.b32.xlu0 %v6449, 16
        %v6536 = vpop.permute.xlu0 %6535
        %6537 = vrot.lane.b32.xlu0 %v6450, 16
        %v6538 = vpop.permute.xlu0 %6537
        %6539 = vrot.lane.b32.xlu0 %v6451, 16
        %v6540 = vpop.permute.xlu0 %6539
        %6541 = vrot.lane.b32.xlu0 %v6452, 16
        %v6542 = vpop.permute.xlu0 %6541
        %6543 = vrot.lane.b32.xlu0 %v6453, 16
        %v6544 = vpop.permute.xlu0 %6543
        %6545 = vrot.lane.b32.xlu0 %v6454, 16
        %v6546 = vpop.permute.xlu0 %6545
        %6547 = vrot.lane.b32.xlu0 %v6455, 16
        %v6548 = vpop.permute.xlu0 %6547
        %6549 = vrot.lane.b32.xlu0 %v6456, 16
        %v6550 = vpop.permute.xlu0 %6549
        %6551 = vrot.lane.b32.xlu0 %v6457, 16
        %v6552 = vpop.permute.xlu0 %6551
        %6553 = vrot.lane.b32.xlu0 %v6458, 16
        %v6554 = vpop.permute.xlu0 %6553
        %6587 = vst.msk [vmem:[#allocation7] sm:$0xf] %vm1443, %v6492
        %6588 = vst.msk [vmem:[#allocation7 + $0x4] sm:$0xf] %vm1443, %v6494
        %6589 = vst.msk [vmem:[#allocation7 + $0x8] sm:$0xf] %vm1443, %v6496
        %6590 = vst.msk [vmem:[#allocation7 + $0xc] sm:$0xf] %vm1443, %v6498
        %6591 = vst.msk [vmem:[#allocation7 + $0x10] sm:$0xf] %vm1443, %v6500
        %6592 = vst.msk [vmem:[#allocation7 + $0x14] sm:$0xf] %vm1443, %v6502
        %6593 = vst.msk [vmem:[#allocation7 + $0x18] sm:$0xf] %vm1443, %v6504
        %6594 = vst.msk [vmem:[#allocation7 + $0x1c] sm:$0xf] %vm1443, %v6506
        %6595 = vst.msk [vmem:[#allocation7 + $0x20] sm:$0xf] %vm1443, %v6508
        %6596 = vst.msk [vmem:[#allocation7 + $0x24] sm:$0xf] %vm1443, %v6510
        %6597 = vst.msk [vmem:[#allocation7 + $0x28] sm:$0xf] %vm1443, %v6512
        %6598 = vst.msk [vmem:[#allocation7 + $0x2c] sm:$0xf] %vm1443, %v6514
        %6599 = vst.msk [vmem:[#allocation7 + $0x30] sm:$0xf] %vm1443, %v6516
        %6600 = vst.msk [vmem:[#allocation7 + $0x34] sm:$0xf] %vm1443, %v6518
        %6601 = vst.msk [vmem:[#allocation7 + $0x38] sm:$0xf] %vm1443, %v6520
        %6602 = vst.msk [vmem:[#allocation7 + $0x3c] sm:$0xf] %vm1443, %v6522
        %6603 = vst.msk [vmem:[#allocation7 + $0x40] sm:$0xf] %vm1443, %v6524
        %6604 = vst.msk [vmem:[#allocation7 + $0x44] sm:$0xf] %vm1443, %v6526
        %6605 = vst.msk [vmem:[#allocation7 + $0x48] sm:$0xf] %vm1443, %v6528
        %6606 = vst.msk [vmem:[#allocation7 + $0x4c] sm:$0xf] %vm1443, %v6530
        %6607 = vst.msk [vmem:[#allocation7 + $0x50] sm:$0xf] %vm1443, %v6532
        %6608 = vst.msk [vmem:[#allocation7 + $0x54] sm:$0xf] %vm1443, %v6534
        %6609 = vst.msk [vmem:[#allocation7 + $0x58] sm:$0xf] %vm1443, %v6536
        %6610 = vst.msk [vmem:[#allocation7 + $0x5c] sm:$0xf] %vm1443, %v6538
        %6611 = vst.msk [vmem:[#allocation7 + $0x60] sm:$0xf] %vm1443, %v6540
        %6612 = vst.msk [vmem:[#allocation7 + $0x64] sm:$0xf] %vm1443, %v6542
        %6613 = vst.msk [vmem:[#allocation7 + $0x68] sm:$0xf] %vm1443, %v6544
        %6614 = vst.msk [vmem:[#allocation7 + $0x6c] sm:$0xf] %vm1443, %v6546
        %6615 = vst.msk [vmem:[#allocation7 + $0x70] sm:$0xf] %vm1443, %v6548
        %6616 = vst.msk [vmem:[#allocation7 + $0x74] sm:$0xf] %vm1443, %v6550
        %6617 = vst.msk [vmem:[#allocation7 + $0x78] sm:$0xf] %vm1443, %v6552
        %6618 = vst.msk [vmem:[#allocation7 + $0x7c] sm:$0xf] %vm1443, %v6554
        %v6619 = vld [vmem:[%s3369 + $0x2] sm:$0xff]
        %v6620 = vld [vmem:[%s3369 + $0xa] sm:$0xff]
        %v6621 = vld [vmem:[%s3369 + $0x1a] sm:$0xff]
        %v6622 = vld [vmem:[%s3369 + $0x22] sm:$0xff]
        %v6623 = vld [vmem:[%s3369 + $0x32] sm:$0xff]
        %v6624 = vld [vmem:[%s3369 + $0x3a] sm:$0xff]
        %v6625 = vld [vmem:[%s3369 + $0x4a] sm:$0xff]
        %v6626 = vld [vmem:[%s3369 + $0x52] sm:$0xff]
        %v6627 = vld [vmem:[%s3369 + $0x62] sm:$0xff]
        %v6628 = vld [vmem:[%s3369 + $0x6a] sm:$0xff]
        %v6629 = vld [vmem:[%s3369 + $0x7a] sm:$0xff]
        %v6630 = vld [vmem:[%s3369 + $0x82] sm:$0xff]
        %v6631 = vld [vmem:[%s3369 + $0x92] sm:$0xff]
        %v6632 = vld [vmem:[%s3369 + $0x9a] sm:$0xff]
        %v6633 = vld [vmem:[%s3369 + $0xaa] sm:$0xff]
        %v6634 = vld [vmem:[%s3369 + $0xb2] sm:$0xff]
        %v6635 = vld [vmem:[%s3369 + $0xc2] sm:$0xff]
        %v6636 = vld [vmem:[%s3369 + $0xca] sm:$0xff]
        %v6637 = vld [vmem:[%s3369 + $0xda] sm:$0xff]
        %v6638 = vld [vmem:[%s3369 + $0xe2] sm:$0xff]
        %v6639 = vld [vmem:[%s3369 + $0xf2] sm:$0xff]
        %v6640 = vld [vmem:[%s3369 + $0xfa] sm:$0xff]
        %v6641 = vld [vmem:[%s3369 + $0x10a] sm:$0xff]
        %v6642 = vld [vmem:[%s3369 + $0x112] sm:$0xff]
        %v6643 = vld [vmem:[%s3369 + $0x122] sm:$0xff]
        %v6644 = vld [vmem:[%s3369 + $0x12a] sm:$0xff]
        %v6645 = vld [vmem:[%s3369 + $0x13a] sm:$0xff]
        %v6646 = vld [vmem:[%s3369 + $0x142] sm:$0xff]
        %v6647 = vld [vmem:[%s3369 + $0x152] sm:$0xff]
        %v6648 = vld [vmem:[%s3369 + $0x15a] sm:$0xff]
        %v6649 = vld [vmem:[%s3369 + $0x16a] sm:$0xff]
        %v6650 = vld [vmem:[%s3369 + $0x172] sm:$0xff]
        %v6651 = vpack.c.bf16 %v6619, %v6619
        %v6652 = vpack.c.bf16 %v6620, %v6620
        %v6653 = vpack.c.bf16 %v6621, %v6621
        %v6654 = vpack.c.bf16 %v6622, %v6622
        %v6655 = vpack.c.bf16 %v6623, %v6623
        %v6656 = vpack.c.bf16 %v6624, %v6624
        %v6657 = vpack.c.bf16 %v6625, %v6625
        %v6658 = vpack.c.bf16 %v6626, %v6626
        %v6659 = vpack.c.bf16 %v6627, %v6627
        %v6660 = vpack.c.bf16 %v6628, %v6628
        %v6661 = vpack.c.bf16 %v6629, %v6629
        %v6662 = vpack.c.bf16 %v6630, %v6630
        %v6663 = vpack.c.bf16 %v6631, %v6631
        %v6664 = vpack.c.bf16 %v6632, %v6632
        %v6665 = vpack.c.bf16 %v6633, %v6633
        %v6666 = vpack.c.bf16 %v6634, %v6634
        %v6667 = vpack.c.bf16 %v6635, %v6635
        %v6668 = vpack.c.bf16 %v6636, %v6636
        %v6669 = vpack.c.bf16 %v6637, %v6637
        %v6670 = vpack.c.bf16 %v6638, %v6638
        %v6671 = vpack.c.bf16 %v6639, %v6639
        %v6672 = vpack.c.bf16 %v6640, %v6640
        %v6673 = vpack.c.bf16 %v6641, %v6641
        %v6674 = vpack.c.bf16 %v6642, %v6642
        %v6675 = vpack.c.bf16 %v6643, %v6643
        %v6676 = vpack.c.bf16 %v6644, %v6644
        %v6677 = vpack.c.bf16 %v6645, %v6645
        %v6678 = vpack.c.bf16 %v6646, %v6646
        %v6679 = vpack.c.bf16 %v6647, %v6647
        %v6680 = vpack.c.bf16 %v6648, %v6648
        %v6681 = vpack.c.bf16 %v6649, %v6649
        %v6682 = vpack.c.bf16 %v6650, %v6650
        %6715 = vrot.lane.b32.xlu0 %v6651, 20
        %v6716 = vpop.permute.xlu0 %6715
        %6717 = vrot.lane.b32.xlu0 %v6652, 20
        %v6718 = vpop.permute.xlu0 %6717
        %6719 = vrot.lane.b32.xlu0 %v6653, 20
        %v6720 = vpop.permute.xlu0 %6719
        %6721 = vrot.lane.b32.xlu0 %v6654, 20
        %v6722 = vpop.permute.xlu0 %6721
        %6723 = vrot.lane.b32.xlu0 %v6655, 20
        %v6724 = vpop.permute.xlu0 %6723
        %6725 = vrot.lane.b32.xlu0 %v6656, 20
        %v6726 = vpop.permute.xlu0 %6725
        %6727 = vrot.lane.b32.xlu0 %v6657, 20
        %v6728 = vpop.permute.xlu0 %6727
        %6729 = vrot.lane.b32.xlu0 %v6658, 20
        %v6730 = vpop.permute.xlu0 %6729
        %6731 = vrot.lane.b32.xlu0 %v6659, 20
        %v6732 = vpop.permute.xlu0 %6731
        %6733 = vrot.lane.b32.xlu0 %v6660, 20
        %v6734 = vpop.permute.xlu0 %6733
        %6735 = vrot.lane.b32.xlu0 %v6661, 20
        %v6736 = vpop.permute.xlu0 %6735
        %6737 = vrot.lane.b32.xlu0 %v6662, 20
        %v6738 = vpop.permute.xlu0 %6737
        %6739 = vrot.lane.b32.xlu0 %v6663, 20
        %v6740 = vpop.permute.xlu0 %6739
        %6741 = vrot.lane.b32.xlu0 %v6664, 20
        %v6742 = vpop.permute.xlu0 %6741
        %6743 = vrot.lane.b32.xlu0 %v6665, 20
        %v6744 = vpop.permute.xlu0 %6743
        %6745 = vrot.lane.b32.xlu0 %v6666, 20
        %v6746 = vpop.permute.xlu0 %6745
        %6747 = vrot.lane.b32.xlu0 %v6667, 20
        %v6748 = vpop.permute.xlu0 %6747
        %6749 = vrot.lane.b32.xlu0 %v6668, 20
        %v6750 = vpop.permute.xlu0 %6749
        %6751 = vrot.lane.b32.xlu0 %v6669, 20
        %v6752 = vpop.permute.xlu0 %6751
        %6753 = vrot.lane.b32.xlu0 %v6670, 20
        %v6754 = vpop.permute.xlu0 %6753
        %6755 = vrot.lane.b32.xlu0 %v6671, 20
        %v6756 = vpop.permute.xlu0 %6755
        %6757 = vrot.lane.b32.xlu0 %v6672, 20
        %v6758 = vpop.permute.xlu0 %6757
        %6759 = vrot.lane.b32.xlu0 %v6673, 20
        %v6760 = vpop.permute.xlu0 %6759
        %6761 = vrot.lane.b32.xlu0 %v6674, 20
        %v6762 = vpop.permute.xlu0 %6761
        %6763 = vrot.lane.b32.xlu0 %v6675, 20
        %v6764 = vpop.permute.xlu0 %6763
        %6765 = vrot.lane.b32.xlu0 %v6676, 20
        %v6766 = vpop.permute.xlu0 %6765
        %6767 = vrot.lane.b32.xlu0 %v6677, 20
        %v6768 = vpop.permute.xlu0 %6767
        %6769 = vrot.lane.b32.xlu0 %v6678, 20
        %v6770 = vpop.permute.xlu0 %6769
        %6771 = vrot.lane.b32.xlu0 %v6679, 20
        %v6772 = vpop.permute.xlu0 %6771
        %6773 = vrot.lane.b32.xlu0 %v6680, 20
        %v6774 = vpop.permute.xlu0 %6773
        %6775 = vrot.lane.b32.xlu0 %v6681, 20
        %v6776 = vpop.permute.xlu0 %6775
        %6777 = vrot.lane.b32.xlu0 %v6682, 20
        %v6778 = vpop.permute.xlu0 %6777
        %6811 = vst.msk [vmem:[#allocation7] sm:$0xf] %vm1668, %v6716
        %6812 = vst.msk [vmem:[#allocation7 + $0x4] sm:$0xf] %vm1668, %v6718
        %6813 = vst.msk [vmem:[#allocation7 + $0x8] sm:$0xf] %vm1668, %v6720
        %6814 = vst.msk [vmem:[#allocation7 + $0xc] sm:$0xf] %vm1668, %v6722
        %6815 = vst.msk [vmem:[#allocation7 + $0x10] sm:$0xf] %vm1668, %v6724
        %6816 = vst.msk [vmem:[#allocation7 + $0x14] sm:$0xf] %vm1668, %v6726
        %6817 = vst.msk [vmem:[#allocation7 + $0x18] sm:$0xf] %vm1668, %v6728
        %6818 = vst.msk [vmem:[#allocation7 + $0x1c] sm:$0xf] %vm1668, %v6730
        %6819 = vst.msk [vmem:[#allocation7 + $0x20] sm:$0xf] %vm1668, %v6732
        %6820 = vst.msk [vmem:[#allocation7 + $0x24] sm:$0xf] %vm1668, %v6734
        %6821 = vst.msk [vmem:[#allocation7 + $0x28] sm:$0xf] %vm1668, %v6736
        %6822 = vst.msk [vmem:[#allocation7 + $0x2c] sm:$0xf] %vm1668, %v6738
        %6823 = vst.msk [vmem:[#allocation7 + $0x30] sm:$0xf] %vm1668, %v6740
        %6824 = vst.msk [vmem:[#allocation7 + $0x34] sm:$0xf] %vm1668, %v6742
        %6825 = vst.msk [vmem:[#allocation7 + $0x38] sm:$0xf] %vm1668, %v6744
        %6826 = vst.msk [vmem:[#allocation7 + $0x3c] sm:$0xf] %vm1668, %v6746
        %6827 = vst.msk [vmem:[#allocation7 + $0x40] sm:$0xf] %vm1668, %v6748
        %6828 = vst.msk [vmem:[#allocation7 + $0x44] sm:$0xf] %vm1668, %v6750
        %6829 = vst.msk [vmem:[#allocation7 + $0x48] sm:$0xf] %vm1668, %v6752
        %6830 = vst.msk [vmem:[#allocation7 + $0x4c] sm:$0xf] %vm1668, %v6754
        %6831 = vst.msk [vmem:[#allocation7 + $0x50] sm:$0xf] %vm1668, %v6756
        %6832 = vst.msk [vmem:[#allocation7 + $0x54] sm:$0xf] %vm1668, %v6758
        %6833 = vst.msk [vmem:[#allocation7 + $0x58] sm:$0xf] %vm1668, %v6760
        %6834 = vst.msk [vmem:[#allocation7 + $0x5c] sm:$0xf] %vm1668, %v6762
        %6835 = vst.msk [vmem:[#allocation7 + $0x60] sm:$0xf] %vm1668, %v6764
        %6836 = vst.msk [vmem:[#allocation7 + $0x64] sm:$0xf] %vm1668, %v6766
        %6837 = vst.msk [vmem:[#allocation7 + $0x68] sm:$0xf] %vm1668, %v6768
        %6838 = vst.msk [vmem:[#allocation7 + $0x6c] sm:$0xf] %vm1668, %v6770
        %6839 = vst.msk [vmem:[#allocation7 + $0x70] sm:$0xf] %vm1668, %v6772
        %6840 = vst.msk [vmem:[#allocation7 + $0x74] sm:$0xf] %vm1668, %v6774
        %6841 = vst.msk [vmem:[#allocation7 + $0x78] sm:$0xf] %vm1668, %v6776
        %6842 = vst.msk [vmem:[#allocation7 + $0x7c] sm:$0xf] %vm1668, %v6778
        %v6843 = vld [vmem:[%s4618] sm:$0xff]
        %v6844 = vld [vmem:[%s4618 + $0x8] sm:$0xff]
        %v6845 = vld [vmem:[%s4618 + $0x18] sm:$0xff]
        %v6846 = vld [vmem:[%s4618 + $0x20] sm:$0xff]
        %v6847 = vld [vmem:[%s4618 + $0x30] sm:$0xff]
        %v6848 = vld [vmem:[%s4618 + $0x38] sm:$0xff]
        %v6849 = vld [vmem:[%s4618 + $0x48] sm:$0xff]
        %v6850 = vld [vmem:[%s4618 + $0x50] sm:$0xff]
        %v6851 = vld [vmem:[%s4618 + $0x60] sm:$0xff]
        %v6852 = vld [vmem:[%s4618 + $0x68] sm:$0xff]
        %v6853 = vld [vmem:[%s4618 + $0x78] sm:$0xff]
        %v6854 = vld [vmem:[%s4618 + $0x80] sm:$0xff]
        %v6855 = vld [vmem:[%s4618 + $0x90] sm:$0xff]
        %v6856 = vld [vmem:[%s4618 + $0x98] sm:$0xff]
        %v6857 = vld [vmem:[%s4618 + $0xa8] sm:$0xff]
        %v6858 = vld [vmem:[%s4618 + $0xb0] sm:$0xff]
        %v6859 = vld [vmem:[%s4618 + $0xc0] sm:$0xff]
        %v6860 = vld [vmem:[%s4618 + $0xc8] sm:$0xff]
        %v6861 = vld [vmem:[%s4618 + $0xd8] sm:$0xff]
        %v6862 = vld [vmem:[%s4618 + $0xe0] sm:$0xff]
        %v6863 = vld [vmem:[%s4618 + $0xf0] sm:$0xff]
        %v6864 = vld [vmem:[%s4618 + $0xf8] sm:$0xff]
        %v6865 = vld [vmem:[%s4618 + $0x108] sm:$0xff]
        %v6866 = vld [vmem:[%s4618 + $0x110] sm:$0xff]
        %v6867 = vld [vmem:[%s4618 + $0x120] sm:$0xff]
        %v6868 = vld [vmem:[%s4618 + $0x128] sm:$0xff]
        %v6869 = vld [vmem:[%s4618 + $0x138] sm:$0xff]
        %v6870 = vld [vmem:[%s4618 + $0x140] sm:$0xff]
        %v6871 = vld [vmem:[%s4618 + $0x150] sm:$0xff]
        %v6872 = vld [vmem:[%s4618 + $0x158] sm:$0xff]
        %v6873 = vld [vmem:[%s4618 + $0x168] sm:$0xff]
        %v6874 = vld [vmem:[%s4618 + $0x170] sm:$0xff]
        %v6875 = vpack.c.bf16 %v6843, %v6843
        %v6876 = vpack.c.bf16 %v6844, %v6844
        %v6877 = vpack.c.bf16 %v6845, %v6845
        %v6878 = vpack.c.bf16 %v6846, %v6846
        %v6879 = vpack.c.bf16 %v6847, %v6847
        %v6880 = vpack.c.bf16 %v6848, %v6848
        %v6881 = vpack.c.bf16 %v6849, %v6849
        %v6882 = vpack.c.bf16 %v6850, %v6850
        %v6883 = vpack.c.bf16 %v6851, %v6851
        %v6884 = vpack.c.bf16 %v6852, %v6852
        %v6885 = vpack.c.bf16 %v6853, %v6853
        %v6886 = vpack.c.bf16 %v6854, %v6854
        %v6887 = vpack.c.bf16 %v6855, %v6855
        %v6888 = vpack.c.bf16 %v6856, %v6856
        %v6889 = vpack.c.bf16 %v6857, %v6857
        %v6890 = vpack.c.bf16 %v6858, %v6858
        %v6891 = vpack.c.bf16 %v6859, %v6859
        %v6892 = vpack.c.bf16 %v6860, %v6860
        %v6893 = vpack.c.bf16 %v6861, %v6861
        %v6894 = vpack.c.bf16 %v6862, %v6862
        %v6895 = vpack.c.bf16 %v6863, %v6863
        %v6896 = vpack.c.bf16 %v6864, %v6864
        %v6897 = vpack.c.bf16 %v6865, %v6865
        %v6898 = vpack.c.bf16 %v6866, %v6866
        %v6899 = vpack.c.bf16 %v6867, %v6867
        %v6900 = vpack.c.bf16 %v6868, %v6868
        %v6901 = vpack.c.bf16 %v6869, %v6869
        %v6902 = vpack.c.bf16 %v6870, %v6870
        %v6903 = vpack.c.bf16 %v6871, %v6871
        %v6904 = vpack.c.bf16 %v6872, %v6872
        %v6905 = vpack.c.bf16 %v6873, %v6873
        %v6906 = vpack.c.bf16 %v6874, %v6874
        %6939 = vrot.lane.b32.xlu0 %v6875, 24
        %v6940 = vpop.permute.xlu0 %6939
        %6941 = vrot.lane.b32.xlu0 %v6876, 24
        %v6942 = vpop.permute.xlu0 %6941
        %6943 = vrot.lane.b32.xlu0 %v6877, 24
        %v6944 = vpop.permute.xlu0 %6943
        %6945 = vrot.lane.b32.xlu0 %v6878, 24
        %v6946 = vpop.permute.xlu0 %6945
        %6947 = vrot.lane.b32.xlu0 %v6879, 24
        %v6948 = vpop.permute.xlu0 %6947
        %6949 = vrot.lane.b32.xlu0 %v6880, 24
        %v6950 = vpop.permute.xlu0 %6949
        %6951 = vrot.lane.b32.xlu0 %v6881, 24
        %v6952 = vpop.permute.xlu0 %6951
        %6953 = vrot.lane.b32.xlu0 %v6882, 24
        %v6954 = vpop.permute.xlu0 %6953
        %6955 = vrot.lane.b32.xlu0 %v6883, 24
        %v6956 = vpop.permute.xlu0 %6955
        %6957 = vrot.lane.b32.xlu0 %v6884, 24
        %v6958 = vpop.permute.xlu0 %6957
        %6959 = vrot.lane.b32.xlu0 %v6885, 24
        %v6960 = vpop.permute.xlu0 %6959
        %6961 = vrot.lane.b32.xlu0 %v6886, 24
        %v6962 = vpop.permute.xlu0 %6961
        %6963 = vrot.lane.b32.xlu0 %v6887, 24
        %v6964 = vpop.permute.xlu0 %6963
        %6965 = vrot.lane.b32.xlu0 %v6888, 24
        %v6966 = vpop.permute.xlu0 %6965
        %6967 = vrot.lane.b32.xlu0 %v6889, 24
        %v6968 = vpop.permute.xlu0 %6967
        %6969 = vrot.lane.b32.xlu0 %v6890, 24
        %v6970 = vpop.permute.xlu0 %6969
        %6971 = vrot.lane.b32.xlu0 %v6891, 24
        %v6972 = vpop.permute.xlu0 %6971
        %6973 = vrot.lane.b32.xlu0 %v6892, 24
        %v6974 = vpop.permute.xlu0 %6973
        %6975 = vrot.lane.b32.xlu0 %v6893, 24
        %v6976 = vpop.permute.xlu0 %6975
        %6977 = vrot.lane.b32.xlu0 %v6894, 24
        %v6978 = vpop.permute.xlu0 %6977
        %6979 = vrot.lane.b32.xlu0 %v6895, 24
        %v6980 = vpop.permute.xlu0 %6979
        %6981 = vrot.lane.b32.xlu0 %v6896, 24
        %v6982 = vpop.permute.xlu0 %6981
        %6983 = vrot.lane.b32.xlu0 %v6897, 24
        %v6984 = vpop.permute.xlu0 %6983
        %6985 = vrot.lane.b32.xlu0 %v6898, 24
        %v6986 = vpop.permute.xlu0 %6985
        %6987 = vrot.lane.b32.xlu0 %v6899, 24
        %v6988 = vpop.permute.xlu0 %6987
        %6989 = vrot.lane.b32.xlu0 %v6900, 24
        %v6990 = vpop.permute.xlu0 %6989
        %6991 = vrot.lane.b32.xlu0 %v6901, 24
        %v6992 = vpop.permute.xlu0 %6991
        %6993 = vrot.lane.b32.xlu0 %v6902, 24
        %v6994 = vpop.permute.xlu0 %6993
        %6995 = vrot.lane.b32.xlu0 %v6903, 24
        %v6996 = vpop.permute.xlu0 %6995
        %6997 = vrot.lane.b32.xlu0 %v6904, 24
        %v6998 = vpop.permute.xlu0 %6997
        %6999 = vrot.lane.b32.xlu0 %v6905, 24
        %v7000 = vpop.permute.xlu0 %6999
        %7001 = vrot.lane.b32.xlu0 %v6906, 24
        %v7002 = vpop.permute.xlu0 %7001
        %7035 = vst.msk [vmem:[#allocation7] sm:$0xf] %vm1894, %v6940
        %7036 = vst.msk [vmem:[#allocation7 + $0x4] sm:$0xf] %vm1894, %v6942
        %7037 = vst.msk [vmem:[#allocation7 + $0x8] sm:$0xf] %vm1894, %v6944
        %7038 = vst.msk [vmem:[#allocation7 + $0xc] sm:$0xf] %vm1894, %v6946
        %7039 = vst.msk [vmem:[#allocation7 + $0x10] sm:$0xf] %vm1894, %v6948
        %7040 = vst.msk [vmem:[#allocation7 + $0x14] sm:$0xf] %vm1894, %v6950
        %7041 = vst.msk [vmem:[#allocation7 + $0x18] sm:$0xf] %vm1894, %v6952
        %7042 = vst.msk [vmem:[#allocation7 + $0x1c] sm:$0xf] %vm1894, %v6954
        %7043 = vst.msk [vmem:[#allocation7 + $0x20] sm:$0xf] %vm1894, %v6956
        %7044 = vst.msk [vmem:[#allocation7 + $0x24] sm:$0xf] %vm1894, %v6958
        %7045 = vst.msk [vmem:[#allocation7 + $0x28] sm:$0xf] %vm1894, %v6960
        %7046 = vst.msk [vmem:[#allocation7 + $0x2c] sm:$0xf] %vm1894, %v6962
        %7047 = vst.msk [vmem:[#allocation7 + $0x30] sm:$0xf] %vm1894, %v6964
        %7048 = vst.msk [vmem:[#allocation7 + $0x34] sm:$0xf] %vm1894, %v6966
        %7049 = vst.msk [vmem:[#allocation7 + $0x38] sm:$0xf] %vm1894, %v6968
        %7050 = vst.msk [vmem:[#allocation7 + $0x3c] sm:$0xf] %vm1894, %v6970
        %7051 = vst.msk [vmem:[#allocation7 + $0x40] sm:$0xf] %vm1894, %v6972
        %7052 = vst.msk [vmem:[#allocation7 + $0x44] sm:$0xf] %vm1894, %v6974
        %7053 = vst.msk [vmem:[#allocation7 + $0x48] sm:$0xf] %vm1894, %v6976
        %7054 = vst.msk [vmem:[#allocation7 + $0x4c] sm:$0xf] %vm1894, %v6978
        %7055 = vst.msk [vmem:[#allocation7 + $0x50] sm:$0xf] %vm1894, %v6980
        %7056 = vst.msk [vmem:[#allocation7 + $0x54] sm:$0xf] %vm1894, %v6982
        %7057 = vst.msk [vmem:[#allocation7 + $0x58] sm:$0xf] %vm1894, %v6984
        %7058 = vst.msk [vmem:[#allocation7 + $0x5c] sm:$0xf] %vm1894, %v6986
        %7059 = vst.msk [vmem:[#allocation7 + $0x60] sm:$0xf] %vm1894, %v6988
        %7060 = vst.msk [vmem:[#allocation7 + $0x64] sm:$0xf] %vm1894, %v6990
        %7061 = vst.msk [vmem:[#allocation7 + $0x68] sm:$0xf] %vm1894, %v6992
        %7062 = vst.msk [vmem:[#allocation7 + $0x6c] sm:$0xf] %vm1894, %v6994
        %7063 = vst.msk [vmem:[#allocation7 + $0x70] sm:$0xf] %vm1894, %v6996
        %7064 = vst.msk [vmem:[#allocation7 + $0x74] sm:$0xf] %vm1894, %v6998
        %7065 = vst.msk [vmem:[#allocation7 + $0x78] sm:$0xf] %vm1894, %v7000
        %7066 = vst.msk [vmem:[#allocation7 + $0x7c] sm:$0xf] %vm1894, %v7002
        %v7067 = vld [vmem:[%s4618 + $0x1] sm:$0xff]
        %v7068 = vld [vmem:[%s4618 + $0x9] sm:$0xff]
        %v7069 = vld [vmem:[%s4618 + $0x19] sm:$0xff]
        %v7070 = vld [vmem:[%s4618 + $0x21] sm:$0xff]
        %v7071 = vld [vmem:[%s4618 + $0x31] sm:$0xff]
        %v7072 = vld [vmem:[%s4618 + $0x39] sm:$0xff]
        %v7073 = vld [vmem:[%s4618 + $0x49] sm:$0xff]
        %v7074 = vld [vmem:[%s4618 + $0x51] sm:$0xff]
        %v7075 = vld [vmem:[%s4618 + $0x61] sm:$0xff]
        %v7076 = vld [vmem:[%s4618 + $0x69] sm:$0xff]
        %v7077 = vld [vmem:[%s4618 + $0x79] sm:$0xff]
        %v7078 = vld [vmem:[%s4618 + $0x81] sm:$0xff]
        %v7079 = vld [vmem:[%s4618 + $0x91] sm:$0xff]
        %v7080 = vld [vmem:[%s4618 + $0x99] sm:$0xff]
        %v7081 = vld [vmem:[%s4618 + $0xa9] sm:$0xff]
        %v7082 = vld [vmem:[%s4618 + $0xb1] sm:$0xff]
        %v7083 = vld [vmem:[%s4618 + $0xc1] sm:$0xff]
        %v7084 = vld [vmem:[%s4618 + $0xc9] sm:$0xff]
        %v7085 = vld [vmem:[%s4618 + $0xd9] sm:$0xff]
        %v7086 = vld [vmem:[%s4618 + $0xe1] sm:$0xff]
        %v7087 = vld [vmem:[%s4618 + $0xf1] sm:$0xff]
        %v7088 = vld [vmem:[%s4618 + $0xf9] sm:$0xff]
        %v7089 = vld [vmem:[%s4618 + $0x109] sm:$0xff]
        %v7090 = vld [vmem:[%s4618 + $0x111] sm:$0xff]
        %v7091 = vld [vmem:[%s4618 + $0x121] sm:$0xff]
        %v7092 = vld [vmem:[%s4618 + $0x129] sm:$0xff]
        %v7093 = vld [vmem:[%s4618 + $0x139] sm:$0xff]
        %v7094 = vld [vmem:[%s4618 + $0x141] sm:$0xff]
        %v7095 = vld [vmem:[%s4618 + $0x151] sm:$0xff]
        %v7096 = vld [vmem:[%s4618 + $0x159] sm:$0xff]
        %v7097 = vld [vmem:[%s4618 + $0x169] sm:$0xff]
        %v7098 = vld [vmem:[%s4618 + $0x171] sm:$0xff]
        %v7099 = vpack.c.bf16 %v7067, %v7067
        %v7100 = vpack.c.bf16 %v7068, %v7068
        %v7101 = vpack.c.bf16 %v7069, %v7069
        %v7102 = vpack.c.bf16 %v7070, %v7070
        %v7103 = vpack.c.bf16 %v7071, %v7071
        %v7104 = vpack.c.bf16 %v7072, %v7072
        %v7105 = vpack.c.bf16 %v7073, %v7073
        %v7106 = vpack.c.bf16 %v7074, %v7074
        %v7107 = vpack.c.bf16 %v7075, %v7075
        %v7108 = vpack.c.bf16 %v7076, %v7076
        %v7109 = vpack.c.bf16 %v7077, %v7077
        %v7110 = vpack.c.bf16 %v7078, %v7078
        %v7111 = vpack.c.bf16 %v7079, %v7079
        %v7112 = vpack.c.bf16 %v7080, %v7080
        %v7113 = vpack.c.bf16 %v7081, %v7081
        %v7114 = vpack.c.bf16 %v7082, %v7082
        %v7115 = vpack.c.bf16 %v7083, %v7083
        %v7116 = vpack.c.bf16 %v7084, %v7084
        %v7117 = vpack.c.bf16 %v7085, %v7085
        %v7118 = vpack.c.bf16 %v7086, %v7086
        %v7119 = vpack.c.bf16 %v7087, %v7087
        %v7120 = vpack.c.bf16 %v7088, %v7088
        %v7121 = vpack.c.bf16 %v7089, %v7089
        %v7122 = vpack.c.bf16 %v7090, %v7090
        %v7123 = vpack.c.bf16 %v7091, %v7091
        %v7124 = vpack.c.bf16 %v7092, %v7092
        %v7125 = vpack.c.bf16 %v7093, %v7093
        %v7126 = vpack.c.bf16 %v7094, %v7094
        %v7127 = vpack.c.bf16 %v7095, %v7095
        %v7128 = vpack.c.bf16 %v7096, %v7096
        %v7129 = vpack.c.bf16 %v7097, %v7097
        %v7130 = vpack.c.bf16 %v7098, %v7098
        %7163 = vrot.lane.b32.xlu0 %v7099, 28
        %v7164 = vpop.permute.xlu0 %7163
        %7165 = vrot.lane.b32.xlu0 %v7100, 28
        %v7166 = vpop.permute.xlu0 %7165
        %7167 = vrot.lane.b32.xlu0 %v7101, 28
        %v7168 = vpop.permute.xlu0 %7167
        %7169 = vrot.lane.b32.xlu0 %v7102, 28
        %v7170 = vpop.permute.xlu0 %7169
        %7171 = vrot.lane.b32.xlu0 %v7103, 28
        %v7172 = vpop.permute.xlu0 %7171
        %7173 = vrot.lane.b32.xlu0 %v7104, 28
        %v7174 = vpop.permute.xlu0 %7173
        %7175 = vrot.lane.b32.xlu0 %v7105, 28
        %v7176 = vpop.permute.xlu0 %7175
        %7177 = vrot.lane.b32.xlu0 %v7106, 28
        %v7178 = vpop.permute.xlu0 %7177
        %7179 = vrot.lane.b32.xlu0 %v7107, 28
        %v7180 = vpop.permute.xlu0 %7179
        %7181 = vrot.lane.b32.xlu0 %v7108, 28
        %v7182 = vpop.permute.xlu0 %7181
        %7183 = vrot.lane.b32.xlu0 %v7109, 28
        %v7184 = vpop.permute.xlu0 %7183
        %7185 = vrot.lane.b32.xlu0 %v7110, 28
        %v7186 = vpop.permute.xlu0 %7185
        %7187 = vrot.lane.b32.xlu0 %v7111, 28
        %v7188 = vpop.permute.xlu0 %7187
        %7189 = vrot.lane.b32.xlu0 %v7112, 28
        %v7190 = vpop.permute.xlu0 %7189
        %7191 = vrot.lane.b32.xlu0 %v7113, 28
        %v7192 = vpop.permute.xlu0 %7191
        %7193 = vrot.lane.b32.xlu0 %v7114, 28
        %v7194 = vpop.permute.xlu0 %7193
        %7195 = vrot.lane.b32.xlu0 %v7115, 28
        %v7196 = vpop.permute.xlu0 %7195
        %7197 = vrot.lane.b32.xlu0 %v7116, 28
        %v7198 = vpop.permute.xlu0 %7197
        %7199 = vrot.lane.b32.xlu0 %v7117, 28
        %v7200 = vpop.permute.xlu0 %7199
        %7201 = vrot.lane.b32.xlu0 %v7118, 28
        %v7202 = vpop.permute.xlu0 %7201
        %7203 = vrot.lane.b32.xlu0 %v7119, 28
        %v7204 = vpop.permute.xlu0 %7203
        %7205 = vrot.lane.b32.xlu0 %v7120, 28
        %v7206 = vpop.permute.xlu0 %7205
        %7207 = vrot.lane.b32.xlu0 %v7121, 28
        %v7208 = vpop.permute.xlu0 %7207
        %7209 = vrot.lane.b32.xlu0 %v7122, 28
        %v7210 = vpop.permute.xlu0 %7209
        %7211 = vrot.lane.b32.xlu0 %v7123, 28
        %v7212 = vpop.permute.xlu0 %7211
        %7213 = vrot.lane.b32.xlu0 %v7124, 28
        %v7214 = vpop.permute.xlu0 %7213
        %7215 = vrot.lane.b32.xlu0 %v7125, 28
        %v7216 = vpop.permute.xlu0 %7215
        %7217 = vrot.lane.b32.xlu0 %v7126, 28
        %v7218 = vpop.permute.xlu0 %7217
        %7219 = vrot.lane.b32.xlu0 %v7127, 28
        %v7220 = vpop.permute.xlu0 %7219
        %7221 = vrot.lane.b32.xlu0 %v7128, 28
        %v7222 = vpop.permute.xlu0 %7221
        %7223 = vrot.lane.b32.xlu0 %v7129, 28
        %v7224 = vpop.permute.xlu0 %7223
        %7225 = vrot.lane.b32.xlu0 %v7130, 28
        %v7226 = vpop.permute.xlu0 %7225
        %7259 = vst.msk [vmem:[#allocation7] sm:$0xf] %vm2119, %v7164
        %7260 = vst.msk [vmem:[#allocation7 + $0x4] sm:$0xf] %vm2119, %v7166
        %7261 = vst.msk [vmem:[#allocation7 + $0x8] sm:$0xf] %vm2119, %v7168
        %7262 = vst.msk [vmem:[#allocation7 + $0xc] sm:$0xf] %vm2119, %v7170
        %7263 = vst.msk [vmem:[#allocation7 + $0x10] sm:$0xf] %vm2119, %v7172
        %7264 = vst.msk [vmem:[#allocation7 + $0x14] sm:$0xf] %vm2119, %v7174
        %7265 = vst.msk [vmem:[#allocation7 + $0x18] sm:$0xf] %vm2119, %v7176
        %7266 = vst.msk [vmem:[#allocation7 + $0x1c] sm:$0xf] %vm2119, %v7178
        %7267 = vst.msk [vmem:[#allocation7 + $0x20] sm:$0xf] %vm2119, %v7180
        %7268 = vst.msk [vmem:[#allocation7 + $0x24] sm:$0xf] %vm2119, %v7182
        %7269 = vst.msk [vmem:[#allocation7 + $0x28] sm:$0xf] %vm2119, %v7184
        %7270 = vst.msk [vmem:[#allocation7 + $0x2c] sm:$0xf] %vm2119, %v7186
        %7271 = vst.msk [vmem:[#allocation7 + $0x30] sm:$0xf] %vm2119, %v7188
        %7272 = vst.msk [vmem:[#allocation7 + $0x34] sm:$0xf] %vm2119, %v7190
        %7273 = vst.msk [vmem:[#allocation7 + $0x38] sm:$0xf] %vm2119, %v7192
        %7274 = vst.msk [vmem:[#allocation7 + $0x3c] sm:$0xf] %vm2119, %v7194
        %7275 = vst.msk [vmem:[#allocation7 + $0x40] sm:$0xf] %vm2119, %v7196
        %7276 = vst.msk [vmem:[#allocation7 + $0x44] sm:$0xf] %vm2119, %v7198
        %7277 = vst.msk [vmem:[#allocation7 + $0x48] sm:$0xf] %vm2119, %v7200
        %7278 = vst.msk [vmem:[#allocation7 + $0x4c] sm:$0xf] %vm2119, %v7202
        %7279 = vst.msk [vmem:[#allocation7 + $0x50] sm:$0xf] %vm2119, %v7204
        %7280 = vst.msk [vmem:[#allocation7 + $0x54] sm:$0xf] %vm2119, %v7206
        %7281 = vst.msk [vmem:[#allocation7 + $0x58] sm:$0xf] %vm2119, %v7208
        %7282 = vst.msk [vmem:[#allocation7 + $0x5c] sm:$0xf] %vm2119, %v7210
        %7283 = vst.msk [vmem:[#allocation7 + $0x60] sm:$0xf] %vm2119, %v7212
        %7284 = vst.msk [vmem:[#allocation7 + $0x64] sm:$0xf] %vm2119, %v7214
        %7285 = vst.msk [vmem:[#allocation7 + $0x68] sm:$0xf] %vm2119, %v7216
        %7286 = vst.msk [vmem:[#allocation7 + $0x6c] sm:$0xf] %vm2119, %v7218
        %7287 = vst.msk [vmem:[#allocation7 + $0x70] sm:$0xf] %vm2119, %v7220
        %7288 = vst.msk [vmem:[#allocation7 + $0x74] sm:$0xf] %vm2119, %v7222
        %7289 = vst.msk [vmem:[#allocation7 + $0x78] sm:$0xf] %vm2119, %v7224
        %7290 = vst.msk [vmem:[#allocation7 + $0x7c] sm:$0xf] %vm2119, %v7226
        %v7291 = vld [vmem:[%s4618 + $0x2] sm:$0xff]
        %v7292 = vld [vmem:[%s4618 + $0xa] sm:$0xff]
        %v7293 = vld [vmem:[%s4618 + $0x1a] sm:$0xff]
        %v7294 = vld [vmem:[%s4618 + $0x22] sm:$0xff]
        %v7295 = vld [vmem:[%s4618 + $0x32] sm:$0xff]
        %v7296 = vld [vmem:[%s4618 + $0x3a] sm:$0xff]
        %v7297 = vld [vmem:[%s4618 + $0x4a] sm:$0xff]
        %v7298 = vld [vmem:[%s4618 + $0x52] sm:$0xff]
        %v7299 = vld [vmem:[%s4618 + $0x62] sm:$0xff]
        %v7300 = vld [vmem:[%s4618 + $0x6a] sm:$0xff]
        %v7301 = vld [vmem:[%s4618 + $0x7a] sm:$0xff]
        %v7302 = vld [vmem:[%s4618 + $0x82] sm:$0xff]
        %v7303 = vld [vmem:[%s4618 + $0x92] sm:$0xff]
        %v7304 = vld [vmem:[%s4618 + $0x9a] sm:$0xff]
        %v7305 = vld [vmem:[%s4618 + $0xaa] sm:$0xff]
        %v7306 = vld [vmem:[%s4618 + $0xb2] sm:$0xff]
        %v7307 = vld [vmem:[%s4618 + $0xc2] sm:$0xff]
        %v7308 = vld [vmem:[%s4618 + $0xca] sm:$0xff]
        %v7309 = vld [vmem:[%s4618 + $0xda] sm:$0xff]
        %v7310 = vld [vmem:[%s4618 + $0xe2] sm:$0xff]
        %v7311 = vld [vmem:[%s4618 + $0xf2] sm:$0xff]
        %v7312 = vld [vmem:[%s4618 + $0xfa] sm:$0xff]
        %v7313 = vld [vmem:[%s4618 + $0x10a] sm:$0xff]
        %v7314 = vld [vmem:[%s4618 + $0x112] sm:$0xff]
        %v7315 = vld [vmem:[%s4618 + $0x122] sm:$0xff]
        %v7316 = vld [vmem:[%s4618 + $0x12a] sm:$0xff]
        %v7317 = vld [vmem:[%s4618 + $0x13a] sm:$0xff]
        %v7318 = vld [vmem:[%s4618 + $0x142] sm:$0xff]
        %v7319 = vld [vmem:[%s4618 + $0x152] sm:$0xff]
        %v7320 = vld [vmem:[%s4618 + $0x15a] sm:$0xff]
        %v7321 = vld [vmem:[%s4618 + $0x16a] sm:$0xff]
        %v7322 = vld [vmem:[%s4618 + $0x172] sm:$0xff]
        %v7323 = vpack.c.bf16 %v7291, %v7291
        %v7324 = vpack.c.bf16 %v7292, %v7292
        %v7325 = vpack.c.bf16 %v7293, %v7293
        %v7326 = vpack.c.bf16 %v7294, %v7294
        %v7327 = vpack.c.bf16 %v7295, %v7295
        %v7328 = vpack.c.bf16 %v7296, %v7296
        %v7329 = vpack.c.bf16 %v7297, %v7297
        %v7330 = vpack.c.bf16 %v7298, %v7298
        %v7331 = vpack.c.bf16 %v7299, %v7299
        %v7332 = vpack.c.bf16 %v7300, %v7300
        %v7333 = vpack.c.bf16 %v7301, %v7301
        %v7334 = vpack.c.bf16 %v7302, %v7302
        %v7335 = vpack.c.bf16 %v7303, %v7303
        %v7336 = vpack.c.bf16 %v7304, %v7304
        %v7337 = vpack.c.bf16 %v7305, %v7305
        %v7338 = vpack.c.bf16 %v7306, %v7306
        %v7339 = vpack.c.bf16 %v7307, %v7307
        %v7340 = vpack.c.bf16 %v7308, %v7308
        %v7341 = vpack.c.bf16 %v7309, %v7309
        %v7342 = vpack.c.bf16 %v7310, %v7310
        %v7343 = vpack.c.bf16 %v7311, %v7311
        %v7344 = vpack.c.bf16 %v7312, %v7312
        %v7345 = vpack.c.bf16 %v7313, %v7313
        %v7346 = vpack.c.bf16 %v7314, %v7314
        %v7347 = vpack.c.bf16 %v7315, %v7315
        %v7348 = vpack.c.bf16 %v7316, %v7316
        %v7349 = vpack.c.bf16 %v7317, %v7317
        %v7350 = vpack.c.bf16 %v7318, %v7318
        %v7351 = vpack.c.bf16 %v7319, %v7319
        %v7352 = vpack.c.bf16 %v7320, %v7320
        %v7353 = vpack.c.bf16 %v7321, %v7321
        %v7354 = vpack.c.bf16 %v7322, %v7322
        %7387 = vrot.lane.b32.xlu0 %v7323, 32
        %v7388 = vpop.permute.xlu0 %7387
        %7389 = vrot.lane.b32.xlu0 %v7324, 32
        %v7390 = vpop.permute.xlu0 %7389
        %7391 = vrot.lane.b32.xlu0 %v7325, 32
        %v7392 = vpop.permute.xlu0 %7391
        %7393 = vrot.lane.b32.xlu0 %v7326, 32
        %v7394 = vpop.permute.xlu0 %7393
        %7395 = vrot.lane.b32.xlu0 %v7327, 32
        %v7396 = vpop.permute.xlu0 %7395
        %7397 = vrot.lane.b32.xlu0 %v7328, 32
        %v7398 = vpop.permute.xlu0 %7397
        %7399 = vrot.lane.b32.xlu0 %v7329, 32
        %v7400 = vpop.permute.xlu0 %7399
        %7401 = vrot.lane.b32.xlu0 %v7330, 32
        %v7402 = vpop.permute.xlu0 %7401
        %7403 = vrot.lane.b32.xlu0 %v7331, 32
        %v7404 = vpop.permute.xlu0 %7403
        %7405 = vrot.lane.b32.xlu0 %v7332, 32
        %v7406 = vpop.permute.xlu0 %7405
        %7407 = vrot.lane.b32.xlu0 %v7333, 32
        %v7408 = vpop.permute.xlu0 %7407
        %7409 = vrot.lane.b32.xlu0 %v7334, 32
        %v7410 = vpop.permute.xlu0 %7409
        %7411 = vrot.lane.b32.xlu0 %v7335, 32
        %v7412 = vpop.permute.xlu0 %7411
        %7413 = vrot.lane.b32.xlu0 %v7336, 32
        %v7414 = vpop.permute.xlu0 %7413
        %7415 = vrot.lane.b32.xlu0 %v7337, 32
        %v7416 = vpop.permute.xlu0 %7415
        %7417 = vrot.lane.b32.xlu0 %v7338, 32
        %v7418 = vpop.permute.xlu0 %7417
        %7419 = vrot.lane.b32.xlu0 %v7339, 32
        %v7420 = vpop.permute.xlu0 %7419
        %7421 = vrot.lane.b32.xlu0 %v7340, 32
        %v7422 = vpop.permute.xlu0 %7421
        %7423 = vrot.lane.b32.xlu0 %v7341, 32
        %v7424 = vpop.permute.xlu0 %7423
        %7425 = vrot.lane.b32.xlu0 %v7342, 32
        %v7426 = vpop.permute.xlu0 %7425
        %7427 = vrot.lane.b32.xlu0 %v7343, 32
        %v7428 = vpop.permute.xlu0 %7427
        %7429 = vrot.lane.b32.xlu0 %v7344, 32
        %v7430 = vpop.permute.xlu0 %7429
        %7431 = vrot.lane.b32.xlu0 %v7345, 32
        %v7432 = vpop.permute.xlu0 %7431
        %7433 = vrot.lane.b32.xlu0 %v7346, 32
        %v7434 = vpop.permute.xlu0 %7433
        %7435 = vrot.lane.b32.xlu0 %v7347, 32
        %v7436 = vpop.permute.xlu0 %7435
        %7437 = vrot.lane.b32.xlu0 %v7348, 32
        %v7438 = vpop.permute.xlu0 %7437
        %7439 = vrot.lane.b32.xlu0 %v7349, 32
        %v7440 = vpop.permute.xlu0 %7439
        %7441 = vrot.lane.b32.xlu0 %v7350, 32
        %v7442 = vpop.permute.xlu0 %7441
        %7443 = vrot.lane.b32.xlu0 %v7351, 32
        %v7444 = vpop.permute.xlu0 %7443
        %7445 = vrot.lane.b32.xlu0 %v7352, 32
        %v7446 = vpop.permute.xlu0 %7445
        %7447 = vrot.lane.b32.xlu0 %v7353, 32
        %v7448 = vpop.permute.xlu0 %7447
        %7449 = vrot.lane.b32.xlu0 %v7354, 32
        %v7450 = vpop.permute.xlu0 %7449
        %7483 = vst.msk [vmem:[#allocation7] sm:$0xf] %vm2344, %v7388
        %7484 = vst.msk [vmem:[#allocation7 + $0x4] sm:$0xf] %vm2344, %v7390
        %7485 = vst.msk [vmem:[#allocation7 + $0x8] sm:$0xf] %vm2344, %v7392
        %7486 = vst.msk [vmem:[#allocation7 + $0xc] sm:$0xf] %vm2344, %v7394
        %7487 = vst.msk [vmem:[#allocation7 + $0x10] sm:$0xf] %vm2344, %v7396
        %7488 = vst.msk [vmem:[#allocation7 + $0x14] sm:$0xf] %vm2344, %v7398
        %7489 = vst.msk [vmem:[#allocation7 + $0x18] sm:$0xf] %vm2344, %v7400
        %7490 = vst.msk [vmem:[#allocation7 + $0x1c] sm:$0xf] %vm2344, %v7402
        %7491 = vst.msk [vmem:[#allocation7 + $0x20] sm:$0xf] %vm2344, %v7404
        %7492 = vst.msk [vmem:[#allocation7 + $0x24] sm:$0xf] %vm2344, %v7406
        %7493 = vst.msk [vmem:[#allocation7 + $0x28] sm:$0xf] %vm2344, %v7408
        %7494 = vst.msk [vmem:[#allocation7 + $0x2c] sm:$0xf] %vm2344, %v7410
        %7495 = vst.msk [vmem:[#allocation7 + $0x30] sm:$0xf] %vm2344, %v7412
        %7496 = vst.msk [vmem:[#allocation7 + $0x34] sm:$0xf] %vm2344, %v7414
        %7497 = vst.msk [vmem:[#allocation7 + $0x38] sm:$0xf] %vm2344, %v7416
        %7498 = vst.msk [vmem:[#allocation7 + $0x3c] sm:$0xf] %vm2344, %v7418
        %7499 = vst.msk [vmem:[#allocation7 + $0x40] sm:$0xf] %vm2344, %v7420
        %7500 = vst.msk [vmem:[#allocation7 + $0x44] sm:$0xf] %vm2344, %v7422
        %7501 = vst.msk [vmem:[#allocation7 + $0x48] sm:$0xf] %vm2344, %v7424
        %7502 = vst.msk [vmem:[#allocation7 + $0x4c] sm:$0xf] %vm2344, %v7426
        %7503 = vst.msk [vmem:[#allocation7 + $0x50] sm:$0xf] %vm2344, %v7428
        %7504 = vst.msk [vmem:[#allocation7 + $0x54] sm:$0xf] %vm2344, %v7430
        %7505 = vst.msk [vmem:[#allocation7 + $0x58] sm:$0xf] %vm2344, %v7432
        %7506 = vst.msk [vmem:[#allocation7 + $0x5c] sm:$0xf] %vm2344, %v7434
        %7507 = vst.msk [vmem:[#allocation7 + $0x60] sm:$0xf] %vm2344, %v7436
        %7508 = vst.msk [vmem:[#allocation7 + $0x64] sm:$0xf] %vm2344, %v7438
        %7509 = vst.msk [vmem:[#allocation7 + $0x68] sm:$0xf] %vm2344, %v7440
        %7510 = vst.msk [vmem:[#allocation7 + $0x6c] sm:$0xf] %vm2344, %v7442
        %7511 = vst.msk [vmem:[#allocation7 + $0x70] sm:$0xf] %vm2344, %v7444
        %7512 = vst.msk [vmem:[#allocation7 + $0x74] sm:$0xf] %vm2344, %v7446
        %7513 = vst.msk [vmem:[#allocation7 + $0x78] sm:$0xf] %vm2344, %v7448
        %7514 = vst.msk [vmem:[#allocation7 + $0x7c] sm:$0xf] %vm2344, %v7450
        %v7515 = vld [vmem:[#allocation7] sm:$0xf]
        %v7516 = vld [vmem:[#allocation7 + $0x4] sm:$0xf]
        %v7517 = vld [vmem:[#allocation7 + $0x8] sm:$0xf]
        %v7518 = vld [vmem:[#allocation7 + $0xc] sm:$0xf]
        %v7519 = vld [vmem:[#allocation7 + $0x10] sm:$0xf]
        %v7520 = vld [vmem:[#allocation7 + $0x14] sm:$0xf]
        %v7521 = vld [vmem:[#allocation7 + $0x18] sm:$0xf]
        %v7522 = vld [vmem:[#allocation7 + $0x1c] sm:$0xf]
        %v7523 = vld [vmem:[#allocation7 + $0x20] sm:$0xf]
        %v7524 = vld [vmem:[#allocation7 + $0x24] sm:$0xf]
        %v7525 = vld [vmem:[#allocation7 + $0x28] sm:$0xf]
        %v7526 = vld [vmem:[#allocation7 + $0x2c] sm:$0xf]
        %v7527 = vld [vmem:[#allocation7 + $0x30] sm:$0xf]
        %v7528 = vld [vmem:[#allocation7 + $0x34] sm:$0xf]
        %v7529 = vld [vmem:[#allocation7 + $0x38] sm:$0xf]
        %v7530 = vld [vmem:[#allocation7 + $0x3c] sm:$0xf]
        %v7531 = vld [vmem:[#allocation7 + $0x40] sm:$0xf]
        %v7532 = vld [vmem:[#allocation7 + $0x44] sm:$0xf]
        %v7533 = vld [vmem:[#allocation7 + $0x48] sm:$0xf]
        %v7534 = vld [vmem:[#allocation7 + $0x4c] sm:$0xf]
        %v7535 = vld [vmem:[#allocation7 + $0x50] sm:$0xf]
        %v7536 = vld [vmem:[#allocation7 + $0x54] sm:$0xf]
        %v7537 = vld [vmem:[#allocation7 + $0x58] sm:$0xf]
        %v7538 = vld [vmem:[#allocation7 + $0x5c] sm:$0xf]
        %v7539 = vld [vmem:[#allocation7 + $0x60] sm:$0xf]
        %v7540 = vld [vmem:[#allocation7 + $0x64] sm:$0xf]
        %v7541 = vld [vmem:[#allocation7 + $0x68] sm:$0xf]
        %v7542 = vld [vmem:[#allocation7 + $0x6c] sm:$0xf]
        %v7543 = vld [vmem:[#allocation7 + $0x70] sm:$0xf]
        %v7544 = vld [vmem:[#allocation7 + $0x74] sm:$0xf]
        %v7545 = vld [vmem:[#allocation7 + $0x78] sm:$0xf]
        %v7546 = vld [vmem:[#allocation7 + $0x7c] sm:$0xf]
        %v7547 = vld [vmem:[%s4] sm:$0xf]
        %v7548 = vld [vmem:[%s4 + $0x4] sm:$0xf]
        %v7549 = vld [vmem:[%s4 + $0x8] sm:$0xf]
        %v7550 = vld [vmem:[%s4 + $0xc] sm:$0xf]
        %v7551 = vld [vmem:[%s4 + $0x10] sm:$0x3]
        %v7584 = vunpack.c.l.b16 %v7515
        %v7585 = vunpack.c.l.b16 %v7516
        %v7586 = vunpack.c.l.b16 %v7517
        %v7587 = vunpack.c.l.b16 %v7518
        %v7588 = vunpack.c.l.b16 %v7519
        %v7589 = vunpack.c.l.b16 %v7520
        %v7590 = vunpack.c.l.b16 %v7521
        %v7591 = vunpack.c.l.b16 %v7522
        %v7592 = vunpack.c.l.b16 %v7523
        %v7593 = vunpack.c.l.b16 %v7524
        %v7594 = vunpack.c.l.b16 %v7525
        %v7595 = vunpack.c.l.b16 %v7526
        %v7596 = vunpack.c.l.b16 %v7527
        %v7597 = vunpack.c.l.b16 %v7528
        %v7598 = vunpack.c.l.b16 %v7529
        %v7599 = vunpack.c.l.b16 %v7530
        %v7600 = vunpack.c.l.b16 %v7531
        %v7601 = vunpack.c.l.b16 %v7532
        %v7602 = vunpack.c.l.b16 %v7533
        %v7603 = vunpack.c.l.b16 %v7534
        %v7604 = vunpack.c.l.b16 %v7535
        %v7605 = vunpack.c.l.b16 %v7536
        %v7606 = vunpack.c.l.b16 %v7537
        %v7607 = vunpack.c.l.b16 %v7538
        %v7608 = vunpack.c.l.b16 %v7539
        %v7609 = vunpack.c.l.b16 %v7540
        %v7610 = vunpack.c.l.b16 %v7541
        %v7611 = vunpack.c.l.b16 %v7542
        %v7612 = vunpack.c.l.b16 %v7543
        %v7613 = vunpack.c.l.b16 %v7544
        %v7614 = vunpack.c.l.b16 %v7545
        %v7615 = vunpack.c.l.b16 %v7546
        %v7616 = vpack.c.b16 %v7585, %v7584
        %v7617 = vpack.c.b16 %v7587, %v7586
        %v7618 = vpack.c.b16 %v7589, %v7588
        %v7619 = vpack.c.b16 %v7591, %v7590
        %v7620 = vpack.c.b16 %v7593, %v7592
        %v7621 = vpack.c.b16 %v7595, %v7594
        %v7622 = vpack.c.b16 %v7597, %v7596
        %v7623 = vpack.c.b16 %v7599, %v7598
        %v7624 = vpack.c.b16 %v7601, %v7600
        %v7625 = vpack.c.b16 %v7603, %v7602
        %v7626 = vpack.c.b16 %v7605, %v7604
        %v7627 = vpack.c.b16 %v7607, %v7606
        %v7628 = vpack.c.b16 %v7609, %v7608
        %v7629 = vpack.c.b16 %v7611, %v7610
        %v7630 = vpack.c.b16 %v7613, %v7612
        %v7631 = vpack.c.b16 %v7615, %v7614
        %v7637 = vunpack.c.l.b16 %v7547
        %v7638 = vunpack.c.l.b16 %v7548
        %v7639 = vunpack.c.l.b16 %v7549
        %v7640 = vunpack.c.l.b16 %v7550
        %v7641 = vunpack.c.l.b16 %v7551
        %v7642 = vpack.c.b16 %v7638, %v7637
        %v7643 = vpack.c.b16 %v7640, %v7639
        %v7644 = vpack.c.b16 %v7641, %v7641
        %v7648 = vsel %vm2509, %v7616, 0
        %v7651 = vsel %vm2509, %v7617, 0
        %v7654 = vsel %vm2509, %v7618, 0
        %v7657 = vsel %vm2509, %v7619, 0
        %v7660 = vsel %vm2509, %v7620, 0
        %v7663 = vsel %vm2509, %v7621, 0
        %v7666 = vsel %vm2509, %v7622, 0
        %v7669 = vsel %vm2509, %v7623, 0
        %v7672 = vsel %vm2509, %v7624, 0
        %v7675 = vsel %vm2509, %v7625, 0
        %v7678 = vsel %vm2509, %v7626, 0
        %v7681 = vsel %vm2509, %v7627, 0
        %v7684 = vsel %vm2509, %v7628, 0
        %v7687 = vsel %vm2509, %v7629, 0
        %v7690 = vsel %vm2509, %v7630, 0
        %v7693 = vsel %vm2509, %v7631, 0
        %v7696 = vsel %vm2558, %v7644, 0
        %7698 = vmatpush.bf16.msra.mxu0 0
        %7699 = vmatpush.bf16.msra.mxu0 0
        %7700 = vmatpush.bf16.msra.mxu0 0
        %7701 = vmatpush.bf16.msra.mxu0 0
        %7702 = vmatpush.bf16.msra.mxu0 0
        %7703 = vmatpush.bf16.msra.mxu0 %v7696
        %7704 = vmatpush.bf16.msra.mxu0 %v7643
        %7705 = vmatpush.bf16.msra.mxu0 %v7642
        %7706 = vmatmul.bf16.gmra.mxu0 %v7648
        %v7707 = vpop.f32.mrf.mxu0
        %v7708 = vadd.f32 0.0, %v7707
        %v7709 = vpop.f32.mrf.mxu0
        %v7710 = vadd.f32 0.0, %v7709
        %7711 = vmatmul.bf16.gmra.mxu0 %v7651
        %v7712 = vpop.f32.mrf.mxu0
        %v7713 = vadd.f32 0.0, %v7712
        %v7714 = vpop.f32.mrf.mxu0
        %v7715 = vadd.f32 0.0, %v7714
        %7716 = vmatmul.bf16.gmra.mxu0 %v7654
        %v7717 = vpop.f32.mrf.mxu0
        %v7718 = vadd.f32 0.0, %v7717
        %v7719 = vpop.f32.mrf.mxu0
        %v7720 = vadd.f32 0.0, %v7719
        %7721 = vmatmul.bf16.gmra.mxu0 %v7657
        %v7722 = vpop.f32.mrf.mxu0
        %v7723 = vadd.f32 0.0, %v7722
        %v7724 = vpop.f32.mrf.mxu0
        %v7725 = vadd.f32 0.0, %v7724
        %7726 = vmatmul.bf16.gmra.mxu0 %v7660
        %v7727 = vpop.f32.mrf.mxu0
        %v7728 = vadd.f32 0.0, %v7727
        %v7729 = vpop.f32.mrf.mxu0
        %v7730 = vadd.f32 0.0, %v7729
        %7731 = vmatmul.bf16.gmra.mxu0 %v7663
        %v7732 = vpop.f32.mrf.mxu0
        %v7733 = vadd.f32 0.0, %v7732
        %v7734 = vpop.f32.mrf.mxu0
        %v7735 = vadd.f32 0.0, %v7734
        %7736 = vmatmul.bf16.gmra.mxu0 %v7666
        %v7737 = vpop.f32.mrf.mxu0
        %v7738 = vadd.f32 0.0, %v7737
        %v7739 = vpop.f32.mrf.mxu0
        %v7740 = vadd.f32 0.0, %v7739
        %7741 = vmatmul.bf16.gmra.mxu0 %v7669
        %v7742 = vpop.f32.mrf.mxu0
        %v7743 = vadd.f32 0.0, %v7742
        %v7744 = vpop.f32.mrf.mxu0
        %v7745 = vadd.f32 0.0, %v7744
        %7746 = vmatmul.bf16.gmra.mxu0 %v7672
        %v7747 = vpop.f32.mrf.mxu0
        %v7748 = vadd.f32 0.0, %v7747
        %v7749 = vpop.f32.mrf.mxu0
        %v7750 = vadd.f32 0.0, %v7749
        %7751 = vmatmul.bf16.gmra.mxu0 %v7675
        %v7752 = vpop.f32.mrf.mxu0
        %v7753 = vadd.f32 0.0, %v7752
        %v7754 = vpop.f32.mrf.mxu0
        %v7755 = vadd.f32 0.0, %v7754
        %7756 = vmatmul.bf16.gmra.mxu0 %v7678
        %v7757 = vpop.f32.mrf.mxu0
        %v7758 = vadd.f32 0.0, %v7757
        %v7759 = vpop.f32.mrf.mxu0
        %v7760 = vadd.f32 0.0, %v7759
        %7761 = vmatmul.bf16.gmra.mxu0 %v7681
        %v7762 = vpop.f32.mrf.mxu0
        %v7763 = vadd.f32 0.0, %v7762
        %v7764 = vpop.f32.mrf.mxu0
        %v7765 = vadd.f32 0.0, %v7764
        %7766 = vmatmul.bf16.gmra.mxu0 %v7684
        %v7767 = vpop.f32.mrf.mxu0
        %v7768 = vadd.f32 0.0, %v7767
        %v7769 = vpop.f32.mrf.mxu0
        %v7770 = vadd.f32 0.0, %v7769
        %7771 = vmatmul.bf16.gmra.mxu0 %v7687
        %v7772 = vpop.f32.mrf.mxu0
        %v7773 = vadd.f32 0.0, %v7772
        %v7774 = vpop.f32.mrf.mxu0
        %v7775 = vadd.f32 0.0, %v7774
        %7776 = vmatmul.bf16.gmra.mxu0 %v7690
        %v7777 = vpop.f32.mrf.mxu0
        %v7778 = vadd.f32 0.0, %v7777
        %v7779 = vpop.f32.mrf.mxu0
        %v7780 = vadd.f32 0.0, %v7779
        %7781 = vmatmul.bf16.gmra.mxu0 %v7693
        %v7782 = vpop.f32.mrf.mxu0
        %v7783 = vadd.f32 0.0, %v7782
        %v7784 = vpop.f32.mrf.mxu0
        %v7785 = vadd.f32 0.0, %v7784
        %7786 = vdwg.mxu0
        %s7787 = scalar_lea.vmem [#allocation4], 256
        %7788 = vst.msk [vmem:[%s7787] sm:$0xff] %vm413, %v7708
        %7789 = vst.msk [vmem:[%s7787 + $0x8] sm:$0xff] %vm413, %v7710
        %7790 = vst.msk [vmem:[%s7787 + $0x10] sm:$0xff] %vm413, %v7713
        %7791 = vst.msk [vmem:[%s7787 + $0x18] sm:$0xff] %vm413, %v7715
        %7792 = vst.msk [vmem:[%s7787 + $0x20] sm:$0xff] %vm413, %v7718
        %7793 = vst.msk [vmem:[%s7787 + $0x28] sm:$0xff] %vm413, %v7720
        %7794 = vst.msk [vmem:[%s7787 + $0x30] sm:$0xff] %vm413, %v7723
        %7795 = vst.msk [vmem:[%s7787 + $0x38] sm:$0xff] %vm413, %v7725
        %7796 = vst.msk [vmem:[%s7787 + $0x40] sm:$0xff] %vm413, %v7728
        %7797 = vst.msk [vmem:[%s7787 + $0x48] sm:$0xff] %vm413, %v7730
        %7798 = vst.msk [vmem:[%s7787 + $0x50] sm:$0xff] %vm413, %v7733
        %7799 = vst.msk [vmem:[%s7787 + $0x58] sm:$0xff] %vm413, %v7735
        %7800 = vst.msk [vmem:[%s7787 + $0x60] sm:$0xff] %vm413, %v7738
        %7801 = vst.msk [vmem:[%s7787 + $0x68] sm:$0xff] %vm413, %v7740
        %7802 = vst.msk [vmem:[%s7787 + $0x70] sm:$0xff] %vm413, %v7743
        %7803 = vst.msk [vmem:[%s7787 + $0x78] sm:$0xff] %vm413, %v7745
        %7804 = vst.msk [vmem:[%s7787 + $0x80] sm:$0xff] %vm413, %v7748
        %7805 = vst.msk [vmem:[%s7787 + $0x88] sm:$0xff] %vm413, %v7750
        %7806 = vst.msk [vmem:[%s7787 + $0x90] sm:$0xff] %vm413, %v7753
        %7807 = vst.msk [vmem:[%s7787 + $0x98] sm:$0xff] %vm413, %v7755
        %7808 = vst.msk [vmem:[%s7787 + $0xa0] sm:$0xff] %vm413, %v7758
        %7809 = vst.msk [vmem:[%s7787 + $0xa8] sm:$0xff] %vm413, %v7760
        %7810 = vst.msk [vmem:[%s7787 + $0xb0] sm:$0xff] %vm413, %v7763
        %7811 = vst.msk [vmem:[%s7787 + $0xb8] sm:$0xff] %vm413, %v7765
        %7812 = vst.msk [vmem:[%s7787 + $0xc0] sm:$0xff] %vm413, %v7768
        %7813 = vst.msk [vmem:[%s7787 + $0xc8] sm:$0xff] %vm413, %v7770
        %7814 = vst.msk [vmem:[%s7787 + $0xd0] sm:$0xff] %vm413, %v7773
        %7815 = vst.msk [vmem:[%s7787 + $0xd8] sm:$0xff] %vm413, %v7775
        %7816 = vst.msk [vmem:[%s7787 + $0xe0] sm:$0xff] %vm413, %v7778
        %7817 = vst.msk [vmem:[%s7787 + $0xe8] sm:$0xff] %vm413, %v7780
        %7818 = vst.msk [vmem:[%s7787 + $0xf0] sm:$0xff] %vm413, %v7783
        %7819 = vst.msk [vmem:[%s7787 + $0xf8] sm:$0xff] %vm413, %v7785
        %v7820 = vld [vmem:[#allocation4] sm:$0xff]
        %v7821 = vld [vmem:[#allocation4 + $0x8] sm:$0xff]
        %v7822 = vld [vmem:[#allocation4 + $0x10] sm:$0xff]
        %v7823 = vld [vmem:[#allocation4 + $0x18] sm:$0xff]
        %v7824 = vld [vmem:[#allocation4 + $0x20] sm:$0xff]
        %v7825 = vld [vmem:[#allocation4 + $0x28] sm:$0xff]
        %v7826 = vld [vmem:[#allocation4 + $0x30] sm:$0xff]
        %v7827 = vld [vmem:[#allocation4 + $0x38] sm:$0xff]
        %v7828 = vld [vmem:[#allocation4 + $0x40] sm:$0xff]
        %v7829 = vld [vmem:[#allocation4 + $0x48] sm:$0xff]
        %v7830 = vld [vmem:[#allocation4 + $0x50] sm:$0xff]
        %v7831 = vld [vmem:[#allocation4 + $0x58] sm:$0xff]
        %v7832 = vld [vmem:[#allocation4 + $0x60] sm:$0xff]
        %v7833 = vld [vmem:[#allocation4 + $0x68] sm:$0xff]
        %v7834 = vld [vmem:[#allocation4 + $0x70] sm:$0xff]
        %v7835 = vld [vmem:[#allocation4 + $0x78] sm:$0xff]
        %v7836 = vld [vmem:[#allocation4 + $0x80] sm:$0xff]
        %v7837 = vld [vmem:[#allocation4 + $0x88] sm:$0xff]
        %v7838 = vld [vmem:[#allocation4 + $0x90] sm:$0xff]
        %v7839 = vld [vmem:[#allocation4 + $0x98] sm:$0xff]
        %v7840 = vld [vmem:[#allocation4 + $0xa0] sm:$0xff]
        %v7841 = vld [vmem:[#allocation4 + $0xa8] sm:$0xff]
        %v7842 = vld [vmem:[#allocation4 + $0xb0] sm:$0xff]
        %v7843 = vld [vmem:[#allocation4 + $0xb8] sm:$0xff]
        %v7844 = vld [vmem:[#allocation4 + $0xc0] sm:$0xff]
        %v7845 = vld [vmem:[#allocation4 + $0xc8] sm:$0xff]
        %v7846 = vld [vmem:[#allocation4 + $0xd0] sm:$0xff]
        %v7847 = vld [vmem:[#allocation4 + $0xd8] sm:$0xff]
        %v7848 = vld [vmem:[#allocation4 + $0xe0] sm:$0xff]
        %v7849 = vld [vmem:[#allocation4 + $0xe8] sm:$0xff]
        %v7850 = vld [vmem:[#allocation4 + $0xf0] sm:$0xff]
        %v7851 = vld [vmem:[#allocation4 + $0xf8] sm:$0xff]
        %v7852 = vld [vmem:[#allocation4 + $0x100] sm:$0xff]
        %v7853 = vld [vmem:[#allocation4 + $0x108] sm:$0xff]
        %v7854 = vld [vmem:[#allocation4 + $0x110] sm:$0xff]
        %v7855 = vld [vmem:[#allocation4 + $0x118] sm:$0xff]
        %v7856 = vld [vmem:[#allocation4 + $0x120] sm:$0xff]
        %v7857 = vld [vmem:[#allocation4 + $0x128] sm:$0xff]
        %v7858 = vld [vmem:[#allocation4 + $0x130] sm:$0xff]
        %v7859 = vld [vmem:[#allocation4 + $0x138] sm:$0xff]
        %v7860 = vld [vmem:[#allocation4 + $0x140] sm:$0xff]
        %v7861 = vld [vmem:[#allocation4 + $0x148] sm:$0xff]
        %v7862 = vld [vmem:[#allocation4 + $0x150] sm:$0xff]
        %v7863 = vld [vmem:[#allocation4 + $0x158] sm:$0xff]
        %v7864 = vld [vmem:[#allocation4 + $0x160] sm:$0xff]
        %v7865 = vld [vmem:[#allocation4 + $0x168] sm:$0xff]
        %v7866 = vld [vmem:[#allocation4 + $0x170] sm:$0xff]
        %v7867 = vld [vmem:[#allocation4 + $0x178] sm:$0xff]
        %v7868 = vld [vmem:[#allocation4 + $0x180] sm:$0xff]
        %v7869 = vld [vmem:[#allocation4 + $0x188] sm:$0xff]
        %v7870 = vld [vmem:[#allocation4 + $0x190] sm:$0xff]
        %v7871 = vld [vmem:[#allocation4 + $0x198] sm:$0xff]
        %v7872 = vld [vmem:[#allocation4 + $0x1a0] sm:$0xff]
        %v7873 = vld [vmem:[#allocation4 + $0x1a8] sm:$0xff]
        %v7874 = vld [vmem:[#allocation4 + $0x1b0] sm:$0xff]
        %v7875 = vld [vmem:[#allocation4 + $0x1b8] sm:$0xff]
        %v7876 = vld [vmem:[#allocation4 + $0x1c0] sm:$0xff]
        %v7877 = vld [vmem:[#allocation4 + $0x1c8] sm:$0xff]
        %v7878 = vld [vmem:[#allocation4 + $0x1d0] sm:$0xff]
        %v7879 = vld [vmem:[#allocation4 + $0x1d8] sm:$0xff]
        %v7880 = vld [vmem:[#allocation4 + $0x1e0] sm:$0xff]
        %v7881 = vld [vmem:[#allocation4 + $0x1e8] sm:$0xff]
        %v7882 = vld [vmem:[#allocation4 + $0x1f0] sm:$0xff]
        %v7883 = vld [vmem:[#allocation4 + $0x1f8] sm:$0xff]
        %v7884 = vld [vmem:[%s5] sm:$0x1]
        %v7885 = vld [vmem:[%s6] sm:$0x1]
        %v7886 = vsel %vm413, %v7820, 0.0
        %v7887 = vsel %vm413, %v7821, 0.0
        %v7888 = vadd.f32 %v7886, %v7887
        %v7889 = vsel %vm413, %v7822, 0.0
        %v7890 = vadd.f32 %v7888, %v7889
        %v7891 = vsel %vm413, %v7823, 0.0
        %v7892 = vadd.f32 %v7890, %v7891
        %v7893 = vsel %vm413, %v7824, 0.0
        %v7894 = vadd.f32 %v7892, %v7893
        %v7895 = vsel %vm413, %v7825, 0.0
        %v7896 = vadd.f32 %v7894, %v7895
        %v7897 = vsel %vm413, %v7826, 0.0
        %v7898 = vadd.f32 %v7896, %v7897
        %v7899 = vsel %vm413, %v7827, 0.0
        %v7900 = vadd.f32 %v7898, %v7899
        %v7901 = vsel %vm413, %v7828, 0.0
        %v7902 = vadd.f32 %v7900, %v7901
        %v7903 = vsel %vm413, %v7829, 0.0
        %v7904 = vadd.f32 %v7902, %v7903
        %v7905 = vsel %vm413, %v7830, 0.0
        %v7906 = vadd.f32 %v7904, %v7905
        %v7907 = vsel %vm413, %v7831, 0.0
        %v7908 = vadd.f32 %v7906, %v7907
        %v7909 = vsel %vm413, %v7832, 0.0
        %v7910 = vadd.f32 %v7908, %v7909
        %v7911 = vsel %vm413, %v7833, 0.0
        %v7912 = vadd.f32 %v7910, %v7911
        %v7913 = vsel %vm413, %v7834, 0.0
        %v7914 = vadd.f32 %v7912, %v7913
        %v7915 = vsel %vm413, %v7835, 0.0
        %v7916 = vadd.f32 %v7914, %v7915
        %v7917 = vsel %vm413, %v7836, 0.0
        %v7918 = vadd.f32 %v7916, %v7917
        %v7919 = vsel %vm413, %v7837, 0.0
        %v7920 = vadd.f32 %v7918, %v7919
        %v7921 = vsel %vm413, %v7838, 0.0
        %v7922 = vadd.f32 %v7920, %v7921
        %v7923 = vsel %vm413, %v7839, 0.0
        %v7924 = vadd.f32 %v7922, %v7923
        %v7925 = vsel %vm413, %v7840, 0.0
        %v7926 = vadd.f32 %v7924, %v7925
        %v7927 = vsel %vm413, %v7841, 0.0
        %v7928 = vadd.f32 %v7926, %v7927
        %v7929 = vsel %vm413, %v7842, 0.0
        %v7930 = vadd.f32 %v7928, %v7929
        %v7931 = vsel %vm413, %v7843, 0.0
        %v7932 = vadd.f32 %v7930, %v7931
        %v7933 = vsel %vm413, %v7844, 0.0
        %v7934 = vadd.f32 %v7932, %v7933
        %v7935 = vsel %vm413, %v7845, 0.0
        %v7936 = vadd.f32 %v7934, %v7935
        %v7937 = vsel %vm413, %v7846, 0.0
        %v7938 = vadd.f32 %v7936, %v7937
        %v7939 = vsel %vm413, %v7847, 0.0
        %v7940 = vadd.f32 %v7938, %v7939
        %v7941 = vsel %vm413, %v7848, 0.0
        %v7942 = vadd.f32 %v7940, %v7941
        %v7943 = vsel %vm413, %v7849, 0.0
        %v7944 = vadd.f32 %v7942, %v7943
        %v7945 = vsel %vm413, %v7850, 0.0
        %v7946 = vadd.f32 %v7944, %v7945
        %v7947 = vsel %vm413, %v7851, 0.0
        %v7948 = vadd.f32 %v7946, %v7947
        %v7949 = vsel %vm413, %v7852, 0.0
        %v7950 = vadd.f32 %v7948, %v7949
        %v7951 = vsel %vm413, %v7853, 0.0
        %v7952 = vadd.f32 %v7950, %v7951
        %v7953 = vsel %vm413, %v7854, 0.0
        %v7954 = vadd.f32 %v7952, %v7953
        %v7955 = vsel %vm413, %v7855, 0.0
        %v7956 = vadd.f32 %v7954, %v7955
        %v7957 = vsel %vm413, %v7856, 0.0
        %v7958 = vadd.f32 %v7956, %v7957
        %v7959 = vsel %vm413, %v7857, 0.0
        %v7960 = vadd.f32 %v7958, %v7959
        %v7961 = vsel %vm413, %v7858, 0.0
        %v7962 = vadd.f32 %v7960, %v7961
        %v7963 = vsel %vm413, %v7859, 0.0
        %v7964 = vadd.f32 %v7962, %v7963
        %v7965 = vsel %vm413, %v7860, 0.0
        %v7966 = vadd.f32 %v7964, %v7965
        %v7967 = vsel %vm413, %v7861, 0.0
        %v7968 = vadd.f32 %v7966, %v7967
        %v7969 = vsel %vm413, %v7862, 0.0
        %v7970 = vadd.f32 %v7968, %v7969
        %v7971 = vsel %vm413, %v7863, 0.0
        %v7972 = vadd.f32 %v7970, %v7971
        %v7973 = vsel %vm413, %v7864, 0.0
        %v7974 = vadd.f32 %v7972, %v7973
        %v7975 = vsel %vm413, %v7865, 0.0
        %v7976 = vadd.f32 %v7974, %v7975
        %v7977 = vsel %vm413, %v7866, 0.0
        %v7978 = vadd.f32 %v7976, %v7977
        %v7979 = vsel %vm413, %v7867, 0.0
        %v7980 = vadd.f32 %v7978, %v7979
        %v7981 = vsel %vm413, %v7868, 0.0
        %v7982 = vadd.f32 %v7980, %v7981
        %v7983 = vsel %vm413, %v7869, 0.0
        %v7984 = vadd.f32 %v7982, %v7983
        %v7985 = vsel %vm413, %v7870, 0.0
        %v7986 = vadd.f32 %v7984, %v7985
        %v7987 = vsel %vm413, %v7871, 0.0
        %v7988 = vadd.f32 %v7986, %v7987
        %v7989 = vsel %vm413, %v7872, 0.0
        %v7990 = vadd.f32 %v7988, %v7989
        %v7991 = vsel %vm413, %v7873, 0.0
        %v7992 = vadd.f32 %v7990, %v7991
        %v7993 = vsel %vm413, %v7874, 0.0
        %v7994 = vadd.f32 %v7992, %v7993
        %v7995 = vsel %vm413, %v7875, 0.0
        %v7996 = vadd.f32 %v7994, %v7995
        %v7997 = vsel %vm413, %v7876, 0.0
        %v7998 = vadd.f32 %v7996, %v7997
        %v7999 = vsel %vm413, %v7877, 0.0
        %v8000 = vadd.f32 %v7998, %v7999
        %v8001 = vsel %vm413, %v7878, 0.0
        %v8002 = vadd.f32 %v8000, %v8001
        %v8003 = vsel %vm413, %v7879, 0.0
        %v8004 = vadd.f32 %v8002, %v8003
        %v8005 = vsel %vm413, %v7880, 0.0
        %v8006 = vadd.f32 %v8004, %v8005
        %v8007 = vsel %vm413, %v7881, 0.0
        %v8008 = vadd.f32 %v8006, %v8007
        %v8009 = vsel %vm413, %v7882, 0.0
        %v8010 = vadd.f32 %v8008, %v8009
        %v8011 = vsel %vm413, %v7883, 0.0
        %v8012 = vadd.f32 %v8010, %v8011
        %v8013 = vrot.slane %v8012, 4
        %v8014 = vadd.f32 %v8012, %v8013
        %v8015 = vrot.slane %v8014, 2
        %v8016 = vadd.f32 %v8014, %v8015
        %v8017 = vrot.slane %v8016, 1
        %v8018 = vadd.f32 %v8016, %v8017
        %v8019 = vmul.f32 %v8018, %v2893
        %v8020 = vsub.f32 %v7820, %v8019
        %v8021 = vsub.f32 %v7821, %v8019
        %v8022 = vsub.f32 %v7822, %v8019
        %v8023 = vsub.f32 %v7823, %v8019
        %v8024 = vsub.f32 %v7824, %v8019
        %v8025 = vsub.f32 %v7825, %v8019
        %v8026 = vsub.f32 %v7826, %v8019
        %v8027 = vsub.f32 %v7827, %v8019
        %v8028 = vsub.f32 %v7828, %v8019
        %v8029 = vsub.f32 %v7829, %v8019
        %v8030 = vsub.f32 %v7830, %v8019
        %v8031 = vsub.f32 %v7831, %v8019
        %v8032 = vsub.f32 %v7832, %v8019
        %v8033 = vsub.f32 %v7833, %v8019
        %v8034 = vsub.f32 %v7834, %v8019
        %v8035 = vsub.f32 %v7835, %v8019
        %v8036 = vsub.f32 %v7836, %v8019
        %v8037 = vsub.f32 %v7837, %v8019
        %v8038 = vsub.f32 %v7838, %v8019
        %v8039 = vsub.f32 %v7839, %v8019
        %v8040 = vsub.f32 %v7840, %v8019
        %v8041 = vsub.f32 %v7841, %v8019
        %v8042 = vsub.f32 %v7842, %v8019
        %v8043 = vsub.f32 %v7843, %v8019
        %v8044 = vsub.f32 %v7844, %v8019
        %v8045 = vsub.f32 %v7845, %v8019
        %v8046 = vsub.f32 %v7846, %v8019
        %v8047 = vsub.f32 %v7847, %v8019
        %v8048 = vsub.f32 %v7848, %v8019
        %v8049 = vsub.f32 %v7849, %v8019
        %v8050 = vsub.f32 %v7850, %v8019
        %v8051 = vsub.f32 %v7851, %v8019
        %v8052 = vsub.f32 %v7852, %v8019
        %v8053 = vsub.f32 %v7853, %v8019
        %v8054 = vsub.f32 %v7854, %v8019
        %v8055 = vsub.f32 %v7855, %v8019
        %v8056 = vsub.f32 %v7856, %v8019
        %v8057 = vsub.f32 %v7857, %v8019
        %v8058 = vsub.f32 %v7858, %v8019
        %v8059 = vsub.f32 %v7859, %v8019
        %v8060 = vsub.f32 %v7860, %v8019
        %v8061 = vsub.f32 %v7861, %v8019
        %v8062 = vsub.f32 %v7862, %v8019
        %v8063 = vsub.f32 %v7863, %v8019
        %v8064 = vsub.f32 %v7864, %v8019
        %v8065 = vsub.f32 %v7865, %v8019
        %v8066 = vsub.f32 %v7866, %v8019
        %v8067 = vsub.f32 %v7867, %v8019
        %v8068 = vsub.f32 %v7868, %v8019
        %v8069 = vsub.f32 %v7869, %v8019
        %v8070 = vsub.f32 %v7870, %v8019
        %v8071 = vsub.f32 %v7871, %v8019
        %v8072 = vsub.f32 %v7872, %v8019
        %v8073 = vsub.f32 %v7873, %v8019
        %v8074 = vsub.f32 %v7874, %v8019
        %v8075 = vsub.f32 %v7875, %v8019
        %v8076 = vsub.f32 %v7876, %v8019
        %v8077 = vsub.f32 %v7877, %v8019
        %v8078 = vsub.f32 %v7878, %v8019
        %v8079 = vsub.f32 %v7879, %v8019
        %v8080 = vsub.f32 %v7880, %v8019
        %v8081 = vsub.f32 %v7881, %v8019
        %v8082 = vsub.f32 %v7882, %v8019
        %v8083 = vsub.f32 %v7883, %v8019
        %v8084 = vmul.f32 %v8020, %v8020
        %v8085 = vmul.f32 %v8021, %v8021
        %v8086 = vmul.f32 %v8022, %v8022
        %v8087 = vmul.f32 %v8023, %v8023
        %v8088 = vmul.f32 %v8024, %v8024
        %v8089 = vmul.f32 %v8025, %v8025
        %v8090 = vmul.f32 %v8026, %v8026
        %v8091 = vmul.f32 %v8027, %v8027
        %v8092 = vmul.f32 %v8028, %v8028
        %v8093 = vmul.f32 %v8029, %v8029
        %v8094 = vmul.f32 %v8030, %v8030
        %v8095 = vmul.f32 %v8031, %v8031
        %v8096 = vmul.f32 %v8032, %v8032
        %v8097 = vmul.f32 %v8033, %v8033
        %v8098 = vmul.f32 %v8034, %v8034
        %v8099 = vmul.f32 %v8035, %v8035
        %v8100 = vmul.f32 %v8036, %v8036
        %v8101 = vmul.f32 %v8037, %v8037
        %v8102 = vmul.f32 %v8038, %v8038
        %v8103 = vmul.f32 %v8039, %v8039
        %v8104 = vmul.f32 %v8040, %v8040
        %v8105 = vmul.f32 %v8041, %v8041
        %v8106 = vmul.f32 %v8042, %v8042
        %v8107 = vmul.f32 %v8043, %v8043
        %v8108 = vmul.f32 %v8044, %v8044
        %v8109 = vmul.f32 %v8045, %v8045
        %v8110 = vmul.f32 %v8046, %v8046
        %v8111 = vmul.f32 %v8047, %v8047
        %v8112 = vmul.f32 %v8048, %v8048
        %v8113 = vmul.f32 %v8049, %v8049
        %v8114 = vmul.f32 %v8050, %v8050
        %v8115 = vmul.f32 %v8051, %v8051
        %v8116 = vmul.f32 %v8052, %v8052
        %v8117 = vmul.f32 %v8053, %v8053
        %v8118 = vmul.f32 %v8054, %v8054
        %v8119 = vmul.f32 %v8055, %v8055
        %v8120 = vmul.f32 %v8056, %v8056
        %v8121 = vmul.f32 %v8057, %v8057
        %v8122 = vmul.f32 %v8058, %v8058
        %v8123 = vmul.f32 %v8059, %v8059
        %v8124 = vmul.f32 %v8060, %v8060
        %v8125 = vmul.f32 %v8061, %v8061
        %v8126 = vmul.f32 %v8062, %v8062
        %v8127 = vmul.f32 %v8063, %v8063
        %v8128 = vmul.f32 %v8064, %v8064
        %v8129 = vmul.f32 %v8065, %v8065
        %v8130 = vmul.f32 %v8066, %v8066
        %v8131 = vmul.f32 %v8067, %v8067
        %v8132 = vmul.f32 %v8068, %v8068
        %v8133 = vmul.f32 %v8069, %v8069
        %v8134 = vmul.f32 %v8070, %v8070
        %v8135 = vmul.f32 %v8071, %v8071
        %v8136 = vmul.f32 %v8072, %v8072
        %v8137 = vmul.f32 %v8073, %v8073
        %v8138 = vmul.f32 %v8074, %v8074
        %v8139 = vmul.f32 %v8075, %v8075
        %v8140 = vmul.f32 %v8076, %v8076
        %v8141 = vmul.f32 %v8077, %v8077
        %v8142 = vmul.f32 %v8078, %v8078
        %v8143 = vmul.f32 %v8079, %v8079
        %v8144 = vmul.f32 %v8080, %v8080
        %v8145 = vmul.f32 %v8081, %v8081
        %v8146 = vmul.f32 %v8082, %v8082
        %v8147 = vmul.f32 %v8083, %v8083
        %v8148 = vsel %vm413, %v8084, 0.0
        %v8149 = vsel %vm413, %v8085, 0.0
        %v8150 = vadd.f32 %v8148, %v8149
        %v8151 = vsel %vm413, %v8086, 0.0
        %v8152 = vadd.f32 %v8150, %v8151
        %v8153 = vsel %vm413, %v8087, 0.0
        %v8154 = vadd.f32 %v8152, %v8153
        %v8155 = vsel %vm413, %v8088, 0.0
        %v8156 = vadd.f32 %v8154, %v8155
        %v8157 = vsel %vm413, %v8089, 0.0
        %v8158 = vadd.f32 %v8156, %v8157
        %v8159 = vsel %vm413, %v8090, 0.0
        %v8160 = vadd.f32 %v8158, %v8159
        %v8161 = vsel %vm413, %v8091, 0.0
        %v8162 = vadd.f32 %v8160, %v8161
        %v8163 = vsel %vm413, %v8092, 0.0
        %v8164 = vadd.f32 %v8162, %v8163
        %v8165 = vsel %vm413, %v8093, 0.0
        %v8166 = vadd.f32 %v8164, %v8165
        %v8167 = vsel %vm413, %v8094, 0.0
        %v8168 = vadd.f32 %v8166, %v8167
        %v8169 = vsel %vm413, %v8095, 0.0
        %v8170 = vadd.f32 %v8168, %v8169
        %v8171 = vsel %vm413, %v8096, 0.0
        %v8172 = vadd.f32 %v8170, %v8171
        %v8173 = vsel %vm413, %v8097, 0.0
        %v8174 = vadd.f32 %v8172, %v8173
        %v8175 = vsel %vm413, %v8098, 0.0
        %v8176 = vadd.f32 %v8174, %v8175
        %v8177 = vsel %vm413, %v8099, 0.0
        %v8178 = vadd.f32 %v8176, %v8177
        %v8179 = vsel %vm413, %v8100, 0.0
        %v8180 = vadd.f32 %v8178, %v8179
        %v8181 = vsel %vm413, %v8101, 0.0
        %v8182 = vadd.f32 %v8180, %v8181
        %v8183 = vsel %vm413, %v8102, 0.0
        %v8184 = vadd.f32 %v8182, %v8183
        %v8185 = vsel %vm413, %v8103, 0.0
        %v8186 = vadd.f32 %v8184, %v8185
        %v8187 = vsel %vm413, %v8104, 0.0
        %v8188 = vadd.f32 %v8186, %v8187
        %v8189 = vsel %vm413, %v8105, 0.0
        %v8190 = vadd.f32 %v8188, %v8189
        %v8191 = vsel %vm413, %v8106, 0.0
        %v8192 = vadd.f32 %v8190, %v8191
        %v8193 = vsel %vm413, %v8107, 0.0
        %v8194 = vadd.f32 %v8192, %v8193
        %v8195 = vsel %vm413, %v8108, 0.0
        %v8196 = vadd.f32 %v8194, %v8195
        %v8197 = vsel %vm413, %v8109, 0.0
        %v8198 = vadd.f32 %v8196, %v8197
        %v8199 = vsel %vm413, %v8110, 0.0
        %v8200 = vadd.f32 %v8198, %v8199
        %v8201 = vsel %vm413, %v8111, 0.0
        %v8202 = vadd.f32 %v8200, %v8201
        %v8203 = vsel %vm413, %v8112, 0.0
        %v8204 = vadd.f32 %v8202, %v8203
        %v8205 = vsel %vm413, %v8113, 0.0
        %v8206 = vadd.f32 %v8204, %v8205
        %v8207 = vsel %vm413, %v8114, 0.0
        %v8208 = vadd.f32 %v8206, %v8207
        %v8209 = vsel %vm413, %v8115, 0.0
        %v8210 = vadd.f32 %v8208, %v8209
        %v8211 = vsel %vm413, %v8116, 0.0
        %v8212 = vadd.f32 %v8210, %v8211
        %v8213 = vsel %vm413, %v8117, 0.0
        %v8214 = vadd.f32 %v8212, %v8213
        %v8215 = vsel %vm413, %v8118, 0.0
        %v8216 = vadd.f32 %v8214, %v8215
        %v8217 = vsel %vm413, %v8119, 0.0
        %v8218 = vadd.f32 %v8216, %v8217
        %v8219 = vsel %vm413, %v8120, 0.0
        %v8220 = vadd.f32 %v8218, %v8219
        %v8221 = vsel %vm413, %v8121, 0.0
        %v8222 = vadd.f32 %v8220, %v8221
        %v8223 = vsel %vm413, %v8122, 0.0
        %v8224 = vadd.f32 %v8222, %v8223
        %v8225 = vsel %vm413, %v8123, 0.0
        %v8226 = vadd.f32 %v8224, %v8225
        %v8227 = vsel %vm413, %v8124, 0.0
        %v8228 = vadd.f32 %v8226, %v8227
        %v8229 = vsel %vm413, %v8125, 0.0
        %v8230 = vadd.f32 %v8228, %v8229
        %v8231 = vsel %vm413, %v8126, 0.0
        %v8232 = vadd.f32 %v8230, %v8231
        %v8233 = vsel %vm413, %v8127, 0.0
        %v8234 = vadd.f32 %v8232, %v8233
        %v8235 = vsel %vm413, %v8128, 0.0
        %v8236 = vadd.f32 %v8234, %v8235
        %v8237 = vsel %vm413, %v8129, 0.0
        %v8238 = vadd.f32 %v8236, %v8237
        %v8239 = vsel %vm413, %v8130, 0.0
        %v8240 = vadd.f32 %v8238, %v8239
        %v8241 = vsel %vm413, %v8131, 0.0
        %v8242 = vadd.f32 %v8240, %v8241
        %v8243 = vsel %vm413, %v8132, 0.0
        %v8244 = vadd.f32 %v8242, %v8243
        %v8245 = vsel %vm413, %v8133, 0.0
        %v8246 = vadd.f32 %v8244, %v8245
        %v8247 = vsel %vm413, %v8134, 0.0
        %v8248 = vadd.f32 %v8246, %v8247
        %v8249 = vsel %vm413, %v8135, 0.0
        %v8250 = vadd.f32 %v8248, %v8249
        %v8251 = vsel %vm413, %v8136, 0.0
        %v8252 = vadd.f32 %v8250, %v8251
        %v8253 = vsel %vm413, %v8137, 0.0
        %v8254 = vadd.f32 %v8252, %v8253
        %v8255 = vsel %vm413, %v8138, 0.0
        %v8256 = vadd.f32 %v8254, %v8255
        %v8257 = vsel %vm413, %v8139, 0.0
        %v8258 = vadd.f32 %v8256, %v8257
        %v8259 = vsel %vm413, %v8140, 0.0
        %v8260 = vadd.f32 %v8258, %v8259
        %v8261 = vsel %vm413, %v8141, 0.0
        %v8262 = vadd.f32 %v8260, %v8261
        %v8263 = vsel %vm413, %v8142, 0.0
        %v8264 = vadd.f32 %v8262, %v8263
        %v8265 = vsel %vm413, %v8143, 0.0
        %v8266 = vadd.f32 %v8264, %v8265
        %v8267 = vsel %vm413, %v8144, 0.0
        %v8268 = vadd.f32 %v8266, %v8267
        %v8269 = vsel %vm413, %v8145, 0.0
        %v8270 = vadd.f32 %v8268, %v8269
        %v8271 = vsel %vm413, %v8146, 0.0
        %v8272 = vadd.f32 %v8270, %v8271
        %v8273 = vsel %vm413, %v8147, 0.0
        %v8274 = vadd.f32 %v8272, %v8273
        %v8275 = vrot.slane %v8274, 4
        %v8276 = vadd.f32 %v8274, %v8275
        %v8277 = vrot.slane %v8276, 2
        %v8278 = vadd.f32 %v8276, %v8277
        %v8279 = vrot.slane %v8278, 1
        %v8280 = vadd.f32 %v8278, %v8279
        %v8281 = vmul.f32 %v8280, %v2893
        %v8282 = vadd.f32 %v8281, 1e-05
        %v8283 = vrsqrt.pop %v8282
        %v8284 = vmul.f32 %v8283, %v8282
        %v8285 = vmul.f32 %v8284, %v8283
        %v8286 = vmul.f32 0.5, %v8285
        %v8287 = vsub.f32 1.5, %v8286
        %v8288 = vmul.f32 %v8283, %v8287
        %vm8289 = vweird.f32 %v8282
        %vm8290 = vweird.f32 %v8283
        %vm8291 = vmor %vm8289, %vm8290
        %v8292 = vsel %vm8291, %v8283, %v8288
        %v8293 = vmul.f32 %v7884, %v8292
        %v8294 = vmul.f32 %v8019, %v8293
        %v8295 = vsub.f32 %v7885, %v8294
        %v8297 = vperm.slane %v8293, 0
        %v8299 = vmul.f32 %v7820, %v8297
        %v8300 = vmul.f32 %v7821, %v8297
        %v8301 = vmul.f32 %v7822, %v8297
        %v8302 = vmul.f32 %v7823, %v8297
        %v8303 = vmul.f32 %v7824, %v8297
        %v8304 = vmul.f32 %v7825, %v8297
        %v8305 = vmul.f32 %v7826, %v8297
        %v8306 = vmul.f32 %v7827, %v8297
        %v8307 = vmul.f32 %v7828, %v8297
        %v8308 = vmul.f32 %v7829, %v8297
        %v8309 = vmul.f32 %v7830, %v8297
        %v8310 = vmul.f32 %v7831, %v8297
        %v8311 = vmul.f32 %v7832, %v8297
        %v8312 = vmul.f32 %v7833, %v8297
        %v8313 = vmul.f32 %v7834, %v8297
        %v8314 = vmul.f32 %v7835, %v8297
        %v8315 = vmul.f32 %v7836, %v8297
        %v8316 = vmul.f32 %v7837, %v8297
        %v8317 = vmul.f32 %v7838, %v8297
        %v8318 = vmul.f32 %v7839, %v8297
        %v8319 = vmul.f32 %v7840, %v8297
        %v8320 = vmul.f32 %v7841, %v8297
        %v8321 = vmul.f32 %v7842, %v8297
        %v8322 = vmul.f32 %v7843, %v8297
        %v8323 = vmul.f32 %v7844, %v8297
        %v8324 = vmul.f32 %v7845, %v8297
        %v8325 = vmul.f32 %v7846, %v8297
        %v8326 = vmul.f32 %v7847, %v8297
        %v8327 = vmul.f32 %v7848, %v8297
        %v8328 = vmul.f32 %v7849, %v8297
        %v8329 = vmul.f32 %v7850, %v8297
        %v8330 = vmul.f32 %v7851, %v8297
        %v8331 = vmul.f32 %v7852, %v8297
        %v8332 = vmul.f32 %v7853, %v8297
        %v8333 = vmul.f32 %v7854, %v8297
        %v8334 = vmul.f32 %v7855, %v8297
        %v8335 = vmul.f32 %v7856, %v8297
        %v8336 = vmul.f32 %v7857, %v8297
        %v8337 = vmul.f32 %v7858, %v8297
        %v8338 = vmul.f32 %v7859, %v8297
        %v8339 = vmul.f32 %v7860, %v8297
        %v8340 = vmul.f32 %v7861, %v8297
        %v8341 = vmul.f32 %v7862, %v8297
        %v8342 = vmul.f32 %v7863, %v8297
        %v8343 = vmul.f32 %v7864, %v8297
        %v8344 = vmul.f32 %v7865, %v8297
        %v8345 = vmul.f32 %v7866, %v8297
        %v8346 = vmul.f32 %v7867, %v8297
        %v8347 = vmul.f32 %v7868, %v8297
        %v8348 = vmul.f32 %v7869, %v8297
        %v8349 = vmul.f32 %v7870, %v8297
        %v8350 = vmul.f32 %v7871, %v8297
        %v8351 = vmul.f32 %v7872, %v8297
        %v8352 = vmul.f32 %v7873, %v8297
        %v8353 = vmul.f32 %v7874, %v8297
        %v8354 = vmul.f32 %v7875, %v8297
        %v8355 = vmul.f32 %v7876, %v8297
        %v8356 = vmul.f32 %v7877, %v8297
        %v8357 = vmul.f32 %v7878, %v8297
        %v8358 = vmul.f32 %v7879, %v8297
        %v8359 = vmul.f32 %v7880, %v8297
        %v8360 = vmul.f32 %v7881, %v8297
        %v8361 = vmul.f32 %v7882, %v8297
        %v8362 = vmul.f32 %v7883, %v8297
        %v8364 = vperm.slane %v8295, 0
        %v8366 = vadd.f32 %v8299, %v8364
        %v8367 = vadd.f32 %v8300, %v8364
        %v8368 = vadd.f32 %v8301, %v8364
        %v8369 = vadd.f32 %v8302, %v8364
        %v8370 = vadd.f32 %v8303, %v8364
        %v8371 = vadd.f32 %v8304, %v8364
        %v8372 = vadd.f32 %v8305, %v8364
        %v8373 = vadd.f32 %v8306, %v8364
        %v8374 = vadd.f32 %v8307, %v8364
        %v8375 = vadd.f32 %v8308, %v8364
        %v8376 = vadd.f32 %v8309, %v8364
        %v8377 = vadd.f32 %v8310, %v8364
        %v8378 = vadd.f32 %v8311, %v8364
        %v8379 = vadd.f32 %v8312, %v8364
        %v8380 = vadd.f32 %v8313, %v8364
        %v8381 = vadd.f32 %v8314, %v8364
        %v8382 = vadd.f32 %v8315, %v8364
        %v8383 = vadd.f32 %v8316, %v8364
        %v8384 = vadd.f32 %v8317, %v8364
        %v8385 = vadd.f32 %v8318, %v8364
        %v8386 = vadd.f32 %v8319, %v8364
        %v8387 = vadd.f32 %v8320, %v8364
        %v8388 = vadd.f32 %v8321, %v8364
        %v8389 = vadd.f32 %v8322, %v8364
        %v8390 = vadd.f32 %v8323, %v8364
        %v8391 = vadd.f32 %v8324, %v8364
        %v8392 = vadd.f32 %v8325, %v8364
        %v8393 = vadd.f32 %v8326, %v8364
        %v8394 = vadd.f32 %v8327, %v8364
        %v8395 = vadd.f32 %v8328, %v8364
        %v8396 = vadd.f32 %v8329, %v8364
        %v8397 = vadd.f32 %v8330, %v8364
        %v8398 = vadd.f32 %v8331, %v8364
        %v8399 = vadd.f32 %v8332, %v8364
        %v8400 = vadd.f32 %v8333, %v8364
        %v8401 = vadd.f32 %v8334, %v8364
        %v8402 = vadd.f32 %v8335, %v8364
        %v8403 = vadd.f32 %v8336, %v8364
        %v8404 = vadd.f32 %v8337, %v8364
        %v8405 = vadd.f32 %v8338, %v8364
        %v8406 = vadd.f32 %v8339, %v8364
        %v8407 = vadd.f32 %v8340, %v8364
        %v8408 = vadd.f32 %v8341, %v8364
        %v8409 = vadd.f32 %v8342, %v8364
        %v8410 = vadd.f32 %v8343, %v8364
        %v8411 = vadd.f32 %v8344, %v8364
        %v8412 = vadd.f32 %v8345, %v8364
        %v8413 = vadd.f32 %v8346, %v8364
        %v8414 = vadd.f32 %v8347, %v8364
        %v8415 = vadd.f32 %v8348, %v8364
        %v8416 = vadd.f32 %v8349, %v8364
        %v8417 = vadd.f32 %v8350, %v8364
        %v8418 = vadd.f32 %v8351, %v8364
        %v8419 = vadd.f32 %v8352, %v8364
        %v8420 = vadd.f32 %v8353, %v8364
        %v8421 = vadd.f32 %v8354, %v8364
        %v8422 = vadd.f32 %v8355, %v8364
        %v8423 = vadd.f32 %v8356, %v8364
        %v8424 = vadd.f32 %v8357, %v8364
        %v8425 = vadd.f32 %v8358, %v8364
        %v8426 = vadd.f32 %v8359, %v8364
        %v8427 = vadd.f32 %v8360, %v8364
        %v8428 = vadd.f32 %v8361, %v8364
        %v8429 = vadd.f32 %v8362, %v8364
        %v8430 = vld [vmem:[#allocation5] sm:$0xff]
        %v8431 = vld [vmem:[#allocation5 + $0x8] sm:$0xff]
        %v8432 = vld [vmem:[#allocation5 + $0x10] sm:$0xff]
        %v8433 = vld [vmem:[#allocation5 + $0x18] sm:$0xff]
        %v8434 = vld [vmem:[#allocation5 + $0x20] sm:$0xff]
        %v8435 = vld [vmem:[#allocation5 + $0x28] sm:$0xff]
        %v8436 = vld [vmem:[#allocation5 + $0x30] sm:$0xff]
        %v8437 = vld [vmem:[#allocation5 + $0x38] sm:$0xff]
        %v8438 = vld [vmem:[#allocation5 + $0x40] sm:$0xff]
        %v8439 = vld [vmem:[#allocation5 + $0x48] sm:$0xff]
        %v8440 = vld [vmem:[#allocation5 + $0x50] sm:$0xff]
        %v8441 = vld [vmem:[#allocation5 + $0x58] sm:$0xff]
        %v8442 = vld [vmem:[#allocation5 + $0x60] sm:$0xff]
        %v8443 = vld [vmem:[#allocation5 + $0x68] sm:$0xff]
        %v8444 = vld [vmem:[#allocation5 + $0x70] sm:$0xff]
        %v8445 = vld [vmem:[#allocation5 + $0x78] sm:$0xff]
        %v8446 = vld [vmem:[#allocation5 + $0x80] sm:$0xff]
        %v8447 = vld [vmem:[#allocation5 + $0x88] sm:$0xff]
        %v8448 = vld [vmem:[#allocation5 + $0x90] sm:$0xff]
        %v8449 = vld [vmem:[#allocation5 + $0x98] sm:$0xff]
        %v8450 = vld [vmem:[#allocation5 + $0xa0] sm:$0xff]
        %v8451 = vld [vmem:[#allocation5 + $0xa8] sm:$0xff]
        %v8452 = vld [vmem:[#allocation5 + $0xb0] sm:$0xff]
        %v8453 = vld [vmem:[#allocation5 + $0xb8] sm:$0xff]
        %v8454 = vld [vmem:[#allocation5 + $0xc0] sm:$0xff]
        %v8455 = vld [vmem:[#allocation5 + $0xc8] sm:$0xff]
        %v8456 = vld [vmem:[#allocation5 + $0xd0] sm:$0xff]
        %v8457 = vld [vmem:[#allocation5 + $0xd8] sm:$0xff]
        %v8458 = vld [vmem:[#allocation5 + $0xe0] sm:$0xff]
        %v8459 = vld [vmem:[#allocation5 + $0xe8] sm:$0xff]
        %v8460 = vld [vmem:[#allocation5 + $0xf0] sm:$0xff]
        %v8461 = vld [vmem:[#allocation5 + $0xf8] sm:$0xff]
        %v8462 = vld [vmem:[#allocation5 + $0x100] sm:$0xff]
        %v8463 = vld [vmem:[#allocation5 + $0x108] sm:$0xff]
        %v8464 = vld [vmem:[#allocation5 + $0x110] sm:$0xff]
        %v8465 = vld [vmem:[#allocation5 + $0x118] sm:$0xff]
        %v8466 = vld [vmem:[#allocation5 + $0x120] sm:$0xff]
        %v8467 = vld [vmem:[#allocation5 + $0x128] sm:$0xff]
        %v8468 = vld [vmem:[#allocation5 + $0x130] sm:$0xff]
        %v8469 = vld [vmem:[#allocation5 + $0x138] sm:$0xff]
        %v8470 = vld [vmem:[#allocation5 + $0x140] sm:$0xff]
        %v8471 = vld [vmem:[#allocation5 + $0x148] sm:$0xff]
        %v8472 = vld [vmem:[#allocation5 + $0x150] sm:$0xff]
        %v8473 = vld [vmem:[#allocation5 + $0x158] sm:$0xff]
        %v8474 = vld [vmem:[#allocation5 + $0x160] sm:$0xff]
        %v8475 = vld [vmem:[#allocation5 + $0x168] sm:$0xff]
        %v8476 = vld [vmem:[#allocation5 + $0x170] sm:$0xff]
        %v8477 = vld [vmem:[#allocation5 + $0x178] sm:$0xff]
        %v8478 = vld [vmem:[#allocation5 + $0x180] sm:$0xff]
        %v8479 = vld [vmem:[#allocation5 + $0x188] sm:$0xff]
        %v8480 = vld [vmem:[#allocation5 + $0x190] sm:$0xff]
        %v8481 = vld [vmem:[#allocation5 + $0x198] sm:$0xff]
        %v8482 = vld [vmem:[#allocation5 + $0x1a0] sm:$0xff]
        %v8483 = vld [vmem:[#allocation5 + $0x1a8] sm:$0xff]
        %v8484 = vld [vmem:[#allocation5 + $0x1b0] sm:$0xff]
        %v8485 = vld [vmem:[#allocation5 + $0x1b8] sm:$0xff]
        %v8486 = vld [vmem:[#allocation5 + $0x1c0] sm:$0xff]
        %v8487 = vld [vmem:[#allocation5 + $0x1c8] sm:$0xff]
        %v8488 = vld [vmem:[#allocation5 + $0x1d0] sm:$0xff]
        %v8489 = vld [vmem:[#allocation5 + $0x1d8] sm:$0xff]
        %v8490 = vld [vmem:[#allocation5 + $0x1e0] sm:$0xff]
        %v8491 = vld [vmem:[#allocation5 + $0x1e8] sm:$0xff]
        %v8492 = vld [vmem:[#allocation5 + $0x1f0] sm:$0xff]
        %v8493 = vld [vmem:[#allocation5 + $0x1f8] sm:$0xff]
        %v8494 = vadd.f32 %v8366, %v8430
        %v8495 = vadd.f32 %v8367, %v8431
        %v8496 = vadd.f32 %v8368, %v8432
        %v8497 = vadd.f32 %v8369, %v8433
        %v8498 = vadd.f32 %v8370, %v8434
        %v8499 = vadd.f32 %v8371, %v8435
        %v8500 = vadd.f32 %v8372, %v8436
        %v8501 = vadd.f32 %v8373, %v8437
        %v8502 = vadd.f32 %v8374, %v8438
        %v8503 = vadd.f32 %v8375, %v8439
        %v8504 = vadd.f32 %v8376, %v8440
        %v8505 = vadd.f32 %v8377, %v8441
        %v8506 = vadd.f32 %v8378, %v8442
        %v8507 = vadd.f32 %v8379, %v8443
        %v8508 = vadd.f32 %v8380, %v8444
        %v8509 = vadd.f32 %v8381, %v8445
        %v8510 = vadd.f32 %v8382, %v8446
        %v8511 = vadd.f32 %v8383, %v8447
        %v8512 = vadd.f32 %v8384, %v8448
        %v8513 = vadd.f32 %v8385, %v8449
        %v8514 = vadd.f32 %v8386, %v8450
        %v8515 = vadd.f32 %v8387, %v8451
        %v8516 = vadd.f32 %v8388, %v8452
        %v8517 = vadd.f32 %v8389, %v8453
        %v8518 = vadd.f32 %v8390, %v8454
        %v8519 = vadd.f32 %v8391, %v8455
        %v8520 = vadd.f32 %v8392, %v8456
        %v8521 = vadd.f32 %v8393, %v8457
        %v8522 = vadd.f32 %v8394, %v8458
        %v8523 = vadd.f32 %v8395, %v8459
        %v8524 = vadd.f32 %v8396, %v8460
        %v8525 = vadd.f32 %v8397, %v8461
        %v8526 = vadd.f32 %v8398, %v8462
        %v8527 = vadd.f32 %v8399, %v8463
        %v8528 = vadd.f32 %v8400, %v8464
        %v8529 = vadd.f32 %v8401, %v8465
        %v8530 = vadd.f32 %v8402, %v8466
        %v8531 = vadd.f32 %v8403, %v8467
        %v8532 = vadd.f32 %v8404, %v8468
        %v8533 = vadd.f32 %v8405, %v8469
        %v8534 = vadd.f32 %v8406, %v8470
        %v8535 = vadd.f32 %v8407, %v8471
        %v8536 = vadd.f32 %v8408, %v8472
        %v8537 = vadd.f32 %v8409, %v8473
        %v8538 = vadd.f32 %v8410, %v8474
        %v8539 = vadd.f32 %v8411, %v8475
        %v8540 = vadd.f32 %v8412, %v8476
        %v8541 = vadd.f32 %v8413, %v8477
        %v8542 = vadd.f32 %v8414, %v8478
        %v8543 = vadd.f32 %v8415, %v8479
        %v8544 = vadd.f32 %v8416, %v8480
        %v8545 = vadd.f32 %v8417, %v8481
        %v8546 = vadd.f32 %v8418, %v8482
        %v8547 = vadd.f32 %v8419, %v8483
        %v8548 = vadd.f32 %v8420, %v8484
        %v8549 = vadd.f32 %v8421, %v8485
        %v8550 = vadd.f32 %v8422, %v8486
        %v8551 = vadd.f32 %v8423, %v8487
        %v8552 = vadd.f32 %v8424, %v8488
        %v8553 = vadd.f32 %v8425, %v8489
        %v8554 = vadd.f32 %v8426, %v8490
        %v8555 = vadd.f32 %v8427, %v8491
        %v8556 = vadd.f32 %v8428, %v8492
        %v8557 = vadd.f32 %v8429, %v8493
        %v8558 = vmax.f32 %v8494, 0.0
        %v8559 = vmax.f32 %v8495, 0.0
        %v8560 = vmax.f32 %v8496, 0.0
        %v8561 = vmax.f32 %v8497, 0.0
        %v8562 = vmax.f32 %v8498, 0.0
        %v8563 = vmax.f32 %v8499, 0.0
        %v8564 = vmax.f32 %v8500, 0.0
        %v8565 = vmax.f32 %v8501, 0.0
        %v8566 = vmax.f32 %v8502, 0.0
        %v8567 = vmax.f32 %v8503, 0.0
        %v8568 = vmax.f32 %v8504, 0.0
        %v8569 = vmax.f32 %v8505, 0.0
        %v8570 = vmax.f32 %v8506, 0.0
        %v8571 = vmax.f32 %v8507, 0.0
        %v8572 = vmax.f32 %v8508, 0.0
        %v8573 = vmax.f32 %v8509, 0.0
        %v8574 = vmax.f32 %v8510, 0.0
        %v8575 = vmax.f32 %v8511, 0.0
        %v8576 = vmax.f32 %v8512, 0.0
        %v8577 = vmax.f32 %v8513, 0.0
        %v8578 = vmax.f32 %v8514, 0.0
        %v8579 = vmax.f32 %v8515, 0.0
        %v8580 = vmax.f32 %v8516, 0.0
        %v8581 = vmax.f32 %v8517, 0.0
        %v8582 = vmax.f32 %v8518, 0.0
        %v8583 = vmax.f32 %v8519, 0.0
        %v8584 = vmax.f32 %v8520, 0.0
        %v8585 = vmax.f32 %v8521, 0.0
        %v8586 = vmax.f32 %v8522, 0.0
        %v8587 = vmax.f32 %v8523, 0.0
        %v8588 = vmax.f32 %v8524, 0.0
        %v8589 = vmax.f32 %v8525, 0.0
        %v8590 = vmax.f32 %v8526, 0.0
        %v8591 = vmax.f32 %v8527, 0.0
        %v8592 = vmax.f32 %v8528, 0.0
        %v8593 = vmax.f32 %v8529, 0.0
        %v8594 = vmax.f32 %v8530, 0.0
        %v8595 = vmax.f32 %v8531, 0.0
        %v8596 = vmax.f32 %v8532, 0.0
        %v8597 = vmax.f32 %v8533, 0.0
        %v8598 = vmax.f32 %v8534, 0.0
        %v8599 = vmax.f32 %v8535, 0.0
        %v8600 = vmax.f32 %v8536, 0.0
        %v8601 = vmax.f32 %v8537, 0.0
        %v8602 = vmax.f32 %v8538, 0.0
        %v8603 = vmax.f32 %v8539, 0.0
        %v8604 = vmax.f32 %v8540, 0.0
        %v8605 = vmax.f32 %v8541, 0.0
        %v8606 = vmax.f32 %v8542, 0.0
        %v8607 = vmax.f32 %v8543, 0.0
        %v8608 = vmax.f32 %v8544, 0.0
        %v8609 = vmax.f32 %v8545, 0.0
        %v8610 = vmax.f32 %v8546, 0.0
        %v8611 = vmax.f32 %v8547, 0.0
        %v8612 = vmax.f32 %v8548, 0.0
        %v8613 = vmax.f32 %v8549, 0.0
        %v8614 = vmax.f32 %v8550, 0.0
        %v8615 = vmax.f32 %v8551, 0.0
        %v8616 = vmax.f32 %v8552, 0.0
        %v8617 = vmax.f32 %v8553, 0.0
        %v8618 = vmax.f32 %v8554, 0.0
        %v8619 = vmax.f32 %v8555, 0.0
        %v8620 = vmax.f32 %v8556, 0.0
        %v8621 = vmax.f32 %v8557, 0.0
        %8622 = vst.msk [vmem:[%s7] sm:$0xff] %vm413, %v8558
        %8623 = vst.msk [vmem:[%s7 + $0x8] sm:$0xff] %vm413, %v8559
        %8624 = vst.msk [vmem:[%s7 + $0x10] sm:$0xff] %vm413, %v8560
        %8625 = vst.msk [vmem:[%s7 + $0x18] sm:$0xff] %vm413, %v8561
        %8626 = vst.msk [vmem:[%s7 + $0x20] sm:$0xff] %vm413, %v8562
        %8627 = vst.msk [vmem:[%s7 + $0x28] sm:$0xff] %vm413, %v8563
        %8628 = vst.msk [vmem:[%s7 + $0x30] sm:$0xff] %vm413, %v8564
        %8629 = vst.msk [vmem:[%s7 + $0x38] sm:$0xff] %vm413, %v8565
        %8630 = vst.msk [vmem:[%s7 + $0x40] sm:$0xff] %vm413, %v8566
        %8631 = vst.msk [vmem:[%s7 + $0x48] sm:$0xff] %vm413, %v8567
        %8632 = vst.msk [vmem:[%s7 + $0x50] sm:$0xff] %vm413, %v8568
        %8633 = vst.msk [vmem:[%s7 + $0x58] sm:$0xff] %vm413, %v8569
        %8634 = vst.msk [vmem:[%s7 + $0x60] sm:$0xff] %vm413, %v8570
        %8635 = vst.msk [vmem:[%s7 + $0x68] sm:$0xff] %vm413, %v8571
        %8636 = vst.msk [vmem:[%s7 + $0x70] sm:$0xff] %vm413, %v8572
        %8637 = vst.msk [vmem:[%s7 + $0x78] sm:$0xff] %vm413, %v8573
        %8638 = vst.msk [vmem:[%s7 + $0x80] sm:$0xff] %vm413, %v8574
        %8639 = vst.msk [vmem:[%s7 + $0x88] sm:$0xff] %vm413, %v8575
        %8640 = vst.msk [vmem:[%s7 + $0x90] sm:$0xff] %vm413, %v8576
        %8641 = vst.msk [vmem:[%s7 + $0x98] sm:$0xff] %vm413, %v8577
        %8642 = vst.msk [vmem:[%s7 + $0xa0] sm:$0xff] %vm413, %v8578
        %8643 = vst.msk [vmem:[%s7 + $0xa8] sm:$0xff] %vm413, %v8579
        %8644 = vst.msk [vmem:[%s7 + $0xb0] sm:$0xff] %vm413, %v8580
        %8645 = vst.msk [vmem:[%s7 + $0xb8] sm:$0xff] %vm413, %v8581
        %8646 = vst.msk [vmem:[%s7 + $0xc0] sm:$0xff] %vm413, %v8582
        %8647 = vst.msk [vmem:[%s7 + $0xc8] sm:$0xff] %vm413, %v8583
        %8648 = vst.msk [vmem:[%s7 + $0xd0] sm:$0xff] %vm413, %v8584
        %8649 = vst.msk [vmem:[%s7 + $0xd8] sm:$0xff] %vm413, %v8585
        %8650 = vst.msk [vmem:[%s7 + $0xe0] sm:$0xff] %vm413, %v8586
        %8651 = vst.msk [vmem:[%s7 + $0xe8] sm:$0xff] %vm413, %v8587
        %8652 = vst.msk [vmem:[%s7 + $0xf0] sm:$0xff] %vm413, %v8588
        %8653 = vst.msk [vmem:[%s7 + $0xf8] sm:$0xff] %vm413, %v8589
        %8654 = vst.msk [vmem:[%s7 + $0x100] sm:$0xff] %vm413, %v8590
        %8655 = vst.msk [vmem:[%s7 + $0x108] sm:$0xff] %vm413, %v8591
        %8656 = vst.msk [vmem:[%s7 + $0x110] sm:$0xff] %vm413, %v8592
        %8657 = vst.msk [vmem:[%s7 + $0x118] sm:$0xff] %vm413, %v8593
        %8658 = vst.msk [vmem:[%s7 + $0x120] sm:$0xff] %vm413, %v8594
        %8659 = vst.msk [vmem:[%s7 + $0x128] sm:$0xff] %vm413, %v8595
        %8660 = vst.msk [vmem:[%s7 + $0x130] sm:$0xff] %vm413, %v8596
        %8661 = vst.msk [vmem:[%s7 + $0x138] sm:$0xff] %vm413, %v8597
        %8662 = vst.msk [vmem:[%s7 + $0x140] sm:$0xff] %vm413, %v8598
        %8663 = vst.msk [vmem:[%s7 + $0x148] sm:$0xff] %vm413, %v8599
        %8664 = vst.msk [vmem:[%s7 + $0x150] sm:$0xff] %vm413, %v8600
        %8665 = vst.msk [vmem:[%s7 + $0x158] sm:$0xff] %vm413, %v8601
        %8666 = vst.msk [vmem:[%s7 + $0x160] sm:$0xff] %vm413, %v8602
        %8667 = vst.msk [vmem:[%s7 + $0x168] sm:$0xff] %vm413, %v8603
        %8668 = vst.msk [vmem:[%s7 + $0x170] sm:$0xff] %vm413, %v8604
        %8669 = vst.msk [vmem:[%s7 + $0x178] sm:$0xff] %vm413, %v8605
        %8670 = vst.msk [vmem:[%s7 + $0x180] sm:$0xff] %vm413, %v8606
        %8671 = vst.msk [vmem:[%s7 + $0x188] sm:$0xff] %vm413, %v8607
        %8672 = vst.msk [vmem:[%s7 + $0x190] sm:$0xff] %vm413, %v8608
        %8673 = vst.msk [vmem:[%s7 + $0x198] sm:$0xff] %vm413, %v8609
        %8674 = vst.msk [vmem:[%s7 + $0x1a0] sm:$0xff] %vm413, %v8610
        %8675 = vst.msk [vmem:[%s7 + $0x1a8] sm:$0xff] %vm413, %v8611
        %8676 = vst.msk [vmem:[%s7 + $0x1b0] sm:$0xff] %vm413, %v8612
        %8677 = vst.msk [vmem:[%s7 + $0x1b8] sm:$0xff] %vm413, %v8613
        %8678 = vst.msk [vmem:[%s7 + $0x1c0] sm:$0xff] %vm413, %v8614
        %8679 = vst.msk [vmem:[%s7 + $0x1c8] sm:$0xff] %vm413, %v8615
        %8680 = vst.msk [vmem:[%s7 + $0x1d0] sm:$0xff] %vm413, %v8616
        %8681 = vst.msk [vmem:[%s7 + $0x1d8] sm:$0xff] %vm413, %v8617
        %8682 = vst.msk [vmem:[%s7 + $0x1e0] sm:$0xff] %vm413, %v8618
        %8683 = vst.msk [vmem:[%s7 + $0x1e8] sm:$0xff] %vm413, %v8619
        %8684 = vst.msk [vmem:[%s7 + $0x1f0] sm:$0xff] %vm413, %v8620
        %8685 = vst.msk [vmem:[%s7 + $0x1f8] sm:$0xff] %vm413, %v8621
      $region56: #{baseblock_forward.1} parent=47 // pred_fallthru
        _
      // Predicated region
      $region57: #{baseblock_forward.1} parent=47 // pred_check
        %p8686 = pneg %p183
      $region58: #{baseblock_forward.1} parent=47 // pred_check_branch
        %8688 = sbr.rel (%p8686) target = $region60
      $region59: #{baseblock_forward.1} parent=47 // pred_region
        _
      $region60: #{baseblock_forward.1} parent=47 // pred_fallthru
        _
      // Predicated region
      $region61: #{baseblock_forward.1} parent=47 // pred_check
        %p8689 = pneg %p183
      $region62: #{baseblock_forward.1} parent=47 // pred_check_branch
        %8691 = sbr.rel (%p8689) target = $region64
      $region63: #{baseblock_forward.1} parent=47 // pred_region
        _
      $region64: #{baseblock_forward.1} parent=47 // pred_fallthru
        _
    $region48: #{baseblock_forward.1} parent=5 // pred_fallthru
      _
    %p8692 = scmp.le.s32.totalorder 2, %s13
    // Predicated region
    $region65: #{baseblock_forward.1} parent=5 // pred_check
      %p8693 = pneg %p8692
    $region66: #{baseblock_forward.1} parent=5 // pred_check_branch
      %8695 = sbr.rel (%p8693) target = $region68
    $region67: #{baseblock_forward.1} parent=5 // pred_region
      %s8696 = ssub.s32 %s13, 2
    $region68: #{baseblock_forward.1} parent=5 // pred_fallthru
      _
  $region6: #{baseblock_forward.1} parent=0 // loop_footer
    %s17 = sadd.s32 1, %s13
  $region7: #{baseblock_forward.1} parent=0 // loop_footer_branch
    %12 = sbr.rel target = $region3
  $region8: #{baseblock_forward.1} parent=0 // loop_exit
    _

</llo_original>
